<compile_context>
chip_gen: v6e
topology: v6e:2x2x1
jax: 0.10.0
libtpu: 0.0.40
codegen_flags: <defaults>
</compile_context>

<pallas_src>
import jax
import jax.numpy as jnp
from jax.experimental import pallas as pl
from jax.experimental.pallas import tpu as pltpu


# ---------------------------------------------------------------------------
# Fused kernel: one (batch, depth-slab) per grid step
# ---------------------------------------------------------------------------
def _attention_kernel(x_ref, w1b_ref, b1_ref, w2d_ref, b2_ref, o_ref):
    """Refs (batch dim squeezed by the BlockSpecs):
      x_ref   : (Dp, Hp, Wp*Cin)     zero-padded, lane-packed input, bf16
      w1b_ref : (9, Wp*Cin, W*Cout)  banded 3x3x3 conv weights per (kd,kh), bf16
      b1_ref  : (1, W*Cout)          conv1 bias tiled over w, f32
      w2d_ref : (W*Cout, W*Cout)     block-diagonal 1x1x1 conv weights, bf16
      b2_ref  : (1, W*Cout)          conv2 bias tiled over w, f32
      o_ref   : (Dt, H, W*Cout)      output depth slab, f32 (lane-dense store)
    """
    Dt, H, n_out = o_ref.shape
    kin = x_ref.shape[-1]

    s = pl.program_id(1)                       # depth-slab index
    d0 = pl.multiple_of(s * Dt, Dt)            # first (padded) depth row of slab
    M = Dt * H

    # 3x3x3 conv + bias, as 9 lane-dense matmuls accumulated in f32 on the MXU.
    acc = jnp.zeros((M, n_out), jnp.float32)
    for kd in range(3):
        for kh in range(3):
            win = x_ref[pl.ds(d0 + kd, Dt), pl.ds(kh, H), :]   # (Dt, H, Wp*Cin)
            win2d = win.reshape(M, kin)                        # merge leading dims
            acc = acc + jnp.dot(win2d, w1b_ref[kd * 3 + kh],
                                preferred_element_type=jnp.float32)

    # ReLU, then 1x1x1 conv as a block-diagonal matmul (stays lane-dense).
    h = jnp.maximum(acc + b1_ref[...], 0.0).astype(jnp.bfloat16)
    a = jnp.dot(h, w2d_ref[...], preferred_element_type=jnp.float32)

    # sigmoid(a + b2) + 1, written as exp/div so it lowers to EUP ops.
    z = a + b2_ref[...]
    a = 1.0 / (1.0 + jnp.exp(-z)) + 1.0

    o_ref[...] = a.reshape(Dt, H, n_out)


def _pick_depth_tile(D):
    for dt in (8, 4, 2, 1):
        if D % dt == 0:
            return dt
    return D


# ---------------------------------------------------------------------------
# Wrapper: PyTorch NCDHW in / NCDHW out
# ---------------------------------------------------------------------------
def attention_forward(x_ncdhw, w1, b1, w2, b2):
    """Forward pass of the PyTorch `Attention` module.

    x_ncdhw : (B, Cin, D, H, W) f32
    w1      : (Cout, Cin, 3, 3, 3) f32,   b1 : (Cout,) f32
    w2      : (Cout, Cout, 1, 1, 1) f32,  b2 : (Cout,) f32
    returns : (B, Cout, D, H, W) f32
    """
    B, Cin, D, H, W = x_ncdhw.shape
    Cout = w1.shape[0]
    Dp, Hp, Wp = D + 2, H + 2, W + 2
    kin = Wp * Cin           # input lane width  (e.g. 18*4 = 72)
    n_out = W * Cout         # output lane width (e.g. 16*32 = 512)
    Dt = _pick_depth_tile(D)

    # Channels-last, bf16, zero pad (Conv3d padding=1), pack W*Cin onto lanes.
    x = jnp.transpose(x_ncdhw, (0, 2, 3, 4, 1)).astype(jnp.bfloat16)
    xp = jnp.pad(x, ((0, 0), (1, 1), (1, 1), (1, 1), (0, 0)))
    xp = xp.reshape(B, Dp, Hp, kin)

    # Banded 3x3x3 weights: w1b[kd*3+kh, wp*Cin+ci, w*Cout+co] =
    #     w1[co, ci, kd, kh, wp-w]   if wp-w in {0,1,2}, else 0.
    shift = (jnp.arange(Wp)[None, :, None] ==
             (jnp.arange(3)[:, None, None] + jnp.arange(W)[None, None, :])
             ).astype(jnp.float32)                              # (3, Wp, W)
    w1r = jnp.transpose(w1, (2, 3, 4, 1, 0))                    # (kd,kh,kw,ci,co)
    w1b = jnp.einsum('zpw,xyzio->xypiwo', shift, w1r)           # (3,3,Wp,Cin,W,Cout)
    w1b = w1b.reshape(9, kin, n_out).astype(jnp.bfloat16)

    # Block-diagonal 1x1x1 weights: w2d[w*Cout+ci, w'*Cout+co] = delta(w,w')*w2[co,ci]
    w2m = jnp.transpose(w2.reshape(Cout, Cout))                 # (ci, co)
    w2d = jnp.einsum('vw,io->viwo', jnp.eye(W, dtype=jnp.float32), w2m)
    w2d = w2d.reshape(n_out, n_out).astype(jnp.bfloat16)

    b1p = jnp.tile(b1, W).reshape(1, n_out).astype(jnp.float32)
    b2p = jnp.tile(b2, W).reshape(1, n_out).astype(jnp.float32)

    out = pl.pallas_call(
        _attention_kernel,
        out_shape=jax.ShapeDtypeStruct((B, D, H, n_out), jnp.float32),
        grid_spec=pltpu.PrefetchScalarGridSpec(
            num_scalar_prefetch=0,
            grid=(B, D // Dt),
            in_specs=[
                # whole padded volume of one batch element stays resident
                # across its depth-slab steps (~150 KB packed, DMA'd once)
                pl.BlockSpec((None, Dp, Hp, kin), lambda b, s: (b, 0, 0, 0)),
                pl.BlockSpec((9, kin, n_out), lambda b, s: (0, 0, 0)),
                pl.BlockSpec((1, n_out), lambda b, s: (0, 0)),
                pl.BlockSpec((n_out, n_out), lambda b, s: (0, 0)),
                pl.BlockSpec((1, n_out), lambda b, s: (0, 0)),
            ],
            out_specs=pl.BlockSpec((None, Dt, H, n_out),
                                   lambda b, s: (b, s, 0, 0)),
        ),
        compiler_params=pltpu.CompilerParams(
            dimension_semantics=("parallel", "parallel")),
    )(xp, w1b, b1p, w2d, b2p)

    # Back to PyTorch NCDHW layout.
    out = out.reshape(B, D, H, W, Cout)
    return jnp.transpose(out, (0, 4, 1, 2, 3))


# ---------------------------------------------------------------------------
# Plain-JAX reference (same bf16 operand rounding as the kernel)
# ---------------------------------------------------------------------------
def attention_reference(x, w1, b1, w2, b2):
    dn = ("NCDHW", "OIDHW", "NCDHW")
    y = jax.lax.conv_general_dilated(
        x.astype(jnp.bfloat16), w1.astype(jnp.bfloat16),
        window_strides=(1, 1, 1), padding=((1, 1), (1, 1), (1, 1)),
        dimension_numbers=dn, preferred_element_type=jnp.float32)
    y = jnp.maximum(y + b1[None, :, None, None, None], 0.0)
    y = jax.lax.conv_general_dilated(
        y.astype(jnp.bfloat16), w2.astype(jnp.bfloat16),
        window_strides=(1, 1, 1), padding="VALID",
        dimension_numbers=dn, preferred_element_type=jnp.float32)
    y = jax.nn.sigmoid(y + b2[None, :, None, None, None]) + 1.0
    return y


# ---------------------------------------------------------------------------
if __name__ == "__main__":
    key = jax.random.PRNGKey(0)
    kx, kw1, kb1, kw2, kb2 = jax.random.split(key, 5)

    B, Cin, Cout, S = 2, 4, 32, 16          # spatial D = H = W = 16

    x = jax.random.normal(kx, (B, Cin, S, S, S), jnp.float32)
    w1 = jax.random.normal(kw1, (Cout, Cin, 3, 3, 3), jnp.float32) / jnp.sqrt(27.0 * Cin)
    b1 = 0.05 * jax.random.normal(kb1, (Cout,), jnp.float32)
    w2 = jax.random.normal(kw2, (Cout, Cout, 1, 1, 1), jnp.float32) / jnp.sqrt(float(Cout))
    b2 = 0.05 * jax.random.normal(kb2, (Cout,), jnp.float32)

    fwd = jax.jit(attention_forward)
    out = fwd(x, w1, b1, w2, b2)
    jax.block_until_ready(out)

    assert out.shape == (B, Cout, S, S, S)
    assert bool(jnp.all(jnp.isfinite(out)))

    ref = attention_reference(x, w1, b1, w2, b2)
    err = float(jnp.max(jnp.abs(out - ref)))
    assert err < 2e-2, f"max abs error {err}"

    print("KERNEL_OK")
</pallas_src>

<mosaic_0001>
module attributes {stable_mosaic.version = 11 : i64} {
  func.func @_attention_kernel(%arg0: i32, %arg1: i32, %arg2: memref<1x18x18x72xbf16, #tpu.memory_space<vmem>>, %arg3: memref<9x72x512xbf16, #tpu.memory_space<vmem>>, %arg4: memref<1x512xf32, #tpu.memory_space<vmem>>, %arg5: memref<512x512xbf16, #tpu.memory_space<vmem>>, %arg6: memref<1x512xf32, #tpu.memory_space<vmem>>, %arg7: memref<1x8x16x512xf32, #tpu.memory_space<vmem>>) attributes {dimension_semantics = [#tpu.dimension_semantics<parallel>, #tpu.dimension_semantics<parallel>], iteration_bounds = array<i64: 2, 2>, scalar_prefetch = 0 : i64, scratch_operands = 0 : i64, tpu.core_type = #tpu.core_type<tc>, window_params = [{transform_indices = @transform_0, window_bounds = array<i64: 1, 18, 18, 72>}, {pipeline_mode = #tpu.pipeline_mode<synchronous>, transform_indices = @transform_1, window_bounds = array<i64: 9, 72, 512>}, {pipeline_mode = #tpu.pipeline_mode<synchronous>, transform_indices = @transform_2, window_bounds = array<i64: 1, 512>}, {pipeline_mode = #tpu.pipeline_mode<synchronous>, transform_indices = @transform_3, window_bounds = array<i64: 512, 512>}, {pipeline_mode = #tpu.pipeline_mode<synchronous>, transform_indices = @transform_4, window_bounds = array<i64: 1, 512>}, {transform_indices = @transform_5, window_bounds = array<i64: 1, 8, 16, 512>}]} {
    %c8_i32 = arith.constant 8 : i32
    %0 = arith.muli %arg1, %c8_i32 : i32
    %1 = tpu.assume_multiple %0, 8 : i32
    %cst = arith.constant 0.000000e+00 : f32
    %2 = vector.broadcast %cst : f32 to vector<128x512xf32>
    %c0_i32 = arith.constant 0 : i32
    %3 = arith.addi %1, %c0_i32 : i32
    %c0 = arith.constant 0 : index
    %4 = arith.index_cast %3 : i32 to index
    %c0_0 = arith.constant 0 : index
    %c0_1 = arith.constant 0 : index
    %5 = vector.load %arg2[%c0, %4, %c0_0, %c0_1] : memref<1x18x18x72xbf16, #tpu.memory_space<vmem>>, vector<1x8x16x72xbf16>
    %6 = vector.shape_cast %5 : vector<1x8x16x72xbf16> to vector<8x16x72xbf16>
    %7 = vector.shape_cast %6 : vector<8x16x72xbf16> to vector<128x72xbf16>
    %c0_2 = arith.constant 0 : index
    %c0_3 = arith.constant 0 : index
    %c0_4 = arith.constant 0 : index
    %8 = vector.load %arg3[%c0_2, %c0_3, %c0_4] : memref<9x72x512xbf16, #tpu.memory_space<vmem>>, vector<1x72x512xbf16>
    %9 = vector.shape_cast %8 : vector<1x72x512xbf16> to vector<72x512xbf16>
    %cst_5 = arith.constant dense<0.000000e+00> : vector<128x512xf32>
    %10 = tpu.matmul %7, %9, %cst_5 {dimension_numbers = #tpu.dot_dimension_numbers<[1], [0], [0], [1], [0, 0, 1, 1], [], []>} : vector<128x72xbf16>, vector<72x512xbf16>, vector<128x512xf32> -> vector<128x512xf32>
    %11 = arith.addf %2, %10 : vector<128x512xf32>
    %c0_i32_6 = arith.constant 0 : i32
    %12 = arith.addi %1, %c0_i32_6 : i32
    %c0_7 = arith.constant 0 : index
    %13 = arith.index_cast %12 : i32 to index
    %c1 = arith.constant 1 : index
    %c0_8 = arith.constant 0 : index
    %14 = vector.load %arg2[%c0_7, %13, %c1, %c0_8] : memref<1x18x18x72xbf16, #tpu.memory_space<vmem>>, vector<1x8x16x72xbf16>
    %15 = vector.shape_cast %14 : vector<1x8x16x72xbf16> to vector<8x16x72xbf16>
    %16 = vector.shape_cast %15 : vector<8x16x72xbf16> to vector<128x72xbf16>
    %c1_9 = arith.constant 1 : index
    %c0_10 = arith.constant 0 : index
    %c0_11 = arith.constant 0 : index
    %17 = vector.load %arg3[%c1_9, %c0_10, %c0_11] : memref<9x72x512xbf16, #tpu.memory_space<vmem>>, vector<1x72x512xbf16>
    %18 = vector.shape_cast %17 : vector<1x72x512xbf16> to vector<72x512xbf16>
    %cst_12 = arith.constant dense<0.000000e+00> : vector<128x512xf32>
    %19 = tpu.matmul %16, %18, %cst_12 {dimension_numbers = #tpu.dot_dimension_numbers<[1], [0], [0], [1], [0, 0, 1, 1], [], []>} : vector<128x72xbf16>, vector<72x512xbf16>, vector<128x512xf32> -> vector<128x512xf32>
    %20 = arith.addf %11, %19 : vector<128x512xf32>
    %c0_i32_13 = arith.constant 0 : i32
    %21 = arith.addi %1, %c0_i32_13 : i32
    %c0_14 = arith.constant 0 : index
    %22 = arith.index_cast %21 : i32 to index
    %c2 = arith.constant 2 : index
    %c0_15 = arith.constant 0 : index
    %23 = vector.load %arg2[%c0_14, %22, %c2, %c0_15] : memref<1x18x18x72xbf16, #tpu.memory_space<vmem>>, vector<1x8x16x72xbf16>
    %24 = vector.shape_cast %23 : vector<1x8x16x72xbf16> to vector<8x16x72xbf16>
    %25 = vector.shape_cast %24 : vector<8x16x72xbf16> to vector<128x72xbf16>
    %c2_16 = arith.constant 2 : index
    %c0_17 = arith.constant 0 : index
    %c0_18 = arith.constant 0 : index
    %26 = vector.load %arg3[%c2_16, %c0_17, %c0_18] : memref<9x72x512xbf16, #tpu.memory_space<vmem>>, vector<1x72x512xbf16>
    %27 = vector.shape_cast %26 : vector<1x72x512xbf16> to vector<72x512xbf16>
    %cst_19 = arith.constant dense<0.000000e+00> : vector<128x512xf32>
    %28 = tpu.matmul %25, %27, %cst_19 {dimension_numbers = #tpu.dot_dimension_numbers<[1], [0], [0], [1], [0, 0, 1, 1], [], []>} : vector<128x72xbf16>, vector<72x512xbf16>, vector<128x512xf32> -> vector<128x512xf32>
    %29 = arith.addf %20, %28 : vector<128x512xf32>
    %c1_i32 = arith.constant 1 : i32
    %30 = arith.addi %1, %c1_i32 : i32
    %c0_20 = arith.constant 0 : index
    %31 = arith.index_cast %30 : i32 to index
    %c0_21 = arith.constant 0 : index
    %c0_22 = arith.constant 0 : index
    %32 = vector.load %arg2[%c0_20, %31, %c0_21, %c0_22] : memref<1x18x18x72xbf16, #tpu.memory_space<vmem>>, vector<1x8x16x72xbf16>
    %33 = vector.shape_cast %32 : vector<1x8x16x72xbf16> to vector<8x16x72xbf16>
    %34 = vector.shape_cast %33 : vector<8x16x72xbf16> to vector<128x72xbf16>
    %c3 = arith.constant 3 : index
    %c0_23 = arith.constant 0 : index
    %c0_24 = arith.constant 0 : index
    %35 = vector.load %arg3[%c3, %c0_23, %c0_24] : memref<9x72x512xbf16, #tpu.memory_space<vmem>>, vector<1x72x512xbf16>
    %36 = vector.shape_cast %35 : vector<1x72x512xbf16> to vector<72x512xbf16>
    %cst_25 = arith.constant dense<0.000000e+00> : vector<128x512xf32>
    %37 = tpu.matmul %34, %36, %cst_25 {dimension_numbers = #tpu.dot_dimension_numbers<[1], [0], [0], [1], [0, 0, 1, 1], [], []>} : vector<128x72xbf16>, vector<72x512xbf16>, vector<128x512xf32> -> vector<128x512xf32>
    %38 = arith.addf %29, %37 : vector<128x512xf32>
    %c1_i32_26 = arith.constant 1 : i32
    %39 = arith.addi %1, %c1_i32_26 : i32
    %c0_27 = arith.constant 0 : index
    %40 = arith.index_cast %39 : i32 to index
    %c1_28 = arith.constant 1 : index
    %c0_29 = arith.constant 0 : index
    %41 = vector.load %arg2[%c0_27, %40, %c1_28, %c0_29] : memref<1x18x18x72xbf16, #tpu.memory_space<vmem>>, vector<1x8x16x72xbf16>
    %42 = vector.shape_cast %41 : vector<1x8x16x72xbf16> to vector<8x16x72xbf16>
    %43 = vector.shape_cast %42 : vector<8x16x72xbf16> to vector<128x72xbf16>
    %c4 = arith.constant 4 : index
    %c0_30 = arith.constant 0 : index
    %c0_31 = arith.constant 0 : index
    %44 = vector.load %arg3[%c4, %c0_30, %c0_31] : memref<9x72x512xbf16, #tpu.memory_space<vmem>>, vector<1x72x512xbf16>
    %45 = vector.shape_cast %44 : vector<1x72x512xbf16> to vector<72x512xbf16>
    %cst_32 = arith.constant dense<0.000000e+00> : vector<128x512xf32>
    %46 = tpu.matmul %43, %45, %cst_32 {dimension_numbers = #tpu.dot_dimension_numbers<[1], [0], [0], [1], [0, 0, 1, 1], [], []>} : vector<128x72xbf16>, vector<72x512xbf16>, vector<128x512xf32> -> vector<128x512xf32>
    %47 = arith.addf %38, %46 : vector<128x512xf32>
    %c1_i32_33 = arith.constant 1 : i32
    %48 = arith.addi %1, %c1_i32_33 : i32
    %c0_34 = arith.constant 0 : index
    %49 = arith.index_cast %48 : i32 to index
    %c2_35 = arith.constant 2 : index
    %c0_36 = arith.constant 0 : index
    %50 = vector.load %arg2[%c0_34, %49, %c2_35, %c0_36] : memref<1x18x18x72xbf16, #tpu.memory_space<vmem>>, vector<1x8x16x72xbf16>
    %51 = vector.shape_cast %50 : vector<1x8x16x72xbf16> to vector<8x16x72xbf16>
    %52 = vector.shape_cast %51 : vector<8x16x72xbf16> to vector<128x72xbf16>
    %c5 = arith.constant 5 : index
    %c0_37 = arith.constant 0 : index
    %c0_38 = arith.constant 0 : index
    %53 = vector.load %arg3[%c5, %c0_37, %c0_38] : memref<9x72x512xbf16, #tpu.memory_space<vmem>>, vector<1x72x512xbf16>
    %54 = vector.shape_cast %53 : vector<1x72x512xbf16> to vector<72x512xbf16>
    %cst_39 = arith.constant dense<0.000000e+00> : vector<128x512xf32>
    %55 = tpu.matmul %52, %54, %cst_39 {dimension_numbers = #tpu.dot_dimension_numbers<[1], [0], [0], [1], [0, 0, 1, 1], [], []>} : vector<128x72xbf16>, vector<72x512xbf16>, vector<128x512xf32> -> vector<128x512xf32>
    %56 = arith.addf %47, %55 : vector<128x512xf32>
    %c2_i32 = arith.constant 2 : i32
    %57 = arith.addi %1, %c2_i32 : i32
    %c0_40 = arith.constant 0 : index
    %58 = arith.index_cast %57 : i32 to index
    %c0_41 = arith.constant 0 : index
    %c0_42 = arith.constant 0 : index
    %59 = vector.load %arg2[%c0_40, %58, %c0_41, %c0_42] : memref<1x18x18x72xbf16, #tpu.memory_space<vmem>>, vector<1x8x16x72xbf16>
    %60 = vector.shape_cast %59 : vector<1x8x16x72xbf16> to vector<8x16x72xbf16>
    %61 = vector.shape_cast %60 : vector<8x16x72xbf16> to vector<128x72xbf16>
    %c6 = arith.constant 6 : index
    %c0_43 = arith.constant 0 : index
    %c0_44 = arith.constant 0 : index
    %62 = vector.load %arg3[%c6, %c0_43, %c0_44] : memref<9x72x512xbf16, #tpu.memory_space<vmem>>, vector<1x72x512xbf16>
    %63 = vector.shape_cast %62 : vector<1x72x512xbf16> to vector<72x512xbf16>
    %cst_45 = arith.constant dense<0.000000e+00> : vector<128x512xf32>
    %64 = tpu.matmul %61, %63, %cst_45 {dimension_numbers = #tpu.dot_dimension_numbers<[1], [0], [0], [1], [0, 0, 1, 1], [], []>} : vector<128x72xbf16>, vector<72x512xbf16>, vector<128x512xf32> -> vector<128x512xf32>
    %65 = arith.addf %56, %64 : vector<128x512xf32>
    %c2_i32_46 = arith.constant 2 : i32
    %66 = arith.addi %1, %c2_i32_46 : i32
    %c0_47 = arith.constant 0 : index
    %67 = arith.index_cast %66 : i32 to index
    %c1_48 = arith.constant 1 : index
    %c0_49 = arith.constant 0 : index
    %68 = vector.load %arg2[%c0_47, %67, %c1_48, %c0_49] : memref<1x18x18x72xbf16, #tpu.memory_space<vmem>>, vector<1x8x16x72xbf16>
    %69 = vector.shape_cast %68 : vector<1x8x16x72xbf16> to vector<8x16x72xbf16>
    %70 = vector.shape_cast %69 : vector<8x16x72xbf16> to vector<128x72xbf16>
    %c7 = arith.constant 7 : index
    %c0_50 = arith.constant 0 : index
    %c0_51 = arith.constant 0 : index
    %71 = vector.load %arg3[%c7, %c0_50, %c0_51] : memref<9x72x512xbf16, #tpu.memory_space<vmem>>, vector<1x72x512xbf16>
    %72 = vector.shape_cast %71 : vector<1x72x512xbf16> to vector<72x512xbf16>
    %cst_52 = arith.constant dense<0.000000e+00> : vector<128x512xf32>
    %73 = tpu.matmul %70, %72, %cst_52 {dimension_numbers = #tpu.dot_dimension_numbers<[1], [0], [0], [1], [0, 0, 1, 1], [], []>} : vector<128x72xbf16>, vector<72x512xbf16>, vector<128x512xf32> -> vector<128x512xf32>
    %74 = arith.addf %65, %73 : vector<128x512xf32>
    %c2_i32_53 = arith.constant 2 : i32
    %75 = arith.addi %1, %c2_i32_53 : i32
    %c0_54 = arith.constant 0 : index
    %76 = arith.index_cast %75 : i32 to index
    %c2_55 = arith.constant 2 : index
    %c0_56 = arith.constant 0 : index
    %77 = vector.load %arg2[%c0_54, %76, %c2_55, %c0_56] : memref<1x18x18x72xbf16, #tpu.memory_space<vmem>>, vector<1x8x16x72xbf16>
    %78 = vector.shape_cast %77 : vector<1x8x16x72xbf16> to vector<8x16x72xbf16>
    %79 = vector.shape_cast %78 : vector<8x16x72xbf16> to vector<128x72xbf16>
    %c8 = arith.constant 8 : index
    %c0_57 = arith.constant 0 : index
    %c0_58 = arith.constant 0 : index
    %80 = vector.load %arg3[%c8, %c0_57, %c0_58] : memref<9x72x512xbf16, #tpu.memory_space<vmem>>, vector<1x72x512xbf16>
    %81 = vector.shape_cast %80 : vector<1x72x512xbf16> to vector<72x512xbf16>
    %cst_59 = arith.constant dense<0.000000e+00> : vector<128x512xf32>
    %82 = tpu.matmul %79, %81, %cst_59 {dimension_numbers = #tpu.dot_dimension_numbers<[1], [0], [0], [1], [0, 0, 1, 1], [], []>} : vector<128x72xbf16>, vector<72x512xbf16>, vector<128x512xf32> -> vector<128x512xf32>
    %83 = arith.addf %74, %82 : vector<128x512xf32>
    %c0_60 = arith.constant 0 : index
    %c0_61 = arith.constant 0 : index
    %84 = vector.load %arg4[%c0_60, %c0_61] : memref<1x512xf32, #tpu.memory_space<vmem>>, vector<1x512xf32>
    %85 = vector.broadcast %84 : vector<1x512xf32> to vector<128x512xf32>
    %86 = arith.addf %83, %85 : vector<128x512xf32>
    %cst_62 = arith.constant 0.000000e+00 : f32
    %87 = vector.broadcast %cst_62 : f32 to vector<128x512xf32>
    %88 = arith.maximumf %86, %87 : vector<128x512xf32>
    %89 = arith.truncf %88 : vector<128x512xf32> to vector<128x512xbf16>
    %c0_63 = arith.constant 0 : index
    %c0_64 = arith.constant 0 : index
    %90 = vector.load %arg5[%c0_63, %c0_64] : memref<512x512xbf16, #tpu.memory_space<vmem>>, vector<512x512xbf16>
    %cst_65 = arith.constant dense<0.000000e+00> : vector<128x512xf32>
    %91 = tpu.matmul %89, %90, %cst_65 {dimension_numbers = #tpu.dot_dimension_numbers<[1], [0], [0], [1], [0, 0, 1, 1], [], []>} : vector<128x512xbf16>, vector<512x512xbf16>, vector<128x512xf32> -> vector<128x512xf32>
    %c0_66 = arith.constant 0 : index
    %c0_67 = arith.constant 0 : index
    %92 = vector.load %arg6[%c0_66, %c0_67] : memref<1x512xf32, #tpu.memory_space<vmem>>, vector<1x512xf32>
    %93 = vector.broadcast %92 : vector<1x512xf32> to vector<128x512xf32>
    %94 = arith.addf %91, %93 : vector<128x512xf32>
    %cst_68 = arith.constant 0.000000e+00 : f32
    %95 = vector.broadcast %cst_68 : f32 to vector<128x512xf32>
    %96 = arith.subf %95, %94 : vector<128x512xf32>
    %97 = math.exp %96 : vector<128x512xf32>
    %cst_69 = arith.constant 1.000000e+00 : f32
    %98 = vector.broadcast %cst_69 : f32 to vector<128x512xf32>
    %99 = arith.addf %98, %97 : vector<128x512xf32>
    %cst_70 = arith.constant 1.000000e+00 : f32
    %100 = vector.broadcast %cst_70 : f32 to vector<128x512xf32>
    %101 = arith.divf %100, %99 : vector<128x512xf32>
    %cst_71 = arith.constant 1.000000e+00 : f32
    %102 = vector.broadcast %cst_71 : f32 to vector<128x512xf32>
    %103 = arith.addf %101, %102 : vector<128x512xf32>
    %104 = vector.shape_cast %103 : vector<128x512xf32> to vector<8x16x512xf32>
    %c0_72 = arith.constant 0 : index
    %c0_73 = arith.constant 0 : index
    %c0_74 = arith.constant 0 : index
    %c0_75 = arith.constant 0 : index
    %105 = vector.load %arg7[%c0_72, %c0_73, %c0_74, %c0_75] : memref<1x8x16x512xf32, #tpu.memory_space<vmem>>, vector<1x8x16x512xf32>
    %106 = vector.shape_cast %105 : vector<1x8x16x512xf32> to vector<8x16x512xf32>
    %107 = vector.shape_cast %104 : vector<8x16x512xf32> to vector<1x8x16x512xf32>
    tpu.vector_store %arg7[%c0_72, %c0_73, %c0_74, %c0_75], %107 {strides = array<i32>} : memref<1x8x16x512xf32, #tpu.memory_space<vmem>>, vector<1x8x16x512xf32>,
    return
  }
  func.func @transform_0(%arg0: i32, %arg1: i32) -> (i32, i32, i32, i32) {
    %c0_i32 = arith.constant 0 : i32
    %c0_i32_0 = arith.constant 0 : i32
    %c0_i32_1 = arith.constant 0 : i32
    %c0_i32_2 = arith.constant 0 : i32
    return %arg0, %c0_i32, %c0_i32_0, %c0_i32_1 : i32, i32, i32, i32
  }
  func.func @transform_1(%arg0: i32, %arg1: i32) -> (i32, i32, i32) {
    %c0_i32 = arith.constant 0 : i32
    %c0_i32_0 = arith.constant 0 : i32
    %c0_i32_1 = arith.constant 0 : i32
    %c0_i32_2 = arith.constant 0 : i32
    return %c0_i32, %c0_i32_0, %c0_i32_1 : i32, i32, i32
  }
  func.func @transform_2(%arg0: i32, %arg1: i32) -> (i32, i32) {
    %c0_i32 = arith.constant 0 : i32
    %c0_i32_0 = arith.constant 0 : i32
    %c0_i32_1 = arith.constant 0 : i32
    return %c0_i32, %c0_i32_0 : i32, i32
  }
  func.func @transform_3(%arg0: i32, %arg1: i32) -> (i32, i32) {
    %c0_i32 = arith.constant 0 : i32
    %c0_i32_0 = arith.constant 0 : i32
    %c0_i32_1 = arith.constant 0 : i32
    return %c0_i32, %c0_i32_0 : i32, i32
  }
  func.func @transform_4(%arg0: i32, %arg1: i32) -> (i32, i32) {
    %c0_i32 = arith.constant 0 : i32
    %c0_i32_0 = arith.constant 0 : i32
    %c0_i32_1 = arith.constant 0 : i32
    return %c0_i32, %c0_i32_0 : i32, i32
  }
  func.func @transform_5(%arg0: i32, %arg1: i32) -> (i32, i32, i32, i32) {
    %c0_i32 = arith.constant 0 : i32
    %c0_i32_0 = arith.constant 0 : i32
    %c0_i32_1 = arith.constant 0 : i32
    return %arg0, %arg1, %c0_i32, %c0_i32_0 : i32, i32, i32, i32
  }
}

</mosaic_0001>

<llo_original>
// kernel: tile.13
$region0: #{tile.13}
  #allocation0 [shape = 's32[1]{0}', space=sflag, size = 0x4, scoped, tag = 'scoped memory for tile.13']
  %s0 = inlined_call_operand.vmem [shape: f32[32], index: 0, kind: input, shape index: {}]
  %s1 = inlined_call_operand.vmem [shape: f32[16,32], index: 1, kind: output, shape index: {}]
  // Predicated region
  $region2: #{tile.13} parent=0 // pred_check
    _
  $region3: #{tile.13} parent=0 // pred_check_branch
    %3 = sbr.rel (0) target = $region5
  $region4: #{tile.13} parent=0 // pred_region
    _
  $region5: #{tile.13} parent=0 // pred_fallthru
    _
  %v4 = vld [vmem:[%s0] ss:$0 sm:$0xff]
  %5 = vst [vmem:[%s1] sm:$0xff] %v4
  %s6 = scalar_lea.vmem %s1, 8
  %7 = vst [vmem:[%s6] sm:$0xff] %v4

// kernel: tile.14
$region0: #{tile.14}
  %s0 = inlined_call_operand.vmem [shape: f32[16,32], index: 0, kind: input, shape index: {}]
  %s1 = inlined_call_operand.vmem [shape: f32[1,512], index: 1, kind: output, shape index: {}]
  $region1: #{tile.14} parent=0
    #allocation0 [shape = 'u8[16384]{0}', space=vmem, size = 0x4000, scoped, tag = 'scoped mem for output reshape']
    %v2 = vld [vmem:[%s0] ss:$4 sm:$0xf]
    %vm3 = vcmask 261120
    %4 = vst.msk [vmem:[#allocation0] ss:$8 sm:$0xf] %vm3, %v2
    %s5 = scalar_lea.vmem %s0, 3
    %v6 = vld [vmem:[%s5] ss:$4 sm:$0xf]
    %7 = vrot.lane.b32.xlu0 %v6, 96
    %v8 = vpop.permute.xlu0 %7
    %vm9 = vcmask 1048320
    %10 = vst.msk [vmem:[#allocation0] ss:$8 sm:$0xf] %vm9, %v8
    %s11 = scalar_lea.vmem %s0, 2
    %v12 = vld [vmem:[%s11] ss:$4 sm:$0xf]
    %13 = vrot.lane.b32.xlu0 %v12, 64
    %v14 = vpop.permute.xlu0 %13
    %vm15 = vcmask 785920
    %16 = vst.msk [vmem:[#allocation0] ss:$8 sm:$0xf] %vm15, %v14
    %s17 = scalar_lea.vmem %s0, 1
    %v18 = vld [vmem:[%s17] ss:$4 sm:$0xf]
    %19 = vrot.lane.b32.xlu0 %v18, 32
    %v20 = vpop.permute.xlu0 %19
    %vm21 = vcmask 523520
    %22 = vst.msk [vmem:[#allocation0] ss:$8 sm:$0xf] %vm21, %v20
    %s24 = sshll.u32 1, 1
    %s25 = ssub.s32 %s24, 1
    %v27 = vld [vmem:[#allocation0] sm:%s25]
    %s28 = sshll.u32 1, 1
    %s29 = ssub.s32 %s28, 1
    %30 = vst [vmem:[%s1] sm:%s29] %v27
    %s31 = scalar_lea.vmem [#allocation0], 8
    %v32 = vld [vmem:[%s31] sm:%s25]
    %s33 = sshll.u32 1, 1
    %s34 = ssub.s32 %s33, 1
    %s35 = scalar_lea.vmem %s1, 1
    %36 = vst [vmem:[%s35] sm:%s34] %v32
    %s37 = scalar_lea.vmem [#allocation0], 16
    %v38 = vld [vmem:[%s37] sm:%s25]
    %s39 = sshll.u32 1, 1
    %s40 = ssub.s32 %s39, 1
    %s41 = smul.addr 1, 2
    %s42 = scalar_lea.vmem %s1, %s41
    %43 = vst [vmem:[%s42] sm:%s40] %v38
    %s44 = scalar_lea.vmem [#allocation0], 24
    %v45 = vld [vmem:[%s44] sm:%s25]
    %s46 = sshll.u32 1, 1
    %s47 = ssub.s32 %s46, 1
    %s48 = smul.addr 1, 3
    %s49 = scalar_lea.vmem %s1, %s48
    %50 = vst [vmem:[%s49] sm:%s47] %v45

// kernel: attention_forward.1
$region0: #{attention_forward.1}
  #allocation0 [shape = 'u32[]', space=smem, size = 0x4, offset = 0x4, fixed_abs, tag = 'smem constant byte address 0x4 - core index']
  #allocation1 [shape = 'u32[144,128]{1,0:T(1,128)}', space=vmem, size = 0x12000, scoped, tag = 'internal scratch']
  %s0 = inlined_call_operand.vmem [shape: bf16[2,18,18,72], index: 0, kind: input, shape index: {}]
  %s1 = inlined_call_operand.vmem [shape: bf16[9,72,512], index: 1, kind: input, shape index: {}]
  %s2 = inlined_call_operand.vmem [shape: f32[1,512], index: 2, kind: input, shape index: {}]
  %s3 = inlined_call_operand.vmem [shape: bf16[512,512], index: 3, kind: input, shape index: {}]
  %s4 = inlined_call_operand.vmem [shape: f32[1,512], index: 4, kind: input, shape index: {}]
  %s5 = inlined_call_operand.vmem [shape: f32[2,16,16,512], index: 5, kind: output, shape index: {}]
  %s6 = sld [smem:[#allocation0]]
  $region53: #{attention_forward.1} parent=0
    _
  %s8 = ssub.s32 1, %s6
  %s9 = scalar_select 0, %s8, %s6
  loop: start=0, step=1, limit=6
  $region2: #{attention_forward.1} parent=0 // loop_pre_header
    _
  $region3: #{attention_forward.1} parent=0 // loop_header
    %s11 = sphi 0, %s15
    %p12 = scmp.ge.s32.totalorder %s11, 6
    %s18 = sphi 0, %s30
    %s19 = sphi 0, %s26
    %s20 = sphi 0, %s18
    %s21 = sphi 0, %s19
    %s22 = sphi 0, %s20
    %s23 = sphi 0, %s21
    %s33 = sphi 0, %s35
    %s36 = sphi 0, %s33
    %s37 = sphi 0, %s36
    %s53 = sphi 0, %s37
    %s57 = sphi 0, %s57
    %s59 = sphi 0, %s57
    %s60 = sphi 0, %s59
    %s74 = sphi 0, %s60
    %s78 = sphi 0, %s78
    %s80 = sphi 0, %s78
    %s81 = sphi 0, %s80
    %s95 = sphi 0, %s81
    %s99 = sphi 0, %s99
    %s101 = sphi 0, %s99
    %s102 = sphi 0, %s101
    %s116 = sphi 0, %s102
    %s120 = sphi 0, %s120
    %s122 = sphi 0, %s120
    %s123 = sphi 0, %s122
    %s137 = sphi 0, %s123
    %s145 = sphi 0, %s147
    %s148 = sphi 0, %s145
    %s149 = sphi 0, %s148
    %s165 = sphi 0, %s149
  $region4: #{attention_forward.1} parent=0 // loop_header_branch
    %14 = sbr.rel (%p12) target = $region8
  $region5: #{attention_forward.1} parent=0 // loop_body
    %s16 = ssub.s32 %s11, 1
    %s17 = ssub.s32 %s11, 2
    %s24 = sadd.s32 1, %s19
    %p25 = scmp.ge.s32.totalorder %s24, 2
    %s26 = scalar_select %p25, 0, %s24
    %s27 = sadd.s32 1, %s18
    %s28 = scalar_select %p25, %s27, %s18
    %p29 = scmp.ge.s32.totalorder %s28, 2
    %s30 = scalar_select %p29, 0, %s28
    %s31 = ssub.s32 %s18, %s30
    %p32 = scmp.eq.s32.totalorder %s31, 0
    %s34 = sadd.s32 %s33, 1
    %s35 = scalar_select %p32, %s33, %s34
    %p38 = pneg %p32
    %p39 = scmp.eq.s32.totalorder %s11, 3
    %p40 = por %p38, %p39
    %p41 = scmp.ne.s32.totalorder %s33, %s36
    %p42 = scmp.eq.s32.totalorder %s11, 0
    %p43 = por %p41, %p42
    %p44 = scmp.ne.s32.totalorder %s33, %s36
    %p45 = scmp.eq.s32.totalorder %s16, 3
    %p46 = por %p44, %p45
    %p47 = scmp.ne.s32.totalorder %s36, %s37
    %p48 = scmp.eq.s32.totalorder %s16, 0
    %p49 = por %p47, %p48
    %p50 = scmp.ne.s32.totalorder %s36, %s37
    %p51 = scmp.eq.s32.totalorder %s17, 3
    %p52 = por %p50, %p51
    %p54 = scmp.ne.s32.totalorder %s37, %s53
    %p55 = scmp.eq.s32.totalorder %s17, 0
    %p56 = por %p54, %p55
    %s58 = sadd.s32 %s57, 1
    %p61 = scmp.eq.s32.totalorder %s11, 3
    %p62 = scmp.ne.s32.totalorder %s57, %s59
    %p63 = scmp.eq.s32.totalorder %s11, 0
    %p64 = por %p62, %p63
    %p65 = scmp.ne.s32.totalorder %s57, %s59
    %p66 = scmp.eq.s32.totalorder %s16, 3
    %p67 = por %p65, %p66
    %p68 = scmp.ne.s32.totalorder %s59, %s60
    %p69 = scmp.eq.s32.totalorder %s16, 0
    %p70 = por %p68, %p69
    %p71 = scmp.ne.s32.totalorder %s59, %s60
    %p72 = scmp.eq.s32.totalorder %s17, 3
    %p73 = por %p71, %p72
    %p75 = scmp.ne.s32.totalorder %s60, %s74
    %p76 = scmp.eq.s32.totalorder %s17, 0
    %p77 = por %p75, %p76
    %s79 = sadd.s32 %s78, 1
    %p82 = scmp.eq.s32.totalorder %s11, 3
    %p83 = scmp.ne.s32.totalorder %s78, %s80
    %p84 = scmp.eq.s32.totalorder %s11, 0
    %p85 = por %p83, %p84
    %p86 = scmp.ne.s32.totalorder %s78, %s80
    %p87 = scmp.eq.s32.totalorder %s16, 3
    %p88 = por %p86, %p87
    %p89 = scmp.ne.s32.totalorder %s80, %s81
    %p90 = scmp.eq.s32.totalorder %s16, 0
    %p91 = por %p89, %p90
    %p92 = scmp.ne.s32.totalorder %s80, %s81
    %p93 = scmp.eq.s32.totalorder %s17, 3
    %p94 = por %p92, %p93
    %p96 = scmp.ne.s32.totalorder %s81, %s95
    %p97 = scmp.eq.s32.totalorder %s17, 0
    %p98 = por %p96, %p97
    %s100 = sadd.s32 %s99, 1
    %p103 = scmp.eq.s32.totalorder %s11, 3
    %p104 = scmp.ne.s32.totalorder %s99, %s101
    %p105 = scmp.eq.s32.totalorder %s11, 0
    %p106 = por %p104, %p105
    %p107 = scmp.ne.s32.totalorder %s99, %s101
    %p108 = scmp.eq.s32.totalorder %s16, 3
    %p109 = por %p107, %p108
    %p110 = scmp.ne.s32.totalorder %s101, %s102
    %p111 = scmp.eq.s32.totalorder %s16, 0
    %p112 = por %p110, %p111
    %p113 = scmp.ne.s32.totalorder %s101, %s102
    %p114 = scmp.eq.s32.totalorder %s17, 3
    %p115 = por %p113, %p114
    %p117 = scmp.ne.s32.totalorder %s102, %s116
    %p118 = scmp.eq.s32.totalorder %s17, 0
    %p119 = por %p117, %p118
    %s121 = sadd.s32 %s120, 1
    %p124 = scmp.eq.s32.totalorder %s11, 3
    %p125 = scmp.ne.s32.totalorder %s120, %s122
    %p126 = scmp.eq.s32.totalorder %s11, 0
    %p127 = por %p125, %p126
    %p128 = scmp.ne.s32.totalorder %s120, %s122
    %p129 = scmp.eq.s32.totalorder %s16, 3
    %p130 = por %p128, %p129
    %p131 = scmp.ne.s32.totalorder %s122, %s123
    %p132 = scmp.eq.s32.totalorder %s16, 0
    %p133 = por %p131, %p132
    %p134 = scmp.ne.s32.totalorder %s122, %s123
    %p135 = scmp.eq.s32.totalorder %s17, 3
    %p136 = por %p134, %p135
    %p138 = scmp.ne.s32.totalorder %s123, %s137
    %p139 = scmp.eq.s32.totalorder %s17, 0
    %p140 = por %p138, %p139
    %s141 = ssub.s32 %s18, %s30
    %s142 = ssub.s32 %s19, %s26
    %s143 = sor.u32 %s141, %s142
    %p144 = scmp.eq.s32.totalorder %s143, 0
    %s146 = sadd.s32 %s145, 1
    %s147 = scalar_select %p144, %s145, %s146
    %p150 = pneg %p144
    %p151 = scmp.eq.s32.totalorder %s11, 3
    %p152 = por %p150, %p151
    %p153 = scmp.ne.s32.totalorder %s145, %s148
    %p154 = scmp.eq.s32.totalorder %s11, 0
    %p155 = por %p153, %p154
    %p156 = scmp.ne.s32.totalorder %s145, %s148
    %p157 = scmp.eq.s32.totalorder %s16, 3
    %p158 = por %p156, %p157
    %p159 = scmp.ne.s32.totalorder %s148, %s149
    %p160 = scmp.eq.s32.totalorder %s16, 0
    %p161 = por %p159, %p160
    %p162 = scmp.ne.s32.totalorder %s148, %s149
    %p163 = scmp.eq.s32.totalorder %s17, 3
    %p164 = por %p162, %p163
    %p166 = scmp.ne.s32.totalorder %s149, %s165
    %p167 = scmp.eq.s32.totalorder %s17, 0
    %p168 = por %p166, %p167
    %p169 = scmp.le.s32.totalorder 1, %s11
    %p170 = scmp.lt.s32.totalorder %s11, 5
    %p171 = pnand %p169, %p170
    %p172 = pneg %p171
    // Predicated region
    $region9: #{attention_forward.1} parent=5 // pred_check
      _
    $region10: #{attention_forward.1} parent=5 // pred_check_branch
      %174 = sbr.rel (%p171) target = $region12
    $region11: #{attention_forward.1} parent=5 // pred_region
      %s175 = ssub.s32 %s11, 1
      // Predicated region
      $region13: #{attention_forward.1} parent=11 // pred_check
        %p176 = pneg %p70
      $region14: #{attention_forward.1} parent=11 // pred_check_branch
        %178 = sbr.rel (%p176) target = $region16
      $region15: #{attention_forward.1} parent=11 // pred_region
        _
      $region16: #{attention_forward.1} parent=11 // pred_fallthru
        _
      // Predicated region
      $region17: #{attention_forward.1} parent=11 // pred_check
        %p179 = pneg %p91
      $region18: #{attention_forward.1} parent=11 // pred_check_branch
        %181 = sbr.rel (%p179) target = $region20
      $region19: #{attention_forward.1} parent=11 // pred_region
        _
      $region20: #{attention_forward.1} parent=11 // pred_fallthru
        _
      // Predicated region
      $region21: #{attention_forward.1} parent=11 // pred_check
        %p182 = pneg %p112
      $region22: #{attention_forward.1} parent=11 // pred_check_branch
        %184 = sbr.rel (%p182) target = $region24
      $region23: #{attention_forward.1} parent=11 // pred_region
        _
      $region24: #{attention_forward.1} parent=11 // pred_fallthru
        _
      // Predicated region
      $region25: #{attention_forward.1} parent=11 // pred_check
        %p185 = pneg %p133
      $region26: #{attention_forward.1} parent=11 // pred_check_branch
        %187 = sbr.rel (%p185) target = $region28
      $region27: #{attention_forward.1} parent=11 // pred_region
        _
      $region28: #{attention_forward.1} parent=11 // pred_fallthru
        _
    $region12: #{attention_forward.1} parent=5 // pred_fallthru
      _
    %p188 = scmp.lt.s32.totalorder %s11, 4
    // Predicated region
    $region29: #{attention_forward.1} parent=5 // pred_check
      %p189 = pneg %p188
    $region30: #{attention_forward.1} parent=5 // pred_check_branch
      %191 = sbr.rel (%p189) target = $region32
    $region31: #{attention_forward.1} parent=5 // pred_region
      // Predicated region
      $region33: #{attention_forward.1} parent=31 // pred_check
        %p192 = pneg %p43
      $region34: #{attention_forward.1} parent=31 // pred_check_branch
        %194 = sbr.rel (%p192) target = $region36
      $region35: #{attention_forward.1} parent=31 // pred_region
        %p195 = scmp.lt.s32.totalorder %s18, 1
        %s196 = scalar_select %p195, %s18, 1
        %s197 = smul.addr %s196, 54
        %s198 = smul.addr %s197, 4
        %s199 = scalar_lea.vmem %s0, %s198
      $region36: #{attention_forward.1} parent=31 // pred_fallthru
        _
    $region32: #{attention_forward.1} parent=5 // pred_fallthru
      _
    %p200 = scmp.le.s32.totalorder 1, %s11
    %p201 = scmp.lt.s32.totalorder %s11, 5
    %p202 = pnand %p200, %p201
    %p203 = pneg %p202
    // Predicated region
    $region37: #{attention_forward.1} parent=5 // pred_check
      _
    $region38: #{attention_forward.1} parent=5 // pred_check_branch
      %205 = sbr.rel (%p202) target = $region40
    $region39: #{attention_forward.1} parent=5 // pred_region
      %s206 = ssub.s32 %s11, 1
      %p207 = scmp.lt.s32.totalorder %s20, 1
      %s208 = scalar_select %p207, %s20, 1
      %s209 = smul.addr %s208, 54
      %s210 = smul.addr %s209, 4
      %s211 = scalar_lea.vmem %s0, %s210
      %p212 = pneg %p49
      %p213 = pneg %p46
      %p214 = pneg %p70
      %p215 = pneg %p67
      %p216 = pneg %p91
      %p217 = pneg %p88
      %p218 = pneg %p112
      %p219 = pneg %p109
      %p220 = pneg %p133
      %p221 = pneg %p130
      %p222 = pneg %p161
      %p223 = pneg %p158
      %s224 = smul.u32 8, %s21
      %p225 = scmp.lt.s32.totalorder %s20, 1
      %s226 = scalar_select %p225, %s20, 1
      %p227 = scmp.lt.s32.totalorder %s224, 15
      %s228 = scalar_select %p227, %s224, 15
      %s229 = smul.addr %s228, 8
      %s230 = smul.addr %s226, 128
      %s231 = sadd.s32 %s229, %s230
      %s232 = smul.addr %s231, 8
      %s233 = scalar_lea.vmem %s5, %s232
      %p234 = scmp.lt.s32.totalorder %s20, 1
      %s235 = scalar_select %p234, %s20, 1
      %s236 = smul.addr %s235, 54
      %s237 = smul.addr %s236, 4
      %s238 = scalar_lea.vmem %s0, %s237
      %s239 = smul.u32 8, %s21
      %p240 = scmp.lt.s32.totalorder %s20, 1
      %s241 = scalar_select %p240, %s20, 1
      %p242 = scmp.lt.s32.totalorder %s239, 15
      %s243 = scalar_select %p242, %s239, 15
      %s244 = smul.addr %s243, 8
      %s245 = smul.addr %s241, 128
      %s246 = sadd.s32 %s244, %s245
      %s247 = smul.addr %s246, 8
      %s248 = scalar_lea.vmem %s5, %s247
      %s249 = smul.u32 8, %s21
      %s251 = smul.u32 %s21, 8
      %s252 = smul.u32 %s251, 3
      %s253 = smul.addr %s252, 4
      %s254 = scalar_lea.vmem %s238, %s253
      %v255 = vld [vmem:[%s254] sm:$0xf]
      %v256 = vld [vmem:[%s254 + $0x4] sm:$0xf]
      %v257 = vld [vmem:[%s254 + $0xc] sm:$0xf]
      %v258 = vld [vmem:[%s254 + $0x10] sm:$0xf]
      %v259 = vld [vmem:[%s254 + $0x18] sm:$0xf]
      %v260 = vld [vmem:[%s254 + $0x1c] sm:$0xf]
      %v261 = vld [vmem:[%s254 + $0x24] sm:$0xf]
      %v262 = vld [vmem:[%s254 + $0x28] sm:$0xf]
      %v263 = vld [vmem:[%s254 + $0x30] sm:$0xf]
      %v264 = vld [vmem:[%s254 + $0x34] sm:$0xf]
      %v265 = vld [vmem:[%s254 + $0x3c] sm:$0xf]
      %v266 = vld [vmem:[%s254 + $0x40] sm:$0xf]
      %v267 = vld [vmem:[%s254 + $0x48] sm:$0xf]
      %v268 = vld [vmem:[%s254 + $0x4c] sm:$0xf]
      %v269 = vld [vmem:[%s254 + $0x54] sm:$0xf]
      %v270 = vld [vmem:[%s254 + $0x58] sm:$0xf]
      %v271 = vld [vmem:[%s1] sm:$0xff]
      %v272 = vld [vmem:[%s1 + $0x8] sm:$0xff]
      %v273 = vld [vmem:[%s1 + $0x10] sm:$0xff]
      %v274 = vld [vmem:[%s1 + $0x18] sm:$0xff]
      %v275 = vld [vmem:[%s1 + $0x20] sm:$0xff]
      %v276 = vld [vmem:[%s1 + $0x28] sm:$0xff]
      %v277 = vld [vmem:[%s1 + $0x30] sm:$0xff]
      %v278 = vld [vmem:[%s1 + $0x38] sm:$0xff]
      %v279 = vld [vmem:[%s1 + $0x40] sm:$0xff]
      %v280 = vld [vmem:[%s1 + $0x48] sm:$0xff]
      %v281 = vld [vmem:[%s1 + $0x50] sm:$0xff]
      %v282 = vld [vmem:[%s1 + $0x58] sm:$0xff]
      %v283 = vld [vmem:[%s1 + $0x60] sm:$0xff]
      %v284 = vld [vmem:[%s1 + $0x68] sm:$0xff]
      %v285 = vld [vmem:[%s1 + $0x70] sm:$0xff]
      %v286 = vld [vmem:[%s1 + $0x78] sm:$0xff]
      %v287 = vld [vmem:[%s1 + $0x80] sm:$0xff]
      %v288 = vld [vmem:[%s1 + $0x88] sm:$0xff]
      %v289 = vld [vmem:[%s254 + $0x8] sm:$0x1]
      %v290 = vld [vmem:[%s254 + $0x14] sm:$0x1]
      %v291 = vld [vmem:[%s254 + $0x20] sm:$0x1]
      %v292 = vld [vmem:[%s254 + $0x2c] sm:$0x1]
      %v293 = vld [vmem:[%s254 + $0x38] sm:$0x1]
      %v294 = vld [vmem:[%s254 + $0x44] sm:$0x1]
      %v295 = vld [vmem:[%s254 + $0x50] sm:$0x1]
      %v296 = vld [vmem:[%s254 + $0x5c] sm:$0x1]
      %vm297 = vsmask.f32 3328
      %vm298 = vsmask.f32 7440
      %vm299 = vmor %vm297, %vm298
      %v301 = vshrl.u32 %v255, 16
      %v303 = vrot.slane %v301, 4
      %v304 = vshll.u32 %v255, 16
      %v306 = vrot.slane %v304, 5
      %v307 = vor.u32 %v303, %v306
      %v308 = vrot.slane %v307, 4
      %v310 = vshll.u32 %v256, 16
      %v312 = vrot.slane %v310, 5
      %v313 = vsel %vm299, %v308, %v312
      %v314 = vshrl.u32 %v256, 16
      %v316 = vrot.slane %v314, 4
      %v317 = vor.u32 %v316, %v312
      %v318 = vrot.slane %v317, 4
      %v320 = vshll.u32 %v289, 16
      %v322 = vrot.slane %v320, 5
      %v323 = vsel %vm299, %v318, %v322
      %v325 = vshrl.u32 %v257, 16
      %v327 = vrot.slane %v325, 4
      %v328 = vshll.u32 %v257, 16
      %v330 = vrot.slane %v328, 5
      %v331 = vor.u32 %v327, %v330
      %v332 = vrot.slane %v331, 4
      %v334 = vshll.u32 %v258, 16
      %v336 = vrot.slane %v334, 5
      %v337 = vsel %vm299, %v332, %v336
      %v338 = vshrl.u32 %v258, 16
      %v340 = vrot.slane %v338, 4
      %v341 = vor.u32 %v340, %v336
      %v342 = vrot.slane %v341, 4
      %v344 = vshll.u32 %v290, 16
      %v346 = vrot.slane %v344, 5
      %v347 = vsel %vm299, %v342, %v346
      %v349 = vshrl.u32 %v259, 16
      %v351 = vrot.slane %v349, 4
      %v352 = vshll.u32 %v259, 16
      %v354 = vrot.slane %v352, 5
      %v355 = vor.u32 %v351, %v354
      %v356 = vrot.slane %v355, 4
      %v358 = vshll.u32 %v260, 16
      %v360 = vrot.slane %v358, 5
      %v361 = vsel %vm299, %v356, %v360
      %v362 = vshrl.u32 %v260, 16
      %v364 = vrot.slane %v362, 4
      %v365 = vor.u32 %v364, %v360
      %v366 = vrot.slane %v365, 4
      %v368 = vshll.u32 %v291, 16
      %v370 = vrot.slane %v368, 5
      %v371 = vsel %vm299, %v366, %v370
      %v373 = vshrl.u32 %v261, 16
      %v375 = vrot.slane %v373, 4
      %v376 = vshll.u32 %v261, 16
      %v378 = vrot.slane %v376, 5
      %v379 = vor.u32 %v375, %v378
      %v380 = vrot.slane %v379, 4
      %v382 = vshll.u32 %v262, 16
      %v384 = vrot.slane %v382, 5
      %v385 = vsel %vm299, %v380, %v384
      %v386 = vshrl.u32 %v262, 16
      %v388 = vrot.slane %v386, 4
      %v389 = vor.u32 %v388, %v384
      %v390 = vrot.slane %v389, 4
      %v392 = vshll.u32 %v292, 16
      %v394 = vrot.slane %v392, 5
      %v395 = vsel %vm299, %v390, %v394
      %v397 = vshrl.u32 %v263, 16
      %v399 = vrot.slane %v397, 4
      %v400 = vshll.u32 %v263, 16
      %v402 = vrot.slane %v400, 5
      %v403 = vor.u32 %v399, %v402
      %v404 = vrot.slane %v403, 4
      %v406 = vshll.u32 %v264, 16
      %v408 = vrot.slane %v406, 5
      %v409 = vsel %vm299, %v404, %v408
      %v410 = vshrl.u32 %v264, 16
      %v412 = vrot.slane %v410, 4
      %v413 = vor.u32 %v412, %v408
      %v414 = vrot.slane %v413, 4
      %v416 = vshll.u32 %v293, 16
      %v418 = vrot.slane %v416, 5
      %v419 = vsel %vm299, %v414, %v418
      %v421 = vshrl.u32 %v265, 16
      %v423 = vrot.slane %v421, 4
      %v424 = vshll.u32 %v265, 16
      %v426 = vrot.slane %v424, 5
      %v427 = vor.u32 %v423, %v426
      %v428 = vrot.slane %v427, 4
      %v430 = vshll.u32 %v266, 16
      %v432 = vrot.slane %v430, 5
      %v433 = vsel %vm299, %v428, %v432
      %v434 = vshrl.u32 %v266, 16
      %v436 = vrot.slane %v434, 4
      %v437 = vor.u32 %v436, %v432
      %v438 = vrot.slane %v437, 4
      %v440 = vshll.u32 %v294, 16
      %v442 = vrot.slane %v440, 5
      %v443 = vsel %vm299, %v438, %v442
      %v445 = vshrl.u32 %v267, 16
      %v447 = vrot.slane %v445, 4
      %v448 = vshll.u32 %v267, 16
      %v450 = vrot.slane %v448, 5
      %v451 = vor.u32 %v447, %v450
      %v452 = vrot.slane %v451, 4
      %v454 = vshll.u32 %v268, 16
      %v456 = vrot.slane %v454, 5
      %v457 = vsel %vm299, %v452, %v456
      %v458 = vshrl.u32 %v268, 16
      %v460 = vrot.slane %v458, 4
      %v461 = vor.u32 %v460, %v456
      %v462 = vrot.slane %v461, 4
      %v464 = vshll.u32 %v295, 16
      %v466 = vrot.slane %v464, 5
      %v467 = vsel %vm299, %v462, %v466
      %v469 = vshrl.u32 %v269, 16
      %v471 = vrot.slane %v469, 4
      %v472 = vshll.u32 %v269, 16
      %v474 = vrot.slane %v472, 5
      %v475 = vor.u32 %v471, %v474
      %v476 = vrot.slane %v475, 4
      %v478 = vshll.u32 %v270, 16
      %v480 = vrot.slane %v478, 5
      %v481 = vsel %vm299, %v476, %v480
      %v482 = vshrl.u32 %v270, 16
      %v484 = vrot.slane %v482, 4
      %v485 = vor.u32 %v484, %v480
      %v486 = vrot.slane %v485, 4
      %v488 = vshll.u32 %v296, 16
      %v490 = vrot.slane %v488, 5
      %v491 = vsel %vm299, %v486, %v490
      %s492 = scalar_lea.vmem %s1, 144
      %v493 = vld [vmem:[%s492] sm:$0xff]
      %v494 = vld [vmem:[%s492 + $0x8] sm:$0xff]
      %v495 = vld [vmem:[%s492 + $0x10] sm:$0xff]
      %v496 = vld [vmem:[%s492 + $0x18] sm:$0xff]
      %v497 = vld [vmem:[%s492 + $0x20] sm:$0xff]
      %v498 = vld [vmem:[%s492 + $0x28] sm:$0xff]
      %v499 = vld [vmem:[%s492 + $0x30] sm:$0xff]
      %v500 = vld [vmem:[%s492 + $0x38] sm:$0xff]
      %v501 = vld [vmem:[%s492 + $0x40] sm:$0xff]
      %v502 = vld [vmem:[%s492 + $0x48] sm:$0xff]
      %v503 = vld [vmem:[%s492 + $0x50] sm:$0xff]
      %v504 = vld [vmem:[%s492 + $0x58] sm:$0xff]
      %v505 = vld [vmem:[%s492 + $0x60] sm:$0xff]
      %v506 = vld [vmem:[%s492 + $0x68] sm:$0xff]
      %v507 = vld [vmem:[%s492 + $0x70] sm:$0xff]
      %v508 = vld [vmem:[%s492 + $0x78] sm:$0xff]
      %v509 = vld [vmem:[%s492 + $0x80] sm:$0xff]
      %v510 = vld [vmem:[%s492 + $0x88] sm:$0xff]
      %v511 = vunpack.c.l.b16 %v313
      %v512 = vunpack.c.l.b16 %v323
      %v513 = vunpack.c.l.b16 %v337
      %v514 = vunpack.c.l.b16 %v347
      %v515 = vunpack.c.l.b16 %v361
      %v516 = vunpack.c.l.b16 %v371
      %v517 = vunpack.c.l.b16 %v385
      %v518 = vunpack.c.l.b16 %v395
      %v519 = vunpack.c.l.b16 %v409
      %v520 = vunpack.c.l.b16 %v419
      %v521 = vunpack.c.l.b16 %v433
      %v522 = vunpack.c.l.b16 %v443
      %v523 = vunpack.c.l.b16 %v457
      %v524 = vunpack.c.l.b16 %v467
      %v525 = vunpack.c.l.b16 %v481
      %v526 = vunpack.c.l.b16 %v491
      %v527 = vpack.c.b16 %v512, %v511
      %v528 = vpack.c.b16 %v514, %v513
      %v529 = vpack.c.b16 %v516, %v515
      %v530 = vpack.c.b16 %v518, %v517
      %v531 = vpack.c.b16 %v520, %v519
      %v532 = vpack.c.b16 %v522, %v521
      %v533 = vpack.c.b16 %v524, %v523
      %v534 = vpack.c.b16 %v526, %v525
      %v553 = vunpack.c.l.b16 %v493
      %v554 = vunpack.c.h.b16 %v493
      %v555 = vunpack.c.l.b16 %v494
      %v556 = vunpack.c.h.b16 %v494
      %v557 = vunpack.c.l.b16 %v495
      %v558 = vunpack.c.h.b16 %v495
      %v559 = vunpack.c.l.b16 %v496
      %v560 = vunpack.c.h.b16 %v496
      %v561 = vunpack.c.l.b16 %v497
      %v562 = vunpack.c.h.b16 %v497
      %v563 = vunpack.c.l.b16 %v498
      %v564 = vunpack.c.h.b16 %v498
      %v565 = vunpack.c.l.b16 %v499
      %v566 = vunpack.c.h.b16 %v499
      %v567 = vunpack.c.l.b16 %v500
      %v568 = vunpack.c.h.b16 %v500
      %v569 = vunpack.c.l.b16 %v501
      %v570 = vunpack.c.h.b16 %v501
      %v571 = vunpack.c.l.b16 %v502
      %v572 = vunpack.c.h.b16 %v502
      %v573 = vunpack.c.l.b16 %v503
      %v574 = vunpack.c.h.b16 %v503
      %v575 = vunpack.c.l.b16 %v504
      %v576 = vunpack.c.h.b16 %v504
      %v577 = vunpack.c.l.b16 %v505
      %v578 = vunpack.c.h.b16 %v505
      %v579 = vunpack.c.l.b16 %v506
      %v580 = vunpack.c.h.b16 %v506
      %v581 = vunpack.c.l.b16 %v507
      %v582 = vunpack.c.h.b16 %v507
      %v583 = vunpack.c.l.b16 %v508
      %v584 = vunpack.c.h.b16 %v508
      %v585 = vunpack.c.l.b16 %v509
      %v586 = vunpack.c.h.b16 %v509
      %v587 = vunpack.c.l.b16 %v510
      %v588 = vunpack.c.h.b16 %v510
      %v589 = vpack.c.b16 %v557, %v553
      %v590 = vpack.c.b16 %v558, %v554
      %v591 = vpack.c.b16 %v559, %v555
      %v592 = vpack.c.b16 %v560, %v556
      %v593 = vpack.c.b16 %v565, %v561
      %v594 = vpack.c.b16 %v566, %v562
      %v595 = vpack.c.b16 %v567, %v563
      %v596 = vpack.c.b16 %v568, %v564
      %v597 = vpack.c.b16 %v573, %v569
      %v598 = vpack.c.b16 %v574, %v570
      %v599 = vpack.c.b16 %v575, %v571
      %v600 = vpack.c.b16 %v576, %v572
      %v601 = vpack.c.b16 %v581, %v577
      %v602 = vpack.c.b16 %v582, %v578
      %v603 = vpack.c.b16 %v583, %v579
      %v604 = vpack.c.b16 %v584, %v580
      %v605 = vpack.c.b16 %v585, %v585
      %v606 = vpack.c.b16 %v586, %v586
      %v607 = vpack.c.b16 %v587, %v587
      %v608 = vpack.c.b16 %v588, %v588
      %vm625 = vcmask 588800
      %v627 = vsel %vm625, %v527, 0
      %v630 = vsel %vm625, %v528, 0
      %v633 = vsel %vm625, %v529, 0
      %v636 = vsel %vm625, %v530, 0
      %v639 = vsel %vm625, %v531, 0
      %v642 = vsel %vm625, %v532, 0
      %v645 = vsel %vm625, %v533, 0
      %v648 = vsel %vm625, %v534, 0
      %vm650 = vcmask 1043456
      %v652 = vsel %vm650, %v605, 0
      %v655 = vsel %vm650, %v606, 0
      %v658 = vsel %vm650, %v607, 0
      %v661 = vsel %vm650, %v608, 0
      %663 = vmatprep.subr.bf16.mxu0 0
      %664 = vmatpush1.bf16.msra.mxu0 0
      %665 = vmatprep.subr.bf16.mxu0 0
      %666 = vmatpush1.bf16.msra.mxu0 0
      %667 = vmatprep.subr.bf16.mxu0 0
      %668 = vmatpush1.bf16.msra.mxu0 0
      %669 = vmatprep.subr.bf16.mxu0 %v655
      %670 = vmatpush1.bf16.msra.mxu0 %v652
      %671 = vmatprep.subr.bf16.mxu0 %v602
      %672 = vmatpush1.bf16.msra.mxu0 %v601
      %673 = vmatprep.subr.bf16.mxu0 %v598
      %674 = vmatpush1.bf16.msra.mxu0 %v597
      %675 = vmatprep.subr.bf16.mxu0 %v594
      %676 = vmatpush1.bf16.msra.mxu0 %v593
      %677 = vmatprep.subr.bf16.mxu0 %v590
      %678 = vmatpush1.bf16.msra.mxu0 %v589
      %679 = vmatprep.subr.bf16.mxu0 0
      %680 = vmatpush2.bf16.msra.mxu0 0
      %681 = vmatprep.subr.bf16.mxu0 0
      %682 = vmatpush2.bf16.msra.mxu0 0
      %683 = vmatprep.subr.bf16.mxu0 0
      %684 = vmatpush2.bf16.msra.mxu0 0
      %685 = vmatprep.subr.bf16.mxu0 0
      %686 = vmatpush2.bf16.msra.mxu0 0
      %687 = vmatprep.subr.bf16.mxu0 0
      %688 = vmatpush2.bf16.msra.mxu0 0
      %689 = vmatprep.subr.bf16.mxu0 0
      %690 = vmatpush2.bf16.msra.mxu0 0
      %691 = vmatprep.subr.bf16.mxu0 0
      %692 = vmatpush2.bf16.msra.mxu0 0
      %693 = vmatprep.subr.bf16.mxu0 0
      %694 = vmatpush2.bf16.msra.mxu0 0
      %695 = vmatprep.mubr.bf16.mxu0 0
      %696 = vmatmul.mubr.bf16.gmra.mxu0 %v627
      %v697 = vpop.f32.mrf.mxu0
      %v698 = vadd.f32 0.0, %v697
      %v699 = vpop.f32.mrf.mxu0
      %v700 = vadd.f32 0.0, %v699
      %v701 = vpop.f32.mrf.mxu0
      %v702 = vadd.f32 0.0, %v701
      %v703 = vpop.f32.mrf.mxu0
      %v704 = vadd.f32 0.0, %v703
      %705 = vmatprep.mubr.bf16.mxu0 0
      %706 = vmatmul.mubr.bf16.gmra.mxu0 %v630
      %v707 = vpop.f32.mrf.mxu0
      %v708 = vadd.f32 0.0, %v707
      %v709 = vpop.f32.mrf.mxu0
      %v710 = vadd.f32 0.0, %v709
      %v711 = vpop.f32.mrf.mxu0
      %v712 = vadd.f32 0.0, %v711
      %v713 = vpop.f32.mrf.mxu0
      %v714 = vadd.f32 0.0, %v713
      %715 = vmatprep.mubr.bf16.mxu0 0
      %716 = vmatmul.mubr.bf16.gmra.mxu0 %v633
      %v717 = vpop.f32.mrf.mxu0
      %v718 = vadd.f32 0.0, %v717
      %v719 = vpop.f32.mrf.mxu0
      %v720 = vadd.f32 0.0, %v719
      %v721 = vpop.f32.mrf.mxu0
      %v722 = vadd.f32 0.0, %v721
      %v723 = vpop.f32.mrf.mxu0
      %v724 = vadd.f32 0.0, %v723
      %725 = vmatprep.mubr.bf16.mxu0 0
      %726 = vmatmul.mubr.bf16.gmra.mxu0 %v636
      %v727 = vpop.f32.mrf.mxu0
      %v728 = vadd.f32 0.0, %v727
      %v729 = vpop.f32.mrf.mxu0
      %v730 = vadd.f32 0.0, %v729
      %v731 = vpop.f32.mrf.mxu0
      %v732 = vadd.f32 0.0, %v731
      %v733 = vpop.f32.mrf.mxu0
      %v734 = vadd.f32 0.0, %v733
      %735 = vmatprep.mubr.bf16.mxu0 0
      %736 = vmatmul.mubr.bf16.gmra.mxu0 %v639
      %v737 = vpop.f32.mrf.mxu0
      %v738 = vadd.f32 0.0, %v737
      %v739 = vpop.f32.mrf.mxu0
      %v740 = vadd.f32 0.0, %v739
      %v741 = vpop.f32.mrf.mxu0
      %v742 = vadd.f32 0.0, %v741
      %v743 = vpop.f32.mrf.mxu0
      %v744 = vadd.f32 0.0, %v743
      %745 = vmatprep.mubr.bf16.mxu0 0
      %746 = vmatmul.mubr.bf16.gmra.mxu0 %v642
      %v747 = vpop.f32.mrf.mxu0
      %v748 = vadd.f32 0.0, %v747
      %v749 = vpop.f32.mrf.mxu0
      %v750 = vadd.f32 0.0, %v749
      %v751 = vpop.f32.mrf.mxu0
      %v752 = vadd.f32 0.0, %v751
      %v753 = vpop.f32.mrf.mxu0
      %v754 = vadd.f32 0.0, %v753
      %755 = vmatprep.mubr.bf16.mxu0 0
      %756 = vmatmul.mubr.bf16.gmra.mxu0 %v645
      %v757 = vpop.f32.mrf.mxu0
      %v758 = vadd.f32 0.0, %v757
      %v759 = vpop.f32.mrf.mxu0
      %v760 = vadd.f32 0.0, %v759
      %v761 = vpop.f32.mrf.mxu0
      %v762 = vadd.f32 0.0, %v761
      %v763 = vpop.f32.mrf.mxu0
      %v764 = vadd.f32 0.0, %v763
      %765 = vmatprep.mubr.bf16.mxu0 0
      %766 = vmatmul.mubr.bf16.gmra.mxu0 %v648
      %v767 = vpop.f32.mrf.mxu0
      %v768 = vadd.f32 0.0, %v767
      %v769 = vpop.f32.mrf.mxu0
      %v770 = vadd.f32 0.0, %v769
      %v771 = vpop.f32.mrf.mxu0
      %v772 = vadd.f32 0.0, %v771
      %v773 = vpop.f32.mrf.mxu0
      %v774 = vadd.f32 0.0, %v773
      %775 = vdwg.mxu0
      %776 = vmatprep.subr.bf16.mxu0 0
      %777 = vmatpush1.bf16.msra.mxu0 0
      %778 = vmatprep.subr.bf16.mxu0 0
      %779 = vmatpush1.bf16.msra.mxu0 0
      %780 = vmatprep.subr.bf16.mxu0 0
      %781 = vmatpush1.bf16.msra.mxu0 0
      %782 = vmatprep.subr.bf16.mxu0 %v661
      %783 = vmatpush1.bf16.msra.mxu0 %v658
      %784 = vmatprep.subr.bf16.mxu0 %v604
      %785 = vmatpush1.bf16.msra.mxu0 %v603
      %786 = vmatprep.subr.bf16.mxu0 %v600
      %787 = vmatpush1.bf16.msra.mxu0 %v599
      %788 = vmatprep.subr.bf16.mxu0 %v596
      %789 = vmatpush1.bf16.msra.mxu0 %v595
      %790 = vmatprep.subr.bf16.mxu0 %v592
      %791 = vmatpush1.bf16.msra.mxu0 %v591
      %792 = vmatprep.subr.bf16.mxu0 0
      %793 = vmatpush2.bf16.msra.mxu0 0
      %794 = vmatprep.subr.bf16.mxu0 0
      %795 = vmatpush2.bf16.msra.mxu0 0
      %796 = vmatprep.subr.bf16.mxu0 0
      %797 = vmatpush2.bf16.msra.mxu0 0
      %798 = vmatprep.subr.bf16.mxu0 0
      %799 = vmatpush2.bf16.msra.mxu0 0
      %800 = vmatprep.subr.bf16.mxu0 0
      %801 = vmatpush2.bf16.msra.mxu0 0
      %802 = vmatprep.subr.bf16.mxu0 0
      %803 = vmatpush2.bf16.msra.mxu0 0
      %804 = vmatprep.subr.bf16.mxu0 0
      %805 = vmatpush2.bf16.msra.mxu0 0
      %806 = vmatprep.subr.bf16.mxu0 0
      %807 = vmatpush2.bf16.msra.mxu0 0
      %808 = vmatprep.mubr.bf16.mxu0 0
      %809 = vmatmul.mubr.bf16.gmra.mxu0 %v627
      %v810 = vpop.f32.mrf.mxu0
      %v811 = vadd.f32 0.0, %v810
      %v812 = vpop.f32.mrf.mxu0
      %v813 = vadd.f32 0.0, %v812
      %v814 = vpop.f32.mrf.mxu0
      %v815 = vadd.f32 0.0, %v814
      %v816 = vpop.f32.mrf.mxu0
      %v817 = vadd.f32 0.0, %v816
      %818 = vmatprep.mubr.bf16.mxu0 0
      %819 = vmatmul.mubr.bf16.gmra.mxu0 %v630
      %v820 = vpop.f32.mrf.mxu0
      %v821 = vadd.f32 0.0, %v820
      %v822 = vpop.f32.mrf.mxu0
      %v823 = vadd.f32 0.0, %v822
      %v824 = vpop.f32.mrf.mxu0
      %v825 = vadd.f32 0.0, %v824
      %v826 = vpop.f32.mrf.mxu0
      %v827 = vadd.f32 0.0, %v826
      %828 = vmatprep.mubr.bf16.mxu0 0
      %829 = vmatmul.mubr.bf16.gmra.mxu0 %v633
      %v830 = vpop.f32.mrf.mxu0
      %v831 = vadd.f32 0.0, %v830
      %v832 = vpop.f32.mrf.mxu0
      %v833 = vadd.f32 0.0, %v832
      %v834 = vpop.f32.mrf.mxu0
      %v835 = vadd.f32 0.0, %v834
      %v836 = vpop.f32.mrf.mxu0
      %v837 = vadd.f32 0.0, %v836
      %838 = vmatprep.mubr.bf16.mxu0 0
      %839 = vmatmul.mubr.bf16.gmra.mxu0 %v636
      %v840 = vpop.f32.mrf.mxu0
      %v841 = vadd.f32 0.0, %v840
      %v842 = vpop.f32.mrf.mxu0
      %v843 = vadd.f32 0.0, %v842
      %v844 = vpop.f32.mrf.mxu0
      %v845 = vadd.f32 0.0, %v844
      %v846 = vpop.f32.mrf.mxu0
      %v847 = vadd.f32 0.0, %v846
      %848 = vmatprep.mubr.bf16.mxu0 0
      %849 = vmatmul.mubr.bf16.gmra.mxu0 %v639
      %v850 = vpop.f32.mrf.mxu0
      %v851 = vadd.f32 0.0, %v850
      %v852 = vpop.f32.mrf.mxu0
      %v853 = vadd.f32 0.0, %v852
      %v854 = vpop.f32.mrf.mxu0
      %v855 = vadd.f32 0.0, %v854
      %v856 = vpop.f32.mrf.mxu0
      %v857 = vadd.f32 0.0, %v856
      %858 = vmatprep.mubr.bf16.mxu0 0
      %859 = vmatmul.mubr.bf16.gmra.mxu0 %v642
      %v860 = vpop.f32.mrf.mxu0
      %v861 = vadd.f32 0.0, %v860
      %v862 = vpop.f32.mrf.mxu0
      %v863 = vadd.f32 0.0, %v862
      %v864 = vpop.f32.mrf.mxu0
      %v865 = vadd.f32 0.0, %v864
      %v866 = vpop.f32.mrf.mxu0
      %v867 = vadd.f32 0.0, %v866
      %868 = vmatprep.mubr.bf16.mxu0 0
      %869 = vmatmul.mubr.bf16.gmra.mxu0 %v645
      %v870 = vpop.f32.mrf.mxu0
      %v871 = vadd.f32 0.0, %v870
      %v872 = vpop.f32.mrf.mxu0
      %v873 = vadd.f32 0.0, %v872
      %v874 = vpop.f32.mrf.mxu0
      %v875 = vadd.f32 0.0, %v874
      %v876 = vpop.f32.mrf.mxu0
      %v877 = vadd.f32 0.0, %v876
      %878 = vmatprep.mubr.bf16.mxu0 0
      %879 = vmatmul.mubr.bf16.gmra.mxu0 %v648
      %v880 = vpop.f32.mrf.mxu0
      %v881 = vadd.f32 0.0, %v880
      %v882 = vpop.f32.mrf.mxu0
      %v883 = vadd.f32 0.0, %v882
      %v884 = vpop.f32.mrf.mxu0
      %v885 = vadd.f32 0.0, %v884
      %v886 = vpop.f32.mrf.mxu0
      %v887 = vadd.f32 0.0, %v886
      %888 = vdwg.mxu0
      %v905 = vunpack.c.l.b16 %v255
      %v906 = vunpack.c.l.b16 %v256
      %v907 = vunpack.c.l.b16 %v257
      %v908 = vunpack.c.l.b16 %v258
      %v909 = vunpack.c.l.b16 %v259
      %v910 = vunpack.c.l.b16 %v260
      %v911 = vunpack.c.l.b16 %v261
      %v912 = vunpack.c.l.b16 %v262
      %v913 = vunpack.c.l.b16 %v263
      %v914 = vunpack.c.l.b16 %v264
      %v915 = vunpack.c.l.b16 %v265
      %v916 = vunpack.c.l.b16 %v266
      %v917 = vunpack.c.l.b16 %v267
      %v918 = vunpack.c.l.b16 %v268
      %v919 = vunpack.c.l.b16 %v269
      %v920 = vunpack.c.l.b16 %v270
      %v921 = vpack.c.b16 %v906, %v905
      %v922 = vpack.c.b16 %v908, %v907
      %v923 = vpack.c.b16 %v910, %v909
      %v924 = vpack.c.b16 %v912, %v911
      %v925 = vpack.c.b16 %v914, %v913
      %v926 = vpack.c.b16 %v916, %v915
      %v927 = vpack.c.b16 %v918, %v917
      %v928 = vpack.c.b16 %v920, %v919
      %v947 = vunpack.c.l.b16 %v271
      %v948 = vunpack.c.h.b16 %v271
      %v949 = vunpack.c.l.b16 %v272
      %v950 = vunpack.c.h.b16 %v272
      %v951 = vunpack.c.l.b16 %v273
      %v952 = vunpack.c.h.b16 %v273
      %v953 = vunpack.c.l.b16 %v274
      %v954 = vunpack.c.h.b16 %v274
      %v955 = vunpack.c.l.b16 %v275
      %v956 = vunpack.c.h.b16 %v275
      %v957 = vunpack.c.l.b16 %v276
      %v958 = vunpack.c.h.b16 %v276
      %v959 = vunpack.c.l.b16 %v277
      %v960 = vunpack.c.h.b16 %v277
      %v961 = vunpack.c.l.b16 %v278
      %v962 = vunpack.c.h.b16 %v278
      %v963 = vunpack.c.l.b16 %v279
      %v964 = vunpack.c.h.b16 %v279
      %v965 = vunpack.c.l.b16 %v280
      %v966 = vunpack.c.h.b16 %v280
      %v967 = vunpack.c.l.b16 %v281
      %v968 = vunpack.c.h.b16 %v281
      %v969 = vunpack.c.l.b16 %v282
      %v970 = vunpack.c.h.b16 %v282
      %v971 = vunpack.c.l.b16 %v283
      %v972 = vunpack.c.h.b16 %v283
      %v973 = vunpack.c.l.b16 %v284
      %v974 = vunpack.c.h.b16 %v284
      %v975 = vunpack.c.l.b16 %v285
      %v976 = vunpack.c.h.b16 %v285
      %v977 = vunpack.c.l.b16 %v286
      %v978 = vunpack.c.h.b16 %v286
      %v979 = vunpack.c.l.b16 %v287
      %v980 = vunpack.c.h.b16 %v287
      %v981 = vunpack.c.l.b16 %v288
      %v982 = vunpack.c.h.b16 %v288
      %v983 = vpack.c.b16 %v951, %v947
      %v984 = vpack.c.b16 %v952, %v948
      %v985 = vpack.c.b16 %v953, %v949
      %v986 = vpack.c.b16 %v954, %v950
      %v987 = vpack.c.b16 %v959, %v955
      %v988 = vpack.c.b16 %v960, %v956
      %v989 = vpack.c.b16 %v961, %v957
      %v990 = vpack.c.b16 %v962, %v958
      %v991 = vpack.c.b16 %v967, %v963
      %v992 = vpack.c.b16 %v968, %v964
      %v993 = vpack.c.b16 %v969, %v965
      %v994 = vpack.c.b16 %v970, %v966
      %v995 = vpack.c.b16 %v975, %v971
      %v996 = vpack.c.b16 %v976, %v972
      %v997 = vpack.c.b16 %v977, %v973
      %v998 = vpack.c.b16 %v978, %v974
      %v999 = vpack.c.b16 %v979, %v979
      %v1000 = vpack.c.b16 %v980, %v980
      %v1001 = vpack.c.b16 %v981, %v981
      %v1002 = vpack.c.b16 %v982, %v982
      %v1020 = vsel %vm625, %v921, 0
      %v1023 = vsel %vm625, %v922, 0
      %v1026 = vsel %vm625, %v923, 0
      %v1029 = vsel %vm625, %v924, 0
      %v1032 = vsel %vm625, %v925, 0
      %v1035 = vsel %vm625, %v926, 0
      %v1038 = vsel %vm625, %v927, 0
      %v1041 = vsel %vm625, %v928, 0
      %v1044 = vsel %vm650, %v999, 0
      %v1047 = vsel %vm650, %v1000, 0
      %v1050 = vsel %vm650, %v1001, 0
      %v1053 = vsel %vm650, %v1002, 0
      %1055 = vmatprep.subr.bf16.mxu0 0
      %1056 = vmatpush1.bf16.msra.mxu0 0
      %1057 = vmatprep.subr.bf16.mxu0 0
      %1058 = vmatpush1.bf16.msra.mxu0 0
      %1059 = vmatprep.subr.bf16.mxu0 0
      %1060 = vmatpush1.bf16.msra.mxu0 0
      %1061 = vmatprep.subr.bf16.mxu0 %v1047
      %1062 = vmatpush1.bf16.msra.mxu0 %v1044
      %1063 = vmatprep.subr.bf16.mxu0 %v996
      %1064 = vmatpush1.bf16.msra.mxu0 %v995
      %1065 = vmatprep.subr.bf16.mxu0 %v992
      %1066 = vmatpush1.bf16.msra.mxu0 %v991
      %1067 = vmatprep.subr.bf16.mxu0 %v988
      %1068 = vmatpush1.bf16.msra.mxu0 %v987
      %1069 = vmatprep.subr.bf16.mxu0 %v984
      %1070 = vmatpush1.bf16.msra.mxu0 %v983
      %1071 = vmatprep.subr.bf16.mxu0 0
      %1072 = vmatpush2.bf16.msra.mxu0 0
      %1073 = vmatprep.subr.bf16.mxu0 0
      %1074 = vmatpush2.bf16.msra.mxu0 0
      %1075 = vmatprep.subr.bf16.mxu0 0
      %1076 = vmatpush2.bf16.msra.mxu0 0
      %1077 = vmatprep.subr.bf16.mxu0 0
      %1078 = vmatpush2.bf16.msra.mxu0 0
      %1079 = vmatprep.subr.bf16.mxu0 0
      %1080 = vmatpush2.bf16.msra.mxu0 0
      %1081 = vmatprep.subr.bf16.mxu0 0
      %1082 = vmatpush2.bf16.msra.mxu0 0
      %1083 = vmatprep.subr.bf16.mxu0 0
      %1084 = vmatpush2.bf16.msra.mxu0 0
      %1085 = vmatprep.subr.bf16.mxu0 0
      %1086 = vmatpush2.bf16.msra.mxu0 0
      %1087 = vmatprep.mubr.bf16.mxu0 0
      %1088 = vmatmul.mubr.bf16.gmra.mxu0 %v1020
      %v1089 = vpop.f32.mrf.mxu0
      %v1090 = vadd.f32 %v698, %v1089
      %v1091 = vpop.f32.mrf.mxu0
      %v1092 = vadd.f32 %v700, %v1091
      %v1093 = vpop.f32.mrf.mxu0
      %v1094 = vadd.f32 %v702, %v1093
      %v1095 = vpop.f32.mrf.mxu0
      %v1096 = vadd.f32 %v704, %v1095
      %1097 = vmatprep.mubr.bf16.mxu0 0
      %1098 = vmatmul.mubr.bf16.gmra.mxu0 %v1023
      %v1099 = vpop.f32.mrf.mxu0
      %v1100 = vadd.f32 %v708, %v1099
      %v1101 = vpop.f32.mrf.mxu0
      %v1102 = vadd.f32 %v710, %v1101
      %v1103 = vpop.f32.mrf.mxu0
      %v1104 = vadd.f32 %v712, %v1103
      %v1105 = vpop.f32.mrf.mxu0
      %v1106 = vadd.f32 %v714, %v1105
      %1107 = vmatprep.mubr.bf16.mxu0 0
      %1108 = vmatmul.mubr.bf16.gmra.mxu0 %v1026
      %v1109 = vpop.f32.mrf.mxu0
      %v1110 = vadd.f32 %v718, %v1109
      %v1111 = vpop.f32.mrf.mxu0
      %v1112 = vadd.f32 %v720, %v1111
      %v1113 = vpop.f32.mrf.mxu0
      %v1114 = vadd.f32 %v722, %v1113
      %v1115 = vpop.f32.mrf.mxu0
      %v1116 = vadd.f32 %v724, %v1115
      %1117 = vmatprep.mubr.bf16.mxu0 0
      %1118 = vmatmul.mubr.bf16.gmra.mxu0 %v1029
      %v1119 = vpop.f32.mrf.mxu0
      %v1120 = vadd.f32 %v728, %v1119
      %v1121 = vpop.f32.mrf.mxu0
      %v1122 = vadd.f32 %v730, %v1121
      %v1123 = vpop.f32.mrf.mxu0
      %v1124 = vadd.f32 %v732, %v1123
      %v1125 = vpop.f32.mrf.mxu0
      %v1126 = vadd.f32 %v734, %v1125
      %1127 = vmatprep.mubr.bf16.mxu0 0
      %1128 = vmatmul.mubr.bf16.gmra.mxu0 %v1032
      %v1129 = vpop.f32.mrf.mxu0
      %v1130 = vadd.f32 %v738, %v1129
      %v1131 = vpop.f32.mrf.mxu0
      %v1132 = vadd.f32 %v740, %v1131
      %v1133 = vpop.f32.mrf.mxu0
      %v1134 = vadd.f32 %v742, %v1133
      %v1135 = vpop.f32.mrf.mxu0
      %v1136 = vadd.f32 %v744, %v1135
      %1137 = vmatprep.mubr.bf16.mxu0 0
      %1138 = vmatmul.mubr.bf16.gmra.mxu0 %v1035
      %v1139 = vpop.f32.mrf.mxu0
      %v1140 = vadd.f32 %v748, %v1139
      %v1141 = vpop.f32.mrf.mxu0
      %v1142 = vadd.f32 %v750, %v1141
      %v1143 = vpop.f32.mrf.mxu0
      %v1144 = vadd.f32 %v752, %v1143
      %v1145 = vpop.f32.mrf.mxu0
      %v1146 = vadd.f32 %v754, %v1145
      %1147 = vmatprep.mubr.bf16.mxu0 0
      %1148 = vmatmul.mubr.bf16.gmra.mxu0 %v1038
      %v1149 = vpop.f32.mrf.mxu0
      %v1150 = vadd.f32 %v758, %v1149
      %v1151 = vpop.f32.mrf.mxu0
      %v1152 = vadd.f32 %v760, %v1151
      %v1153 = vpop.f32.mrf.mxu0
      %v1154 = vadd.f32 %v762, %v1153
      %v1155 = vpop.f32.mrf.mxu0
      %v1156 = vadd.f32 %v764, %v1155
      %1157 = vmatprep.mubr.bf16.mxu0 0
      %1158 = vmatmul.mubr.bf16.gmra.mxu0 %v1041
      %v1159 = vpop.f32.mrf.mxu0
      %v1160 = vadd.f32 %v768, %v1159
      %v1161 = vpop.f32.mrf.mxu0
      %v1162 = vadd.f32 %v770, %v1161
      %v1163 = vpop.f32.mrf.mxu0
      %v1164 = vadd.f32 %v772, %v1163
      %v1165 = vpop.f32.mrf.mxu0
      %v1166 = vadd.f32 %v774, %v1165
      %1167 = vdwg.mxu0
      %1168 = vmatprep.subr.bf16.mxu0 0
      %1169 = vmatpush1.bf16.msra.mxu0 0
      %1170 = vmatprep.subr.bf16.mxu0 0
      %1171 = vmatpush1.bf16.msra.mxu0 0
      %1172 = vmatprep.subr.bf16.mxu0 0
      %1173 = vmatpush1.bf16.msra.mxu0 0
      %1174 = vmatprep.subr.bf16.mxu0 %v1053
      %1175 = vmatpush1.bf16.msra.mxu0 %v1050
      %1176 = vmatprep.subr.bf16.mxu0 %v998
      %1177 = vmatpush1.bf16.msra.mxu0 %v997
      %1178 = vmatprep.subr.bf16.mxu0 %v994
      %1179 = vmatpush1.bf16.msra.mxu0 %v993
      %1180 = vmatprep.subr.bf16.mxu0 %v990
      %1181 = vmatpush1.bf16.msra.mxu0 %v989
      %1182 = vmatprep.subr.bf16.mxu0 %v986
      %1183 = vmatpush1.bf16.msra.mxu0 %v985
      %1184 = vmatprep.subr.bf16.mxu0 0
      %1185 = vmatpush2.bf16.msra.mxu0 0
      %1186 = vmatprep.subr.bf16.mxu0 0
      %1187 = vmatpush2.bf16.msra.mxu0 0
      %1188 = vmatprep.subr.bf16.mxu0 0
      %1189 = vmatpush2.bf16.msra.mxu0 0
      %1190 = vmatprep.subr.bf16.mxu0 0
      %1191 = vmatpush2.bf16.msra.mxu0 0
      %1192 = vmatprep.subr.bf16.mxu0 0
      %1193 = vmatpush2.bf16.msra.mxu0 0
      %1194 = vmatprep.subr.bf16.mxu0 0
      %1195 = vmatpush2.bf16.msra.mxu0 0
      %1196 = vmatprep.subr.bf16.mxu0 0
      %1197 = vmatpush2.bf16.msra.mxu0 0
      %1198 = vmatprep.subr.bf16.mxu0 0
      %1199 = vmatpush2.bf16.msra.mxu0 0
      %1200 = vmatprep.mubr.bf16.mxu0 0
      %1201 = vmatmul.mubr.bf16.gmra.mxu0 %v1020
      %v1202 = vpop.f32.mrf.mxu0
      %v1203 = vadd.f32 %v811, %v1202
      %v1204 = vpop.f32.mrf.mxu0
      %v1205 = vadd.f32 %v813, %v1204
      %v1206 = vpop.f32.mrf.mxu0
      %v1207 = vadd.f32 %v815, %v1206
      %v1208 = vpop.f32.mrf.mxu0
      %v1209 = vadd.f32 %v817, %v1208
      %1210 = vmatprep.mubr.bf16.mxu0 0
      %1211 = vmatmul.mubr.bf16.gmra.mxu0 %v1023
      %v1212 = vpop.f32.mrf.mxu0
      %v1213 = vadd.f32 %v821, %v1212
      %v1214 = vpop.f32.mrf.mxu0
      %v1215 = vadd.f32 %v823, %v1214
      %v1216 = vpop.f32.mrf.mxu0
      %v1217 = vadd.f32 %v825, %v1216
      %v1218 = vpop.f32.mrf.mxu0
      %v1219 = vadd.f32 %v827, %v1218
      %1220 = vmatprep.mubr.bf16.mxu0 0
      %1221 = vmatmul.mubr.bf16.gmra.mxu0 %v1026
      %v1222 = vpop.f32.mrf.mxu0
      %v1223 = vadd.f32 %v831, %v1222
      %v1224 = vpop.f32.mrf.mxu0
      %v1225 = vadd.f32 %v833, %v1224
      %v1226 = vpop.f32.mrf.mxu0
      %v1227 = vadd.f32 %v835, %v1226
      %v1228 = vpop.f32.mrf.mxu0
      %v1229 = vadd.f32 %v837, %v1228
      %1230 = vmatprep.mubr.bf16.mxu0 0
      %1231 = vmatmul.mubr.bf16.gmra.mxu0 %v1029
      %v1232 = vpop.f32.mrf.mxu0
      %v1233 = vadd.f32 %v841, %v1232
      %v1234 = vpop.f32.mrf.mxu0
      %v1235 = vadd.f32 %v843, %v1234
      %v1236 = vpop.f32.mrf.mxu0
      %v1237 = vadd.f32 %v845, %v1236
      %v1238 = vpop.f32.mrf.mxu0
      %v1239 = vadd.f32 %v847, %v1238
      %1240 = vmatprep.mubr.bf16.mxu0 0
      %1241 = vmatmul.mubr.bf16.gmra.mxu0 %v1032
      %v1242 = vpop.f32.mrf.mxu0
      %v1243 = vadd.f32 %v851, %v1242
      %v1244 = vpop.f32.mrf.mxu0
      %v1245 = vadd.f32 %v853, %v1244
      %v1246 = vpop.f32.mrf.mxu0
      %v1247 = vadd.f32 %v855, %v1246
      %v1248 = vpop.f32.mrf.mxu0
      %v1249 = vadd.f32 %v857, %v1248
      %1250 = vmatprep.mubr.bf16.mxu0 0
      %1251 = vmatmul.mubr.bf16.gmra.mxu0 %v1035
      %v1252 = vpop.f32.mrf.mxu0
      %v1253 = vadd.f32 %v861, %v1252
      %v1254 = vpop.f32.mrf.mxu0
      %v1255 = vadd.f32 %v863, %v1254
      %v1256 = vpop.f32.mrf.mxu0
      %v1257 = vadd.f32 %v865, %v1256
      %v1258 = vpop.f32.mrf.mxu0
      %v1259 = vadd.f32 %v867, %v1258
      %1260 = vmatprep.mubr.bf16.mxu0 0
      %1261 = vmatmul.mubr.bf16.gmra.mxu0 %v1038
      %v1262 = vpop.f32.mrf.mxu0
      %v1263 = vadd.f32 %v871, %v1262
      %v1264 = vpop.f32.mrf.mxu0
      %v1265 = vadd.f32 %v873, %v1264
      %v1266 = vpop.f32.mrf.mxu0
      %v1267 = vadd.f32 %v875, %v1266
      %v1268 = vpop.f32.mrf.mxu0
      %v1269 = vadd.f32 %v877, %v1268
      %1270 = vmatprep.mubr.bf16.mxu0 0
      %1271 = vmatmul.mubr.bf16.gmra.mxu0 %v1041
      %v1272 = vpop.f32.mrf.mxu0
      %v1273 = vadd.f32 %v881, %v1272
      %v1274 = vpop.f32.mrf.mxu0
      %v1275 = vadd.f32 %v883, %v1274
      %v1276 = vpop.f32.mrf.mxu0
      %v1277 = vadd.f32 %v885, %v1276
      %v1278 = vpop.f32.mrf.mxu0
      %v1279 = vadd.f32 %v887, %v1278
      %1280 = vdwg.mxu0
      %v1281 = vld [vmem:[%s254] sm:$0xe]
      %v1282 = vld [vmem:[%s254 + $0xc] sm:$0xe]
      %v1283 = vld [vmem:[%s254 + $0x18] sm:$0xe]
      %v1284 = vld [vmem:[%s254 + $0x24] sm:$0xe]
      %v1285 = vld [vmem:[%s254 + $0x30] sm:$0xe]
      %v1286 = vld [vmem:[%s254 + $0x3c] sm:$0xe]
      %v1287 = vld [vmem:[%s254 + $0x48] sm:$0xe]
      %v1288 = vld [vmem:[%s254 + $0x54] sm:$0xe]
      %vm1305 = vcmask 1042432
      %vm1306 = vcmask 1046532
      %vm1307 = vmor %vm1305, %vm1306
      %v1308 = vrot.slane %v1281, 5
      %v1309 = vrot.slane %v1308, 4
      %v1310 = vrot.slane %v256, 5
      %v1311 = vsel %vm1307, %v1309, %v1310
      %v1312 = vrot.slane %v1310, 4
      %v1313 = vrot.slane %v289, 5
      %v1314 = vsel %vm1307, %v1312, %v1313
      %v1315 = vrot.slane %v1282, 5
      %v1316 = vrot.slane %v1315, 4
      %v1317 = vrot.slane %v258, 5
      %v1318 = vsel %vm1307, %v1316, %v1317
      %v1319 = vrot.slane %v1317, 4
      %v1320 = vrot.slane %v290, 5
      %v1321 = vsel %vm1307, %v1319, %v1320
      %v1322 = vrot.slane %v1283, 5
      %v1323 = vrot.slane %v1322, 4
      %v1324 = vrot.slane %v260, 5
      %v1325 = vsel %vm1307, %v1323, %v1324
      %v1326 = vrot.slane %v1324, 4
      %v1327 = vrot.slane %v291, 5
      %v1328 = vsel %vm1307, %v1326, %v1327
      %v1329 = vrot.slane %v1284, 5
      %v1330 = vrot.slane %v1329, 4
      %v1331 = vrot.slane %v262, 5
      %v1332 = vsel %vm1307, %v1330, %v1331
      %v1333 = vrot.slane %v1331, 4
      %v1334 = vrot.slane %v292, 5
      %v1335 = vsel %vm1307, %v1333, %v1334
      %v1336 = vrot.slane %v1285, 5
      %v1337 = vrot.slane %v1336, 4
      %v1338 = vrot.slane %v264, 5
      %v1339 = vsel %vm1307, %v1337, %v1338
      %v1340 = vrot.slane %v1338, 4
      %v1341 = vrot.slane %v293, 5
      %v1342 = vsel %vm1307, %v1340, %v1341
      %v1343 = vrot.slane %v1286, 5
      %v1344 = vrot.slane %v1343, 4
      %v1345 = vrot.slane %v266, 5
      %v1346 = vsel %vm1307, %v1344, %v1345
      %v1347 = vrot.slane %v1345, 4
      %v1348 = vrot.slane %v294, 5
      %v1349 = vsel %vm1307, %v1347, %v1348
      %v1350 = vrot.slane %v1287, 5
      %v1351 = vrot.slane %v1350, 4
      %v1352 = vrot.slane %v268, 5
      %v1353 = vsel %vm1307, %v1351, %v1352
      %v1354 = vrot.slane %v1352, 4
      %v1355 = vrot.slane %v295, 5
      %v1356 = vsel %vm1307, %v1354, %v1355
      %v1357 = vrot.slane %v1288, 5
      %v1358 = vrot.slane %v1357, 4
      %v1359 = vrot.slane %v270, 5
      %v1360 = vsel %vm1307, %v1358, %v1359
      %v1361 = vrot.slane %v1359, 4
      %v1362 = vrot.slane %v296, 5
      %v1363 = vsel %vm1307, %v1361, %v1362
      %s1364 = scalar_lea.vmem %s1, 288
      %v1365 = vld [vmem:[%s1364] sm:$0xff]
      %v1366 = vld [vmem:[%s1364 + $0x8] sm:$0xff]
      %v1367 = vld [vmem:[%s1364 + $0x10] sm:$0xff]
      %v1368 = vld [vmem:[%s1364 + $0x18] sm:$0xff]
      %v1369 = vld [vmem:[%s1364 + $0x20] sm:$0xff]
      %v1370 = vld [vmem:[%s1364 + $0x28] sm:$0xff]
      %v1371 = vld [vmem:[%s1364 + $0x30] sm:$0xff]
      %v1372 = vld [vmem:[%s1364 + $0x38] sm:$0xff]
      %v1373 = vld [vmem:[%s1364 + $0x40] sm:$0xff]
      %v1374 = vld [vmem:[%s1364 + $0x48] sm:$0xff]
      %v1375 = vld [vmem:[%s1364 + $0x50] sm:$0xff]
      %v1376 = vld [vmem:[%s1364 + $0x58] sm:$0xff]
      %v1377 = vld [vmem:[%s1364 + $0x60] sm:$0xff]
      %v1378 = vld [vmem:[%s1364 + $0x68] sm:$0xff]
      %v1379 = vld [vmem:[%s1364 + $0x70] sm:$0xff]
      %v1380 = vld [vmem:[%s1364 + $0x78] sm:$0xff]
      %v1381 = vld [vmem:[%s1364 + $0x80] sm:$0xff]
      %v1382 = vld [vmem:[%s1364 + $0x88] sm:$0xff]
      %v1383 = vunpack.c.l.b16 %v1311
      %v1384 = vunpack.c.l.b16 %v1314
      %v1385 = vunpack.c.l.b16 %v1318
      %v1386 = vunpack.c.l.b16 %v1321
      %v1387 = vunpack.c.l.b16 %v1325
      %v1388 = vunpack.c.l.b16 %v1328
      %v1389 = vunpack.c.l.b16 %v1332
      %v1390 = vunpack.c.l.b16 %v1335
      %v1391 = vunpack.c.l.b16 %v1339
      %v1392 = vunpack.c.l.b16 %v1342
      %v1393 = vunpack.c.l.b16 %v1346
      %v1394 = vunpack.c.l.b16 %v1349
      %v1395 = vunpack.c.l.b16 %v1353
      %v1396 = vunpack.c.l.b16 %v1356
      %v1397 = vunpack.c.l.b16 %v1360
      %v1398 = vunpack.c.l.b16 %v1363
      %v1399 = vpack.c.b16 %v1384, %v1383
      %v1400 = vpack.c.b16 %v1386, %v1385
      %v1401 = vpack.c.b16 %v1388, %v1387
      %v1402 = vpack.c.b16 %v1390, %v1389
      %v1403 = vpack.c.b16 %v1392, %v1391
      %v1404 = vpack.c.b16 %v1394, %v1393
      %v1405 = vpack.c.b16 %v1396, %v1395
      %v1406 = vpack.c.b16 %v1398, %v1397
      %v1425 = vunpack.c.l.b16 %v1365
      %v1426 = vunpack.c.h.b16 %v1365
      %v1427 = vunpack.c.l.b16 %v1366
      %v1428 = vunpack.c.h.b16 %v1366
      %v1429 = vunpack.c.l.b16 %v1367
      %v1430 = vunpack.c.h.b16 %v1367
      %v1431 = vunpack.c.l.b16 %v1368
      %v1432 = vunpack.c.h.b16 %v1368
      %v1433 = vunpack.c.l.b16 %v1369
      %v1434 = vunpack.c.h.b16 %v1369
      %v1435 = vunpack.c.l.b16 %v1370
      %v1436 = vunpack.c.h.b16 %v1370
      %v1437 = vunpack.c.l.b16 %v1371
      %v1438 = vunpack.c.h.b16 %v1371
      %v1439 = vunpack.c.l.b16 %v1372
      %v1440 = vunpack.c.h.b16 %v1372
      %v1441 = vunpack.c.l.b16 %v1373
      %v1442 = vunpack.c.h.b16 %v1373
      %v1443 = vunpack.c.l.b16 %v1374
      %v1444 = vunpack.c.h.b16 %v1374
      %v1445 = vunpack.c.l.b16 %v1375
      %v1446 = vunpack.c.h.b16 %v1375
      %v1447 = vunpack.c.l.b16 %v1376
      %v1448 = vunpack.c.h.b16 %v1376
      %v1449 = vunpack.c.l.b16 %v1377
      %v1450 = vunpack.c.h.b16 %v1377
      %v1451 = vunpack.c.l.b16 %v1378
      %v1452 = vunpack.c.h.b16 %v1378
      %v1453 = vunpack.c.l.b16 %v1379
      %v1454 = vunpack.c.h.b16 %v1379
      %v1455 = vunpack.c.l.b16 %v1380
      %v1456 = vunpack.c.h.b16 %v1380
      %v1457 = vunpack.c.l.b16 %v1381
      %v1458 = vunpack.c.h.b16 %v1381
      %v1459 = vunpack.c.l.b16 %v1382
      %v1460 = vunpack.c.h.b16 %v1382
      %v1461 = vpack.c.b16 %v1429, %v1425
      %v1462 = vpack.c.b16 %v1430, %v1426
      %v1463 = vpack.c.b16 %v1431, %v1427
      %v1464 = vpack.c.b16 %v1432, %v1428
      %v1465 = vpack.c.b16 %v1437, %v1433
      %v1466 = vpack.c.b16 %v1438, %v1434
      %v1467 = vpack.c.b16 %v1439, %v1435
      %v1468 = vpack.c.b16 %v1440, %v1436
      %v1469 = vpack.c.b16 %v1445, %v1441
      %v1470 = vpack.c.b16 %v1446, %v1442
      %v1471 = vpack.c.b16 %v1447, %v1443
      %v1472 = vpack.c.b16 %v1448, %v1444
      %v1473 = vpack.c.b16 %v1453, %v1449
      %v1474 = vpack.c.b16 %v1454, %v1450
      %v1475 = vpack.c.b16 %v1455, %v1451
      %v1476 = vpack.c.b16 %v1456, %v1452
      %v1477 = vpack.c.b16 %v1457, %v1457
      %v1478 = vpack.c.b16 %v1458, %v1458
      %v1479 = vpack.c.b16 %v1459, %v1459
      %v1480 = vpack.c.b16 %v1460, %v1460
      %v1498 = vsel %vm625, %v1399, 0
      %v1501 = vsel %vm625, %v1400, 0
      %v1504 = vsel %vm625, %v1401, 0
      %v1507 = vsel %vm625, %v1402, 0
      %v1510 = vsel %vm625, %v1403, 0
      %v1513 = vsel %vm625, %v1404, 0
      %v1516 = vsel %vm625, %v1405, 0
      %v1519 = vsel %vm625, %v1406, 0
      %v1522 = vsel %vm650, %v1477, 0
      %v1525 = vsel %vm650, %v1478, 0
      %v1528 = vsel %vm650, %v1479, 0
      %v1531 = vsel %vm650, %v1480, 0
      %1533 = vmatprep.subr.bf16.mxu0 0
      %1534 = vmatpush1.bf16.msra.mxu0 0
      %1535 = vmatprep.subr.bf16.mxu0 0
      %1536 = vmatpush1.bf16.msra.mxu0 0
      %1537 = vmatprep.subr.bf16.mxu0 0
      %1538 = vmatpush1.bf16.msra.mxu0 0
      %1539 = vmatprep.subr.bf16.mxu0 %v1525
      %1540 = vmatpush1.bf16.msra.mxu0 %v1522
      %1541 = vmatprep.subr.bf16.mxu0 %v1474
      %1542 = vmatpush1.bf16.msra.mxu0 %v1473
      %1543 = vmatprep.subr.bf16.mxu0 %v1470
      %1544 = vmatpush1.bf16.msra.mxu0 %v1469
      %1545 = vmatprep.subr.bf16.mxu0 %v1466
      %1546 = vmatpush1.bf16.msra.mxu0 %v1465
      %1547 = vmatprep.subr.bf16.mxu0 %v1462
      %1548 = vmatpush1.bf16.msra.mxu0 %v1461
      %1549 = vmatprep.subr.bf16.mxu0 0
      %1550 = vmatpush2.bf16.msra.mxu0 0
      %1551 = vmatprep.subr.bf16.mxu0 0
      %1552 = vmatpush2.bf16.msra.mxu0 0
      %1553 = vmatprep.subr.bf16.mxu0 0
      %1554 = vmatpush2.bf16.msra.mxu0 0
      %1555 = vmatprep.subr.bf16.mxu0 0
      %1556 = vmatpush2.bf16.msra.mxu0 0
      %1557 = vmatprep.subr.bf16.mxu0 0
      %1558 = vmatpush2.bf16.msra.mxu0 0
      %1559 = vmatprep.subr.bf16.mxu0 0
      %1560 = vmatpush2.bf16.msra.mxu0 0
      %1561 = vmatprep.subr.bf16.mxu0 0
      %1562 = vmatpush2.bf16.msra.mxu0 0
      %1563 = vmatprep.subr.bf16.mxu0 0
      %1564 = vmatpush2.bf16.msra.mxu0 0
      %1565 = vmatprep.mubr.bf16.mxu0 0
      %1566 = vmatmul.mubr.bf16.gmra.mxu0 %v1498
      %v1567 = vpop.f32.mrf.mxu0
      %v1568 = vadd.f32 0.0, %v1567
      %v1569 = vpop.f32.mrf.mxu0
      %v1570 = vadd.f32 0.0, %v1569
      %v1571 = vpop.f32.mrf.mxu0
      %v1572 = vadd.f32 0.0, %v1571
      %v1573 = vpop.f32.mrf.mxu0
      %v1574 = vadd.f32 0.0, %v1573
      %1575 = vmatprep.mubr.bf16.mxu0 0
      %1576 = vmatmul.mubr.bf16.gmra.mxu0 %v1501
      %v1577 = vpop.f32.mrf.mxu0
      %v1578 = vadd.f32 0.0, %v1577
      %v1579 = vpop.f32.mrf.mxu0
      %v1580 = vadd.f32 0.0, %v1579
      %v1581 = vpop.f32.mrf.mxu0
      %v1582 = vadd.f32 0.0, %v1581
      %v1583 = vpop.f32.mrf.mxu0
      %v1584 = vadd.f32 0.0, %v1583
      %1585 = vmatprep.mubr.bf16.mxu0 0
      %1586 = vmatmul.mubr.bf16.gmra.mxu0 %v1504
      %v1587 = vpop.f32.mrf.mxu0
      %v1588 = vadd.f32 0.0, %v1587
      %v1589 = vpop.f32.mrf.mxu0
      %v1590 = vadd.f32 0.0, %v1589
      %v1591 = vpop.f32.mrf.mxu0
      %v1592 = vadd.f32 0.0, %v1591
      %v1593 = vpop.f32.mrf.mxu0
      %v1594 = vadd.f32 0.0, %v1593
      %1595 = vmatprep.mubr.bf16.mxu0 0
      %1596 = vmatmul.mubr.bf16.gmra.mxu0 %v1507
      %v1597 = vpop.f32.mrf.mxu0
      %v1598 = vadd.f32 0.0, %v1597
      %v1599 = vpop.f32.mrf.mxu0
      %v1600 = vadd.f32 0.0, %v1599
      %v1601 = vpop.f32.mrf.mxu0
      %v1602 = vadd.f32 0.0, %v1601
      %v1603 = vpop.f32.mrf.mxu0
      %v1604 = vadd.f32 0.0, %v1603
      %1605 = vmatprep.mubr.bf16.mxu0 0
      %1606 = vmatmul.mubr.bf16.gmra.mxu0 %v1510
      %v1607 = vpop.f32.mrf.mxu0
      %v1608 = vadd.f32 0.0, %v1607
      %v1609 = vpop.f32.mrf.mxu0
      %v1610 = vadd.f32 0.0, %v1609
      %v1611 = vpop.f32.mrf.mxu0
      %v1612 = vadd.f32 0.0, %v1611
      %v1613 = vpop.f32.mrf.mxu0
      %v1614 = vadd.f32 0.0, %v1613
      %1615 = vmatprep.mubr.bf16.mxu0 0
      %1616 = vmatmul.mubr.bf16.gmra.mxu0 %v1513
      %v1617 = vpop.f32.mrf.mxu0
      %v1618 = vadd.f32 0.0, %v1617
      %v1619 = vpop.f32.mrf.mxu0
      %v1620 = vadd.f32 0.0, %v1619
      %v1621 = vpop.f32.mrf.mxu0
      %v1622 = vadd.f32 0.0, %v1621
      %v1623 = vpop.f32.mrf.mxu0
      %v1624 = vadd.f32 0.0, %v1623
      %1625 = vmatprep.mubr.bf16.mxu0 0
      %1626 = vmatmul.mubr.bf16.gmra.mxu0 %v1516
      %v1627 = vpop.f32.mrf.mxu0
      %v1628 = vadd.f32 0.0, %v1627
      %v1629 = vpop.f32.mrf.mxu0
      %v1630 = vadd.f32 0.0, %v1629
      %v1631 = vpop.f32.mrf.mxu0
      %v1632 = vadd.f32 0.0, %v1631
      %v1633 = vpop.f32.mrf.mxu0
      %v1634 = vadd.f32 0.0, %v1633
      %1635 = vmatprep.mubr.bf16.mxu0 0
      %1636 = vmatmul.mubr.bf16.gmra.mxu0 %v1519
      %v1637 = vpop.f32.mrf.mxu0
      %v1638 = vadd.f32 0.0, %v1637
      %v1639 = vpop.f32.mrf.mxu0
      %v1640 = vadd.f32 0.0, %v1639
      %v1641 = vpop.f32.mrf.mxu0
      %v1642 = vadd.f32 0.0, %v1641
      %v1643 = vpop.f32.mrf.mxu0
      %v1644 = vadd.f32 0.0, %v1643
      %1645 = vdwg.mxu0
      %1646 = vmatprep.subr.bf16.mxu0 0
      %1647 = vmatpush1.bf16.msra.mxu0 0
      %1648 = vmatprep.subr.bf16.mxu0 0
      %1649 = vmatpush1.bf16.msra.mxu0 0
      %1650 = vmatprep.subr.bf16.mxu0 0
      %1651 = vmatpush1.bf16.msra.mxu0 0
      %1652 = vmatprep.subr.bf16.mxu0 %v1531
      %1653 = vmatpush1.bf16.msra.mxu0 %v1528
      %1654 = vmatprep.subr.bf16.mxu0 %v1476
      %1655 = vmatpush1.bf16.msra.mxu0 %v1475
      %1656 = vmatprep.subr.bf16.mxu0 %v1472
      %1657 = vmatpush1.bf16.msra.mxu0 %v1471
      %1658 = vmatprep.subr.bf16.mxu0 %v1468
      %1659 = vmatpush1.bf16.msra.mxu0 %v1467
      %1660 = vmatprep.subr.bf16.mxu0 %v1464
      %1661 = vmatpush1.bf16.msra.mxu0 %v1463
      %1662 = vmatprep.subr.bf16.mxu0 0
      %1663 = vmatpush2.bf16.msra.mxu0 0
      %1664 = vmatprep.subr.bf16.mxu0 0
      %1665 = vmatpush2.bf16.msra.mxu0 0
      %1666 = vmatprep.subr.bf16.mxu0 0
      %1667 = vmatpush2.bf16.msra.mxu0 0
      %1668 = vmatprep.subr.bf16.mxu0 0
      %1669 = vmatpush2.bf16.msra.mxu0 0
      %1670 = vmatprep.subr.bf16.mxu0 0
      %1671 = vmatpush2.bf16.msra.mxu0 0
      %1672 = vmatprep.subr.bf16.mxu0 0
      %1673 = vmatpush2.bf16.msra.mxu0 0
      %1674 = vmatprep.subr.bf16.mxu0 0
      %1675 = vmatpush2.bf16.msra.mxu0 0
      %1676 = vmatprep.subr.bf16.mxu0 0
      %1677 = vmatpush2.bf16.msra.mxu0 0
      %1678 = vmatprep.mubr.bf16.mxu0 0
      %1679 = vmatmul.mubr.bf16.gmra.mxu0 %v1498
      %v1680 = vpop.f32.mrf.mxu0
      %v1681 = vadd.f32 0.0, %v1680
      %v1682 = vpop.f32.mrf.mxu0
      %v1683 = vadd.f32 0.0, %v1682
      %v1684 = vpop.f32.mrf.mxu0
      %v1685 = vadd.f32 0.0, %v1684
      %v1686 = vpop.f32.mrf.mxu0
      %v1687 = vadd.f32 0.0, %v1686
      %1688 = vmatprep.mubr.bf16.mxu0 0
      %1689 = vmatmul.mubr.bf16.gmra.mxu0 %v1501
      %v1690 = vpop.f32.mrf.mxu0
      %v1691 = vadd.f32 0.0, %v1690
      %v1692 = vpop.f32.mrf.mxu0
      %v1693 = vadd.f32 0.0, %v1692
      %v1694 = vpop.f32.mrf.mxu0
      %v1695 = vadd.f32 0.0, %v1694
      %v1696 = vpop.f32.mrf.mxu0
      %v1697 = vadd.f32 0.0, %v1696
      %1698 = vmatprep.mubr.bf16.mxu0 0
      %1699 = vmatmul.mubr.bf16.gmra.mxu0 %v1504
      %v1700 = vpop.f32.mrf.mxu0
      %v1701 = vadd.f32 0.0, %v1700
      %v1702 = vpop.f32.mrf.mxu0
      %v1703 = vadd.f32 0.0, %v1702
      %v1704 = vpop.f32.mrf.mxu0
      %v1705 = vadd.f32 0.0, %v1704
      %v1706 = vpop.f32.mrf.mxu0
      %v1707 = vadd.f32 0.0, %v1706
      %1708 = vmatprep.mubr.bf16.mxu0 0
      %1709 = vmatmul.mubr.bf16.gmra.mxu0 %v1507
      %v1710 = vpop.f32.mrf.mxu0
      %v1711 = vadd.f32 0.0, %v1710
      %v1712 = vpop.f32.mrf.mxu0
      %v1713 = vadd.f32 0.0, %v1712
      %v1714 = vpop.f32.mrf.mxu0
      %v1715 = vadd.f32 0.0, %v1714
      %v1716 = vpop.f32.mrf.mxu0
      %v1717 = vadd.f32 0.0, %v1716
      %1718 = vmatprep.mubr.bf16.mxu0 0
      %1719 = vmatmul.mubr.bf16.gmra.mxu0 %v1510
      %v1720 = vpop.f32.mrf.mxu0
      %v1721 = vadd.f32 0.0, %v1720
      %v1722 = vpop.f32.mrf.mxu0
      %v1723 = vadd.f32 0.0, %v1722
      %v1724 = vpop.f32.mrf.mxu0
      %v1725 = vadd.f32 0.0, %v1724
      %v1726 = vpop.f32.mrf.mxu0
      %v1727 = vadd.f32 0.0, %v1726
      %1728 = vmatprep.mubr.bf16.mxu0 0
      %1729 = vmatmul.mubr.bf16.gmra.mxu0 %v1513
      %v1730 = vpop.f32.mrf.mxu0
      %v1731 = vadd.f32 0.0, %v1730
      %v1732 = vpop.f32.mrf.mxu0
      %v1733 = vadd.f32 0.0, %v1732
      %v1734 = vpop.f32.mrf.mxu0
      %v1735 = vadd.f32 0.0, %v1734
      %v1736 = vpop.f32.mrf.mxu0
      %v1737 = vadd.f32 0.0, %v1736
      %1738 = vmatprep.mubr.bf16.mxu0 0
      %1739 = vmatmul.mubr.bf16.gmra.mxu0 %v1516
      %v1740 = vpop.f32.mrf.mxu0
      %v1741 = vadd.f32 0.0, %v1740
      %v1742 = vpop.f32.mrf.mxu0
      %v1743 = vadd.f32 0.0, %v1742
      %v1744 = vpop.f32.mrf.mxu0
      %v1745 = vadd.f32 0.0, %v1744
      %v1746 = vpop.f32.mrf.mxu0
      %v1747 = vadd.f32 0.0, %v1746
      %1748 = vmatprep.mubr.bf16.mxu0 0
      %1749 = vmatmul.mubr.bf16.gmra.mxu0 %v1519
      %v1750 = vpop.f32.mrf.mxu0
      %v1751 = vadd.f32 0.0, %v1750
      %v1752 = vpop.f32.mrf.mxu0
      %v1753 = vadd.f32 0.0, %v1752
      %v1754 = vpop.f32.mrf.mxu0
      %v1755 = vadd.f32 0.0, %v1754
      %v1756 = vpop.f32.mrf.mxu0
      %v1757 = vadd.f32 0.0, %v1756
      %1758 = vdwg.mxu0
      %v1759 = vadd.f32 %v1090, %v1568
      %v1760 = vadd.f32 %v1092, %v1570
      %v1761 = vadd.f32 %v1203, %v1681
      %v1762 = vadd.f32 %v1205, %v1683
      %v1763 = vadd.f32 %v1094, %v1572
      %v1764 = vadd.f32 %v1096, %v1574
      %v1765 = vadd.f32 %v1207, %v1685
      %v1766 = vadd.f32 %v1209, %v1687
      %v1767 = vadd.f32 %v1100, %v1578
      %v1768 = vadd.f32 %v1102, %v1580
      %v1769 = vadd.f32 %v1213, %v1691
      %v1770 = vadd.f32 %v1215, %v1693
      %v1771 = vadd.f32 %v1104, %v1582
      %v1772 = vadd.f32 %v1106, %v1584
      %v1773 = vadd.f32 %v1217, %v1695
      %v1774 = vadd.f32 %v1219, %v1697
      %v1775 = vadd.f32 %v1110, %v1588
      %v1776 = vadd.f32 %v1112, %v1590
      %v1777 = vadd.f32 %v1223, %v1701
      %v1778 = vadd.f32 %v1225, %v1703
      %v1779 = vadd.f32 %v1114, %v1592
      %v1780 = vadd.f32 %v1116, %v1594
      %v1781 = vadd.f32 %v1227, %v1705
      %v1782 = vadd.f32 %v1229, %v1707
      %v1783 = vadd.f32 %v1120, %v1598
      %v1784 = vadd.f32 %v1122, %v1600
      %v1785 = vadd.f32 %v1233, %v1711
      %v1786 = vadd.f32 %v1235, %v1713
      %v1787 = vadd.f32 %v1124, %v1602
      %v1788 = vadd.f32 %v1126, %v1604
      %v1789 = vadd.f32 %v1237, %v1715
      %v1790 = vadd.f32 %v1239, %v1717
      %v1791 = vadd.f32 %v1130, %v1608
      %v1792 = vadd.f32 %v1132, %v1610
      %v1793 = vadd.f32 %v1243, %v1721
      %v1794 = vadd.f32 %v1245, %v1723
      %v1795 = vadd.f32 %v1134, %v1612
      %v1796 = vadd.f32 %v1136, %v1614
      %v1797 = vadd.f32 %v1247, %v1725
      %v1798 = vadd.f32 %v1249, %v1727
      %v1799 = vadd.f32 %v1140, %v1618
      %v1800 = vadd.f32 %v1142, %v1620
      %v1801 = vadd.f32 %v1253, %v1731
      %v1802 = vadd.f32 %v1255, %v1733
      %v1803 = vadd.f32 %v1144, %v1622
      %v1804 = vadd.f32 %v1146, %v1624
      %v1805 = vadd.f32 %v1257, %v1735
      %v1806 = vadd.f32 %v1259, %v1737
      %v1807 = vadd.f32 %v1150, %v1628
      %v1808 = vadd.f32 %v1152, %v1630
      %v1809 = vadd.f32 %v1263, %v1741
      %v1810 = vadd.f32 %v1265, %v1743
      %v1811 = vadd.f32 %v1154, %v1632
      %v1812 = vadd.f32 %v1156, %v1634
      %v1813 = vadd.f32 %v1267, %v1745
      %v1814 = vadd.f32 %v1269, %v1747
      %v1815 = vadd.f32 %v1160, %v1638
      %v1816 = vadd.f32 %v1162, %v1640
      %v1817 = vadd.f32 %v1273, %v1751
      %v1818 = vadd.f32 %v1275, %v1753
      %v1819 = vadd.f32 %v1164, %v1642
      %v1820 = vadd.f32 %v1166, %v1644
      %v1821 = vadd.f32 %v1277, %v1755
      %v1822 = vadd.f32 %v1279, %v1757
      %s1823 = sadd.s32 %s251, 1
      %s1824 = smul.u32 %s1823, 3
      %s1825 = smul.addr %s1824, 4
      %s1826 = scalar_lea.vmem %s238, %s1825
      %v1827 = vld [vmem:[%s1826] sm:$0xf]
      %v1828 = vld [vmem:[%s1826 + $0x4] sm:$0xf]
      %v1829 = vld [vmem:[%s1826 + $0xc] sm:$0xf]
      %v1830 = vld [vmem:[%s1826 + $0x10] sm:$0xf]
      %v1831 = vld [vmem:[%s1826 + $0x18] sm:$0xf]
      %v1832 = vld [vmem:[%s1826 + $0x1c] sm:$0xf]
      %v1833 = vld [vmem:[%s1826 + $0x24] sm:$0xf]
      %v1834 = vld [vmem:[%s1826 + $0x28] sm:$0xf]
      %v1835 = vld [vmem:[%s1826 + $0x30] sm:$0xf]
      %v1836 = vld [vmem:[%s1826 + $0x34] sm:$0xf]
      %v1837 = vld [vmem:[%s1826 + $0x3c] sm:$0xf]
      %v1838 = vld [vmem:[%s1826 + $0x40] sm:$0xf]
      %v1839 = vld [vmem:[%s1826 + $0x48] sm:$0xf]
      %v1840 = vld [vmem:[%s1826 + $0x4c] sm:$0xf]
      %v1841 = vld [vmem:[%s1826 + $0x54] sm:$0xf]
      %v1842 = vld [vmem:[%s1826 + $0x58] sm:$0xf]
      %s1843 = scalar_lea.vmem %s1, 432
      %v1844 = vld [vmem:[%s1843] sm:$0xff]
      %v1845 = vld [vmem:[%s1843 + $0x8] sm:$0xff]
      %v1846 = vld [vmem:[%s1843 + $0x10] sm:$0xff]
      %v1847 = vld [vmem:[%s1843 + $0x18] sm:$0xff]
      %v1848 = vld [vmem:[%s1843 + $0x20] sm:$0xff]
      %v1849 = vld [vmem:[%s1843 + $0x28] sm:$0xff]
      %v1850 = vld [vmem:[%s1843 + $0x30] sm:$0xff]
      %v1851 = vld [vmem:[%s1843 + $0x38] sm:$0xff]
      %v1852 = vld [vmem:[%s1843 + $0x40] sm:$0xff]
      %v1853 = vld [vmem:[%s1843 + $0x48] sm:$0xff]
      %v1854 = vld [vmem:[%s1843 + $0x50] sm:$0xff]
      %v1855 = vld [vmem:[%s1843 + $0x58] sm:$0xff]
      %v1856 = vld [vmem:[%s1843 + $0x60] sm:$0xff]
      %v1857 = vld [vmem:[%s1843 + $0x68] sm:$0xff]
      %v1858 = vld [vmem:[%s1843 + $0x70] sm:$0xff]
      %v1859 = vld [vmem:[%s1843 + $0x78] sm:$0xff]
      %v1860 = vld [vmem:[%s1843 + $0x80] sm:$0xff]
      %v1861 = vld [vmem:[%s1843 + $0x88] sm:$0xff]
      %v1878 = vunpack.c.l.b16 %v1827
      %v1879 = vunpack.c.l.b16 %v1828
      %v1880 = vunpack.c.l.b16 %v1829
      %v1881 = vunpack.c.l.b16 %v1830
      %v1882 = vunpack.c.l.b16 %v1831
      %v1883 = vunpack.c.l.b16 %v1832
      %v1884 = vunpack.c.l.b16 %v1833
      %v1885 = vunpack.c.l.b16 %v1834
      %v1886 = vunpack.c.l.b16 %v1835
      %v1887 = vunpack.c.l.b16 %v1836
      %v1888 = vunpack.c.l.b16 %v1837
      %v1889 = vunpack.c.l.b16 %v1838
      %v1890 = vunpack.c.l.b16 %v1839
      %v1891 = vunpack.c.l.b16 %v1840
      %v1892 = vunpack.c.l.b16 %v1841
      %v1893 = vunpack.c.l.b16 %v1842
      %v1894 = vpack.c.b16 %v1879, %v1878
      %v1895 = vpack.c.b16 %v1881, %v1880
      %v1896 = vpack.c.b16 %v1883, %v1882
      %v1897 = vpack.c.b16 %v1885, %v1884
      %v1898 = vpack.c.b16 %v1887, %v1886
      %v1899 = vpack.c.b16 %v1889, %v1888
      %v1900 = vpack.c.b16 %v1891, %v1890
      %v1901 = vpack.c.b16 %v1893, %v1892
      %v1920 = vunpack.c.l.b16 %v1844
      %v1921 = vunpack.c.h.b16 %v1844
      %v1922 = vunpack.c.l.b16 %v1845
      %v1923 = vunpack.c.h.b16 %v1845
      %v1924 = vunpack.c.l.b16 %v1846
      %v1925 = vunpack.c.h.b16 %v1846
      %v1926 = vunpack.c.l.b16 %v1847
      %v1927 = vunpack.c.h.b16 %v1847
      %v1928 = vunpack.c.l.b16 %v1848
      %v1929 = vunpack.c.h.b16 %v1848
      %v1930 = vunpack.c.l.b16 %v1849
      %v1931 = vunpack.c.h.b16 %v1849
      %v1932 = vunpack.c.l.b16 %v1850
      %v1933 = vunpack.c.h.b16 %v1850
      %v1934 = vunpack.c.l.b16 %v1851
      %v1935 = vunpack.c.h.b16 %v1851
      %v1936 = vunpack.c.l.b16 %v1852
      %v1937 = vunpack.c.h.b16 %v1852
      %v1938 = vunpack.c.l.b16 %v1853
      %v1939 = vunpack.c.h.b16 %v1853
      %v1940 = vunpack.c.l.b16 %v1854
      %v1941 = vunpack.c.h.b16 %v1854
      %v1942 = vunpack.c.l.b16 %v1855
      %v1943 = vunpack.c.h.b16 %v1855
      %v1944 = vunpack.c.l.b16 %v1856
      %v1945 = vunpack.c.h.b16 %v1856
      %v1946 = vunpack.c.l.b16 %v1857
      %v1947 = vunpack.c.h.b16 %v1857
      %v1948 = vunpack.c.l.b16 %v1858
      %v1949 = vunpack.c.h.b16 %v1858
      %v1950 = vunpack.c.l.b16 %v1859
      %v1951 = vunpack.c.h.b16 %v1859
      %v1952 = vunpack.c.l.b16 %v1860
      %v1953 = vunpack.c.h.b16 %v1860
      %v1954 = vunpack.c.l.b16 %v1861
      %v1955 = vunpack.c.h.b16 %v1861
      %v1956 = vpack.c.b16 %v1924, %v1920
      %v1957 = vpack.c.b16 %v1925, %v1921
      %v1958 = vpack.c.b16 %v1926, %v1922
      %v1959 = vpack.c.b16 %v1927, %v1923
      %v1960 = vpack.c.b16 %v1932, %v1928
      %v1961 = vpack.c.b16 %v1933, %v1929
      %v1962 = vpack.c.b16 %v1934, %v1930
      %v1963 = vpack.c.b16 %v1935, %v1931
      %v1964 = vpack.c.b16 %v1940, %v1936
      %v1965 = vpack.c.b16 %v1941, %v1937
      %v1966 = vpack.c.b16 %v1942, %v1938
      %v1967 = vpack.c.b16 %v1943, %v1939
      %v1968 = vpack.c.b16 %v1948, %v1944
      %v1969 = vpack.c.b16 %v1949, %v1945
      %v1970 = vpack.c.b16 %v1950, %v1946
      %v1971 = vpack.c.b16 %v1951, %v1947
      %v1972 = vpack.c.b16 %v1952, %v1952
      %v1973 = vpack.c.b16 %v1953, %v1953
      %v1974 = vpack.c.b16 %v1954, %v1954
      %v1975 = vpack.c.b16 %v1955, %v1955
      %v1993 = vsel %vm625, %v1894, 0
      %v1996 = vsel %vm625, %v1895, 0
      %v1999 = vsel %vm625, %v1896, 0
      %v2002 = vsel %vm625, %v1897, 0
      %v2005 = vsel %vm625, %v1898, 0
      %v2008 = vsel %vm625, %v1899, 0
      %v2011 = vsel %vm625, %v1900, 0
      %v2014 = vsel %vm625, %v1901, 0
      %v2017 = vsel %vm650, %v1972, 0
      %v2020 = vsel %vm650, %v1973, 0
      %v2023 = vsel %vm650, %v1974, 0
      %v2026 = vsel %vm650, %v1975, 0
      %2028 = vmatprep.subr.bf16.mxu0 0
      %2029 = vmatpush1.bf16.msra.mxu0 0
      %2030 = vmatprep.subr.bf16.mxu0 0
      %2031 = vmatpush1.bf16.msra.mxu0 0
      %2032 = vmatprep.subr.bf16.mxu0 0
      %2033 = vmatpush1.bf16.msra.mxu0 0
      %2034 = vmatprep.subr.bf16.mxu0 %v2020
      %2035 = vmatpush1.bf16.msra.mxu0 %v2017
      %2036 = vmatprep.subr.bf16.mxu0 %v1969
      %2037 = vmatpush1.bf16.msra.mxu0 %v1968
      %2038 = vmatprep.subr.bf16.mxu0 %v1965
      %2039 = vmatpush1.bf16.msra.mxu0 %v1964
      %2040 = vmatprep.subr.bf16.mxu0 %v1961
      %2041 = vmatpush1.bf16.msra.mxu0 %v1960
      %2042 = vmatprep.subr.bf16.mxu0 %v1957
      %2043 = vmatpush1.bf16.msra.mxu0 %v1956
      %2044 = vmatprep.subr.bf16.mxu0 0
      %2045 = vmatpush2.bf16.msra.mxu0 0
      %2046 = vmatprep.subr.bf16.mxu0 0
      %2047 = vmatpush2.bf16.msra.mxu0 0
      %2048 = vmatprep.subr.bf16.mxu0 0
      %2049 = vmatpush2.bf16.msra.mxu0 0
      %2050 = vmatprep.subr.bf16.mxu0 0
      %2051 = vmatpush2.bf16.msra.mxu0 0
      %2052 = vmatprep.subr.bf16.mxu0 0
      %2053 = vmatpush2.bf16.msra.mxu0 0
      %2054 = vmatprep.subr.bf16.mxu0 0
      %2055 = vmatpush2.bf16.msra.mxu0 0
      %2056 = vmatprep.subr.bf16.mxu0 0
      %2057 = vmatpush2.bf16.msra.mxu0 0
      %2058 = vmatprep.subr.bf16.mxu0 0
      %2059 = vmatpush2.bf16.msra.mxu0 0
      %2060 = vmatprep.mubr.bf16.mxu0 0
      %2061 = vmatmul.mubr.bf16.gmra.mxu0 %v1993
      %v2062 = vpop.f32.mrf.mxu0
      %v2063 = vadd.f32 0.0, %v2062
      %v2064 = vpop.f32.mrf.mxu0
      %v2065 = vadd.f32 0.0, %v2064
      %v2066 = vpop.f32.mrf.mxu0
      %v2067 = vadd.f32 0.0, %v2066
      %v2068 = vpop.f32.mrf.mxu0
      %v2069 = vadd.f32 0.0, %v2068
      %2070 = vmatprep.mubr.bf16.mxu0 0
      %2071 = vmatmul.mubr.bf16.gmra.mxu0 %v1996
      %v2072 = vpop.f32.mrf.mxu0
      %v2073 = vadd.f32 0.0, %v2072
      %v2074 = vpop.f32.mrf.mxu0
      %v2075 = vadd.f32 0.0, %v2074
      %v2076 = vpop.f32.mrf.mxu0
      %v2077 = vadd.f32 0.0, %v2076
      %v2078 = vpop.f32.mrf.mxu0
      %v2079 = vadd.f32 0.0, %v2078
      %2080 = vmatprep.mubr.bf16.mxu0 0
      %2081 = vmatmul.mubr.bf16.gmra.mxu0 %v1999
      %v2082 = vpop.f32.mrf.mxu0
      %v2083 = vadd.f32 0.0, %v2082
      %v2084 = vpop.f32.mrf.mxu0
      %v2085 = vadd.f32 0.0, %v2084
      %v2086 = vpop.f32.mrf.mxu0
      %v2087 = vadd.f32 0.0, %v2086
      %v2088 = vpop.f32.mrf.mxu0
      %v2089 = vadd.f32 0.0, %v2088
      %2090 = vmatprep.mubr.bf16.mxu0 0
      %2091 = vmatmul.mubr.bf16.gmra.mxu0 %v2002
      %v2092 = vpop.f32.mrf.mxu0
      %v2093 = vadd.f32 0.0, %v2092
      %v2094 = vpop.f32.mrf.mxu0
      %v2095 = vadd.f32 0.0, %v2094
      %v2096 = vpop.f32.mrf.mxu0
      %v2097 = vadd.f32 0.0, %v2096
      %v2098 = vpop.f32.mrf.mxu0
      %v2099 = vadd.f32 0.0, %v2098
      %2100 = vmatprep.mubr.bf16.mxu0 0
      %2101 = vmatmul.mubr.bf16.gmra.mxu0 %v2005
      %v2102 = vpop.f32.mrf.mxu0
      %v2103 = vadd.f32 0.0, %v2102
      %v2104 = vpop.f32.mrf.mxu0
      %v2105 = vadd.f32 0.0, %v2104
      %v2106 = vpop.f32.mrf.mxu0
      %v2107 = vadd.f32 0.0, %v2106
      %v2108 = vpop.f32.mrf.mxu0
      %v2109 = vadd.f32 0.0, %v2108
      %2110 = vmatprep.mubr.bf16.mxu0 0
      %2111 = vmatmul.mubr.bf16.gmra.mxu0 %v2008
      %v2112 = vpop.f32.mrf.mxu0
      %v2113 = vadd.f32 0.0, %v2112
      %v2114 = vpop.f32.mrf.mxu0
      %v2115 = vadd.f32 0.0, %v2114
      %v2116 = vpop.f32.mrf.mxu0
      %v2117 = vadd.f32 0.0, %v2116
      %v2118 = vpop.f32.mrf.mxu0
      %v2119 = vadd.f32 0.0, %v2118
      %2120 = vmatprep.mubr.bf16.mxu0 0
      %2121 = vmatmul.mubr.bf16.gmra.mxu0 %v2011
      %v2122 = vpop.f32.mrf.mxu0
      %v2123 = vadd.f32 0.0, %v2122
      %v2124 = vpop.f32.mrf.mxu0
      %v2125 = vadd.f32 0.0, %v2124
      %v2126 = vpop.f32.mrf.mxu0
      %v2127 = vadd.f32 0.0, %v2126
      %v2128 = vpop.f32.mrf.mxu0
      %v2129 = vadd.f32 0.0, %v2128
      %2130 = vmatprep.mubr.bf16.mxu0 0
      %2131 = vmatmul.mubr.bf16.gmra.mxu0 %v2014
      %v2132 = vpop.f32.mrf.mxu0
      %v2133 = vadd.f32 0.0, %v2132
      %v2134 = vpop.f32.mrf.mxu0
      %v2135 = vadd.f32 0.0, %v2134
      %v2136 = vpop.f32.mrf.mxu0
      %v2137 = vadd.f32 0.0, %v2136
      %v2138 = vpop.f32.mrf.mxu0
      %v2139 = vadd.f32 0.0, %v2138
      %2140 = vdwg.mxu0
      %2141 = vmatprep.subr.bf16.mxu0 0
      %2142 = vmatpush1.bf16.msra.mxu0 0
      %2143 = vmatprep.subr.bf16.mxu0 0
      %2144 = vmatpush1.bf16.msra.mxu0 0
      %2145 = vmatprep.subr.bf16.mxu0 0
      %2146 = vmatpush1.bf16.msra.mxu0 0
      %2147 = vmatprep.subr.bf16.mxu0 %v2026
      %2148 = vmatpush1.bf16.msra.mxu0 %v2023
      %2149 = vmatprep.subr.bf16.mxu0 %v1971
      %2150 = vmatpush1.bf16.msra.mxu0 %v1970
      %2151 = vmatprep.subr.bf16.mxu0 %v1967
      %2152 = vmatpush1.bf16.msra.mxu0 %v1966
      %2153 = vmatprep.subr.bf16.mxu0 %v1963
      %2154 = vmatpush1.bf16.msra.mxu0 %v1962
      %2155 = vmatprep.subr.bf16.mxu0 %v1959
      %2156 = vmatpush1.bf16.msra.mxu0 %v1958
      %2157 = vmatprep.subr.bf16.mxu0 0
      %2158 = vmatpush2.bf16.msra.mxu0 0
      %2159 = vmatprep.subr.bf16.mxu0 0
      %2160 = vmatpush2.bf16.msra.mxu0 0
      %2161 = vmatprep.subr.bf16.mxu0 0
      %2162 = vmatpush2.bf16.msra.mxu0 0
      %2163 = vmatprep.subr.bf16.mxu0 0
      %2164 = vmatpush2.bf16.msra.mxu0 0
      %2165 = vmatprep.subr.bf16.mxu0 0
      %2166 = vmatpush2.bf16.msra.mxu0 0
      %2167 = vmatprep.subr.bf16.mxu0 0
      %2168 = vmatpush2.bf16.msra.mxu0 0
      %2169 = vmatprep.subr.bf16.mxu0 0
      %2170 = vmatpush2.bf16.msra.mxu0 0
      %2171 = vmatprep.subr.bf16.mxu0 0
      %2172 = vmatpush2.bf16.msra.mxu0 0
      %2173 = vmatprep.mubr.bf16.mxu0 0
      %2174 = vmatmul.mubr.bf16.gmra.mxu0 %v1993
      %v2175 = vpop.f32.mrf.mxu0
      %v2176 = vadd.f32 0.0, %v2175
      %v2177 = vpop.f32.mrf.mxu0
      %v2178 = vadd.f32 0.0, %v2177
      %v2179 = vpop.f32.mrf.mxu0
      %v2180 = vadd.f32 0.0, %v2179
      %v2181 = vpop.f32.mrf.mxu0
      %v2182 = vadd.f32 0.0, %v2181
      %2183 = vmatprep.mubr.bf16.mxu0 0
      %2184 = vmatmul.mubr.bf16.gmra.mxu0 %v1996
      %v2185 = vpop.f32.mrf.mxu0
      %v2186 = vadd.f32 0.0, %v2185
      %v2187 = vpop.f32.mrf.mxu0
      %v2188 = vadd.f32 0.0, %v2187
      %v2189 = vpop.f32.mrf.mxu0
      %v2190 = vadd.f32 0.0, %v2189
      %v2191 = vpop.f32.mrf.mxu0
      %v2192 = vadd.f32 0.0, %v2191
      %2193 = vmatprep.mubr.bf16.mxu0 0
      %2194 = vmatmul.mubr.bf16.gmra.mxu0 %v1999
      %v2195 = vpop.f32.mrf.mxu0
      %v2196 = vadd.f32 0.0, %v2195
      %v2197 = vpop.f32.mrf.mxu0
      %v2198 = vadd.f32 0.0, %v2197
      %v2199 = vpop.f32.mrf.mxu0
      %v2200 = vadd.f32 0.0, %v2199
      %v2201 = vpop.f32.mrf.mxu0
      %v2202 = vadd.f32 0.0, %v2201
      %2203 = vmatprep.mubr.bf16.mxu0 0
      %2204 = vmatmul.mubr.bf16.gmra.mxu0 %v2002
      %v2205 = vpop.f32.mrf.mxu0
      %v2206 = vadd.f32 0.0, %v2205
      %v2207 = vpop.f32.mrf.mxu0
      %v2208 = vadd.f32 0.0, %v2207
      %v2209 = vpop.f32.mrf.mxu0
      %v2210 = vadd.f32 0.0, %v2209
      %v2211 = vpop.f32.mrf.mxu0
      %v2212 = vadd.f32 0.0, %v2211
      %2213 = vmatprep.mubr.bf16.mxu0 0
      %2214 = vmatmul.mubr.bf16.gmra.mxu0 %v2005
      %v2215 = vpop.f32.mrf.mxu0
      %v2216 = vadd.f32 0.0, %v2215
      %v2217 = vpop.f32.mrf.mxu0
      %v2218 = vadd.f32 0.0, %v2217
      %v2219 = vpop.f32.mrf.mxu0
      %v2220 = vadd.f32 0.0, %v2219
      %v2221 = vpop.f32.mrf.mxu0
      %v2222 = vadd.f32 0.0, %v2221
      %2223 = vmatprep.mubr.bf16.mxu0 0
      %2224 = vmatmul.mubr.bf16.gmra.mxu0 %v2008
      %v2225 = vpop.f32.mrf.mxu0
      %v2226 = vadd.f32 0.0, %v2225
      %v2227 = vpop.f32.mrf.mxu0
      %v2228 = vadd.f32 0.0, %v2227
      %v2229 = vpop.f32.mrf.mxu0
      %v2230 = vadd.f32 0.0, %v2229
      %v2231 = vpop.f32.mrf.mxu0
      %v2232 = vadd.f32 0.0, %v2231
      %2233 = vmatprep.mubr.bf16.mxu0 0
      %2234 = vmatmul.mubr.bf16.gmra.mxu0 %v2011
      %v2235 = vpop.f32.mrf.mxu0
      %v2236 = vadd.f32 0.0, %v2235
      %v2237 = vpop.f32.mrf.mxu0
      %v2238 = vadd.f32 0.0, %v2237
      %v2239 = vpop.f32.mrf.mxu0
      %v2240 = vadd.f32 0.0, %v2239
      %v2241 = vpop.f32.mrf.mxu0
      %v2242 = vadd.f32 0.0, %v2241
      %2243 = vmatprep.mubr.bf16.mxu0 0
      %2244 = vmatmul.mubr.bf16.gmra.mxu0 %v2014
      %v2245 = vpop.f32.mrf.mxu0
      %v2246 = vadd.f32 0.0, %v2245
      %v2247 = vpop.f32.mrf.mxu0
      %v2248 = vadd.f32 0.0, %v2247
      %v2249 = vpop.f32.mrf.mxu0
      %v2250 = vadd.f32 0.0, %v2249
      %v2251 = vpop.f32.mrf.mxu0
      %v2252 = vadd.f32 0.0, %v2251
      %2253 = vdwg.mxu0
      %v2254 = vadd.f32 %v1759, %v2063
      %v2255 = vadd.f32 %v1760, %v2065
      %v2256 = vadd.f32 %v1761, %v2176
      %v2257 = vadd.f32 %v1762, %v2178
      %v2258 = vadd.f32 %v1763, %v2067
      %v2259 = vadd.f32 %v1764, %v2069
      %v2260 = vadd.f32 %v1765, %v2180
      %v2261 = vadd.f32 %v1766, %v2182
      %v2262 = vadd.f32 %v1767, %v2073
      %v2263 = vadd.f32 %v1768, %v2075
      %v2264 = vadd.f32 %v1769, %v2186
      %v2265 = vadd.f32 %v1770, %v2188
      %v2266 = vadd.f32 %v1771, %v2077
      %v2267 = vadd.f32 %v1772, %v2079
      %v2268 = vadd.f32 %v1773, %v2190
      %v2269 = vadd.f32 %v1774, %v2192
      %v2270 = vadd.f32 %v1775, %v2083
      %v2271 = vadd.f32 %v1776, %v2085
      %v2272 = vadd.f32 %v1777, %v2196
      %v2273 = vadd.f32 %v1778, %v2198
      %v2274 = vadd.f32 %v1779, %v2087
      %v2275 = vadd.f32 %v1780, %v2089
      %v2276 = vadd.f32 %v1781, %v2200
      %v2277 = vadd.f32 %v1782, %v2202
      %v2278 = vadd.f32 %v1783, %v2093
      %v2279 = vadd.f32 %v1784, %v2095
      %v2280 = vadd.f32 %v1785, %v2206
      %v2281 = vadd.f32 %v1786, %v2208
      %v2282 = vadd.f32 %v1787, %v2097
      %v2283 = vadd.f32 %v1788, %v2099
      %v2284 = vadd.f32 %v1789, %v2210
      %v2285 = vadd.f32 %v1790, %v2212
      %v2286 = vadd.f32 %v1791, %v2103
      %v2287 = vadd.f32 %v1792, %v2105
      %v2288 = vadd.f32 %v1793, %v2216
      %v2289 = vadd.f32 %v1794, %v2218
      %v2290 = vadd.f32 %v1795, %v2107
      %v2291 = vadd.f32 %v1796, %v2109
      %v2292 = vadd.f32 %v1797, %v2220
      %v2293 = vadd.f32 %v1798, %v2222
      %v2294 = vadd.f32 %v1799, %v2113
      %v2295 = vadd.f32 %v1800, %v2115
      %v2296 = vadd.f32 %v1801, %v2226
      %v2297 = vadd.f32 %v1802, %v2228
      %v2298 = vadd.f32 %v1803, %v2117
      %v2299 = vadd.f32 %v1804, %v2119
      %v2300 = vadd.f32 %v1805, %v2230
      %v2301 = vadd.f32 %v1806, %v2232
      %v2302 = vadd.f32 %v1807, %v2123
      %v2303 = vadd.f32 %v1808, %v2125
      %v2304 = vadd.f32 %v1809, %v2236
      %v2305 = vadd.f32 %v1810, %v2238
      %v2306 = vadd.f32 %v1811, %v2127
      %v2307 = vadd.f32 %v1812, %v2129
      %v2308 = vadd.f32 %v1813, %v2240
      %v2309 = vadd.f32 %v1814, %v2242
      %v2310 = vadd.f32 %v1815, %v2133
      %v2311 = vadd.f32 %v1816, %v2135
      %v2312 = vadd.f32 %v1817, %v2246
      %v2313 = vadd.f32 %v1818, %v2248
      %v2314 = vadd.f32 %v1819, %v2137
      %v2315 = vadd.f32 %v1820, %v2139
      %v2316 = vadd.f32 %v1821, %v2250
      %v2317 = vadd.f32 %v1822, %v2252
      %v2318 = vld [vmem:[%s1826] sm:$0xf]
      %v2319 = vld [vmem:[%s1826 + $0x4] sm:$0xf]
      %v2320 = vld [vmem:[%s1826 + $0x8] sm:$0x1]
      %v2321 = vld [vmem:[%s1826 + $0xc] sm:$0xf]
      %v2322 = vld [vmem:[%s1826 + $0x10] sm:$0xf]
      %v2323 = vld [vmem:[%s1826 + $0x14] sm:$0x1]
      %v2324 = vld [vmem:[%s1826 + $0x18] sm:$0xf]
      %v2325 = vld [vmem:[%s1826 + $0x1c] sm:$0xf]
      %v2326 = vld [vmem:[%s1826 + $0x20] sm:$0x1]
      %v2327 = vld [vmem:[%s1826 + $0x24] sm:$0xf]
      %v2328 = vld [vmem:[%s1826 + $0x28] sm:$0xf]
      %v2329 = vld [vmem:[%s1826 + $0x2c] sm:$0x1]
      %v2330 = vld [vmem:[%s1826 + $0x30] sm:$0xf]
      %v2331 = vld [vmem:[%s1826 + $0x34] sm:$0xf]
      %v2332 = vld [vmem:[%s1826 + $0x38] sm:$0x1]
      %v2333 = vld [vmem:[%s1826 + $0x3c] sm:$0xf]
      %v2334 = vld [vmem:[%s1826 + $0x40] sm:$0xf]
      %v2335 = vld [vmem:[%s1826 + $0x44] sm:$0x1]
      %v2336 = vld [vmem:[%s1826 + $0x48] sm:$0xf]
      %v2337 = vld [vmem:[%s1826 + $0x4c] sm:$0xf]
      %v2338 = vld [vmem:[%s1826 + $0x50] sm:$0x1]
      %v2339 = vld [vmem:[%s1826 + $0x54] sm:$0xf]
      %v2340 = vld [vmem:[%s1826 + $0x58] sm:$0xf]
      %v2341 = vld [vmem:[%s1826 + $0x5c] sm:$0x1]
      %v2343 = vshrl.u32 %v2318, 16
      %v2345 = vrot.slane %v2343, 4
      %v2346 = vshll.u32 %v2318, 16
      %v2348 = vrot.slane %v2346, 5
      %v2349 = vor.u32 %v2345, %v2348
      %v2350 = vrot.slane %v2349, 4
      %v2352 = vshll.u32 %v2319, 16
      %v2354 = vrot.slane %v2352, 5
      %v2355 = vsel %vm299, %v2350, %v2354
      %v2356 = vshrl.u32 %v2319, 16
      %v2358 = vrot.slane %v2356, 4
      %v2359 = vor.u32 %v2358, %v2354
      %v2360 = vrot.slane %v2359, 4
      %v2362 = vshll.u32 %v2320, 16
      %v2364 = vrot.slane %v2362, 5
      %v2365 = vsel %vm299, %v2360, %v2364
      %v2367 = vshrl.u32 %v2321, 16
      %v2369 = vrot.slane %v2367, 4
      %v2370 = vshll.u32 %v2321, 16
      %v2372 = vrot.slane %v2370, 5
      %v2373 = vor.u32 %v2369, %v2372
      %v2374 = vrot.slane %v2373, 4
      %v2376 = vshll.u32 %v2322, 16
      %v2378 = vrot.slane %v2376, 5
      %v2379 = vsel %vm299, %v2374, %v2378
      %v2380 = vshrl.u32 %v2322, 16
      %v2382 = vrot.slane %v2380, 4
      %v2383 = vor.u32 %v2382, %v2378
      %v2384 = vrot.slane %v2383, 4
      %v2386 = vshll.u32 %v2323, 16
      %v2388 = vrot.slane %v2386, 5
      %v2389 = vsel %vm299, %v2384, %v2388
      %v2391 = vshrl.u32 %v2324, 16
      %v2393 = vrot.slane %v2391, 4
      %v2394 = vshll.u32 %v2324, 16
      %v2396 = vrot.slane %v2394, 5
      %v2397 = vor.u32 %v2393, %v2396
      %v2398 = vrot.slane %v2397, 4
      %v2400 = vshll.u32 %v2325, 16
      %v2402 = vrot.slane %v2400, 5
      %v2403 = vsel %vm299, %v2398, %v2402
      %v2404 = vshrl.u32 %v2325, 16
      %v2406 = vrot.slane %v2404, 4
      %v2407 = vor.u32 %v2406, %v2402
      %v2408 = vrot.slane %v2407, 4
      %v2410 = vshll.u32 %v2326, 16
      %v2412 = vrot.slane %v2410, 5
      %v2413 = vsel %vm299, %v2408, %v2412
      %v2415 = vshrl.u32 %v2327, 16
      %v2417 = vrot.slane %v2415, 4
      %v2418 = vshll.u32 %v2327, 16
      %v2420 = vrot.slane %v2418, 5
      %v2421 = vor.u32 %v2417, %v2420
      %v2422 = vrot.slane %v2421, 4
      %v2424 = vshll.u32 %v2328, 16
      %v2426 = vrot.slane %v2424, 5
      %v2427 = vsel %vm299, %v2422, %v2426
      %v2428 = vshrl.u32 %v2328, 16
      %v2430 = vrot.slane %v2428, 4
      %v2431 = vor.u32 %v2430, %v2426
      %v2432 = vrot.slane %v2431, 4
      %v2434 = vshll.u32 %v2329, 16
      %v2436 = vrot.slane %v2434, 5
      %v2437 = vsel %vm299, %v2432, %v2436
      %v2439 = vshrl.u32 %v2330, 16
      %v2441 = vrot.slane %v2439, 4
      %v2442 = vshll.u32 %v2330, 16
      %v2444 = vrot.slane %v2442, 5
      %v2445 = vor.u32 %v2441, %v2444
      %v2446 = vrot.slane %v2445, 4
      %v2448 = vshll.u32 %v2331, 16
      %v2450 = vrot.slane %v2448, 5
      %v2451 = vsel %vm299, %v2446, %v2450
      %v2452 = vshrl.u32 %v2331, 16
      %v2454 = vrot.slane %v2452, 4
      %v2455 = vor.u32 %v2454, %v2450
      %v2456 = vrot.slane %v2455, 4
      %v2458 = vshll.u32 %v2332, 16
      %v2460 = vrot.slane %v2458, 5
      %v2461 = vsel %vm299, %v2456, %v2460
      %v2463 = vshrl.u32 %v2333, 16
      %v2465 = vrot.slane %v2463, 4
      %v2466 = vshll.u32 %v2333, 16
      %v2468 = vrot.slane %v2466, 5
      %v2469 = vor.u32 %v2465, %v2468
      %v2470 = vrot.slane %v2469, 4
      %v2472 = vshll.u32 %v2334, 16
      %v2474 = vrot.slane %v2472, 5
      %v2475 = vsel %vm299, %v2470, %v2474
      %v2476 = vshrl.u32 %v2334, 16
      %v2478 = vrot.slane %v2476, 4
      %v2479 = vor.u32 %v2478, %v2474
      %v2480 = vrot.slane %v2479, 4
      %v2482 = vshll.u32 %v2335, 16
      %v2484 = vrot.slane %v2482, 5
      %v2485 = vsel %vm299, %v2480, %v2484
      %v2487 = vshrl.u32 %v2336, 16
      %v2489 = vrot.slane %v2487, 4
      %v2490 = vshll.u32 %v2336, 16
      %v2492 = vrot.slane %v2490, 5
      %v2493 = vor.u32 %v2489, %v2492
      %v2494 = vrot.slane %v2493, 4
      %v2496 = vshll.u32 %v2337, 16
      %v2498 = vrot.slane %v2496, 5
      %v2499 = vsel %vm299, %v2494, %v2498
      %v2500 = vshrl.u32 %v2337, 16
      %v2502 = vrot.slane %v2500, 4
      %v2503 = vor.u32 %v2502, %v2498
      %v2504 = vrot.slane %v2503, 4
      %v2506 = vshll.u32 %v2338, 16
      %v2508 = vrot.slane %v2506, 5
      %v2509 = vsel %vm299, %v2504, %v2508
      %v2511 = vshrl.u32 %v2339, 16
      %v2513 = vrot.slane %v2511, 4
      %v2514 = vshll.u32 %v2339, 16
      %v2516 = vrot.slane %v2514, 5
      %v2517 = vor.u32 %v2513, %v2516
      %v2518 = vrot.slane %v2517, 4
      %v2520 = vshll.u32 %v2340, 16
      %v2522 = vrot.slane %v2520, 5
      %v2523 = vsel %vm299, %v2518, %v2522
      %v2524 = vshrl.u32 %v2340, 16
      %v2526 = vrot.slane %v2524, 4
      %v2527 = vor.u32 %v2526, %v2522
      %v2528 = vrot.slane %v2527, 4
      %v2530 = vshll.u32 %v2341, 16
      %v2532 = vrot.slane %v2530, 5
      %v2533 = vsel %vm299, %v2528, %v2532
      %s2534 = scalar_lea.vmem %s1, 576
      %v2535 = vld [vmem:[%s2534] sm:$0xff]
      %v2536 = vld [vmem:[%s2534 + $0x8] sm:$0xff]
      %v2537 = vld [vmem:[%s2534 + $0x10] sm:$0xff]
      %v2538 = vld [vmem:[%s2534 + $0x18] sm:$0xff]
      %v2539 = vld [vmem:[%s2534 + $0x20] sm:$0xff]
      %v2540 = vld [vmem:[%s2534 + $0x28] sm:$0xff]
      %v2541 = vld [vmem:[%s2534 + $0x30] sm:$0xff]
      %v2542 = vld [vmem:[%s2534 + $0x38] sm:$0xff]
      %v2543 = vld [vmem:[%s2534 + $0x40] sm:$0xff]
      %v2544 = vld [vmem:[%s2534 + $0x48] sm:$0xff]
      %v2545 = vld [vmem:[%s2534 + $0x50] sm:$0xff]
      %v2546 = vld [vmem:[%s2534 + $0x58] sm:$0xff]
      %v2547 = vld [vmem:[%s2534 + $0x60] sm:$0xff]
      %v2548 = vld [vmem:[%s2534 + $0x68] sm:$0xff]
      %v2549 = vld [vmem:[%s2534 + $0x70] sm:$0xff]
      %v2550 = vld [vmem:[%s2534 + $0x78] sm:$0xff]
      %v2551 = vld [vmem:[%s2534 + $0x80] sm:$0xff]
      %v2552 = vld [vmem:[%s2534 + $0x88] sm:$0xff]
      %v2553 = vunpack.c.l.b16 %v2355
      %v2554 = vunpack.c.l.b16 %v2365
      %v2555 = vunpack.c.l.b16 %v2379
      %v2556 = vunpack.c.l.b16 %v2389
      %v2557 = vunpack.c.l.b16 %v2403
      %v2558 = vunpack.c.l.b16 %v2413
      %v2559 = vunpack.c.l.b16 %v2427
      %v2560 = vunpack.c.l.b16 %v2437
      %v2561 = vunpack.c.l.b16 %v2451
      %v2562 = vunpack.c.l.b16 %v2461
      %v2563 = vunpack.c.l.b16 %v2475
      %v2564 = vunpack.c.l.b16 %v2485
      %v2565 = vunpack.c.l.b16 %v2499
      %v2566 = vunpack.c.l.b16 %v2509
      %v2567 = vunpack.c.l.b16 %v2523
      %v2568 = vunpack.c.l.b16 %v2533
      %v2569 = vpack.c.b16 %v2554, %v2553
      %v2570 = vpack.c.b16 %v2556, %v2555
      %v2571 = vpack.c.b16 %v2558, %v2557
      %v2572 = vpack.c.b16 %v2560, %v2559
      %v2573 = vpack.c.b16 %v2562, %v2561
      %v2574 = vpack.c.b16 %v2564, %v2563
      %v2575 = vpack.c.b16 %v2566, %v2565
      %v2576 = vpack.c.b16 %v2568, %v2567
      %v2595 = vunpack.c.l.b16 %v2535
      %v2596 = vunpack.c.h.b16 %v2535
      %v2597 = vunpack.c.l.b16 %v2536
      %v2598 = vunpack.c.h.b16 %v2536
      %v2599 = vunpack.c.l.b16 %v2537
      %v2600 = vunpack.c.h.b16 %v2537
      %v2601 = vunpack.c.l.b16 %v2538
      %v2602 = vunpack.c.h.b16 %v2538
      %v2603 = vunpack.c.l.b16 %v2539
      %v2604 = vunpack.c.h.b16 %v2539
      %v2605 = vunpack.c.l.b16 %v2540
      %v2606 = vunpack.c.h.b16 %v2540
      %v2607 = vunpack.c.l.b16 %v2541
      %v2608 = vunpack.c.h.b16 %v2541
      %v2609 = vunpack.c.l.b16 %v2542
      %v2610 = vunpack.c.h.b16 %v2542
      %v2611 = vunpack.c.l.b16 %v2543
      %v2612 = vunpack.c.h.b16 %v2543
      %v2613 = vunpack.c.l.b16 %v2544
      %v2614 = vunpack.c.h.b16 %v2544
      %v2615 = vunpack.c.l.b16 %v2545
      %v2616 = vunpack.c.h.b16 %v2545
      %v2617 = vunpack.c.l.b16 %v2546
      %v2618 = vunpack.c.h.b16 %v2546
      %v2619 = vunpack.c.l.b16 %v2547
      %v2620 = vunpack.c.h.b16 %v2547
      %v2621 = vunpack.c.l.b16 %v2548
      %v2622 = vunpack.c.h.b16 %v2548
      %v2623 = vunpack.c.l.b16 %v2549
      %v2624 = vunpack.c.h.b16 %v2549
      %v2625 = vunpack.c.l.b16 %v2550
      %v2626 = vunpack.c.h.b16 %v2550
      %v2627 = vunpack.c.l.b16 %v2551
      %v2628 = vunpack.c.h.b16 %v2551
      %v2629 = vunpack.c.l.b16 %v2552
      %v2630 = vunpack.c.h.b16 %v2552
      %v2631 = vpack.c.b16 %v2599, %v2595
      %v2632 = vpack.c.b16 %v2600, %v2596
      %v2633 = vpack.c.b16 %v2601, %v2597
      %v2634 = vpack.c.b16 %v2602, %v2598
      %v2635 = vpack.c.b16 %v2607, %v2603
      %v2636 = vpack.c.b16 %v2608, %v2604
      %v2637 = vpack.c.b16 %v2609, %v2605
      %v2638 = vpack.c.b16 %v2610, %v2606
      %v2639 = vpack.c.b16 %v2615, %v2611
      %v2640 = vpack.c.b16 %v2616, %v2612
      %v2641 = vpack.c.b16 %v2617, %v2613
      %v2642 = vpack.c.b16 %v2618, %v2614
      %v2643 = vpack.c.b16 %v2623, %v2619
      %v2644 = vpack.c.b16 %v2624, %v2620
      %v2645 = vpack.c.b16 %v2625, %v2621
      %v2646 = vpack.c.b16 %v2626, %v2622
      %v2647 = vpack.c.b16 %v2627, %v2627
      %v2648 = vpack.c.b16 %v2628, %v2628
      %v2649 = vpack.c.b16 %v2629, %v2629
      %v2650 = vpack.c.b16 %v2630, %v2630
      %v2668 = vsel %vm625, %v2569, 0
      %v2671 = vsel %vm625, %v2570, 0
      %v2674 = vsel %vm625, %v2571, 0
      %v2677 = vsel %vm625, %v2572, 0
      %v2680 = vsel %vm625, %v2573, 0
      %v2683 = vsel %vm625, %v2574, 0
      %v2686 = vsel %vm625, %v2575, 0
      %v2689 = vsel %vm625, %v2576, 0
      %v2692 = vsel %vm650, %v2647, 0
      %v2695 = vsel %vm650, %v2648, 0
      %v2698 = vsel %vm650, %v2649, 0
      %v2701 = vsel %vm650, %v2650, 0
      %2703 = vmatprep.subr.bf16.mxu0 0
      %2704 = vmatpush1.bf16.msra.mxu0 0
      %2705 = vmatprep.subr.bf16.mxu0 0
      %2706 = vmatpush1.bf16.msra.mxu0 0
      %2707 = vmatprep.subr.bf16.mxu0 0
      %2708 = vmatpush1.bf16.msra.mxu0 0
      %2709 = vmatprep.subr.bf16.mxu0 %v2695
      %2710 = vmatpush1.bf16.msra.mxu0 %v2692
      %2711 = vmatprep.subr.bf16.mxu0 %v2644
      %2712 = vmatpush1.bf16.msra.mxu0 %v2643
      %2713 = vmatprep.subr.bf16.mxu0 %v2640
      %2714 = vmatpush1.bf16.msra.mxu0 %v2639
      %2715 = vmatprep.subr.bf16.mxu0 %v2636
      %2716 = vmatpush1.bf16.msra.mxu0 %v2635
      %2717 = vmatprep.subr.bf16.mxu0 %v2632
      %2718 = vmatpush1.bf16.msra.mxu0 %v2631
      %2719 = vmatprep.subr.bf16.mxu0 0
      %2720 = vmatpush2.bf16.msra.mxu0 0
      %2721 = vmatprep.subr.bf16.mxu0 0
      %2722 = vmatpush2.bf16.msra.mxu0 0
      %2723 = vmatprep.subr.bf16.mxu0 0
      %2724 = vmatpush2.bf16.msra.mxu0 0
      %2725 = vmatprep.subr.bf16.mxu0 0
      %2726 = vmatpush2.bf16.msra.mxu0 0
      %2727 = vmatprep.subr.bf16.mxu0 0
      %2728 = vmatpush2.bf16.msra.mxu0 0
      %2729 = vmatprep.subr.bf16.mxu0 0
      %2730 = vmatpush2.bf16.msra.mxu0 0
      %2731 = vmatprep.subr.bf16.mxu0 0
      %2732 = vmatpush2.bf16.msra.mxu0 0
      %2733 = vmatprep.subr.bf16.mxu0 0
      %2734 = vmatpush2.bf16.msra.mxu0 0
      %2735 = vmatprep.mubr.bf16.mxu0 0
      %2736 = vmatmul.mubr.bf16.gmra.mxu0 %v2668
      %v2737 = vpop.f32.mrf.mxu0
      %v2738 = vadd.f32 0.0, %v2737
      %v2739 = vpop.f32.mrf.mxu0
      %v2740 = vadd.f32 0.0, %v2739
      %v2741 = vpop.f32.mrf.mxu0
      %v2742 = vadd.f32 0.0, %v2741
      %v2743 = vpop.f32.mrf.mxu0
      %v2744 = vadd.f32 0.0, %v2743
      %2745 = vmatprep.mubr.bf16.mxu0 0
      %2746 = vmatmul.mubr.bf16.gmra.mxu0 %v2671
      %v2747 = vpop.f32.mrf.mxu0
      %v2748 = vadd.f32 0.0, %v2747
      %v2749 = vpop.f32.mrf.mxu0
      %v2750 = vadd.f32 0.0, %v2749
      %v2751 = vpop.f32.mrf.mxu0
      %v2752 = vadd.f32 0.0, %v2751
      %v2753 = vpop.f32.mrf.mxu0
      %v2754 = vadd.f32 0.0, %v2753
      %2755 = vmatprep.mubr.bf16.mxu0 0
      %2756 = vmatmul.mubr.bf16.gmra.mxu0 %v2674
      %v2757 = vpop.f32.mrf.mxu0
      %v2758 = vadd.f32 0.0, %v2757
      %v2759 = vpop.f32.mrf.mxu0
      %v2760 = vadd.f32 0.0, %v2759
      %v2761 = vpop.f32.mrf.mxu0
      %v2762 = vadd.f32 0.0, %v2761
      %v2763 = vpop.f32.mrf.mxu0
      %v2764 = vadd.f32 0.0, %v2763
      %2765 = vmatprep.mubr.bf16.mxu0 0
      %2766 = vmatmul.mubr.bf16.gmra.mxu0 %v2677
      %v2767 = vpop.f32.mrf.mxu0
      %v2768 = vadd.f32 0.0, %v2767
      %v2769 = vpop.f32.mrf.mxu0
      %v2770 = vadd.f32 0.0, %v2769
      %v2771 = vpop.f32.mrf.mxu0
      %v2772 = vadd.f32 0.0, %v2771
      %v2773 = vpop.f32.mrf.mxu0
      %v2774 = vadd.f32 0.0, %v2773
      %2775 = vmatprep.mubr.bf16.mxu0 0
      %2776 = vmatmul.mubr.bf16.gmra.mxu0 %v2680
      %v2777 = vpop.f32.mrf.mxu0
      %v2778 = vadd.f32 0.0, %v2777
      %v2779 = vpop.f32.mrf.mxu0
      %v2780 = vadd.f32 0.0, %v2779
      %v2781 = vpop.f32.mrf.mxu0
      %v2782 = vadd.f32 0.0, %v2781
      %v2783 = vpop.f32.mrf.mxu0
      %v2784 = vadd.f32 0.0, %v2783
      %2785 = vmatprep.mubr.bf16.mxu0 0
      %2786 = vmatmul.mubr.bf16.gmra.mxu0 %v2683
      %v2787 = vpop.f32.mrf.mxu0
      %v2788 = vadd.f32 0.0, %v2787
      %v2789 = vpop.f32.mrf.mxu0
      %v2790 = vadd.f32 0.0, %v2789
      %v2791 = vpop.f32.mrf.mxu0
      %v2792 = vadd.f32 0.0, %v2791
      %v2793 = vpop.f32.mrf.mxu0
      %v2794 = vadd.f32 0.0, %v2793
      %2795 = vmatprep.mubr.bf16.mxu0 0
      %2796 = vmatmul.mubr.bf16.gmra.mxu0 %v2686
      %v2797 = vpop.f32.mrf.mxu0
      %v2798 = vadd.f32 0.0, %v2797
      %v2799 = vpop.f32.mrf.mxu0
      %v2800 = vadd.f32 0.0, %v2799
      %v2801 = vpop.f32.mrf.mxu0
      %v2802 = vadd.f32 0.0, %v2801
      %v2803 = vpop.f32.mrf.mxu0
      %v2804 = vadd.f32 0.0, %v2803
      %2805 = vmatprep.mubr.bf16.mxu0 0
      %2806 = vmatmul.mubr.bf16.gmra.mxu0 %v2689
      %v2807 = vpop.f32.mrf.mxu0
      %v2808 = vadd.f32 0.0, %v2807
      %v2809 = vpop.f32.mrf.mxu0
      %v2810 = vadd.f32 0.0, %v2809
      %v2811 = vpop.f32.mrf.mxu0
      %v2812 = vadd.f32 0.0, %v2811
      %v2813 = vpop.f32.mrf.mxu0
      %v2814 = vadd.f32 0.0, %v2813
      %2815 = vdwg.mxu0
      %2816 = vmatprep.subr.bf16.mxu0 0
      %2817 = vmatpush1.bf16.msra.mxu0 0
      %2818 = vmatprep.subr.bf16.mxu0 0
      %2819 = vmatpush1.bf16.msra.mxu0 0
      %2820 = vmatprep.subr.bf16.mxu0 0
      %2821 = vmatpush1.bf16.msra.mxu0 0
      %2822 = vmatprep.subr.bf16.mxu0 %v2701
      %2823 = vmatpush1.bf16.msra.mxu0 %v2698
      %2824 = vmatprep.subr.bf16.mxu0 %v2646
      %2825 = vmatpush1.bf16.msra.mxu0 %v2645
      %2826 = vmatprep.subr.bf16.mxu0 %v2642
      %2827 = vmatpush1.bf16.msra.mxu0 %v2641
      %2828 = vmatprep.subr.bf16.mxu0 %v2638
      %2829 = vmatpush1.bf16.msra.mxu0 %v2637
      %2830 = vmatprep.subr.bf16.mxu0 %v2634
      %2831 = vmatpush1.bf16.msra.mxu0 %v2633
      %2832 = vmatprep.subr.bf16.mxu0 0
      %2833 = vmatpush2.bf16.msra.mxu0 0
      %2834 = vmatprep.subr.bf16.mxu0 0
      %2835 = vmatpush2.bf16.msra.mxu0 0
      %2836 = vmatprep.subr.bf16.mxu0 0
      %2837 = vmatpush2.bf16.msra.mxu0 0
      %2838 = vmatprep.subr.bf16.mxu0 0
      %2839 = vmatpush2.bf16.msra.mxu0 0
      %2840 = vmatprep.subr.bf16.mxu0 0
      %2841 = vmatpush2.bf16.msra.mxu0 0
      %2842 = vmatprep.subr.bf16.mxu0 0
      %2843 = vmatpush2.bf16.msra.mxu0 0
      %2844 = vmatprep.subr.bf16.mxu0 0
      %2845 = vmatpush2.bf16.msra.mxu0 0
      %2846 = vmatprep.subr.bf16.mxu0 0
      %2847 = vmatpush2.bf16.msra.mxu0 0
      %2848 = vmatprep.mubr.bf16.mxu0 0
      %2849 = vmatmul.mubr.bf16.gmra.mxu0 %v2668
      %v2850 = vpop.f32.mrf.mxu0
      %v2851 = vadd.f32 0.0, %v2850
      %v2852 = vpop.f32.mrf.mxu0
      %v2853 = vadd.f32 0.0, %v2852
      %v2854 = vpop.f32.mrf.mxu0
      %v2855 = vadd.f32 0.0, %v2854
      %v2856 = vpop.f32.mrf.mxu0
      %v2857 = vadd.f32 0.0, %v2856
      %2858 = vmatprep.mubr.bf16.mxu0 0
      %2859 = vmatmul.mubr.bf16.gmra.mxu0 %v2671
      %v2860 = vpop.f32.mrf.mxu0
      %v2861 = vadd.f32 0.0, %v2860
      %v2862 = vpop.f32.mrf.mxu0
      %v2863 = vadd.f32 0.0, %v2862
      %v2864 = vpop.f32.mrf.mxu0
      %v2865 = vadd.f32 0.0, %v2864
      %v2866 = vpop.f32.mrf.mxu0
      %v2867 = vadd.f32 0.0, %v2866
      %2868 = vmatprep.mubr.bf16.mxu0 0
      %2869 = vmatmul.mubr.bf16.gmra.mxu0 %v2674
      %v2870 = vpop.f32.mrf.mxu0
      %v2871 = vadd.f32 0.0, %v2870
      %v2872 = vpop.f32.mrf.mxu0
      %v2873 = vadd.f32 0.0, %v2872
      %v2874 = vpop.f32.mrf.mxu0
      %v2875 = vadd.f32 0.0, %v2874
      %v2876 = vpop.f32.mrf.mxu0
      %v2877 = vadd.f32 0.0, %v2876
      %2878 = vmatprep.mubr.bf16.mxu0 0
      %2879 = vmatmul.mubr.bf16.gmra.mxu0 %v2677
      %v2880 = vpop.f32.mrf.mxu0
      %v2881 = vadd.f32 0.0, %v2880
      %v2882 = vpop.f32.mrf.mxu0
      %v2883 = vadd.f32 0.0, %v2882
      %v2884 = vpop.f32.mrf.mxu0
      %v2885 = vadd.f32 0.0, %v2884
      %v2886 = vpop.f32.mrf.mxu0
      %v2887 = vadd.f32 0.0, %v2886
      %2888 = vmatprep.mubr.bf16.mxu0 0
      %2889 = vmatmul.mubr.bf16.gmra.mxu0 %v2680
      %v2890 = vpop.f32.mrf.mxu0
      %v2891 = vadd.f32 0.0, %v2890
      %v2892 = vpop.f32.mrf.mxu0
      %v2893 = vadd.f32 0.0, %v2892
      %v2894 = vpop.f32.mrf.mxu0
      %v2895 = vadd.f32 0.0, %v2894
      %v2896 = vpop.f32.mrf.mxu0
      %v2897 = vadd.f32 0.0, %v2896
      %2898 = vmatprep.mubr.bf16.mxu0 0
      %2899 = vmatmul.mubr.bf16.gmra.mxu0 %v2683
      %v2900 = vpop.f32.mrf.mxu0
      %v2901 = vadd.f32 0.0, %v2900
      %v2902 = vpop.f32.mrf.mxu0
      %v2903 = vadd.f32 0.0, %v2902
      %v2904 = vpop.f32.mrf.mxu0
      %v2905 = vadd.f32 0.0, %v2904
      %v2906 = vpop.f32.mrf.mxu0
      %v2907 = vadd.f32 0.0, %v2906
      %2908 = vmatprep.mubr.bf16.mxu0 0
      %2909 = vmatmul.mubr.bf16.gmra.mxu0 %v2686
      %v2910 = vpop.f32.mrf.mxu0
      %v2911 = vadd.f32 0.0, %v2910
      %v2912 = vpop.f32.mrf.mxu0
      %v2913 = vadd.f32 0.0, %v2912
      %v2914 = vpop.f32.mrf.mxu0
      %v2915 = vadd.f32 0.0, %v2914
      %v2916 = vpop.f32.mrf.mxu0
      %v2917 = vadd.f32 0.0, %v2916
      %2918 = vmatprep.mubr.bf16.mxu0 0
      %2919 = vmatmul.mubr.bf16.gmra.mxu0 %v2689
      %v2920 = vpop.f32.mrf.mxu0
      %v2921 = vadd.f32 0.0, %v2920
      %v2922 = vpop.f32.mrf.mxu0
      %v2923 = vadd.f32 0.0, %v2922
      %v2924 = vpop.f32.mrf.mxu0
      %v2925 = vadd.f32 0.0, %v2924
      %v2926 = vpop.f32.mrf.mxu0
      %v2927 = vadd.f32 0.0, %v2926
      %2928 = vdwg.mxu0
      %v2929 = vadd.f32 %v2254, %v2738
      %v2930 = vadd.f32 %v2255, %v2740
      %v2931 = vadd.f32 %v2256, %v2851
      %v2932 = vadd.f32 %v2257, %v2853
      %v2933 = vadd.f32 %v2258, %v2742
      %v2934 = vadd.f32 %v2259, %v2744
      %v2935 = vadd.f32 %v2260, %v2855
      %v2936 = vadd.f32 %v2261, %v2857
      %v2937 = vadd.f32 %v2262, %v2748
      %v2938 = vadd.f32 %v2263, %v2750
      %v2939 = vadd.f32 %v2264, %v2861
      %v2940 = vadd.f32 %v2265, %v2863
      %v2941 = vadd.f32 %v2266, %v2752
      %v2942 = vadd.f32 %v2267, %v2754
      %v2943 = vadd.f32 %v2268, %v2865
      %v2944 = vadd.f32 %v2269, %v2867
      %v2945 = vadd.f32 %v2270, %v2758
      %v2946 = vadd.f32 %v2271, %v2760
      %v2947 = vadd.f32 %v2272, %v2871
      %v2948 = vadd.f32 %v2273, %v2873
      %v2949 = vadd.f32 %v2274, %v2762
      %v2950 = vadd.f32 %v2275, %v2764
      %v2951 = vadd.f32 %v2276, %v2875
      %v2952 = vadd.f32 %v2277, %v2877
      %v2953 = vadd.f32 %v2278, %v2768
      %v2954 = vadd.f32 %v2279, %v2770
      %v2955 = vadd.f32 %v2280, %v2881
      %v2956 = vadd.f32 %v2281, %v2883
      %v2957 = vadd.f32 %v2282, %v2772
      %v2958 = vadd.f32 %v2283, %v2774
      %v2959 = vadd.f32 %v2284, %v2885
      %v2960 = vadd.f32 %v2285, %v2887
      %v2961 = vadd.f32 %v2286, %v2778
      %v2962 = vadd.f32 %v2287, %v2780
      %v2963 = vadd.f32 %v2288, %v2891
      %v2964 = vadd.f32 %v2289, %v2893
      %v2965 = vadd.f32 %v2290, %v2782
      %v2966 = vadd.f32 %v2291, %v2784
      %v2967 = vadd.f32 %v2292, %v2895
      %v2968 = vadd.f32 %v2293, %v2897
      %v2969 = vadd.f32 %v2294, %v2788
      %v2970 = vadd.f32 %v2295, %v2790
      %v2971 = vadd.f32 %v2296, %v2901
      %v2972 = vadd.f32 %v2297, %v2903
      %v2973 = vadd.f32 %v2298, %v2792
      %v2974 = vadd.f32 %v2299, %v2794
      %v2975 = vadd.f32 %v2300, %v2905
      %v2976 = vadd.f32 %v2301, %v2907
      %v2977 = vadd.f32 %v2302, %v2798
      %v2978 = vadd.f32 %v2303, %v2800
      %v2979 = vadd.f32 %v2304, %v2911
      %v2980 = vadd.f32 %v2305, %v2913
      %v2981 = vadd.f32 %v2306, %v2802
      %v2982 = vadd.f32 %v2307, %v2804
      %v2983 = vadd.f32 %v2308, %v2915
      %v2984 = vadd.f32 %v2309, %v2917
      %v2985 = vadd.f32 %v2310, %v2808
      %v2986 = vadd.f32 %v2311, %v2810
      %v2987 = vadd.f32 %v2312, %v2921
      %v2988 = vadd.f32 %v2313, %v2923
      %v2989 = vadd.f32 %v2314, %v2812
      %v2990 = vadd.f32 %v2315, %v2814
      %v2991 = vadd.f32 %v2316, %v2925
      %v2992 = vadd.f32 %v2317, %v2927
      %v2993 = vld [vmem:[%s1826] sm:$0xe]
      %v2994 = vld [vmem:[%s1826 + $0xc] sm:$0xe]
      %v2995 = vld [vmem:[%s1826 + $0x18] sm:$0xe]
      %v2996 = vld [vmem:[%s1826 + $0x24] sm:$0xe]
      %v2997 = vld [vmem:[%s1826 + $0x30] sm:$0xe]
      %v2998 = vld [vmem:[%s1826 + $0x3c] sm:$0xe]
      %v2999 = vld [vmem:[%s1826 + $0x48] sm:$0xe]
      %v3000 = vld [vmem:[%s1826 + $0x54] sm:$0xe]
      %v3025 = vrot.slane %v2993, 5
      %v3026 = vrot.slane %v3025, 4
      %v3027 = vrot.slane %v2319, 5
      %v3028 = vsel %vm1307, %v3026, %v3027
      %v3029 = vrot.slane %v3027, 4
      %v3030 = vrot.slane %v2320, 5
      %v3031 = vsel %vm1307, %v3029, %v3030
      %v3032 = vrot.slane %v2994, 5
      %v3033 = vrot.slane %v3032, 4
      %v3034 = vrot.slane %v2322, 5
      %v3035 = vsel %vm1307, %v3033, %v3034
      %v3036 = vrot.slane %v3034, 4
      %v3037 = vrot.slane %v2323, 5
      %v3038 = vsel %vm1307, %v3036, %v3037
      %v3039 = vrot.slane %v2995, 5
      %v3040 = vrot.slane %v3039, 4
      %v3041 = vrot.slane %v2325, 5
      %v3042 = vsel %vm1307, %v3040, %v3041
      %v3043 = vrot.slane %v3041, 4
      %v3044 = vrot.slane %v2326, 5
      %v3045 = vsel %vm1307, %v3043, %v3044
      %v3046 = vrot.slane %v2996, 5
      %v3047 = vrot.slane %v3046, 4
      %v3048 = vrot.slane %v2328, 5
      %v3049 = vsel %vm1307, %v3047, %v3048
      %v3050 = vrot.slane %v3048, 4
      %v3051 = vrot.slane %v2329, 5
      %v3052 = vsel %vm1307, %v3050, %v3051
      %v3053 = vrot.slane %v2997, 5
      %v3054 = vrot.slane %v3053, 4
      %v3055 = vrot.slane %v2331, 5
      %v3056 = vsel %vm1307, %v3054, %v3055
      %v3057 = vrot.slane %v3055, 4
      %v3058 = vrot.slane %v2332, 5
      %v3059 = vsel %vm1307, %v3057, %v3058
      %v3060 = vrot.slane %v2998, 5
      %v3061 = vrot.slane %v3060, 4
      %v3062 = vrot.slane %v2334, 5
      %v3063 = vsel %vm1307, %v3061, %v3062
      %v3064 = vrot.slane %v3062, 4
      %v3065 = vrot.slane %v2335, 5
      %v3066 = vsel %vm1307, %v3064, %v3065
      %v3067 = vrot.slane %v2999, 5
      %v3068 = vrot.slane %v3067, 4
      %v3069 = vrot.slane %v2337, 5
      %v3070 = vsel %vm1307, %v3068, %v3069
      %v3071 = vrot.slane %v3069, 4
      %v3072 = vrot.slane %v2338, 5
      %v3073 = vsel %vm1307, %v3071, %v3072
      %v3074 = vrot.slane %v3000, 5
      %v3075 = vrot.slane %v3074, 4
      %v3076 = vrot.slane %v2340, 5
      %v3077 = vsel %vm1307, %v3075, %v3076
      %v3078 = vrot.slane %v3076, 4
      %v3079 = vrot.slane %v2341, 5
      %v3080 = vsel %vm1307, %v3078, %v3079
      %s3081 = scalar_lea.vmem %s1, 720
      %v3082 = vld [vmem:[%s3081] sm:$0xff]
      %v3083 = vld [vmem:[%s3081 + $0x8] sm:$0xff]
      %v3084 = vld [vmem:[%s3081 + $0x10] sm:$0xff]
      %v3085 = vld [vmem:[%s3081 + $0x18] sm:$0xff]
      %v3086 = vld [vmem:[%s3081 + $0x20] sm:$0xff]
      %v3087 = vld [vmem:[%s3081 + $0x28] sm:$0xff]
      %v3088 = vld [vmem:[%s3081 + $0x30] sm:$0xff]
      %v3089 = vld [vmem:[%s3081 + $0x38] sm:$0xff]
      %v3090 = vld [vmem:[%s3081 + $0x40] sm:$0xff]
      %v3091 = vld [vmem:[%s3081 + $0x48] sm:$0xff]
      %v3092 = vld [vmem:[%s3081 + $0x50] sm:$0xff]
      %v3093 = vld [vmem:[%s3081 + $0x58] sm:$0xff]
      %v3094 = vld [vmem:[%s3081 + $0x60] sm:$0xff]
      %v3095 = vld [vmem:[%s3081 + $0x68] sm:$0xff]
      %v3096 = vld [vmem:[%s3081 + $0x70] sm:$0xff]
      %v3097 = vld [vmem:[%s3081 + $0x78] sm:$0xff]
      %v3098 = vld [vmem:[%s3081 + $0x80] sm:$0xff]
      %v3099 = vld [vmem:[%s3081 + $0x88] sm:$0xff]
      %v3100 = vunpack.c.l.b16 %v3028
      %v3101 = vunpack.c.l.b16 %v3031
      %v3102 = vunpack.c.l.b16 %v3035
      %v3103 = vunpack.c.l.b16 %v3038
      %v3104 = vunpack.c.l.b16 %v3042
      %v3105 = vunpack.c.l.b16 %v3045
      %v3106 = vunpack.c.l.b16 %v3049
      %v3107 = vunpack.c.l.b16 %v3052
      %v3108 = vunpack.c.l.b16 %v3056
      %v3109 = vunpack.c.l.b16 %v3059
      %v3110 = vunpack.c.l.b16 %v3063
      %v3111 = vunpack.c.l.b16 %v3066
      %v3112 = vunpack.c.l.b16 %v3070
      %v3113 = vunpack.c.l.b16 %v3073
      %v3114 = vunpack.c.l.b16 %v3077
      %v3115 = vunpack.c.l.b16 %v3080
      %v3116 = vpack.c.b16 %v3101, %v3100
      %v3117 = vpack.c.b16 %v3103, %v3102
      %v3118 = vpack.c.b16 %v3105, %v3104
      %v3119 = vpack.c.b16 %v3107, %v3106
      %v3120 = vpack.c.b16 %v3109, %v3108
      %v3121 = vpack.c.b16 %v3111, %v3110
      %v3122 = vpack.c.b16 %v3113, %v3112
      %v3123 = vpack.c.b16 %v3115, %v3114
      %v3142 = vunpack.c.l.b16 %v3082
      %v3143 = vunpack.c.h.b16 %v3082
      %v3144 = vunpack.c.l.b16 %v3083
      %v3145 = vunpack.c.h.b16 %v3083
      %v3146 = vunpack.c.l.b16 %v3084
      %v3147 = vunpack.c.h.b16 %v3084
      %v3148 = vunpack.c.l.b16 %v3085
      %v3149 = vunpack.c.h.b16 %v3085
      %v3150 = vunpack.c.l.b16 %v3086
      %v3151 = vunpack.c.h.b16 %v3086
      %v3152 = vunpack.c.l.b16 %v3087
      %v3153 = vunpack.c.h.b16 %v3087
      %v3154 = vunpack.c.l.b16 %v3088
      %v3155 = vunpack.c.h.b16 %v3088
      %v3156 = vunpack.c.l.b16 %v3089
      %v3157 = vunpack.c.h.b16 %v3089
      %v3158 = vunpack.c.l.b16 %v3090
      %v3159 = vunpack.c.h.b16 %v3090
      %v3160 = vunpack.c.l.b16 %v3091
      %v3161 = vunpack.c.h.b16 %v3091
      %v3162 = vunpack.c.l.b16 %v3092
      %v3163 = vunpack.c.h.b16 %v3092
      %v3164 = vunpack.c.l.b16 %v3093
      %v3165 = vunpack.c.h.b16 %v3093
      %v3166 = vunpack.c.l.b16 %v3094
      %v3167 = vunpack.c.h.b16 %v3094
      %v3168 = vunpack.c.l.b16 %v3095
      %v3169 = vunpack.c.h.b16 %v3095
      %v3170 = vunpack.c.l.b16 %v3096
      %v3171 = vunpack.c.h.b16 %v3096
      %v3172 = vunpack.c.l.b16 %v3097
      %v3173 = vunpack.c.h.b16 %v3097
      %v3174 = vunpack.c.l.b16 %v3098
      %v3175 = vunpack.c.h.b16 %v3098
      %v3176 = vunpack.c.l.b16 %v3099
      %v3177 = vunpack.c.h.b16 %v3099
      %v3178 = vpack.c.b16 %v3146, %v3142
      %v3179 = vpack.c.b16 %v3147, %v3143
      %v3180 = vpack.c.b16 %v3148, %v3144
      %v3181 = vpack.c.b16 %v3149, %v3145
      %v3182 = vpack.c.b16 %v3154, %v3150
      %v3183 = vpack.c.b16 %v3155, %v3151
      %v3184 = vpack.c.b16 %v3156, %v3152
      %v3185 = vpack.c.b16 %v3157, %v3153
      %v3186 = vpack.c.b16 %v3162, %v3158
      %v3187 = vpack.c.b16 %v3163, %v3159
      %v3188 = vpack.c.b16 %v3164, %v3160
      %v3189 = vpack.c.b16 %v3165, %v3161
      %v3190 = vpack.c.b16 %v3170, %v3166
      %v3191 = vpack.c.b16 %v3171, %v3167
      %v3192 = vpack.c.b16 %v3172, %v3168
      %v3193 = vpack.c.b16 %v3173, %v3169
      %v3194 = vpack.c.b16 %v3174, %v3174
      %v3195 = vpack.c.b16 %v3175, %v3175
      %v3196 = vpack.c.b16 %v3176, %v3176
      %v3197 = vpack.c.b16 %v3177, %v3177
      %v3215 = vsel %vm625, %v3116, 0
      %v3218 = vsel %vm625, %v3117, 0
      %v3221 = vsel %vm625, %v3118, 0
      %v3224 = vsel %vm625, %v3119, 0
      %v3227 = vsel %vm625, %v3120, 0
      %v3230 = vsel %vm625, %v3121, 0
      %v3233 = vsel %vm625, %v3122, 0
      %v3236 = vsel %vm625, %v3123, 0
      %v3239 = vsel %vm650, %v3194, 0
      %v3242 = vsel %vm650, %v3195, 0
      %v3245 = vsel %vm650, %v3196, 0
      %v3248 = vsel %vm650, %v3197, 0
      %3250 = vmatprep.subr.bf16.mxu0 0
      %3251 = vmatpush1.bf16.msra.mxu0 0
      %3252 = vmatprep.subr.bf16.mxu0 0
      %3253 = vmatpush1.bf16.msra.mxu0 0
      %3254 = vmatprep.subr.bf16.mxu0 0
      %3255 = vmatpush1.bf16.msra.mxu0 0
      %3256 = vmatprep.subr.bf16.mxu0 %v3242
      %3257 = vmatpush1.bf16.msra.mxu0 %v3239
      %3258 = vmatprep.subr.bf16.mxu0 %v3191
      %3259 = vmatpush1.bf16.msra.mxu0 %v3190
      %3260 = vmatprep.subr.bf16.mxu0 %v3187
      %3261 = vmatpush1.bf16.msra.mxu0 %v3186
      %3262 = vmatprep.subr.bf16.mxu0 %v3183
      %3263 = vmatpush1.bf16.msra.mxu0 %v3182
      %3264 = vmatprep.subr.bf16.mxu0 %v3179
      %3265 = vmatpush1.bf16.msra.mxu0 %v3178
      %3266 = vmatprep.subr.bf16.mxu0 0
      %3267 = vmatpush2.bf16.msra.mxu0 0
      %3268 = vmatprep.subr.bf16.mxu0 0
      %3269 = vmatpush2.bf16.msra.mxu0 0
      %3270 = vmatprep.subr.bf16.mxu0 0
      %3271 = vmatpush2.bf16.msra.mxu0 0
      %3272 = vmatprep.subr.bf16.mxu0 0
      %3273 = vmatpush2.bf16.msra.mxu0 0
      %3274 = vmatprep.subr.bf16.mxu0 0
      %3275 = vmatpush2.bf16.msra.mxu0 0
      %3276 = vmatprep.subr.bf16.mxu0 0
      %3277 = vmatpush2.bf16.msra.mxu0 0
      %3278 = vmatprep.subr.bf16.mxu0 0
      %3279 = vmatpush2.bf16.msra.mxu0 0
      %3280 = vmatprep.subr.bf16.mxu0 0
      %3281 = vmatpush2.bf16.msra.mxu0 0
      %3282 = vmatprep.mubr.bf16.mxu0 0
      %3283 = vmatmul.mubr.bf16.gmra.mxu0 %v3215
      %v3284 = vpop.f32.mrf.mxu0
      %v3285 = vadd.f32 0.0, %v3284
      %v3286 = vpop.f32.mrf.mxu0
      %v3287 = vadd.f32 0.0, %v3286
      %v3288 = vpop.f32.mrf.mxu0
      %v3289 = vadd.f32 0.0, %v3288
      %v3290 = vpop.f32.mrf.mxu0
      %v3291 = vadd.f32 0.0, %v3290
      %3292 = vmatprep.mubr.bf16.mxu0 0
      %3293 = vmatmul.mubr.bf16.gmra.mxu0 %v3218
      %v3294 = vpop.f32.mrf.mxu0
      %v3295 = vadd.f32 0.0, %v3294
      %v3296 = vpop.f32.mrf.mxu0
      %v3297 = vadd.f32 0.0, %v3296
      %v3298 = vpop.f32.mrf.mxu0
      %v3299 = vadd.f32 0.0, %v3298
      %v3300 = vpop.f32.mrf.mxu0
      %v3301 = vadd.f32 0.0, %v3300
      %3302 = vmatprep.mubr.bf16.mxu0 0
      %3303 = vmatmul.mubr.bf16.gmra.mxu0 %v3221
      %v3304 = vpop.f32.mrf.mxu0
      %v3305 = vadd.f32 0.0, %v3304
      %v3306 = vpop.f32.mrf.mxu0
      %v3307 = vadd.f32 0.0, %v3306
      %v3308 = vpop.f32.mrf.mxu0
      %v3309 = vadd.f32 0.0, %v3308
      %v3310 = vpop.f32.mrf.mxu0
      %v3311 = vadd.f32 0.0, %v3310
      %3312 = vmatprep.mubr.bf16.mxu0 0
      %3313 = vmatmul.mubr.bf16.gmra.mxu0 %v3224
      %v3314 = vpop.f32.mrf.mxu0
      %v3315 = vadd.f32 0.0, %v3314
      %v3316 = vpop.f32.mrf.mxu0
      %v3317 = vadd.f32 0.0, %v3316
      %v3318 = vpop.f32.mrf.mxu0
      %v3319 = vadd.f32 0.0, %v3318
      %v3320 = vpop.f32.mrf.mxu0
      %v3321 = vadd.f32 0.0, %v3320
      %3322 = vmatprep.mubr.bf16.mxu0 0
      %3323 = vmatmul.mubr.bf16.gmra.mxu0 %v3227
      %v3324 = vpop.f32.mrf.mxu0
      %v3325 = vadd.f32 0.0, %v3324
      %v3326 = vpop.f32.mrf.mxu0
      %v3327 = vadd.f32 0.0, %v3326
      %v3328 = vpop.f32.mrf.mxu0
      %v3329 = vadd.f32 0.0, %v3328
      %v3330 = vpop.f32.mrf.mxu0
      %v3331 = vadd.f32 0.0, %v3330
      %3332 = vmatprep.mubr.bf16.mxu0 0
      %3333 = vmatmul.mubr.bf16.gmra.mxu0 %v3230
      %v3334 = vpop.f32.mrf.mxu0
      %v3335 = vadd.f32 0.0, %v3334
      %v3336 = vpop.f32.mrf.mxu0
      %v3337 = vadd.f32 0.0, %v3336
      %v3338 = vpop.f32.mrf.mxu0
      %v3339 = vadd.f32 0.0, %v3338
      %v3340 = vpop.f32.mrf.mxu0
      %v3341 = vadd.f32 0.0, %v3340
      %3342 = vmatprep.mubr.bf16.mxu0 0
      %3343 = vmatmul.mubr.bf16.gmra.mxu0 %v3233
      %v3344 = vpop.f32.mrf.mxu0
      %v3345 = vadd.f32 0.0, %v3344
      %v3346 = vpop.f32.mrf.mxu0
      %v3347 = vadd.f32 0.0, %v3346
      %v3348 = vpop.f32.mrf.mxu0
      %v3349 = vadd.f32 0.0, %v3348
      %v3350 = vpop.f32.mrf.mxu0
      %v3351 = vadd.f32 0.0, %v3350
      %3352 = vmatprep.mubr.bf16.mxu0 0
      %3353 = vmatmul.mubr.bf16.gmra.mxu0 %v3236
      %v3354 = vpop.f32.mrf.mxu0
      %v3355 = vadd.f32 0.0, %v3354
      %v3356 = vpop.f32.mrf.mxu0
      %v3357 = vadd.f32 0.0, %v3356
      %v3358 = vpop.f32.mrf.mxu0
      %v3359 = vadd.f32 0.0, %v3358
      %v3360 = vpop.f32.mrf.mxu0
      %v3361 = vadd.f32 0.0, %v3360
      %3362 = vdwg.mxu0
      %3363 = vmatprep.subr.bf16.mxu0 0
      %3364 = vmatpush1.bf16.msra.mxu0 0
      %3365 = vmatprep.subr.bf16.mxu0 0
      %3366 = vmatpush1.bf16.msra.mxu0 0
      %3367 = vmatprep.subr.bf16.mxu0 0
      %3368 = vmatpush1.bf16.msra.mxu0 0
      %3369 = vmatprep.subr.bf16.mxu0 %v3248
      %3370 = vmatpush1.bf16.msra.mxu0 %v3245
      %3371 = vmatprep.subr.bf16.mxu0 %v3193
      %3372 = vmatpush1.bf16.msra.mxu0 %v3192
      %3373 = vmatprep.subr.bf16.mxu0 %v3189
      %3374 = vmatpush1.bf16.msra.mxu0 %v3188
      %3375 = vmatprep.subr.bf16.mxu0 %v3185
      %3376 = vmatpush1.bf16.msra.mxu0 %v3184
      %3377 = vmatprep.subr.bf16.mxu0 %v3181
      %3378 = vmatpush1.bf16.msra.mxu0 %v3180
      %3379 = vmatprep.subr.bf16.mxu0 0
      %3380 = vmatpush2.bf16.msra.mxu0 0
      %3381 = vmatprep.subr.bf16.mxu0 0
      %3382 = vmatpush2.bf16.msra.mxu0 0
      %3383 = vmatprep.subr.bf16.mxu0 0
      %3384 = vmatpush2.bf16.msra.mxu0 0
      %3385 = vmatprep.subr.bf16.mxu0 0
      %3386 = vmatpush2.bf16.msra.mxu0 0
      %3387 = vmatprep.subr.bf16.mxu0 0
      %3388 = vmatpush2.bf16.msra.mxu0 0
      %3389 = vmatprep.subr.bf16.mxu0 0
      %3390 = vmatpush2.bf16.msra.mxu0 0
      %3391 = vmatprep.subr.bf16.mxu0 0
      %3392 = vmatpush2.bf16.msra.mxu0 0
      %3393 = vmatprep.subr.bf16.mxu0 0
      %3394 = vmatpush2.bf16.msra.mxu0 0
      %3395 = vmatprep.mubr.bf16.mxu0 0
      %3396 = vmatmul.mubr.bf16.gmra.mxu0 %v3215
      %v3397 = vpop.f32.mrf.mxu0
      %v3398 = vadd.f32 0.0, %v3397
      %v3399 = vpop.f32.mrf.mxu0
      %v3400 = vadd.f32 0.0, %v3399
      %v3401 = vpop.f32.mrf.mxu0
      %v3402 = vadd.f32 0.0, %v3401
      %v3403 = vpop.f32.mrf.mxu0
      %v3404 = vadd.f32 0.0, %v3403
      %3405 = vmatprep.mubr.bf16.mxu0 0
      %3406 = vmatmul.mubr.bf16.gmra.mxu0 %v3218
      %v3407 = vpop.f32.mrf.mxu0
      %v3408 = vadd.f32 0.0, %v3407
      %v3409 = vpop.f32.mrf.mxu0
      %v3410 = vadd.f32 0.0, %v3409
      %v3411 = vpop.f32.mrf.mxu0
      %v3412 = vadd.f32 0.0, %v3411
      %v3413 = vpop.f32.mrf.mxu0
      %v3414 = vadd.f32 0.0, %v3413
      %3415 = vmatprep.mubr.bf16.mxu0 0
      %3416 = vmatmul.mubr.bf16.gmra.mxu0 %v3221
      %v3417 = vpop.f32.mrf.mxu0
      %v3418 = vadd.f32 0.0, %v3417
      %v3419 = vpop.f32.mrf.mxu0
      %v3420 = vadd.f32 0.0, %v3419
      %v3421 = vpop.f32.mrf.mxu0
      %v3422 = vadd.f32 0.0, %v3421
      %v3423 = vpop.f32.mrf.mxu0
      %v3424 = vadd.f32 0.0, %v3423
      %3425 = vmatprep.mubr.bf16.mxu0 0
      %3426 = vmatmul.mubr.bf16.gmra.mxu0 %v3224
      %v3427 = vpop.f32.mrf.mxu0
      %v3428 = vadd.f32 0.0, %v3427
      %v3429 = vpop.f32.mrf.mxu0
      %v3430 = vadd.f32 0.0, %v3429
      %v3431 = vpop.f32.mrf.mxu0
      %v3432 = vadd.f32 0.0, %v3431
      %v3433 = vpop.f32.mrf.mxu0
      %v3434 = vadd.f32 0.0, %v3433
      %3435 = vmatprep.mubr.bf16.mxu0 0
      %3436 = vmatmul.mubr.bf16.gmra.mxu0 %v3227
      %v3437 = vpop.f32.mrf.mxu0
      %v3438 = vadd.f32 0.0, %v3437
      %v3439 = vpop.f32.mrf.mxu0
      %v3440 = vadd.f32 0.0, %v3439
      %v3441 = vpop.f32.mrf.mxu0
      %v3442 = vadd.f32 0.0, %v3441
      %v3443 = vpop.f32.mrf.mxu0
      %v3444 = vadd.f32 0.0, %v3443
      %3445 = vmatprep.mubr.bf16.mxu0 0
      %3446 = vmatmul.mubr.bf16.gmra.mxu0 %v3230
      %v3447 = vpop.f32.mrf.mxu0
      %v3448 = vadd.f32 0.0, %v3447
      %v3449 = vpop.f32.mrf.mxu0
      %v3450 = vadd.f32 0.0, %v3449
      %v3451 = vpop.f32.mrf.mxu0
      %v3452 = vadd.f32 0.0, %v3451
      %v3453 = vpop.f32.mrf.mxu0
      %v3454 = vadd.f32 0.0, %v3453
      %3455 = vmatprep.mubr.bf16.mxu0 0
      %3456 = vmatmul.mubr.bf16.gmra.mxu0 %v3233
      %v3457 = vpop.f32.mrf.mxu0
      %v3458 = vadd.f32 0.0, %v3457
      %v3459 = vpop.f32.mrf.mxu0
      %v3460 = vadd.f32 0.0, %v3459
      %v3461 = vpop.f32.mrf.mxu0
      %v3462 = vadd.f32 0.0, %v3461
      %v3463 = vpop.f32.mrf.mxu0
      %v3464 = vadd.f32 0.0, %v3463
      %3465 = vmatprep.mubr.bf16.mxu0 0
      %3466 = vmatmul.mubr.bf16.gmra.mxu0 %v3236
      %v3467 = vpop.f32.mrf.mxu0
      %v3468 = vadd.f32 0.0, %v3467
      %v3469 = vpop.f32.mrf.mxu0
      %v3470 = vadd.f32 0.0, %v3469
      %v3471 = vpop.f32.mrf.mxu0
      %v3472 = vadd.f32 0.0, %v3471
      %v3473 = vpop.f32.mrf.mxu0
      %v3474 = vadd.f32 0.0, %v3473
      %3475 = vdwg.mxu0
      %v3476 = vadd.f32 %v2929, %v3285
      %v3477 = vadd.f32 %v2930, %v3287
      %v3478 = vadd.f32 %v2931, %v3398
      %v3479 = vadd.f32 %v2932, %v3400
      %v3480 = vadd.f32 %v2933, %v3289
      %v3481 = vadd.f32 %v2934, %v3291
      %v3482 = vadd.f32 %v2935, %v3402
      %v3483 = vadd.f32 %v2936, %v3404
      %v3484 = vadd.f32 %v2937, %v3295
      %v3485 = vadd.f32 %v2938, %v3297
      %v3486 = vadd.f32 %v2939, %v3408
      %v3487 = vadd.f32 %v2940, %v3410
      %v3488 = vadd.f32 %v2941, %v3299
      %v3489 = vadd.f32 %v2942, %v3301
      %v3490 = vadd.f32 %v2943, %v3412
      %v3491 = vadd.f32 %v2944, %v3414
      %v3492 = vadd.f32 %v2945, %v3305
      %v3493 = vadd.f32 %v2946, %v3307
      %v3494 = vadd.f32 %v2947, %v3418
      %v3495 = vadd.f32 %v2948, %v3420
      %v3496 = vadd.f32 %v2949, %v3309
      %v3497 = vadd.f32 %v2950, %v3311
      %v3498 = vadd.f32 %v2951, %v3422
      %v3499 = vadd.f32 %v2952, %v3424
      %v3500 = vadd.f32 %v2953, %v3315
      %v3501 = vadd.f32 %v2954, %v3317
      %v3502 = vadd.f32 %v2955, %v3428
      %v3503 = vadd.f32 %v2956, %v3430
      %v3504 = vadd.f32 %v2957, %v3319
      %v3505 = vadd.f32 %v2958, %v3321
      %v3506 = vadd.f32 %v2959, %v3432
      %v3507 = vadd.f32 %v2960, %v3434
      %v3508 = vadd.f32 %v2961, %v3325
      %v3509 = vadd.f32 %v2962, %v3327
      %v3510 = vadd.f32 %v2963, %v3438
      %v3511 = vadd.f32 %v2964, %v3440
      %v3512 = vadd.f32 %v2965, %v3329
      %v3513 = vadd.f32 %v2966, %v3331
      %v3514 = vadd.f32 %v2967, %v3442
      %v3515 = vadd.f32 %v2968, %v3444
      %v3516 = vadd.f32 %v2969, %v3335
      %v3517 = vadd.f32 %v2970, %v3337
      %v3518 = vadd.f32 %v2971, %v3448
      %v3519 = vadd.f32 %v2972, %v3450
      %v3520 = vadd.f32 %v2973, %v3339
      %v3521 = vadd.f32 %v2974, %v3341
      %v3522 = vadd.f32 %v2975, %v3452
      %v3523 = vadd.f32 %v2976, %v3454
      %v3524 = vadd.f32 %v2977, %v3345
      %v3525 = vadd.f32 %v2978, %v3347
      %v3526 = vadd.f32 %v2979, %v3458
      %v3527 = vadd.f32 %v2980, %v3460
      %v3528 = vadd.f32 %v2981, %v3349
      %v3529 = vadd.f32 %v2982, %v3351
      %v3530 = vadd.f32 %v2983, %v3462
      %v3531 = vadd.f32 %v2984, %v3464
      %v3532 = vadd.f32 %v2985, %v3355
      %v3533 = vadd.f32 %v2986, %v3357
      %v3534 = vadd.f32 %v2987, %v3468
      %v3535 = vadd.f32 %v2988, %v3470
      %v3536 = vadd.f32 %v2989, %v3359
      %v3537 = vadd.f32 %v2990, %v3361
      %v3538 = vadd.f32 %v2991, %v3472
      %v3539 = vadd.f32 %v2992, %v3474
      %s3540 = sadd.s32 %s251, 2
      %s3541 = smul.u32 %s3540, 3
      %s3542 = smul.addr %s3541, 4
      %s3543 = scalar_lea.vmem %s238, %s3542
      %v3544 = vld [vmem:[%s3543] sm:$0xf]
      %v3545 = vld [vmem:[%s3543 + $0x4] sm:$0xf]
      %v3546 = vld [vmem:[%s3543 + $0xc] sm:$0xf]
      %v3547 = vld [vmem:[%s3543 + $0x10] sm:$0xf]
      %v3548 = vld [vmem:[%s3543 + $0x18] sm:$0xf]
      %v3549 = vld [vmem:[%s3543 + $0x1c] sm:$0xf]
      %v3550 = vld [vmem:[%s3543 + $0x24] sm:$0xf]
      %v3551 = vld [vmem:[%s3543 + $0x28] sm:$0xf]
      %v3552 = vld [vmem:[%s3543 + $0x30] sm:$0xf]
      %v3553 = vld [vmem:[%s3543 + $0x34] sm:$0xf]
      %v3554 = vld [vmem:[%s3543 + $0x3c] sm:$0xf]
      %v3555 = vld [vmem:[%s3543 + $0x40] sm:$0xf]
      %v3556 = vld [vmem:[%s3543 + $0x48] sm:$0xf]
      %v3557 = vld [vmem:[%s3543 + $0x4c] sm:$0xf]
      %v3558 = vld [vmem:[%s3543 + $0x54] sm:$0xf]
      %v3559 = vld [vmem:[%s3543 + $0x58] sm:$0xf]
      %s3560 = scalar_lea.vmem %s1, 864
      %v3561 = vld [vmem:[%s3560] sm:$0xff]
      %v3562 = vld [vmem:[%s3560 + $0x8] sm:$0xff]
      %v3563 = vld [vmem:[%s3560 + $0x10] sm:$0xff]
      %v3564 = vld [vmem:[%s3560 + $0x18] sm:$0xff]
      %v3565 = vld [vmem:[%s3560 + $0x20] sm:$0xff]
      %v3566 = vld [vmem:[%s3560 + $0x28] sm:$0xff]
      %v3567 = vld [vmem:[%s3560 + $0x30] sm:$0xff]
      %v3568 = vld [vmem:[%s3560 + $0x38] sm:$0xff]
      %v3569 = vld [vmem:[%s3560 + $0x40] sm:$0xff]
      %v3570 = vld [vmem:[%s3560 + $0x48] sm:$0xff]
      %v3571 = vld [vmem:[%s3560 + $0x50] sm:$0xff]
      %v3572 = vld [vmem:[%s3560 + $0x58] sm:$0xff]
      %v3573 = vld [vmem:[%s3560 + $0x60] sm:$0xff]
      %v3574 = vld [vmem:[%s3560 + $0x68] sm:$0xff]
      %v3575 = vld [vmem:[%s3560 + $0x70] sm:$0xff]
      %v3576 = vld [vmem:[%s3560 + $0x78] sm:$0xff]
      %v3577 = vld [vmem:[%s3560 + $0x80] sm:$0xff]
      %v3578 = vld [vmem:[%s3560 + $0x88] sm:$0xff]
      %v3595 = vunpack.c.l.b16 %v3544
      %v3596 = vunpack.c.l.b16 %v3545
      %v3597 = vunpack.c.l.b16 %v3546
      %v3598 = vunpack.c.l.b16 %v3547
      %v3599 = vunpack.c.l.b16 %v3548
      %v3600 = vunpack.c.l.b16 %v3549
      %v3601 = vunpack.c.l.b16 %v3550
      %v3602 = vunpack.c.l.b16 %v3551
      %v3603 = vunpack.c.l.b16 %v3552
      %v3604 = vunpack.c.l.b16 %v3553
      %v3605 = vunpack.c.l.b16 %v3554
      %v3606 = vunpack.c.l.b16 %v3555
      %v3607 = vunpack.c.l.b16 %v3556
      %v3608 = vunpack.c.l.b16 %v3557
      %v3609 = vunpack.c.l.b16 %v3558
      %v3610 = vunpack.c.l.b16 %v3559
      %v3611 = vpack.c.b16 %v3596, %v3595
      %v3612 = vpack.c.b16 %v3598, %v3597
      %v3613 = vpack.c.b16 %v3600, %v3599
      %v3614 = vpack.c.b16 %v3602, %v3601
      %v3615 = vpack.c.b16 %v3604, %v3603
      %v3616 = vpack.c.b16 %v3606, %v3605
      %v3617 = vpack.c.b16 %v3608, %v3607
      %v3618 = vpack.c.b16 %v3610, %v3609
      %v3637 = vunpack.c.l.b16 %v3561
      %v3638 = vunpack.c.h.b16 %v3561
      %v3639 = vunpack.c.l.b16 %v3562
      %v3640 = vunpack.c.h.b16 %v3562
      %v3641 = vunpack.c.l.b16 %v3563
      %v3642 = vunpack.c.h.b16 %v3563
      %v3643 = vunpack.c.l.b16 %v3564
      %v3644 = vunpack.c.h.b16 %v3564
      %v3645 = vunpack.c.l.b16 %v3565
      %v3646 = vunpack.c.h.b16 %v3565
      %v3647 = vunpack.c.l.b16 %v3566
      %v3648 = vunpack.c.h.b16 %v3566
      %v3649 = vunpack.c.l.b16 %v3567
      %v3650 = vunpack.c.h.b16 %v3567
      %v3651 = vunpack.c.l.b16 %v3568
      %v3652 = vunpack.c.h.b16 %v3568
      %v3653 = vunpack.c.l.b16 %v3569
      %v3654 = vunpack.c.h.b16 %v3569
      %v3655 = vunpack.c.l.b16 %v3570
      %v3656 = vunpack.c.h.b16 %v3570
      %v3657 = vunpack.c.l.b16 %v3571
      %v3658 = vunpack.c.h.b16 %v3571
      %v3659 = vunpack.c.l.b16 %v3572
      %v3660 = vunpack.c.h.b16 %v3572
      %v3661 = vunpack.c.l.b16 %v3573
      %v3662 = vunpack.c.h.b16 %v3573
      %v3663 = vunpack.c.l.b16 %v3574
      %v3664 = vunpack.c.h.b16 %v3574
      %v3665 = vunpack.c.l.b16 %v3575
      %v3666 = vunpack.c.h.b16 %v3575
      %v3667 = vunpack.c.l.b16 %v3576
      %v3668 = vunpack.c.h.b16 %v3576
      %v3669 = vunpack.c.l.b16 %v3577
      %v3670 = vunpack.c.h.b16 %v3577
      %v3671 = vunpack.c.l.b16 %v3578
      %v3672 = vunpack.c.h.b16 %v3578
      %v3673 = vpack.c.b16 %v3641, %v3637
      %v3674 = vpack.c.b16 %v3642, %v3638
      %v3675 = vpack.c.b16 %v3643, %v3639
      %v3676 = vpack.c.b16 %v3644, %v3640
      %v3677 = vpack.c.b16 %v3649, %v3645
      %v3678 = vpack.c.b16 %v3650, %v3646
      %v3679 = vpack.c.b16 %v3651, %v3647
      %v3680 = vpack.c.b16 %v3652, %v3648
      %v3681 = vpack.c.b16 %v3657, %v3653
      %v3682 = vpack.c.b16 %v3658, %v3654
      %v3683 = vpack.c.b16 %v3659, %v3655
      %v3684 = vpack.c.b16 %v3660, %v3656
      %v3685 = vpack.c.b16 %v3665, %v3661
      %v3686 = vpack.c.b16 %v3666, %v3662
      %v3687 = vpack.c.b16 %v3667, %v3663
      %v3688 = vpack.c.b16 %v3668, %v3664
      %v3689 = vpack.c.b16 %v3669, %v3669
      %v3690 = vpack.c.b16 %v3670, %v3670
      %v3691 = vpack.c.b16 %v3671, %v3671
      %v3692 = vpack.c.b16 %v3672, %v3672
      %v3710 = vsel %vm625, %v3611, 0
      %v3713 = vsel %vm625, %v3612, 0
      %v3716 = vsel %vm625, %v3613, 0
      %v3719 = vsel %vm625, %v3614, 0
      %v3722 = vsel %vm625, %v3615, 0
      %v3725 = vsel %vm625, %v3616, 0
      %v3728 = vsel %vm625, %v3617, 0
      %v3731 = vsel %vm625, %v3618, 0
      %v3734 = vsel %vm650, %v3689, 0
      %v3737 = vsel %vm650, %v3690, 0
      %v3740 = vsel %vm650, %v3691, 0
      %v3743 = vsel %vm650, %v3692, 0
      %3745 = vmatprep.subr.bf16.mxu0 0
      %3746 = vmatpush1.bf16.msra.mxu0 0
      %3747 = vmatprep.subr.bf16.mxu0 0
      %3748 = vmatpush1.bf16.msra.mxu0 0
      %3749 = vmatprep.subr.bf16.mxu0 0
      %3750 = vmatpush1.bf16.msra.mxu0 0
      %3751 = vmatprep.subr.bf16.mxu0 %v3737
      %3752 = vmatpush1.bf16.msra.mxu0 %v3734
      %3753 = vmatprep.subr.bf16.mxu0 %v3686
      %3754 = vmatpush1.bf16.msra.mxu0 %v3685
      %3755 = vmatprep.subr.bf16.mxu0 %v3682
      %3756 = vmatpush1.bf16.msra.mxu0 %v3681
      %3757 = vmatprep.subr.bf16.mxu0 %v3678
      %3758 = vmatpush1.bf16.msra.mxu0 %v3677
      %3759 = vmatprep.subr.bf16.mxu0 %v3674
      %3760 = vmatpush1.bf16.msra.mxu0 %v3673
      %3761 = vmatprep.subr.bf16.mxu0 0
      %3762 = vmatpush2.bf16.msra.mxu0 0
      %3763 = vmatprep.subr.bf16.mxu0 0
      %3764 = vmatpush2.bf16.msra.mxu0 0
      %3765 = vmatprep.subr.bf16.mxu0 0
      %3766 = vmatpush2.bf16.msra.mxu0 0
      %3767 = vmatprep.subr.bf16.mxu0 0
      %3768 = vmatpush2.bf16.msra.mxu0 0
      %3769 = vmatprep.subr.bf16.mxu0 0
      %3770 = vmatpush2.bf16.msra.mxu0 0
      %3771 = vmatprep.subr.bf16.mxu0 0
      %3772 = vmatpush2.bf16.msra.mxu0 0
      %3773 = vmatprep.subr.bf16.mxu0 0
      %3774 = vmatpush2.bf16.msra.mxu0 0
      %3775 = vmatprep.subr.bf16.mxu0 0
      %3776 = vmatpush2.bf16.msra.mxu0 0
      %3777 = vmatprep.mubr.bf16.mxu0 0
      %3778 = vmatmul.mubr.bf16.gmra.mxu0 %v3710
      %v3779 = vpop.f32.mrf.mxu0
      %v3780 = vadd.f32 0.0, %v3779
      %v3781 = vpop.f32.mrf.mxu0
      %v3782 = vadd.f32 0.0, %v3781
      %v3783 = vpop.f32.mrf.mxu0
      %v3784 = vadd.f32 0.0, %v3783
      %v3785 = vpop.f32.mrf.mxu0
      %v3786 = vadd.f32 0.0, %v3785
      %3787 = vmatprep.mubr.bf16.mxu0 0
      %3788 = vmatmul.mubr.bf16.gmra.mxu0 %v3713
      %v3789 = vpop.f32.mrf.mxu0
      %v3790 = vadd.f32 0.0, %v3789
      %v3791 = vpop.f32.mrf.mxu0
      %v3792 = vadd.f32 0.0, %v3791
      %v3793 = vpop.f32.mrf.mxu0
      %v3794 = vadd.f32 0.0, %v3793
      %v3795 = vpop.f32.mrf.mxu0
      %v3796 = vadd.f32 0.0, %v3795
      %3797 = vmatprep.mubr.bf16.mxu0 0
      %3798 = vmatmul.mubr.bf16.gmra.mxu0 %v3716
      %v3799 = vpop.f32.mrf.mxu0
      %v3800 = vadd.f32 0.0, %v3799
      %v3801 = vpop.f32.mrf.mxu0
      %v3802 = vadd.f32 0.0, %v3801
      %v3803 = vpop.f32.mrf.mxu0
      %v3804 = vadd.f32 0.0, %v3803
      %v3805 = vpop.f32.mrf.mxu0
      %v3806 = vadd.f32 0.0, %v3805
      %3807 = vmatprep.mubr.bf16.mxu0 0
      %3808 = vmatmul.mubr.bf16.gmra.mxu0 %v3719
      %v3809 = vpop.f32.mrf.mxu0
      %v3810 = vadd.f32 0.0, %v3809
      %v3811 = vpop.f32.mrf.mxu0
      %v3812 = vadd.f32 0.0, %v3811
      %v3813 = vpop.f32.mrf.mxu0
      %v3814 = vadd.f32 0.0, %v3813
      %v3815 = vpop.f32.mrf.mxu0
      %v3816 = vadd.f32 0.0, %v3815
      %3817 = vmatprep.mubr.bf16.mxu0 0
      %3818 = vmatmul.mubr.bf16.gmra.mxu0 %v3722
      %v3819 = vpop.f32.mrf.mxu0
      %v3820 = vadd.f32 0.0, %v3819
      %v3821 = vpop.f32.mrf.mxu0
      %v3822 = vadd.f32 0.0, %v3821
      %v3823 = vpop.f32.mrf.mxu0
      %v3824 = vadd.f32 0.0, %v3823
      %v3825 = vpop.f32.mrf.mxu0
      %v3826 = vadd.f32 0.0, %v3825
      %3827 = vmatprep.mubr.bf16.mxu0 0
      %3828 = vmatmul.mubr.bf16.gmra.mxu0 %v3725
      %v3829 = vpop.f32.mrf.mxu0
      %v3830 = vadd.f32 0.0, %v3829
      %v3831 = vpop.f32.mrf.mxu0
      %v3832 = vadd.f32 0.0, %v3831
      %v3833 = vpop.f32.mrf.mxu0
      %v3834 = vadd.f32 0.0, %v3833
      %v3835 = vpop.f32.mrf.mxu0
      %v3836 = vadd.f32 0.0, %v3835
      %3837 = vmatprep.mubr.bf16.mxu0 0
      %3838 = vmatmul.mubr.bf16.gmra.mxu0 %v3728
      %v3839 = vpop.f32.mrf.mxu0
      %v3840 = vadd.f32 0.0, %v3839
      %v3841 = vpop.f32.mrf.mxu0
      %v3842 = vadd.f32 0.0, %v3841
      %v3843 = vpop.f32.mrf.mxu0
      %v3844 = vadd.f32 0.0, %v3843
      %v3845 = vpop.f32.mrf.mxu0
      %v3846 = vadd.f32 0.0, %v3845
      %3847 = vmatprep.mubr.bf16.mxu0 0
      %3848 = vmatmul.mubr.bf16.gmra.mxu0 %v3731
      %v3849 = vpop.f32.mrf.mxu0
      %v3850 = vadd.f32 0.0, %v3849
      %v3851 = vpop.f32.mrf.mxu0
      %v3852 = vadd.f32 0.0, %v3851
      %v3853 = vpop.f32.mrf.mxu0
      %v3854 = vadd.f32 0.0, %v3853
      %v3855 = vpop.f32.mrf.mxu0
      %v3856 = vadd.f32 0.0, %v3855
      %3857 = vdwg.mxu0
      %3858 = vmatprep.subr.bf16.mxu0 0
      %3859 = vmatpush1.bf16.msra.mxu0 0
      %3860 = vmatprep.subr.bf16.mxu0 0
      %3861 = vmatpush1.bf16.msra.mxu0 0
      %3862 = vmatprep.subr.bf16.mxu0 0
      %3863 = vmatpush1.bf16.msra.mxu0 0
      %3864 = vmatprep.subr.bf16.mxu0 %v3743
      %3865 = vmatpush1.bf16.msra.mxu0 %v3740
      %3866 = vmatprep.subr.bf16.mxu0 %v3688
      %3867 = vmatpush1.bf16.msra.mxu0 %v3687
      %3868 = vmatprep.subr.bf16.mxu0 %v3684
      %3869 = vmatpush1.bf16.msra.mxu0 %v3683
      %3870 = vmatprep.subr.bf16.mxu0 %v3680
      %3871 = vmatpush1.bf16.msra.mxu0 %v3679
      %3872 = vmatprep.subr.bf16.mxu0 %v3676
      %3873 = vmatpush1.bf16.msra.mxu0 %v3675
      %3874 = vmatprep.subr.bf16.mxu0 0
      %3875 = vmatpush2.bf16.msra.mxu0 0
      %3876 = vmatprep.subr.bf16.mxu0 0
      %3877 = vmatpush2.bf16.msra.mxu0 0
      %3878 = vmatprep.subr.bf16.mxu0 0
      %3879 = vmatpush2.bf16.msra.mxu0 0
      %3880 = vmatprep.subr.bf16.mxu0 0
      %3881 = vmatpush2.bf16.msra.mxu0 0
      %3882 = vmatprep.subr.bf16.mxu0 0
      %3883 = vmatpush2.bf16.msra.mxu0 0
      %3884 = vmatprep.subr.bf16.mxu0 0
      %3885 = vmatpush2.bf16.msra.mxu0 0
      %3886 = vmatprep.subr.bf16.mxu0 0
      %3887 = vmatpush2.bf16.msra.mxu0 0
      %3888 = vmatprep.subr.bf16.mxu0 0
      %3889 = vmatpush2.bf16.msra.mxu0 0
      %3890 = vmatprep.mubr.bf16.mxu0 0
      %3891 = vmatmul.mubr.bf16.gmra.mxu0 %v3710
      %v3892 = vpop.f32.mrf.mxu0
      %v3893 = vadd.f32 0.0, %v3892
      %v3894 = vpop.f32.mrf.mxu0
      %v3895 = vadd.f32 0.0, %v3894
      %v3896 = vpop.f32.mrf.mxu0
      %v3897 = vadd.f32 0.0, %v3896
      %v3898 = vpop.f32.mrf.mxu0
      %v3899 = vadd.f32 0.0, %v3898
      %3900 = vmatprep.mubr.bf16.mxu0 0
      %3901 = vmatmul.mubr.bf16.gmra.mxu0 %v3713
      %v3902 = vpop.f32.mrf.mxu0
      %v3903 = vadd.f32 0.0, %v3902
      %v3904 = vpop.f32.mrf.mxu0
      %v3905 = vadd.f32 0.0, %v3904
      %v3906 = vpop.f32.mrf.mxu0
      %v3907 = vadd.f32 0.0, %v3906
      %v3908 = vpop.f32.mrf.mxu0
      %v3909 = vadd.f32 0.0, %v3908
      %3910 = vmatprep.mubr.bf16.mxu0 0
      %3911 = vmatmul.mubr.bf16.gmra.mxu0 %v3716
      %v3912 = vpop.f32.mrf.mxu0
      %v3913 = vadd.f32 0.0, %v3912
      %v3914 = vpop.f32.mrf.mxu0
      %v3915 = vadd.f32 0.0, %v3914
      %v3916 = vpop.f32.mrf.mxu0
      %v3917 = vadd.f32 0.0, %v3916
      %v3918 = vpop.f32.mrf.mxu0
      %v3919 = vadd.f32 0.0, %v3918
      %3920 = vmatprep.mubr.bf16.mxu0 0
      %3921 = vmatmul.mubr.bf16.gmra.mxu0 %v3719
      %v3922 = vpop.f32.mrf.mxu0
      %v3923 = vadd.f32 0.0, %v3922
      %v3924 = vpop.f32.mrf.mxu0
      %v3925 = vadd.f32 0.0, %v3924
      %v3926 = vpop.f32.mrf.mxu0
      %v3927 = vadd.f32 0.0, %v3926
      %v3928 = vpop.f32.mrf.mxu0
      %v3929 = vadd.f32 0.0, %v3928
      %3930 = vmatprep.mubr.bf16.mxu0 0
      %3931 = vmatmul.mubr.bf16.gmra.mxu0 %v3722
      %v3932 = vpop.f32.mrf.mxu0
      %v3933 = vadd.f32 0.0, %v3932
      %v3934 = vpop.f32.mrf.mxu0
      %v3935 = vadd.f32 0.0, %v3934
      %v3936 = vpop.f32.mrf.mxu0
      %v3937 = vadd.f32 0.0, %v3936
      %v3938 = vpop.f32.mrf.mxu0
      %v3939 = vadd.f32 0.0, %v3938
      %3940 = vmatprep.mubr.bf16.mxu0 0
      %3941 = vmatmul.mubr.bf16.gmra.mxu0 %v3725
      %v3942 = vpop.f32.mrf.mxu0
      %v3943 = vadd.f32 0.0, %v3942
      %v3944 = vpop.f32.mrf.mxu0
      %v3945 = vadd.f32 0.0, %v3944
      %v3946 = vpop.f32.mrf.mxu0
      %v3947 = vadd.f32 0.0, %v3946
      %v3948 = vpop.f32.mrf.mxu0
      %v3949 = vadd.f32 0.0, %v3948
      %3950 = vmatprep.mubr.bf16.mxu0 0
      %3951 = vmatmul.mubr.bf16.gmra.mxu0 %v3728
      %v3952 = vpop.f32.mrf.mxu0
      %v3953 = vadd.f32 0.0, %v3952
      %v3954 = vpop.f32.mrf.mxu0
      %v3955 = vadd.f32 0.0, %v3954
      %v3956 = vpop.f32.mrf.mxu0
      %v3957 = vadd.f32 0.0, %v3956
      %v3958 = vpop.f32.mrf.mxu0
      %v3959 = vadd.f32 0.0, %v3958
      %3960 = vmatprep.mubr.bf16.mxu0 0
      %3961 = vmatmul.mubr.bf16.gmra.mxu0 %v3731
      %v3962 = vpop.f32.mrf.mxu0
      %v3963 = vadd.f32 0.0, %v3962
      %v3964 = vpop.f32.mrf.mxu0
      %v3965 = vadd.f32 0.0, %v3964
      %v3966 = vpop.f32.mrf.mxu0
      %v3967 = vadd.f32 0.0, %v3966
      %v3968 = vpop.f32.mrf.mxu0
      %v3969 = vadd.f32 0.0, %v3968
      %3970 = vdwg.mxu0
      %v3971 = vadd.f32 %v3476, %v3780
      %v3972 = vadd.f32 %v3477, %v3782
      %v3973 = vadd.f32 %v3478, %v3893
      %v3974 = vadd.f32 %v3479, %v3895
      %v3975 = vadd.f32 %v3480, %v3784
      %v3976 = vadd.f32 %v3481, %v3786
      %v3977 = vadd.f32 %v3482, %v3897
      %v3978 = vadd.f32 %v3483, %v3899
      %v3979 = vadd.f32 %v3484, %v3790
      %v3980 = vadd.f32 %v3485, %v3792
      %v3981 = vadd.f32 %v3486, %v3903
      %v3982 = vadd.f32 %v3487, %v3905
      %v3983 = vadd.f32 %v3488, %v3794
      %v3984 = vadd.f32 %v3489, %v3796
      %v3985 = vadd.f32 %v3490, %v3907
      %v3986 = vadd.f32 %v3491, %v3909
      %v3987 = vadd.f32 %v3492, %v3800
      %v3988 = vadd.f32 %v3493, %v3802
      %v3989 = vadd.f32 %v3494, %v3913
      %v3990 = vadd.f32 %v3495, %v3915
      %v3991 = vadd.f32 %v3496, %v3804
      %v3992 = vadd.f32 %v3497, %v3806
      %v3993 = vadd.f32 %v3498, %v3917
      %v3994 = vadd.f32 %v3499, %v3919
      %v3995 = vadd.f32 %v3500, %v3810
      %v3996 = vadd.f32 %v3501, %v3812
      %v3997 = vadd.f32 %v3502, %v3923
      %v3998 = vadd.f32 %v3503, %v3925
      %v3999 = vadd.f32 %v3504, %v3814
      %v4000 = vadd.f32 %v3505, %v3816
      %v4001 = vadd.f32 %v3506, %v3927
      %v4002 = vadd.f32 %v3507, %v3929
      %v4003 = vadd.f32 %v3508, %v3820
      %v4004 = vadd.f32 %v3509, %v3822
      %v4005 = vadd.f32 %v3510, %v3933
      %v4006 = vadd.f32 %v3511, %v3935
      %v4007 = vadd.f32 %v3512, %v3824
      %v4008 = vadd.f32 %v3513, %v3826
      %v4009 = vadd.f32 %v3514, %v3937
      %v4010 = vadd.f32 %v3515, %v3939
      %v4011 = vadd.f32 %v3516, %v3830
      %v4012 = vadd.f32 %v3517, %v3832
      %v4013 = vadd.f32 %v3518, %v3943
      %v4014 = vadd.f32 %v3519, %v3945
      %v4015 = vadd.f32 %v3520, %v3834
      %v4016 = vadd.f32 %v3521, %v3836
      %v4017 = vadd.f32 %v3522, %v3947
      %v4018 = vadd.f32 %v3523, %v3949
      %v4019 = vadd.f32 %v3524, %v3840
      %v4020 = vadd.f32 %v3525, %v3842
      %v4021 = vadd.f32 %v3526, %v3953
      %v4022 = vadd.f32 %v3527, %v3955
      %v4023 = vadd.f32 %v3528, %v3844
      %v4024 = vadd.f32 %v3529, %v3846
      %v4025 = vadd.f32 %v3530, %v3957
      %v4026 = vadd.f32 %v3531, %v3959
      %v4027 = vadd.f32 %v3532, %v3850
      %v4028 = vadd.f32 %v3533, %v3852
      %v4029 = vadd.f32 %v3534, %v3963
      %v4030 = vadd.f32 %v3535, %v3965
      %v4031 = vadd.f32 %v3536, %v3854
      %v4032 = vadd.f32 %v3537, %v3856
      %v4033 = vadd.f32 %v3538, %v3967
      %v4034 = vadd.f32 %v3539, %v3969
      %v4035 = vld [vmem:[%s3543] sm:$0xf]
      %v4036 = vld [vmem:[%s3543 + $0x4] sm:$0xf]
      %v4037 = vld [vmem:[%s3543 + $0x8] sm:$0x1]
      %v4038 = vld [vmem:[%s3543 + $0xc] sm:$0xf]
      %v4039 = vld [vmem:[%s3543 + $0x10] sm:$0xf]
      %v4040 = vld [vmem:[%s3543 + $0x14] sm:$0x1]
      %v4041 = vld [vmem:[%s3543 + $0x18] sm:$0xf]
      %v4042 = vld [vmem:[%s3543 + $0x1c] sm:$0xf]
      %v4043 = vld [vmem:[%s3543 + $0x20] sm:$0x1]
      %v4044 = vld [vmem:[%s3543 + $0x24] sm:$0xf]
      %v4045 = vld [vmem:[%s3543 + $0x28] sm:$0xf]
      %v4046 = vld [vmem:[%s3543 + $0x2c] sm:$0x1]
      %v4047 = vld [vmem:[%s3543 + $0x30] sm:$0xf]
      %v4048 = vld [vmem:[%s3543 + $0x34] sm:$0xf]
      %v4049 = vld [vmem:[%s3543 + $0x38] sm:$0x1]
      %v4050 = vld [vmem:[%s3543 + $0x3c] sm:$0xf]
      %v4051 = vld [vmem:[%s3543 + $0x40] sm:$0xf]
      %v4052 = vld [vmem:[%s3543 + $0x44] sm:$0x1]
      %v4053 = vld [vmem:[%s3543 + $0x48] sm:$0xf]
      %v4054 = vld [vmem:[%s3543 + $0x4c] sm:$0xf]
      %v4055 = vld [vmem:[%s3543 + $0x50] sm:$0x1]
      %v4056 = vld [vmem:[%s3543 + $0x54] sm:$0xf]
      %v4057 = vld [vmem:[%s3543 + $0x58] sm:$0xf]
      %v4058 = vld [vmem:[%s3543 + $0x5c] sm:$0x1]
      %v4060 = vshrl.u32 %v4035, 16
      %v4062 = vrot.slane %v4060, 4
      %v4063 = vshll.u32 %v4035, 16
      %v4065 = vrot.slane %v4063, 5
      %v4066 = vor.u32 %v4062, %v4065
      %v4067 = vrot.slane %v4066, 4
      %v4069 = vshll.u32 %v4036, 16
      %v4071 = vrot.slane %v4069, 5
      %v4072 = vsel %vm299, %v4067, %v4071
      %v4073 = vshrl.u32 %v4036, 16
      %v4075 = vrot.slane %v4073, 4
      %v4076 = vor.u32 %v4075, %v4071
      %v4077 = vrot.slane %v4076, 4
      %v4079 = vshll.u32 %v4037, 16
      %v4081 = vrot.slane %v4079, 5
      %v4082 = vsel %vm299, %v4077, %v4081
      %v4084 = vshrl.u32 %v4038, 16
      %v4086 = vrot.slane %v4084, 4
      %v4087 = vshll.u32 %v4038, 16
      %v4089 = vrot.slane %v4087, 5
      %v4090 = vor.u32 %v4086, %v4089
      %v4091 = vrot.slane %v4090, 4
      %v4093 = vshll.u32 %v4039, 16
      %v4095 = vrot.slane %v4093, 5
      %v4096 = vsel %vm299, %v4091, %v4095
      %v4097 = vshrl.u32 %v4039, 16
      %v4099 = vrot.slane %v4097, 4
      %v4100 = vor.u32 %v4099, %v4095
      %v4101 = vrot.slane %v4100, 4
      %v4103 = vshll.u32 %v4040, 16
      %v4105 = vrot.slane %v4103, 5
      %v4106 = vsel %vm299, %v4101, %v4105
      %v4108 = vshrl.u32 %v4041, 16
      %v4110 = vrot.slane %v4108, 4
      %v4111 = vshll.u32 %v4041, 16
      %v4113 = vrot.slane %v4111, 5
      %v4114 = vor.u32 %v4110, %v4113
      %v4115 = vrot.slane %v4114, 4
      %v4117 = vshll.u32 %v4042, 16
      %v4119 = vrot.slane %v4117, 5
      %v4120 = vsel %vm299, %v4115, %v4119
      %v4121 = vshrl.u32 %v4042, 16
      %v4123 = vrot.slane %v4121, 4
      %v4124 = vor.u32 %v4123, %v4119
      %v4125 = vrot.slane %v4124, 4
      %v4127 = vshll.u32 %v4043, 16
      %v4129 = vrot.slane %v4127, 5
      %v4130 = vsel %vm299, %v4125, %v4129
      %v4132 = vshrl.u32 %v4044, 16
      %v4134 = vrot.slane %v4132, 4
      %v4135 = vshll.u32 %v4044, 16
      %v4137 = vrot.slane %v4135, 5
      %v4138 = vor.u32 %v4134, %v4137
      %v4139 = vrot.slane %v4138, 4
      %v4141 = vshll.u32 %v4045, 16
      %v4143 = vrot.slane %v4141, 5
      %v4144 = vsel %vm299, %v4139, %v4143
      %v4145 = vshrl.u32 %v4045, 16
      %v4147 = vrot.slane %v4145, 4
      %v4148 = vor.u32 %v4147, %v4143
      %v4149 = vrot.slane %v4148, 4
      %v4151 = vshll.u32 %v4046, 16
      %v4153 = vrot.slane %v4151, 5
      %v4154 = vsel %vm299, %v4149, %v4153
      %v4156 = vshrl.u32 %v4047, 16
      %v4158 = vrot.slane %v4156, 4
      %v4159 = vshll.u32 %v4047, 16
      %v4161 = vrot.slane %v4159, 5
      %v4162 = vor.u32 %v4158, %v4161
      %v4163 = vrot.slane %v4162, 4
      %v4165 = vshll.u32 %v4048, 16
      %v4167 = vrot.slane %v4165, 5
      %v4168 = vsel %vm299, %v4163, %v4167
      %v4169 = vshrl.u32 %v4048, 16
      %v4171 = vrot.slane %v4169, 4
      %v4172 = vor.u32 %v4171, %v4167
      %v4173 = vrot.slane %v4172, 4
      %v4175 = vshll.u32 %v4049, 16
      %v4177 = vrot.slane %v4175, 5
      %v4178 = vsel %vm299, %v4173, %v4177
      %v4180 = vshrl.u32 %v4050, 16
      %v4182 = vrot.slane %v4180, 4
      %v4183 = vshll.u32 %v4050, 16
      %v4185 = vrot.slane %v4183, 5
      %v4186 = vor.u32 %v4182, %v4185
      %v4187 = vrot.slane %v4186, 4
      %v4189 = vshll.u32 %v4051, 16
      %v4191 = vrot.slane %v4189, 5
      %v4192 = vsel %vm299, %v4187, %v4191
      %v4193 = vshrl.u32 %v4051, 16
      %v4195 = vrot.slane %v4193, 4
      %v4196 = vor.u32 %v4195, %v4191
      %v4197 = vrot.slane %v4196, 4
      %v4199 = vshll.u32 %v4052, 16
      %v4201 = vrot.slane %v4199, 5
      %v4202 = vsel %vm299, %v4197, %v4201
      %v4204 = vshrl.u32 %v4053, 16
      %v4206 = vrot.slane %v4204, 4
      %v4207 = vshll.u32 %v4053, 16
      %v4209 = vrot.slane %v4207, 5
      %v4210 = vor.u32 %v4206, %v4209
      %v4211 = vrot.slane %v4210, 4
      %v4213 = vshll.u32 %v4054, 16
      %v4215 = vrot.slane %v4213, 5
      %v4216 = vsel %vm299, %v4211, %v4215
      %v4217 = vshrl.u32 %v4054, 16
      %v4219 = vrot.slane %v4217, 4
      %v4220 = vor.u32 %v4219, %v4215
      %v4221 = vrot.slane %v4220, 4
      %v4223 = vshll.u32 %v4055, 16
      %v4225 = vrot.slane %v4223, 5
      %v4226 = vsel %vm299, %v4221, %v4225
      %v4228 = vshrl.u32 %v4056, 16
      %v4230 = vrot.slane %v4228, 4
      %v4231 = vshll.u32 %v4056, 16
      %v4233 = vrot.slane %v4231, 5
      %v4234 = vor.u32 %v4230, %v4233
      %v4235 = vrot.slane %v4234, 4
      %v4237 = vshll.u32 %v4057, 16
      %v4239 = vrot.slane %v4237, 5
      %v4240 = vsel %vm299, %v4235, %v4239
      %v4241 = vshrl.u32 %v4057, 16
      %v4243 = vrot.slane %v4241, 4
      %v4244 = vor.u32 %v4243, %v4239
      %v4245 = vrot.slane %v4244, 4
      %v4247 = vshll.u32 %v4058, 16
      %v4249 = vrot.slane %v4247, 5
      %v4250 = vsel %vm299, %v4245, %v4249
      %s4251 = scalar_lea.vmem %s1, 1008
      %v4252 = vld [vmem:[%s4251] sm:$0xff]
      %v4253 = vld [vmem:[%s4251 + $0x8] sm:$0xff]
      %v4254 = vld [vmem:[%s4251 + $0x10] sm:$0xff]
      %v4255 = vld [vmem:[%s4251 + $0x18] sm:$0xff]
      %v4256 = vld [vmem:[%s4251 + $0x20] sm:$0xff]
      %v4257 = vld [vmem:[%s4251 + $0x28] sm:$0xff]
      %v4258 = vld [vmem:[%s4251 + $0x30] sm:$0xff]
      %v4259 = vld [vmem:[%s4251 + $0x38] sm:$0xff]
      %v4260 = vld [vmem:[%s4251 + $0x40] sm:$0xff]
      %v4261 = vld [vmem:[%s4251 + $0x48] sm:$0xff]
      %v4262 = vld [vmem:[%s4251 + $0x50] sm:$0xff]
      %v4263 = vld [vmem:[%s4251 + $0x58] sm:$0xff]
      %v4264 = vld [vmem:[%s4251 + $0x60] sm:$0xff]
      %v4265 = vld [vmem:[%s4251 + $0x68] sm:$0xff]
      %v4266 = vld [vmem:[%s4251 + $0x70] sm:$0xff]
      %v4267 = vld [vmem:[%s4251 + $0x78] sm:$0xff]
      %v4268 = vld [vmem:[%s4251 + $0x80] sm:$0xff]
      %v4269 = vld [vmem:[%s4251 + $0x88] sm:$0xff]
      %v4270 = vunpack.c.l.b16 %v4072
      %v4271 = vunpack.c.l.b16 %v4082
      %v4272 = vunpack.c.l.b16 %v4096
      %v4273 = vunpack.c.l.b16 %v4106
      %v4274 = vunpack.c.l.b16 %v4120
      %v4275 = vunpack.c.l.b16 %v4130
      %v4276 = vunpack.c.l.b16 %v4144
      %v4277 = vunpack.c.l.b16 %v4154
      %v4278 = vunpack.c.l.b16 %v4168
      %v4279 = vunpack.c.l.b16 %v4178
      %v4280 = vunpack.c.l.b16 %v4192
      %v4281 = vunpack.c.l.b16 %v4202
      %v4282 = vunpack.c.l.b16 %v4216
      %v4283 = vunpack.c.l.b16 %v4226
      %v4284 = vunpack.c.l.b16 %v4240
      %v4285 = vunpack.c.l.b16 %v4250
      %v4286 = vpack.c.b16 %v4271, %v4270
      %v4287 = vpack.c.b16 %v4273, %v4272
      %v4288 = vpack.c.b16 %v4275, %v4274
      %v4289 = vpack.c.b16 %v4277, %v4276
      %v4290 = vpack.c.b16 %v4279, %v4278
      %v4291 = vpack.c.b16 %v4281, %v4280
      %v4292 = vpack.c.b16 %v4283, %v4282
      %v4293 = vpack.c.b16 %v4285, %v4284
      %v4312 = vunpack.c.l.b16 %v4252
      %v4313 = vunpack.c.h.b16 %v4252
      %v4314 = vunpack.c.l.b16 %v4253
      %v4315 = vunpack.c.h.b16 %v4253
      %v4316 = vunpack.c.l.b16 %v4254
      %v4317 = vunpack.c.h.b16 %v4254
      %v4318 = vunpack.c.l.b16 %v4255
      %v4319 = vunpack.c.h.b16 %v4255
      %v4320 = vunpack.c.l.b16 %v4256
      %v4321 = vunpack.c.h.b16 %v4256
      %v4322 = vunpack.c.l.b16 %v4257
      %v4323 = vunpack.c.h.b16 %v4257
      %v4324 = vunpack.c.l.b16 %v4258
      %v4325 = vunpack.c.h.b16 %v4258
      %v4326 = vunpack.c.l.b16 %v4259
      %v4327 = vunpack.c.h.b16 %v4259
      %v4328 = vunpack.c.l.b16 %v4260
      %v4329 = vunpack.c.h.b16 %v4260
      %v4330 = vunpack.c.l.b16 %v4261
      %v4331 = vunpack.c.h.b16 %v4261
      %v4332 = vunpack.c.l.b16 %v4262
      %v4333 = vunpack.c.h.b16 %v4262
      %v4334 = vunpack.c.l.b16 %v4263
      %v4335 = vunpack.c.h.b16 %v4263
      %v4336 = vunpack.c.l.b16 %v4264
      %v4337 = vunpack.c.h.b16 %v4264
      %v4338 = vunpack.c.l.b16 %v4265
      %v4339 = vunpack.c.h.b16 %v4265
      %v4340 = vunpack.c.l.b16 %v4266
      %v4341 = vunpack.c.h.b16 %v4266
      %v4342 = vunpack.c.l.b16 %v4267
      %v4343 = vunpack.c.h.b16 %v4267
      %v4344 = vunpack.c.l.b16 %v4268
      %v4345 = vunpack.c.h.b16 %v4268
      %v4346 = vunpack.c.l.b16 %v4269
      %v4347 = vunpack.c.h.b16 %v4269
      %v4348 = vpack.c.b16 %v4316, %v4312
      %v4349 = vpack.c.b16 %v4317, %v4313
      %v4350 = vpack.c.b16 %v4318, %v4314
      %v4351 = vpack.c.b16 %v4319, %v4315
      %v4352 = vpack.c.b16 %v4324, %v4320
      %v4353 = vpack.c.b16 %v4325, %v4321
      %v4354 = vpack.c.b16 %v4326, %v4322
      %v4355 = vpack.c.b16 %v4327, %v4323
      %v4356 = vpack.c.b16 %v4332, %v4328
      %v4357 = vpack.c.b16 %v4333, %v4329
      %v4358 = vpack.c.b16 %v4334, %v4330
      %v4359 = vpack.c.b16 %v4335, %v4331
      %v4360 = vpack.c.b16 %v4340, %v4336
      %v4361 = vpack.c.b16 %v4341, %v4337
      %v4362 = vpack.c.b16 %v4342, %v4338
      %v4363 = vpack.c.b16 %v4343, %v4339
      %v4364 = vpack.c.b16 %v4344, %v4344
      %v4365 = vpack.c.b16 %v4345, %v4345
      %v4366 = vpack.c.b16 %v4346, %v4346
      %v4367 = vpack.c.b16 %v4347, %v4347
      %v4385 = vsel %vm625, %v4286, 0
      %v4388 = vsel %vm625, %v4287, 0
      %v4391 = vsel %vm625, %v4288, 0
      %v4394 = vsel %vm625, %v4289, 0
      %v4397 = vsel %vm625, %v4290, 0
      %v4400 = vsel %vm625, %v4291, 0
      %v4403 = vsel %vm625, %v4292, 0
      %v4406 = vsel %vm625, %v4293, 0
      %v4409 = vsel %vm650, %v4364, 0
      %v4412 = vsel %vm650, %v4365, 0
      %v4415 = vsel %vm650, %v4366, 0
      %v4418 = vsel %vm650, %v4367, 0
      %4420 = vmatprep.subr.bf16.mxu0 0
      %4421 = vmatpush1.bf16.msra.mxu0 0
      %4422 = vmatprep.subr.bf16.mxu0 0
      %4423 = vmatpush1.bf16.msra.mxu0 0
      %4424 = vmatprep.subr.bf16.mxu0 0
      %4425 = vmatpush1.bf16.msra.mxu0 0
      %4426 = vmatprep.subr.bf16.mxu0 %v4412
      %4427 = vmatpush1.bf16.msra.mxu0 %v4409
      %4428 = vmatprep.subr.bf16.mxu0 %v4361
      %4429 = vmatpush1.bf16.msra.mxu0 %v4360
      %4430 = vmatprep.subr.bf16.mxu0 %v4357
      %4431 = vmatpush1.bf16.msra.mxu0 %v4356
      %4432 = vmatprep.subr.bf16.mxu0 %v4353
      %4433 = vmatpush1.bf16.msra.mxu0 %v4352
      %4434 = vmatprep.subr.bf16.mxu0 %v4349
      %4435 = vmatpush1.bf16.msra.mxu0 %v4348
      %4436 = vmatprep.subr.bf16.mxu0 0
      %4437 = vmatpush2.bf16.msra.mxu0 0
      %4438 = vmatprep.subr.bf16.mxu0 0
      %4439 = vmatpush2.bf16.msra.mxu0 0
      %4440 = vmatprep.subr.bf16.mxu0 0
      %4441 = vmatpush2.bf16.msra.mxu0 0
      %4442 = vmatprep.subr.bf16.mxu0 0
      %4443 = vmatpush2.bf16.msra.mxu0 0
      %4444 = vmatprep.subr.bf16.mxu0 0
      %4445 = vmatpush2.bf16.msra.mxu0 0
      %4446 = vmatprep.subr.bf16.mxu0 0
      %4447 = vmatpush2.bf16.msra.mxu0 0
      %4448 = vmatprep.subr.bf16.mxu0 0
      %4449 = vmatpush2.bf16.msra.mxu0 0
      %4450 = vmatprep.subr.bf16.mxu0 0
      %4451 = vmatpush2.bf16.msra.mxu0 0
      %4452 = vmatprep.mubr.bf16.mxu0 0
      %4453 = vmatmul.mubr.bf16.gmra.mxu0 %v4385
      %v4454 = vpop.f32.mrf.mxu0
      %v4455 = vadd.f32 0.0, %v4454
      %v4456 = vpop.f32.mrf.mxu0
      %v4457 = vadd.f32 0.0, %v4456
      %v4458 = vpop.f32.mrf.mxu0
      %v4459 = vadd.f32 0.0, %v4458
      %v4460 = vpop.f32.mrf.mxu0
      %v4461 = vadd.f32 0.0, %v4460
      %4462 = vmatprep.mubr.bf16.mxu0 0
      %4463 = vmatmul.mubr.bf16.gmra.mxu0 %v4388
      %v4464 = vpop.f32.mrf.mxu0
      %v4465 = vadd.f32 0.0, %v4464
      %v4466 = vpop.f32.mrf.mxu0
      %v4467 = vadd.f32 0.0, %v4466
      %v4468 = vpop.f32.mrf.mxu0
      %v4469 = vadd.f32 0.0, %v4468
      %v4470 = vpop.f32.mrf.mxu0
      %v4471 = vadd.f32 0.0, %v4470
      %4472 = vmatprep.mubr.bf16.mxu0 0
      %4473 = vmatmul.mubr.bf16.gmra.mxu0 %v4391
      %v4474 = vpop.f32.mrf.mxu0
      %v4475 = vadd.f32 0.0, %v4474
      %v4476 = vpop.f32.mrf.mxu0
      %v4477 = vadd.f32 0.0, %v4476
      %v4478 = vpop.f32.mrf.mxu0
      %v4479 = vadd.f32 0.0, %v4478
      %v4480 = vpop.f32.mrf.mxu0
      %v4481 = vadd.f32 0.0, %v4480
      %4482 = vmatprep.mubr.bf16.mxu0 0
      %4483 = vmatmul.mubr.bf16.gmra.mxu0 %v4394
      %v4484 = vpop.f32.mrf.mxu0
      %v4485 = vadd.f32 0.0, %v4484
      %v4486 = vpop.f32.mrf.mxu0
      %v4487 = vadd.f32 0.0, %v4486
      %v4488 = vpop.f32.mrf.mxu0
      %v4489 = vadd.f32 0.0, %v4488
      %v4490 = vpop.f32.mrf.mxu0
      %v4491 = vadd.f32 0.0, %v4490
      %4492 = vmatprep.mubr.bf16.mxu0 0
      %4493 = vmatmul.mubr.bf16.gmra.mxu0 %v4397
      %v4494 = vpop.f32.mrf.mxu0
      %v4495 = vadd.f32 0.0, %v4494
      %v4496 = vpop.f32.mrf.mxu0
      %v4497 = vadd.f32 0.0, %v4496
      %v4498 = vpop.f32.mrf.mxu0
      %v4499 = vadd.f32 0.0, %v4498
      %v4500 = vpop.f32.mrf.mxu0
      %v4501 = vadd.f32 0.0, %v4500
      %4502 = vmatprep.mubr.bf16.mxu0 0
      %4503 = vmatmul.mubr.bf16.gmra.mxu0 %v4400
      %v4504 = vpop.f32.mrf.mxu0
      %v4505 = vadd.f32 0.0, %v4504
      %v4506 = vpop.f32.mrf.mxu0
      %v4507 = vadd.f32 0.0, %v4506
      %v4508 = vpop.f32.mrf.mxu0
      %v4509 = vadd.f32 0.0, %v4508
      %v4510 = vpop.f32.mrf.mxu0
      %v4511 = vadd.f32 0.0, %v4510
      %4512 = vmatprep.mubr.bf16.mxu0 0
      %4513 = vmatmul.mubr.bf16.gmra.mxu0 %v4403
      %v4514 = vpop.f32.mrf.mxu0
      %v4515 = vadd.f32 0.0, %v4514
      %v4516 = vpop.f32.mrf.mxu0
      %v4517 = vadd.f32 0.0, %v4516
      %v4518 = vpop.f32.mrf.mxu0
      %v4519 = vadd.f32 0.0, %v4518
      %v4520 = vpop.f32.mrf.mxu0
      %v4521 = vadd.f32 0.0, %v4520
      %4522 = vmatprep.mubr.bf16.mxu0 0
      %4523 = vmatmul.mubr.bf16.gmra.mxu0 %v4406
      %v4524 = vpop.f32.mrf.mxu0
      %v4525 = vadd.f32 0.0, %v4524
      %v4526 = vpop.f32.mrf.mxu0
      %v4527 = vadd.f32 0.0, %v4526
      %v4528 = vpop.f32.mrf.mxu0
      %v4529 = vadd.f32 0.0, %v4528
      %v4530 = vpop.f32.mrf.mxu0
      %v4531 = vadd.f32 0.0, %v4530
      %4532 = vdwg.mxu0
      %4533 = vmatprep.subr.bf16.mxu0 0
      %4534 = vmatpush1.bf16.msra.mxu0 0
      %4535 = vmatprep.subr.bf16.mxu0 0
      %4536 = vmatpush1.bf16.msra.mxu0 0
      %4537 = vmatprep.subr.bf16.mxu0 0
      %4538 = vmatpush1.bf16.msra.mxu0 0
      %4539 = vmatprep.subr.bf16.mxu0 %v4418
      %4540 = vmatpush1.bf16.msra.mxu0 %v4415
      %4541 = vmatprep.subr.bf16.mxu0 %v4363
      %4542 = vmatpush1.bf16.msra.mxu0 %v4362
      %4543 = vmatprep.subr.bf16.mxu0 %v4359
      %4544 = vmatpush1.bf16.msra.mxu0 %v4358
      %4545 = vmatprep.subr.bf16.mxu0 %v4355
      %4546 = vmatpush1.bf16.msra.mxu0 %v4354
      %4547 = vmatprep.subr.bf16.mxu0 %v4351
      %4548 = vmatpush1.bf16.msra.mxu0 %v4350
      %4549 = vmatprep.subr.bf16.mxu0 0
      %4550 = vmatpush2.bf16.msra.mxu0 0
      %4551 = vmatprep.subr.bf16.mxu0 0
      %4552 = vmatpush2.bf16.msra.mxu0 0
      %4553 = vmatprep.subr.bf16.mxu0 0
      %4554 = vmatpush2.bf16.msra.mxu0 0
      %4555 = vmatprep.subr.bf16.mxu0 0
      %4556 = vmatpush2.bf16.msra.mxu0 0
      %4557 = vmatprep.subr.bf16.mxu0 0
      %4558 = vmatpush2.bf16.msra.mxu0 0
      %4559 = vmatprep.subr.bf16.mxu0 0
      %4560 = vmatpush2.bf16.msra.mxu0 0
      %4561 = vmatprep.subr.bf16.mxu0 0
      %4562 = vmatpush2.bf16.msra.mxu0 0
      %4563 = vmatprep.subr.bf16.mxu0 0
      %4564 = vmatpush2.bf16.msra.mxu0 0
      %4565 = vmatprep.mubr.bf16.mxu0 0
      %4566 = vmatmul.mubr.bf16.gmra.mxu0 %v4385
      %v4567 = vpop.f32.mrf.mxu0
      %v4568 = vadd.f32 0.0, %v4567
      %v4569 = vpop.f32.mrf.mxu0
      %v4570 = vadd.f32 0.0, %v4569
      %v4571 = vpop.f32.mrf.mxu0
      %v4572 = vadd.f32 0.0, %v4571
      %v4573 = vpop.f32.mrf.mxu0
      %v4574 = vadd.f32 0.0, %v4573
      %4575 = vmatprep.mubr.bf16.mxu0 0
      %4576 = vmatmul.mubr.bf16.gmra.mxu0 %v4388
      %v4577 = vpop.f32.mrf.mxu0
      %v4578 = vadd.f32 0.0, %v4577
      %v4579 = vpop.f32.mrf.mxu0
      %v4580 = vadd.f32 0.0, %v4579
      %v4581 = vpop.f32.mrf.mxu0
      %v4582 = vadd.f32 0.0, %v4581
      %v4583 = vpop.f32.mrf.mxu0
      %v4584 = vadd.f32 0.0, %v4583
      %4585 = vmatprep.mubr.bf16.mxu0 0
      %4586 = vmatmul.mubr.bf16.gmra.mxu0 %v4391
      %v4587 = vpop.f32.mrf.mxu0
      %v4588 = vadd.f32 0.0, %v4587
      %v4589 = vpop.f32.mrf.mxu0
      %v4590 = vadd.f32 0.0, %v4589
      %v4591 = vpop.f32.mrf.mxu0
      %v4592 = vadd.f32 0.0, %v4591
      %v4593 = vpop.f32.mrf.mxu0
      %v4594 = vadd.f32 0.0, %v4593
      %4595 = vmatprep.mubr.bf16.mxu0 0
      %4596 = vmatmul.mubr.bf16.gmra.mxu0 %v4394
      %v4597 = vpop.f32.mrf.mxu0
      %v4598 = vadd.f32 0.0, %v4597
      %v4599 = vpop.f32.mrf.mxu0
      %v4600 = vadd.f32 0.0, %v4599
      %v4601 = vpop.f32.mrf.mxu0
      %v4602 = vadd.f32 0.0, %v4601
      %v4603 = vpop.f32.mrf.mxu0
      %v4604 = vadd.f32 0.0, %v4603
      %4605 = vmatprep.mubr.bf16.mxu0 0
      %4606 = vmatmul.mubr.bf16.gmra.mxu0 %v4397
      %v4607 = vpop.f32.mrf.mxu0
      %v4608 = vadd.f32 0.0, %v4607
      %v4609 = vpop.f32.mrf.mxu0
      %v4610 = vadd.f32 0.0, %v4609
      %v4611 = vpop.f32.mrf.mxu0
      %v4612 = vadd.f32 0.0, %v4611
      %v4613 = vpop.f32.mrf.mxu0
      %v4614 = vadd.f32 0.0, %v4613
      %4615 = vmatprep.mubr.bf16.mxu0 0
      %4616 = vmatmul.mubr.bf16.gmra.mxu0 %v4400
      %v4617 = vpop.f32.mrf.mxu0
      %v4618 = vadd.f32 0.0, %v4617
      %v4619 = vpop.f32.mrf.mxu0
      %v4620 = vadd.f32 0.0, %v4619
      %v4621 = vpop.f32.mrf.mxu0
      %v4622 = vadd.f32 0.0, %v4621
      %v4623 = vpop.f32.mrf.mxu0
      %v4624 = vadd.f32 0.0, %v4623
      %4625 = vmatprep.mubr.bf16.mxu0 0
      %4626 = vmatmul.mubr.bf16.gmra.mxu0 %v4403
      %v4627 = vpop.f32.mrf.mxu0
      %v4628 = vadd.f32 0.0, %v4627
      %v4629 = vpop.f32.mrf.mxu0
      %v4630 = vadd.f32 0.0, %v4629
      %v4631 = vpop.f32.mrf.mxu0
      %v4632 = vadd.f32 0.0, %v4631
      %v4633 = vpop.f32.mrf.mxu0
      %v4634 = vadd.f32 0.0, %v4633
      %4635 = vmatprep.mubr.bf16.mxu0 0
      %4636 = vmatmul.mubr.bf16.gmra.mxu0 %v4406
      %v4637 = vpop.f32.mrf.mxu0
      %v4638 = vadd.f32 0.0, %v4637
      %v4639 = vpop.f32.mrf.mxu0
      %v4640 = vadd.f32 0.0, %v4639
      %v4641 = vpop.f32.mrf.mxu0
      %v4642 = vadd.f32 0.0, %v4641
      %v4643 = vpop.f32.mrf.mxu0
      %v4644 = vadd.f32 0.0, %v4643
      %4645 = vdwg.mxu0
      %v4646 = vadd.f32 %v3971, %v4455
      %v4647 = vadd.f32 %v3972, %v4457
      %v4648 = vadd.f32 %v3973, %v4568
      %v4649 = vadd.f32 %v3974, %v4570
      %v4650 = vadd.f32 %v3975, %v4459
      %v4651 = vadd.f32 %v3976, %v4461
      %v4652 = vadd.f32 %v3977, %v4572
      %v4653 = vadd.f32 %v3978, %v4574
      %v4654 = vadd.f32 %v3979, %v4465
      %v4655 = vadd.f32 %v3980, %v4467
      %v4656 = vadd.f32 %v3981, %v4578
      %v4657 = vadd.f32 %v3982, %v4580
      %v4658 = vadd.f32 %v3983, %v4469
      %v4659 = vadd.f32 %v3984, %v4471
      %v4660 = vadd.f32 %v3985, %v4582
      %v4661 = vadd.f32 %v3986, %v4584
      %v4662 = vadd.f32 %v3987, %v4475
      %v4663 = vadd.f32 %v3988, %v4477
      %v4664 = vadd.f32 %v3989, %v4588
      %v4665 = vadd.f32 %v3990, %v4590
      %v4666 = vadd.f32 %v3991, %v4479
      %v4667 = vadd.f32 %v3992, %v4481
      %v4668 = vadd.f32 %v3993, %v4592
      %v4669 = vadd.f32 %v3994, %v4594
      %v4670 = vadd.f32 %v3995, %v4485
      %v4671 = vadd.f32 %v3996, %v4487
      %v4672 = vadd.f32 %v3997, %v4598
      %v4673 = vadd.f32 %v3998, %v4600
      %v4674 = vadd.f32 %v3999, %v4489
      %v4675 = vadd.f32 %v4000, %v4491
      %v4676 = vadd.f32 %v4001, %v4602
      %v4677 = vadd.f32 %v4002, %v4604
      %v4678 = vadd.f32 %v4003, %v4495
      %v4679 = vadd.f32 %v4004, %v4497
      %v4680 = vadd.f32 %v4005, %v4608
      %v4681 = vadd.f32 %v4006, %v4610
      %v4682 = vadd.f32 %v4007, %v4499
      %v4683 = vadd.f32 %v4008, %v4501
      %v4684 = vadd.f32 %v4009, %v4612
      %v4685 = vadd.f32 %v4010, %v4614
      %v4686 = vadd.f32 %v4011, %v4505
      %v4687 = vadd.f32 %v4012, %v4507
      %v4688 = vadd.f32 %v4013, %v4618
      %v4689 = vadd.f32 %v4014, %v4620
      %v4690 = vadd.f32 %v4015, %v4509
      %v4691 = vadd.f32 %v4016, %v4511
      %v4692 = vadd.f32 %v4017, %v4622
      %v4693 = vadd.f32 %v4018, %v4624
      %v4694 = vadd.f32 %v4019, %v4515
      %v4695 = vadd.f32 %v4020, %v4517
      %v4696 = vadd.f32 %v4021, %v4628
      %v4697 = vadd.f32 %v4022, %v4630
      %v4698 = vadd.f32 %v4023, %v4519
      %v4699 = vadd.f32 %v4024, %v4521
      %v4700 = vadd.f32 %v4025, %v4632
      %v4701 = vadd.f32 %v4026, %v4634
      %v4702 = vadd.f32 %v4027, %v4525
      %v4703 = vadd.f32 %v4028, %v4527
      %v4704 = vadd.f32 %v4029, %v4638
      %v4705 = vadd.f32 %v4030, %v4640
      %v4706 = vadd.f32 %v4031, %v4529
      %v4707 = vadd.f32 %v4032, %v4531
      %v4708 = vadd.f32 %v4033, %v4642
      %v4709 = vadd.f32 %v4034, %v4644
      %v4710 = vld [vmem:[%s3543] sm:$0xe]
      %v4711 = vld [vmem:[%s3543 + $0xc] sm:$0xe]
      %v4712 = vld [vmem:[%s3543 + $0x18] sm:$0xe]
      %v4713 = vld [vmem:[%s3543 + $0x24] sm:$0xe]
      %v4714 = vld [vmem:[%s3543 + $0x30] sm:$0xe]
      %v4715 = vld [vmem:[%s3543 + $0x3c] sm:$0xe]
      %v4716 = vld [vmem:[%s3543 + $0x48] sm:$0xe]
      %v4717 = vld [vmem:[%s3543 + $0x54] sm:$0xe]
      %v4742 = vrot.slane %v4710, 5
      %v4743 = vrot.slane %v4742, 4
      %v4744 = vrot.slane %v4036, 5
      %v4745 = vsel %vm1307, %v4743, %v4744
      %v4746 = vrot.slane %v4744, 4
      %v4747 = vrot.slane %v4037, 5
      %v4748 = vsel %vm1307, %v4746, %v4747
      %v4749 = vrot.slane %v4711, 5
      %v4750 = vrot.slane %v4749, 4
      %v4751 = vrot.slane %v4039, 5
      %v4752 = vsel %vm1307, %v4750, %v4751
      %v4753 = vrot.slane %v4751, 4
      %v4754 = vrot.slane %v4040, 5
      %v4755 = vsel %vm1307, %v4753, %v4754
      %v4756 = vrot.slane %v4712, 5
      %v4757 = vrot.slane %v4756, 4
      %v4758 = vrot.slane %v4042, 5
      %v4759 = vsel %vm1307, %v4757, %v4758
      %v4760 = vrot.slane %v4758, 4
      %v4761 = vrot.slane %v4043, 5
      %v4762 = vsel %vm1307, %v4760, %v4761
      %v4763 = vrot.slane %v4713, 5
      %v4764 = vrot.slane %v4763, 4
      %v4765 = vrot.slane %v4045, 5
      %v4766 = vsel %vm1307, %v4764, %v4765
      %v4767 = vrot.slane %v4765, 4
      %v4768 = vrot.slane %v4046, 5
      %v4769 = vsel %vm1307, %v4767, %v4768
      %v4770 = vrot.slane %v4714, 5
      %v4771 = vrot.slane %v4770, 4
      %v4772 = vrot.slane %v4048, 5
      %v4773 = vsel %vm1307, %v4771, %v4772
      %v4774 = vrot.slane %v4772, 4
      %v4775 = vrot.slane %v4049, 5
      %v4776 = vsel %vm1307, %v4774, %v4775
      %v4777 = vrot.slane %v4715, 5
      %v4778 = vrot.slane %v4777, 4
      %v4779 = vrot.slane %v4051, 5
      %v4780 = vsel %vm1307, %v4778, %v4779
      %v4781 = vrot.slane %v4779, 4
      %v4782 = vrot.slane %v4052, 5
      %v4783 = vsel %vm1307, %v4781, %v4782
      %v4784 = vrot.slane %v4716, 5
      %v4785 = vrot.slane %v4784, 4
      %v4786 = vrot.slane %v4054, 5
      %v4787 = vsel %vm1307, %v4785, %v4786
      %v4788 = vrot.slane %v4786, 4
      %v4789 = vrot.slane %v4055, 5
      %v4790 = vsel %vm1307, %v4788, %v4789
      %v4791 = vrot.slane %v4717, 5
      %v4792 = vrot.slane %v4791, 4
      %v4793 = vrot.slane %v4057, 5
      %v4794 = vsel %vm1307, %v4792, %v4793
      %v4795 = vrot.slane %v4793, 4
      %v4796 = vrot.slane %v4058, 5
      %v4797 = vsel %vm1307, %v4795, %v4796
      %s4798 = scalar_lea.vmem %s1, 1152
      %v4799 = vld [vmem:[%s4798] sm:$0xff]
      %v4800 = vld [vmem:[%s4798 + $0x8] sm:$0xff]
      %v4801 = vld [vmem:[%s4798 + $0x10] sm:$0xff]
      %v4802 = vld [vmem:[%s4798 + $0x18] sm:$0xff]
      %v4803 = vld [vmem:[%s4798 + $0x20] sm:$0xff]
      %v4804 = vld [vmem:[%s4798 + $0x28] sm:$0xff]
      %v4805 = vld [vmem:[%s4798 + $0x30] sm:$0xff]
      %v4806 = vld [vmem:[%s4798 + $0x38] sm:$0xff]
      %v4807 = vld [vmem:[%s4798 + $0x40] sm:$0xff]
      %v4808 = vld [vmem:[%s4798 + $0x48] sm:$0xff]
      %v4809 = vld [vmem:[%s4798 + $0x50] sm:$0xff]
      %v4810 = vld [vmem:[%s4798 + $0x58] sm:$0xff]
      %v4811 = vld [vmem:[%s4798 + $0x60] sm:$0xff]
      %v4812 = vld [vmem:[%s4798 + $0x68] sm:$0xff]
      %v4813 = vld [vmem:[%s4798 + $0x70] sm:$0xff]
      %v4814 = vld [vmem:[%s4798 + $0x78] sm:$0xff]
      %v4815 = vld [vmem:[%s4798 + $0x80] sm:$0xff]
      %v4816 = vld [vmem:[%s4798 + $0x88] sm:$0xff]
      %v4817 = vunpack.c.l.b16 %v4745
      %v4818 = vunpack.c.l.b16 %v4748
      %v4819 = vunpack.c.l.b16 %v4752
      %v4820 = vunpack.c.l.b16 %v4755
      %v4821 = vunpack.c.l.b16 %v4759
      %v4822 = vunpack.c.l.b16 %v4762
      %v4823 = vunpack.c.l.b16 %v4766
      %v4824 = vunpack.c.l.b16 %v4769
      %v4825 = vunpack.c.l.b16 %v4773
      %v4826 = vunpack.c.l.b16 %v4776
      %v4827 = vunpack.c.l.b16 %v4780
      %v4828 = vunpack.c.l.b16 %v4783
      %v4829 = vunpack.c.l.b16 %v4787
      %v4830 = vunpack.c.l.b16 %v4790
      %v4831 = vunpack.c.l.b16 %v4794
      %v4832 = vunpack.c.l.b16 %v4797
      %v4833 = vpack.c.b16 %v4818, %v4817
      %v4834 = vpack.c.b16 %v4820, %v4819
      %v4835 = vpack.c.b16 %v4822, %v4821
      %v4836 = vpack.c.b16 %v4824, %v4823
      %v4837 = vpack.c.b16 %v4826, %v4825
      %v4838 = vpack.c.b16 %v4828, %v4827
      %v4839 = vpack.c.b16 %v4830, %v4829
      %v4840 = vpack.c.b16 %v4832, %v4831
      %v4859 = vunpack.c.l.b16 %v4799
      %v4860 = vunpack.c.h.b16 %v4799
      %v4861 = vunpack.c.l.b16 %v4800
      %v4862 = vunpack.c.h.b16 %v4800
      %v4863 = vunpack.c.l.b16 %v4801
      %v4864 = vunpack.c.h.b16 %v4801
      %v4865 = vunpack.c.l.b16 %v4802
      %v4866 = vunpack.c.h.b16 %v4802
      %v4867 = vunpack.c.l.b16 %v4803
      %v4868 = vunpack.c.h.b16 %v4803
      %v4869 = vunpack.c.l.b16 %v4804
      %v4870 = vunpack.c.h.b16 %v4804
      %v4871 = vunpack.c.l.b16 %v4805
      %v4872 = vunpack.c.h.b16 %v4805
      %v4873 = vunpack.c.l.b16 %v4806
      %v4874 = vunpack.c.h.b16 %v4806
      %v4875 = vunpack.c.l.b16 %v4807
      %v4876 = vunpack.c.h.b16 %v4807
      %v4877 = vunpack.c.l.b16 %v4808
      %v4878 = vunpack.c.h.b16 %v4808
      %v4879 = vunpack.c.l.b16 %v4809
      %v4880 = vunpack.c.h.b16 %v4809
      %v4881 = vunpack.c.l.b16 %v4810
      %v4882 = vunpack.c.h.b16 %v4810
      %v4883 = vunpack.c.l.b16 %v4811
      %v4884 = vunpack.c.h.b16 %v4811
      %v4885 = vunpack.c.l.b16 %v4812
      %v4886 = vunpack.c.h.b16 %v4812
      %v4887 = vunpack.c.l.b16 %v4813
      %v4888 = vunpack.c.h.b16 %v4813
      %v4889 = vunpack.c.l.b16 %v4814
      %v4890 = vunpack.c.h.b16 %v4814
      %v4891 = vunpack.c.l.b16 %v4815
      %v4892 = vunpack.c.h.b16 %v4815
      %v4893 = vunpack.c.l.b16 %v4816
      %v4894 = vunpack.c.h.b16 %v4816
      %v4895 = vpack.c.b16 %v4863, %v4859
      %v4896 = vpack.c.b16 %v4864, %v4860
      %v4897 = vpack.c.b16 %v4865, %v4861
      %v4898 = vpack.c.b16 %v4866, %v4862
      %v4899 = vpack.c.b16 %v4871, %v4867
      %v4900 = vpack.c.b16 %v4872, %v4868
      %v4901 = vpack.c.b16 %v4873, %v4869
      %v4902 = vpack.c.b16 %v4874, %v4870
      %v4903 = vpack.c.b16 %v4879, %v4875
      %v4904 = vpack.c.b16 %v4880, %v4876
      %v4905 = vpack.c.b16 %v4881, %v4877
      %v4906 = vpack.c.b16 %v4882, %v4878
      %v4907 = vpack.c.b16 %v4887, %v4883
      %v4908 = vpack.c.b16 %v4888, %v4884
      %v4909 = vpack.c.b16 %v4889, %v4885
      %v4910 = vpack.c.b16 %v4890, %v4886
      %v4911 = vpack.c.b16 %v4891, %v4891
      %v4912 = vpack.c.b16 %v4892, %v4892
      %v4913 = vpack.c.b16 %v4893, %v4893
      %v4914 = vpack.c.b16 %v4894, %v4894
      %v4932 = vsel %vm625, %v4833, 0
      %v4935 = vsel %vm625, %v4834, 0
      %v4938 = vsel %vm625, %v4835, 0
      %v4941 = vsel %vm625, %v4836, 0
      %v4944 = vsel %vm625, %v4837, 0
      %v4947 = vsel %vm625, %v4838, 0
      %v4950 = vsel %vm625, %v4839, 0
      %v4953 = vsel %vm625, %v4840, 0
      %v4956 = vsel %vm650, %v4911, 0
      %v4959 = vsel %vm650, %v4912, 0
      %v4962 = vsel %vm650, %v4913, 0
      %v4965 = vsel %vm650, %v4914, 0
      %4967 = vmatprep.subr.bf16.mxu0 0
      %4968 = vmatpush1.bf16.msra.mxu0 0
      %4969 = vmatprep.subr.bf16.mxu0 0
      %4970 = vmatpush1.bf16.msra.mxu0 0
      %4971 = vmatprep.subr.bf16.mxu0 0
      %4972 = vmatpush1.bf16.msra.mxu0 0
      %4973 = vmatprep.subr.bf16.mxu0 %v4959
      %4974 = vmatpush1.bf16.msra.mxu0 %v4956
      %4975 = vmatprep.subr.bf16.mxu0 %v4908
      %4976 = vmatpush1.bf16.msra.mxu0 %v4907
      %4977 = vmatprep.subr.bf16.mxu0 %v4904
      %4978 = vmatpush1.bf16.msra.mxu0 %v4903
      %4979 = vmatprep.subr.bf16.mxu0 %v4900
      %4980 = vmatpush1.bf16.msra.mxu0 %v4899
      %4981 = vmatprep.subr.bf16.mxu0 %v4896
      %4982 = vmatpush1.bf16.msra.mxu0 %v4895
      %4983 = vmatprep.subr.bf16.mxu0 0
      %4984 = vmatpush2.bf16.msra.mxu0 0
      %4985 = vmatprep.subr.bf16.mxu0 0
      %4986 = vmatpush2.bf16.msra.mxu0 0
      %4987 = vmatprep.subr.bf16.mxu0 0
      %4988 = vmatpush2.bf16.msra.mxu0 0
      %4989 = vmatprep.subr.bf16.mxu0 0
      %4990 = vmatpush2.bf16.msra.mxu0 0
      %4991 = vmatprep.subr.bf16.mxu0 0
      %4992 = vmatpush2.bf16.msra.mxu0 0
      %4993 = vmatprep.subr.bf16.mxu0 0
      %4994 = vmatpush2.bf16.msra.mxu0 0
      %4995 = vmatprep.subr.bf16.mxu0 0
      %4996 = vmatpush2.bf16.msra.mxu0 0
      %4997 = vmatprep.subr.bf16.mxu0 0
      %4998 = vmatpush2.bf16.msra.mxu0 0
      %4999 = vmatprep.mubr.bf16.mxu0 0
      %5000 = vmatmul.mubr.bf16.gmra.mxu0 %v4932
      %v5001 = vpop.f32.mrf.mxu0
      %v5002 = vadd.f32 0.0, %v5001
      %v5003 = vpop.f32.mrf.mxu0
      %v5004 = vadd.f32 0.0, %v5003
      %v5005 = vpop.f32.mrf.mxu0
      %v5006 = vadd.f32 0.0, %v5005
      %v5007 = vpop.f32.mrf.mxu0
      %v5008 = vadd.f32 0.0, %v5007
      %5009 = vmatprep.mubr.bf16.mxu0 0
      %5010 = vmatmul.mubr.bf16.gmra.mxu0 %v4935
      %v5011 = vpop.f32.mrf.mxu0
      %v5012 = vadd.f32 0.0, %v5011
      %v5013 = vpop.f32.mrf.mxu0
      %v5014 = vadd.f32 0.0, %v5013
      %v5015 = vpop.f32.mrf.mxu0
      %v5016 = vadd.f32 0.0, %v5015
      %v5017 = vpop.f32.mrf.mxu0
      %v5018 = vadd.f32 0.0, %v5017
      %5019 = vmatprep.mubr.bf16.mxu0 0
      %5020 = vmatmul.mubr.bf16.gmra.mxu0 %v4938
      %v5021 = vpop.f32.mrf.mxu0
      %v5022 = vadd.f32 0.0, %v5021
      %v5023 = vpop.f32.mrf.mxu0
      %v5024 = vadd.f32 0.0, %v5023
      %v5025 = vpop.f32.mrf.mxu0
      %v5026 = vadd.f32 0.0, %v5025
      %v5027 = vpop.f32.mrf.mxu0
      %v5028 = vadd.f32 0.0, %v5027
      %5029 = vmatprep.mubr.bf16.mxu0 0
      %5030 = vmatmul.mubr.bf16.gmra.mxu0 %v4941
      %v5031 = vpop.f32.mrf.mxu0
      %v5032 = vadd.f32 0.0, %v5031
      %v5033 = vpop.f32.mrf.mxu0
      %v5034 = vadd.f32 0.0, %v5033
      %v5035 = vpop.f32.mrf.mxu0
      %v5036 = vadd.f32 0.0, %v5035
      %v5037 = vpop.f32.mrf.mxu0
      %v5038 = vadd.f32 0.0, %v5037
      %5039 = vmatprep.mubr.bf16.mxu0 0
      %5040 = vmatmul.mubr.bf16.gmra.mxu0 %v4944
      %v5041 = vpop.f32.mrf.mxu0
      %v5042 = vadd.f32 0.0, %v5041
      %v5043 = vpop.f32.mrf.mxu0
      %v5044 = vadd.f32 0.0, %v5043
      %v5045 = vpop.f32.mrf.mxu0
      %v5046 = vadd.f32 0.0, %v5045
      %v5047 = vpop.f32.mrf.mxu0
      %v5048 = vadd.f32 0.0, %v5047
      %5049 = vmatprep.mubr.bf16.mxu0 0
      %5050 = vmatmul.mubr.bf16.gmra.mxu0 %v4947
      %v5051 = vpop.f32.mrf.mxu0
      %v5052 = vadd.f32 0.0, %v5051
      %v5053 = vpop.f32.mrf.mxu0
      %v5054 = vadd.f32 0.0, %v5053
      %v5055 = vpop.f32.mrf.mxu0
      %v5056 = vadd.f32 0.0, %v5055
      %v5057 = vpop.f32.mrf.mxu0
      %v5058 = vadd.f32 0.0, %v5057
      %5059 = vmatprep.mubr.bf16.mxu0 0
      %5060 = vmatmul.mubr.bf16.gmra.mxu0 %v4950
      %v5061 = vpop.f32.mrf.mxu0
      %v5062 = vadd.f32 0.0, %v5061
      %v5063 = vpop.f32.mrf.mxu0
      %v5064 = vadd.f32 0.0, %v5063
      %v5065 = vpop.f32.mrf.mxu0
      %v5066 = vadd.f32 0.0, %v5065
      %v5067 = vpop.f32.mrf.mxu0
      %v5068 = vadd.f32 0.0, %v5067
      %5069 = vmatprep.mubr.bf16.mxu0 0
      %5070 = vmatmul.mubr.bf16.gmra.mxu0 %v4953
      %v5071 = vpop.f32.mrf.mxu0
      %v5072 = vadd.f32 0.0, %v5071
      %v5073 = vpop.f32.mrf.mxu0
      %v5074 = vadd.f32 0.0, %v5073
      %v5075 = vpop.f32.mrf.mxu0
      %v5076 = vadd.f32 0.0, %v5075
      %v5077 = vpop.f32.mrf.mxu0
      %v5078 = vadd.f32 0.0, %v5077
      %5079 = vdwg.mxu0
      %5080 = vmatprep.subr.bf16.mxu0 0
      %5081 = vmatpush1.bf16.msra.mxu0 0
      %5082 = vmatprep.subr.bf16.mxu0 0
      %5083 = vmatpush1.bf16.msra.mxu0 0
      %5084 = vmatprep.subr.bf16.mxu0 0
      %5085 = vmatpush1.bf16.msra.mxu0 0
      %5086 = vmatprep.subr.bf16.mxu0 %v4965
      %5087 = vmatpush1.bf16.msra.mxu0 %v4962
      %5088 = vmatprep.subr.bf16.mxu0 %v4910
      %5089 = vmatpush1.bf16.msra.mxu0 %v4909
      %5090 = vmatprep.subr.bf16.mxu0 %v4906
      %5091 = vmatpush1.bf16.msra.mxu0 %v4905
      %5092 = vmatprep.subr.bf16.mxu0 %v4902
      %5093 = vmatpush1.bf16.msra.mxu0 %v4901
      %5094 = vmatprep.subr.bf16.mxu0 %v4898
      %5095 = vmatpush1.bf16.msra.mxu0 %v4897
      %5096 = vmatprep.subr.bf16.mxu0 0
      %5097 = vmatpush2.bf16.msra.mxu0 0
      %5098 = vmatprep.subr.bf16.mxu0 0
      %5099 = vmatpush2.bf16.msra.mxu0 0
      %5100 = vmatprep.subr.bf16.mxu0 0
      %5101 = vmatpush2.bf16.msra.mxu0 0
      %5102 = vmatprep.subr.bf16.mxu0 0
      %5103 = vmatpush2.bf16.msra.mxu0 0
      %5104 = vmatprep.subr.bf16.mxu0 0
      %5105 = vmatpush2.bf16.msra.mxu0 0
      %5106 = vmatprep.subr.bf16.mxu0 0
      %5107 = vmatpush2.bf16.msra.mxu0 0
      %5108 = vmatprep.subr.bf16.mxu0 0
      %5109 = vmatpush2.bf16.msra.mxu0 0
      %5110 = vmatprep.subr.bf16.mxu0 0
      %5111 = vmatpush2.bf16.msra.mxu0 0
      %5112 = vmatprep.mubr.bf16.mxu0 0
      %5113 = vmatmul.mubr.bf16.gmra.mxu0 %v4932
      %v5114 = vpop.f32.mrf.mxu0
      %v5115 = vadd.f32 0.0, %v5114
      %v5116 = vpop.f32.mrf.mxu0
      %v5117 = vadd.f32 0.0, %v5116
      %v5118 = vpop.f32.mrf.mxu0
      %v5119 = vadd.f32 0.0, %v5118
      %v5120 = vpop.f32.mrf.mxu0
      %v5121 = vadd.f32 0.0, %v5120
      %5122 = vmatprep.mubr.bf16.mxu0 0
      %5123 = vmatmul.mubr.bf16.gmra.mxu0 %v4935
      %v5124 = vpop.f32.mrf.mxu0
      %v5125 = vadd.f32 0.0, %v5124
      %v5126 = vpop.f32.mrf.mxu0
      %v5127 = vadd.f32 0.0, %v5126
      %v5128 = vpop.f32.mrf.mxu0
      %v5129 = vadd.f32 0.0, %v5128
      %v5130 = vpop.f32.mrf.mxu0
      %v5131 = vadd.f32 0.0, %v5130
      %5132 = vmatprep.mubr.bf16.mxu0 0
      %5133 = vmatmul.mubr.bf16.gmra.mxu0 %v4938
      %v5134 = vpop.f32.mrf.mxu0
      %v5135 = vadd.f32 0.0, %v5134
      %v5136 = vpop.f32.mrf.mxu0
      %v5137 = vadd.f32 0.0, %v5136
      %v5138 = vpop.f32.mrf.mxu0
      %v5139 = vadd.f32 0.0, %v5138
      %v5140 = vpop.f32.mrf.mxu0
      %v5141 = vadd.f32 0.0, %v5140
      %5142 = vmatprep.mubr.bf16.mxu0 0
      %5143 = vmatmul.mubr.bf16.gmra.mxu0 %v4941
      %v5144 = vpop.f32.mrf.mxu0
      %v5145 = vadd.f32 0.0, %v5144
      %v5146 = vpop.f32.mrf.mxu0
      %v5147 = vadd.f32 0.0, %v5146
      %v5148 = vpop.f32.mrf.mxu0
      %v5149 = vadd.f32 0.0, %v5148
      %v5150 = vpop.f32.mrf.mxu0
      %v5151 = vadd.f32 0.0, %v5150
      %5152 = vmatprep.mubr.bf16.mxu0 0
      %5153 = vmatmul.mubr.bf16.gmra.mxu0 %v4944
      %v5154 = vpop.f32.mrf.mxu0
      %v5155 = vadd.f32 0.0, %v5154
      %v5156 = vpop.f32.mrf.mxu0
      %v5157 = vadd.f32 0.0, %v5156
      %v5158 = vpop.f32.mrf.mxu0
      %v5159 = vadd.f32 0.0, %v5158
      %v5160 = vpop.f32.mrf.mxu0
      %v5161 = vadd.f32 0.0, %v5160
      %5162 = vmatprep.mubr.bf16.mxu0 0
      %5163 = vmatmul.mubr.bf16.gmra.mxu0 %v4947
      %v5164 = vpop.f32.mrf.mxu0
      %v5165 = vadd.f32 0.0, %v5164
      %v5166 = vpop.f32.mrf.mxu0
      %v5167 = vadd.f32 0.0, %v5166
      %v5168 = vpop.f32.mrf.mxu0
      %v5169 = vadd.f32 0.0, %v5168
      %v5170 = vpop.f32.mrf.mxu0
      %v5171 = vadd.f32 0.0, %v5170
      %5172 = vmatprep.mubr.bf16.mxu0 0
      %5173 = vmatmul.mubr.bf16.gmra.mxu0 %v4950
      %v5174 = vpop.f32.mrf.mxu0
      %v5175 = vadd.f32 0.0, %v5174
      %v5176 = vpop.f32.mrf.mxu0
      %v5177 = vadd.f32 0.0, %v5176
      %v5178 = vpop.f32.mrf.mxu0
      %v5179 = vadd.f32 0.0, %v5178
      %v5180 = vpop.f32.mrf.mxu0
      %v5181 = vadd.f32 0.0, %v5180
      %5182 = vmatprep.mubr.bf16.mxu0 0
      %5183 = vmatmul.mubr.bf16.gmra.mxu0 %v4953
      %v5184 = vpop.f32.mrf.mxu0
      %v5185 = vadd.f32 0.0, %v5184
      %v5186 = vpop.f32.mrf.mxu0
      %v5187 = vadd.f32 0.0, %v5186
      %v5188 = vpop.f32.mrf.mxu0
      %v5189 = vadd.f32 0.0, %v5188
      %v5190 = vpop.f32.mrf.mxu0
      %v5191 = vadd.f32 0.0, %v5190
      %5192 = vdwg.mxu0
      %v5193 = vadd.f32 %v4646, %v5002
      %v5194 = vadd.f32 %v4647, %v5004
      %v5195 = vadd.f32 %v4648, %v5115
      %v5196 = vadd.f32 %v4649, %v5117
      %v5197 = vadd.f32 %v4650, %v5006
      %v5198 = vadd.f32 %v4651, %v5008
      %v5199 = vadd.f32 %v4652, %v5119
      %v5200 = vadd.f32 %v4653, %v5121
      %v5201 = vadd.f32 %v4654, %v5012
      %v5202 = vadd.f32 %v4655, %v5014
      %v5203 = vadd.f32 %v4656, %v5125
      %v5204 = vadd.f32 %v4657, %v5127
      %v5205 = vadd.f32 %v4658, %v5016
      %v5206 = vadd.f32 %v4659, %v5018
      %v5207 = vadd.f32 %v4660, %v5129
      %v5208 = vadd.f32 %v4661, %v5131
      %v5209 = vadd.f32 %v4662, %v5022
      %v5210 = vadd.f32 %v4663, %v5024
      %v5211 = vadd.f32 %v4664, %v5135
      %v5212 = vadd.f32 %v4665, %v5137
      %v5213 = vadd.f32 %v4666, %v5026
      %v5214 = vadd.f32 %v4667, %v5028
      %v5215 = vadd.f32 %v4668, %v5139
      %v5216 = vadd.f32 %v4669, %v5141
      %v5217 = vadd.f32 %v4670, %v5032
      %v5218 = vadd.f32 %v4671, %v5034
      %v5219 = vadd.f32 %v4672, %v5145
      %v5220 = vadd.f32 %v4673, %v5147
      %v5221 = vadd.f32 %v4674, %v5036
      %v5222 = vadd.f32 %v4675, %v5038
      %v5223 = vadd.f32 %v4676, %v5149
      %v5224 = vadd.f32 %v4677, %v5151
      %v5225 = vadd.f32 %v4678, %v5042
      %v5226 = vadd.f32 %v4679, %v5044
      %v5227 = vadd.f32 %v4680, %v5155
      %v5228 = vadd.f32 %v4681, %v5157
      %v5229 = vadd.f32 %v4682, %v5046
      %v5230 = vadd.f32 %v4683, %v5048
      %v5231 = vadd.f32 %v4684, %v5159
      %v5232 = vadd.f32 %v4685, %v5161
      %v5233 = vadd.f32 %v4686, %v5052
      %v5234 = vadd.f32 %v4687, %v5054
      %v5235 = vadd.f32 %v4688, %v5165
      %v5236 = vadd.f32 %v4689, %v5167
      %v5237 = vadd.f32 %v4690, %v5056
      %v5238 = vadd.f32 %v4691, %v5058
      %v5239 = vadd.f32 %v4692, %v5169
      %v5240 = vadd.f32 %v4693, %v5171
      %v5241 = vadd.f32 %v4694, %v5062
      %v5242 = vadd.f32 %v4695, %v5064
      %v5243 = vadd.f32 %v4696, %v5175
      %v5244 = vadd.f32 %v4697, %v5177
      %v5245 = vadd.f32 %v4698, %v5066
      %v5246 = vadd.f32 %v4699, %v5068
      %v5247 = vadd.f32 %v4700, %v5179
      %v5248 = vadd.f32 %v4701, %v5181
      %v5249 = vadd.f32 %v4702, %v5072
      %v5250 = vadd.f32 %v4703, %v5074
      %v5251 = vadd.f32 %v4704, %v5185
      %v5252 = vadd.f32 %v4705, %v5187
      %v5253 = vadd.f32 %v4706, %v5076
      %v5254 = vadd.f32 %v4707, %v5078
      %v5255 = vadd.f32 %v4708, %v5189
      %v5256 = vadd.f32 %v4709, %v5191
      %v5257 = vld [vmem:[%s2] sm:$0xf]
      %v5259 = vlaneseq
      %v5260 = vshrl.u32 %v5259, 7
      %v5261 = vsub.s32 0, %v5260
      %v5262 = vrot.slane %v5257, %v5261
      %v5263 = vlaneseq
      %v5264 = vshrl.u32 %v5263, 7
      %v5265 = vsub.s32 1, %v5264
      %v5266 = vrot.slane %v5257, %v5265
      %v5267 = vlaneseq
      %v5268 = vshrl.u32 %v5267, 7
      %v5269 = vsub.s32 2, %v5268
      %v5270 = vrot.slane %v5257, %v5269
      %v5271 = vlaneseq
      %v5272 = vshrl.u32 %v5271, 7
      %v5273 = vsub.s32 3, %v5272
      %v5274 = vrot.slane %v5257, %v5273
      %v5279 = vadd.f32 %v5193, %v5262
      %v5280 = vadd.f32 %v5194, %v5266
      %v5281 = vadd.f32 %v5195, %v5270
      %v5282 = vadd.f32 %v5196, %v5274
      %v5283 = vadd.f32 %v5197, %v5262
      %v5284 = vadd.f32 %v5198, %v5266
      %v5285 = vadd.f32 %v5199, %v5270
      %v5286 = vadd.f32 %v5200, %v5274
      %v5287 = vadd.f32 %v5201, %v5262
      %v5288 = vadd.f32 %v5202, %v5266
      %v5289 = vadd.f32 %v5203, %v5270
      %v5290 = vadd.f32 %v5204, %v5274
      %v5291 = vadd.f32 %v5205, %v5262
      %v5292 = vadd.f32 %v5206, %v5266
      %v5293 = vadd.f32 %v5207, %v5270
      %v5294 = vadd.f32 %v5208, %v5274
      %v5295 = vadd.f32 %v5209, %v5262
      %v5296 = vadd.f32 %v5210, %v5266
      %v5297 = vadd.f32 %v5211, %v5270
      %v5298 = vadd.f32 %v5212, %v5274
      %v5299 = vadd.f32 %v5213, %v5262
      %v5300 = vadd.f32 %v5214, %v5266
      %v5301 = vadd.f32 %v5215, %v5270
      %v5302 = vadd.f32 %v5216, %v5274
      %v5303 = vadd.f32 %v5217, %v5262
      %v5304 = vadd.f32 %v5218, %v5266
      %v5305 = vadd.f32 %v5219, %v5270
      %v5306 = vadd.f32 %v5220, %v5274
      %v5307 = vadd.f32 %v5221, %v5262
      %v5308 = vadd.f32 %v5222, %v5266
      %v5309 = vadd.f32 %v5223, %v5270
      %v5310 = vadd.f32 %v5224, %v5274
      %v5311 = vadd.f32 %v5225, %v5262
      %v5312 = vadd.f32 %v5226, %v5266
      %v5313 = vadd.f32 %v5227, %v5270
      %v5314 = vadd.f32 %v5228, %v5274
      %v5315 = vadd.f32 %v5229, %v5262
      %v5316 = vadd.f32 %v5230, %v5266
      %v5317 = vadd.f32 %v5231, %v5270
      %v5318 = vadd.f32 %v5232, %v5274
      %v5319 = vadd.f32 %v5233, %v5262
      %v5320 = vadd.f32 %v5234, %v5266
      %v5321 = vadd.f32 %v5235, %v5270
      %v5322 = vadd.f32 %v5236, %v5274
      %v5323 = vadd.f32 %v5237, %v5262
      %v5324 = vadd.f32 %v5238, %v5266
      %v5325 = vadd.f32 %v5239, %v5270
      %v5326 = vadd.f32 %v5240, %v5274
      %v5327 = vadd.f32 %v5241, %v5262
      %v5328 = vadd.f32 %v5242, %v5266
      %v5329 = vadd.f32 %v5243, %v5270
      %v5330 = vadd.f32 %v5244, %v5274
      %v5331 = vadd.f32 %v5245, %v5262
      %v5332 = vadd.f32 %v5246, %v5266
      %v5333 = vadd.f32 %v5247, %v5270
      %v5334 = vadd.f32 %v5248, %v5274
      %v5335 = vadd.f32 %v5249, %v5262
      %v5336 = vadd.f32 %v5250, %v5266
      %v5337 = vadd.f32 %v5251, %v5270
      %v5338 = vadd.f32 %v5252, %v5274
      %v5339 = vadd.f32 %v5253, %v5262
      %v5340 = vadd.f32 %v5254, %v5266
      %v5341 = vadd.f32 %v5255, %v5270
      %v5342 = vadd.f32 %v5256, %v5274
      %v5343 = vmax.f32 %v5279, 0.0
      %v5344 = vmax.f32 %v5280, 0.0
      %v5345 = vmax.f32 %v5281, 0.0
      %v5346 = vmax.f32 %v5282, 0.0
      %v5347 = vmax.f32 %v5283, 0.0
      %v5348 = vmax.f32 %v5284, 0.0
      %v5349 = vmax.f32 %v5285, 0.0
      %v5350 = vmax.f32 %v5286, 0.0
      %v5351 = vmax.f32 %v5287, 0.0
      %v5352 = vmax.f32 %v5288, 0.0
      %v5353 = vmax.f32 %v5289, 0.0
      %v5354 = vmax.f32 %v5290, 0.0
      %v5355 = vmax.f32 %v5291, 0.0
      %v5356 = vmax.f32 %v5292, 0.0
      %v5357 = vmax.f32 %v5293, 0.0
      %v5358 = vmax.f32 %v5294, 0.0
      %v5359 = vmax.f32 %v5295, 0.0
      %v5360 = vmax.f32 %v5296, 0.0
      %v5361 = vmax.f32 %v5297, 0.0
      %v5362 = vmax.f32 %v5298, 0.0
      %v5363 = vmax.f32 %v5299, 0.0
      %v5364 = vmax.f32 %v5300, 0.0
      %v5365 = vmax.f32 %v5301, 0.0
      %v5366 = vmax.f32 %v5302, 0.0
      %v5367 = vmax.f32 %v5303, 0.0
      %v5368 = vmax.f32 %v5304, 0.0
      %v5369 = vmax.f32 %v5305, 0.0
      %v5370 = vmax.f32 %v5306, 0.0
      %v5371 = vmax.f32 %v5307, 0.0
      %v5372 = vmax.f32 %v5308, 0.0
      %v5373 = vmax.f32 %v5309, 0.0
      %v5374 = vmax.f32 %v5310, 0.0
      %v5375 = vmax.f32 %v5311, 0.0
      %v5376 = vmax.f32 %v5312, 0.0
      %v5377 = vmax.f32 %v5313, 0.0
      %v5378 = vmax.f32 %v5314, 0.0
      %v5379 = vmax.f32 %v5315, 0.0
      %v5380 = vmax.f32 %v5316, 0.0
      %v5381 = vmax.f32 %v5317, 0.0
      %v5382 = vmax.f32 %v5318, 0.0
      %v5383 = vmax.f32 %v5319, 0.0
      %v5384 = vmax.f32 %v5320, 0.0
      %v5385 = vmax.f32 %v5321, 0.0
      %v5386 = vmax.f32 %v5322, 0.0
      %v5387 = vmax.f32 %v5323, 0.0
      %v5388 = vmax.f32 %v5324, 0.0
      %v5389 = vmax.f32 %v5325, 0.0
      %v5390 = vmax.f32 %v5326, 0.0
      %v5391 = vmax.f32 %v5327, 0.0
      %v5392 = vmax.f32 %v5328, 0.0
      %v5393 = vmax.f32 %v5329, 0.0
      %v5394 = vmax.f32 %v5330, 0.0
      %v5395 = vmax.f32 %v5331, 0.0
      %v5396 = vmax.f32 %v5332, 0.0
      %v5397 = vmax.f32 %v5333, 0.0
      %v5398 = vmax.f32 %v5334, 0.0
      %v5399 = vmax.f32 %v5335, 0.0
      %v5400 = vmax.f32 %v5336, 0.0
      %v5401 = vmax.f32 %v5337, 0.0
      %v5402 = vmax.f32 %v5338, 0.0
      %v5403 = vmax.f32 %v5339, 0.0
      %v5404 = vmax.f32 %v5340, 0.0
      %v5405 = vmax.f32 %v5341, 0.0
      %v5406 = vmax.f32 %v5342, 0.0
      %v5407 = vpack.c.bf16 %v5347, %v5343
      %v5408 = vpack.c.bf16 %v5348, %v5344
      %v5409 = vpack.c.bf16 %v5349, %v5345
      %v5410 = vpack.c.bf16 %v5350, %v5346
      %v5411 = vpack.c.bf16 %v5355, %v5351
      %v5412 = vpack.c.bf16 %v5356, %v5352
      %v5413 = vpack.c.bf16 %v5357, %v5353
      %v5414 = vpack.c.bf16 %v5358, %v5354
      %v5415 = vpack.c.bf16 %v5363, %v5359
      %v5416 = vpack.c.bf16 %v5364, %v5360
      %v5417 = vpack.c.bf16 %v5365, %v5361
      %v5418 = vpack.c.bf16 %v5366, %v5362
      %v5419 = vpack.c.bf16 %v5371, %v5367
      %v5420 = vpack.c.bf16 %v5372, %v5368
      %v5421 = vpack.c.bf16 %v5373, %v5369
      %v5422 = vpack.c.bf16 %v5374, %v5370
      %v5423 = vpack.c.bf16 %v5379, %v5375
      %v5424 = vpack.c.bf16 %v5380, %v5376
      %v5425 = vpack.c.bf16 %v5381, %v5377
      %v5426 = vpack.c.bf16 %v5382, %v5378
      %v5427 = vpack.c.bf16 %v5387, %v5383
      %v5428 = vpack.c.bf16 %v5388, %v5384
      %v5429 = vpack.c.bf16 %v5389, %v5385
      %v5430 = vpack.c.bf16 %v5390, %v5386
      %v5431 = vpack.c.bf16 %v5395, %v5391
      %v5432 = vpack.c.bf16 %v5396, %v5392
      %v5433 = vpack.c.bf16 %v5397, %v5393
      %v5434 = vpack.c.bf16 %v5398, %v5394
      %v5435 = vpack.c.bf16 %v5403, %v5399
      %v5436 = vpack.c.bf16 %v5404, %v5400
      %v5437 = vpack.c.bf16 %v5405, %v5401
      %v5438 = vpack.c.bf16 %v5406, %v5402
      %v5439 = vld [vmem:[%s3] sm:$0xff]
      %v5440 = vld [vmem:[%s3 + $0x8] sm:$0xff]
      %v5441 = vld [vmem:[%s3 + $0x10] sm:$0xff]
      %v5442 = vld [vmem:[%s3 + $0x18] sm:$0xff]
      %v5443 = vld [vmem:[%s3 + $0x20] sm:$0xff]
      %v5444 = vld [vmem:[%s3 + $0x28] sm:$0xff]
      %v5445 = vld [vmem:[%s3 + $0x30] sm:$0xff]
      %v5446 = vld [vmem:[%s3 + $0x38] sm:$0xff]
      %v5447 = vld [vmem:[%s3 + $0x40] sm:$0xff]
      %v5448 = vld [vmem:[%s3 + $0x48] sm:$0xff]
      %v5449 = vld [vmem:[%s3 + $0x50] sm:$0xff]
      %v5450 = vld [vmem:[%s3 + $0x58] sm:$0xff]
      %v5451 = vld [vmem:[%s3 + $0x60] sm:$0xff]
      %v5452 = vld [vmem:[%s3 + $0x68] sm:$0xff]
      %v5453 = vld [vmem:[%s3 + $0x70] sm:$0xff]
      %v5454 = vld [vmem:[%s3 + $0x78] sm:$0xff]
      %v5455 = vld [vmem:[%s3 + $0x80] sm:$0xff]
      %v5456 = vld [vmem:[%s3 + $0x88] sm:$0xff]
      %v5457 = vld [vmem:[%s3 + $0x90] sm:$0xff]
      %v5458 = vld [vmem:[%s3 + $0x98] sm:$0xff]
      %v5459 = vld [vmem:[%s3 + $0xa0] sm:$0xff]
      %v5460 = vld [vmem:[%s3 + $0xa8] sm:$0xff]
      %v5461 = vld [vmem:[%s3 + $0xb0] sm:$0xff]
      %v5462 = vld [vmem:[%s3 + $0xb8] sm:$0xff]
      %v5463 = vld [vmem:[%s3 + $0xc0] sm:$0xff]
      %v5464 = vld [vmem:[%s3 + $0xc8] sm:$0xff]
      %v5465 = vld [vmem:[%s3 + $0xd0] sm:$0xff]
      %v5466 = vld [vmem:[%s3 + $0xd8] sm:$0xff]
      %v5467 = vld [vmem:[%s3 + $0xe0] sm:$0xff]
      %v5468 = vld [vmem:[%s3 + $0xe8] sm:$0xff]
      %v5469 = vld [vmem:[%s3 + $0xf0] sm:$0xff]
      %v5470 = vld [vmem:[%s3 + $0xf8] sm:$0xff]
      %v5471 = vld [vmem:[%s3 + $0x100] sm:$0xff]
      %v5472 = vld [vmem:[%s3 + $0x108] sm:$0xff]
      %v5473 = vld [vmem:[%s3 + $0x110] sm:$0xff]
      %v5474 = vld [vmem:[%s3 + $0x118] sm:$0xff]
      %v5475 = vld [vmem:[%s3 + $0x120] sm:$0xff]
      %v5476 = vld [vmem:[%s3 + $0x128] sm:$0xff]
      %v5477 = vld [vmem:[%s3 + $0x130] sm:$0xff]
      %v5478 = vld [vmem:[%s3 + $0x138] sm:$0xff]
      %v5479 = vld [vmem:[%s3 + $0x140] sm:$0xff]
      %v5480 = vld [vmem:[%s3 + $0x148] sm:$0xff]
      %v5481 = vld [vmem:[%s3 + $0x150] sm:$0xff]
      %v5482 = vld [vmem:[%s3 + $0x158] sm:$0xff]
      %v5483 = vld [vmem:[%s3 + $0x160] sm:$0xff]
      %v5484 = vld [vmem:[%s3 + $0x168] sm:$0xff]
      %v5485 = vld [vmem:[%s3 + $0x170] sm:$0xff]
      %v5486 = vld [vmem:[%s3 + $0x178] sm:$0xff]
      %v5487 = vld [vmem:[%s3 + $0x180] sm:$0xff]
      %v5488 = vld [vmem:[%s3 + $0x188] sm:$0xff]
      %v5489 = vld [vmem:[%s3 + $0x190] sm:$0xff]
      %v5490 = vld [vmem:[%s3 + $0x198] sm:$0xff]
      %v5491 = vld [vmem:[%s3 + $0x1a0] sm:$0xff]
      %v5492 = vld [vmem:[%s3 + $0x1a8] sm:$0xff]
      %v5493 = vld [vmem:[%s3 + $0x1b0] sm:$0xff]
      %v5494 = vld [vmem:[%s3 + $0x1b8] sm:$0xff]
      %v5495 = vld [vmem:[%s3 + $0x1c0] sm:$0xff]
      %v5496 = vld [vmem:[%s3 + $0x1c8] sm:$0xff]
      %v5497 = vld [vmem:[%s3 + $0x1d0] sm:$0xff]
      %v5498 = vld [vmem:[%s3 + $0x1d8] sm:$0xff]
      %v5499 = vld [vmem:[%s3 + $0x1e0] sm:$0xff]
      %v5500 = vld [vmem:[%s3 + $0x1e8] sm:$0xff]
      %v5501 = vld [vmem:[%s3 + $0x1f0] sm:$0xff]
      %v5502 = vld [vmem:[%s3 + $0x1f8] sm:$0xff]
      %v5503 = vld [vmem:[%s3 + $0x200] sm:$0xff]
      %v5504 = vld [vmem:[%s3 + $0x208] sm:$0xff]
      %v5505 = vld [vmem:[%s3 + $0x210] sm:$0xff]
      %v5506 = vld [vmem:[%s3 + $0x218] sm:$0xff]
      %v5507 = vld [vmem:[%s3 + $0x220] sm:$0xff]
      %v5508 = vld [vmem:[%s3 + $0x228] sm:$0xff]
      %v5509 = vld [vmem:[%s3 + $0x230] sm:$0xff]
      %v5510 = vld [vmem:[%s3 + $0x238] sm:$0xff]
      %v5511 = vld [vmem:[%s3 + $0x240] sm:$0xff]
      %v5512 = vld [vmem:[%s3 + $0x248] sm:$0xff]
      %v5513 = vld [vmem:[%s3 + $0x250] sm:$0xff]
      %v5514 = vld [vmem:[%s3 + $0x258] sm:$0xff]
      %v5515 = vld [vmem:[%s3 + $0x260] sm:$0xff]
      %v5516 = vld [vmem:[%s3 + $0x268] sm:$0xff]
      %v5517 = vld [vmem:[%s3 + $0x270] sm:$0xff]
      %v5518 = vld [vmem:[%s3 + $0x278] sm:$0xff]
      %v5519 = vld [vmem:[%s3 + $0x280] sm:$0xff]
      %v5520 = vld [vmem:[%s3 + $0x288] sm:$0xff]
      %v5521 = vld [vmem:[%s3 + $0x290] sm:$0xff]
      %v5522 = vld [vmem:[%s3 + $0x298] sm:$0xff]
      %v5523 = vld [vmem:[%s3 + $0x2a0] sm:$0xff]
      %v5524 = vld [vmem:[%s3 + $0x2a8] sm:$0xff]
      %v5525 = vld [vmem:[%s3 + $0x2b0] sm:$0xff]
      %v5526 = vld [vmem:[%s3 + $0x2b8] sm:$0xff]
      %v5527 = vld [vmem:[%s3 + $0x2c0] sm:$0xff]
      %v5528 = vld [vmem:[%s3 + $0x2c8] sm:$0xff]
      %v5529 = vld [vmem:[%s3 + $0x2d0] sm:$0xff]
      %v5530 = vld [vmem:[%s3 + $0x2d8] sm:$0xff]
      %v5531 = vld [vmem:[%s3 + $0x2e0] sm:$0xff]
      %v5532 = vld [vmem:[%s3 + $0x2e8] sm:$0xff]
      %v5533 = vld [vmem:[%s3 + $0x2f0] sm:$0xff]
      %v5534 = vld [vmem:[%s3 + $0x2f8] sm:$0xff]
      %v5535 = vld [vmem:[%s3 + $0x300] sm:$0xff]
      %v5536 = vld [vmem:[%s3 + $0x308] sm:$0xff]
      %v5537 = vld [vmem:[%s3 + $0x310] sm:$0xff]
      %v5538 = vld [vmem:[%s3 + $0x318] sm:$0xff]
      %v5539 = vld [vmem:[%s3 + $0x320] sm:$0xff]
      %v5540 = vld [vmem:[%s3 + $0x328] sm:$0xff]
      %v5541 = vld [vmem:[%s3 + $0x330] sm:$0xff]
      %v5542 = vld [vmem:[%s3 + $0x338] sm:$0xff]
      %v5543 = vld [vmem:[%s3 + $0x340] sm:$0xff]
      %v5544 = vld [vmem:[%s3 + $0x348] sm:$0xff]
      %v5545 = vld [vmem:[%s3 + $0x350] sm:$0xff]
      %v5546 = vld [vmem:[%s3 + $0x358] sm:$0xff]
      %v5547 = vld [vmem:[%s3 + $0x360] sm:$0xff]
      %v5548 = vld [vmem:[%s3 + $0x368] sm:$0xff]
      %v5549 = vld [vmem:[%s3 + $0x370] sm:$0xff]
      %v5550 = vld [vmem:[%s3 + $0x378] sm:$0xff]
      %v5551 = vld [vmem:[%s3 + $0x380] sm:$0xff]
      %v5552 = vld [vmem:[%s3 + $0x388] sm:$0xff]
      %v5553 = vld [vmem:[%s3 + $0x390] sm:$0xff]
      %v5554 = vld [vmem:[%s3 + $0x398] sm:$0xff]
      %v5555 = vld [vmem:[%s3 + $0x3a0] sm:$0xff]
      %v5556 = vld [vmem:[%s3 + $0x3a8] sm:$0xff]
      %v5557 = vld [vmem:[%s3 + $0x3b0] sm:$0xff]
      %v5558 = vld [vmem:[%s3 + $0x3b8] sm:$0xff]
      %v5559 = vld [vmem:[%s3 + $0x3c0] sm:$0xff]
      %v5560 = vld [vmem:[%s3 + $0x3c8] sm:$0xff]
      %v5561 = vld [vmem:[%s3 + $0x3d0] sm:$0xff]
      %v5562 = vld [vmem:[%s3 + $0x3d8] sm:$0xff]
      %v5563 = vld [vmem:[%s3 + $0x3e0] sm:$0xff]
      %v5564 = vld [vmem:[%s3 + $0x3e8] sm:$0xff]
      %v5565 = vld [vmem:[%s3 + $0x3f0] sm:$0xff]
      %v5566 = vld [vmem:[%s3 + $0x3f8] sm:$0xff]
      %v5567 = vld [vmem:[%s4] sm:$0xf]
      %v5569 = vlaneseq
      %v5570 = vshrl.u32 %v5569, 7
      %v5571 = vsub.s32 0, %v5570
      %v5572 = vrot.slane %v5567, %v5571
      %v5573 = vlaneseq
      %v5574 = vshrl.u32 %v5573, 7
      %v5575 = vsub.s32 1, %v5574
      %v5576 = vrot.slane %v5567, %v5575
      %v5577 = vlaneseq
      %v5578 = vshrl.u32 %v5577, 7
      %v5579 = vsub.s32 2, %v5578
      %v5580 = vrot.slane %v5567, %v5579
      %v5581 = vlaneseq
      %v5582 = vshrl.u32 %v5581, 7
      %v5583 = vsub.s32 3, %v5582
      %v5584 = vrot.slane %v5567, %v5583
      %v5717 = vunpack.c.l.b16 %v5439
      %v5718 = vunpack.c.h.b16 %v5439
      %v5719 = vunpack.c.l.b16 %v5440
      %v5720 = vunpack.c.h.b16 %v5440
      %v5721 = vunpack.c.l.b16 %v5441
      %v5722 = vunpack.c.h.b16 %v5441
      %v5723 = vunpack.c.l.b16 %v5442
      %v5724 = vunpack.c.h.b16 %v5442
      %v5725 = vunpack.c.l.b16 %v5443
      %v5726 = vunpack.c.h.b16 %v5443
      %v5727 = vunpack.c.l.b16 %v5444
      %v5728 = vunpack.c.h.b16 %v5444
      %v5729 = vunpack.c.l.b16 %v5445
      %v5730 = vunpack.c.h.b16 %v5445
      %v5731 = vunpack.c.l.b16 %v5446
      %v5732 = vunpack.c.h.b16 %v5446
      %v5733 = vunpack.c.l.b16 %v5447
      %v5734 = vunpack.c.h.b16 %v5447
      %v5735 = vunpack.c.l.b16 %v5448
      %v5736 = vunpack.c.h.b16 %v5448
      %v5737 = vunpack.c.l.b16 %v5449
      %v5738 = vunpack.c.h.b16 %v5449
      %v5739 = vunpack.c.l.b16 %v5450
      %v5740 = vunpack.c.h.b16 %v5450
      %v5741 = vunpack.c.l.b16 %v5451
      %v5742 = vunpack.c.h.b16 %v5451
      %v5743 = vunpack.c.l.b16 %v5452
      %v5744 = vunpack.c.h.b16 %v5452
      %v5745 = vunpack.c.l.b16 %v5453
      %v5746 = vunpack.c.h.b16 %v5453
      %v5747 = vunpack.c.l.b16 %v5454
      %v5748 = vunpack.c.h.b16 %v5454
      %v5749 = vunpack.c.l.b16 %v5455
      %v5750 = vunpack.c.h.b16 %v5455
      %v5751 = vunpack.c.l.b16 %v5456
      %v5752 = vunpack.c.h.b16 %v5456
      %v5753 = vunpack.c.l.b16 %v5457
      %v5754 = vunpack.c.h.b16 %v5457
      %v5755 = vunpack.c.l.b16 %v5458
      %v5756 = vunpack.c.h.b16 %v5458
      %v5757 = vunpack.c.l.b16 %v5459
      %v5758 = vunpack.c.h.b16 %v5459
      %v5759 = vunpack.c.l.b16 %v5460
      %v5760 = vunpack.c.h.b16 %v5460
      %v5761 = vunpack.c.l.b16 %v5461
      %v5762 = vunpack.c.h.b16 %v5461
      %v5763 = vunpack.c.l.b16 %v5462
      %v5764 = vunpack.c.h.b16 %v5462
      %v5765 = vunpack.c.l.b16 %v5463
      %v5766 = vunpack.c.h.b16 %v5463
      %v5767 = vunpack.c.l.b16 %v5464
      %v5768 = vunpack.c.h.b16 %v5464
      %v5769 = vunpack.c.l.b16 %v5465
      %v5770 = vunpack.c.h.b16 %v5465
      %v5771 = vunpack.c.l.b16 %v5466
      %v5772 = vunpack.c.h.b16 %v5466
      %v5773 = vunpack.c.l.b16 %v5467
      %v5774 = vunpack.c.h.b16 %v5467
      %v5775 = vunpack.c.l.b16 %v5468
      %v5776 = vunpack.c.h.b16 %v5468
      %v5777 = vunpack.c.l.b16 %v5469
      %v5778 = vunpack.c.h.b16 %v5469
      %v5779 = vunpack.c.l.b16 %v5470
      %v5780 = vunpack.c.h.b16 %v5470
      %v5781 = vunpack.c.l.b16 %v5471
      %v5782 = vunpack.c.h.b16 %v5471
      %v5783 = vunpack.c.l.b16 %v5472
      %v5784 = vunpack.c.h.b16 %v5472
      %v5785 = vunpack.c.l.b16 %v5473
      %v5786 = vunpack.c.h.b16 %v5473
      %v5787 = vunpack.c.l.b16 %v5474
      %v5788 = vunpack.c.h.b16 %v5474
      %v5789 = vunpack.c.l.b16 %v5475
      %v5790 = vunpack.c.h.b16 %v5475
      %v5791 = vunpack.c.l.b16 %v5476
      %v5792 = vunpack.c.h.b16 %v5476
      %v5793 = vunpack.c.l.b16 %v5477
      %v5794 = vunpack.c.h.b16 %v5477
      %v5795 = vunpack.c.l.b16 %v5478
      %v5796 = vunpack.c.h.b16 %v5478
      %v5797 = vunpack.c.l.b16 %v5479
      %v5798 = vunpack.c.h.b16 %v5479
      %v5799 = vunpack.c.l.b16 %v5480
      %v5800 = vunpack.c.h.b16 %v5480
      %v5801 = vunpack.c.l.b16 %v5481
      %v5802 = vunpack.c.h.b16 %v5481
      %v5803 = vunpack.c.l.b16 %v5482
      %v5804 = vunpack.c.h.b16 %v5482
      %v5805 = vunpack.c.l.b16 %v5483
      %v5806 = vunpack.c.h.b16 %v5483
      %v5807 = vunpack.c.l.b16 %v5484
      %v5808 = vunpack.c.h.b16 %v5484
      %v5809 = vunpack.c.l.b16 %v5485
      %v5810 = vunpack.c.h.b16 %v5485
      %v5811 = vunpack.c.l.b16 %v5486
      %v5812 = vunpack.c.h.b16 %v5486
      %v5813 = vunpack.c.l.b16 %v5487
      %v5814 = vunpack.c.h.b16 %v5487
      %v5815 = vunpack.c.l.b16 %v5488
      %v5816 = vunpack.c.h.b16 %v5488
      %v5817 = vunpack.c.l.b16 %v5489
      %v5818 = vunpack.c.h.b16 %v5489
      %v5819 = vunpack.c.l.b16 %v5490
      %v5820 = vunpack.c.h.b16 %v5490
      %v5821 = vunpack.c.l.b16 %v5491
      %v5822 = vunpack.c.h.b16 %v5491
      %v5823 = vunpack.c.l.b16 %v5492
      %v5824 = vunpack.c.h.b16 %v5492
      %v5825 = vunpack.c.l.b16 %v5493
      %v5826 = vunpack.c.h.b16 %v5493
      %v5827 = vunpack.c.l.b16 %v5494
      %v5828 = vunpack.c.h.b16 %v5494
      %v5829 = vunpack.c.l.b16 %v5495
      %v5830 = vunpack.c.h.b16 %v5495
      %v5831 = vunpack.c.l.b16 %v5496
      %v5832 = vunpack.c.h.b16 %v5496
      %v5833 = vunpack.c.l.b16 %v5497
      %v5834 = vunpack.c.h.b16 %v5497
      %v5835 = vunpack.c.l.b16 %v5498
      %v5836 = vunpack.c.h.b16 %v5498
      %v5837 = vunpack.c.l.b16 %v5499
      %v5838 = vunpack.c.h.b16 %v5499
      %v5839 = vunpack.c.l.b16 %v5500
      %v5840 = vunpack.c.h.b16 %v5500
      %v5841 = vunpack.c.l.b16 %v5501
      %v5842 = vunpack.c.h.b16 %v5501
      %v5843 = vunpack.c.l.b16 %v5502
      %v5844 = vunpack.c.h.b16 %v5502
      %v5845 = vunpack.c.l.b16 %v5503
      %v5846 = vunpack.c.h.b16 %v5503
      %v5847 = vunpack.c.l.b16 %v5504
      %v5848 = vunpack.c.h.b16 %v5504
      %v5849 = vunpack.c.l.b16 %v5505
      %v5850 = vunpack.c.h.b16 %v5505
      %v5851 = vunpack.c.l.b16 %v5506
      %v5852 = vunpack.c.h.b16 %v5506
      %v5853 = vunpack.c.l.b16 %v5507
      %v5854 = vunpack.c.h.b16 %v5507
      %v5855 = vunpack.c.l.b16 %v5508
      %v5856 = vunpack.c.h.b16 %v5508
      %v5857 = vunpack.c.l.b16 %v5509
      %v5858 = vunpack.c.h.b16 %v5509
      %v5859 = vunpack.c.l.b16 %v5510
      %v5860 = vunpack.c.h.b16 %v5510
      %v5861 = vunpack.c.l.b16 %v5511
      %v5862 = vunpack.c.h.b16 %v5511
      %v5863 = vunpack.c.l.b16 %v5512
      %v5864 = vunpack.c.h.b16 %v5512
      %v5865 = vunpack.c.l.b16 %v5513
      %v5866 = vunpack.c.h.b16 %v5513
      %v5867 = vunpack.c.l.b16 %v5514
      %v5868 = vunpack.c.h.b16 %v5514
      %v5869 = vunpack.c.l.b16 %v5515
      %v5870 = vunpack.c.h.b16 %v5515
      %v5871 = vunpack.c.l.b16 %v5516
      %v5872 = vunpack.c.h.b16 %v5516
      %v5873 = vunpack.c.l.b16 %v5517
      %v5874 = vunpack.c.h.b16 %v5517
      %v5875 = vunpack.c.l.b16 %v5518
      %v5876 = vunpack.c.h.b16 %v5518
      %v5877 = vunpack.c.l.b16 %v5519
      %v5878 = vunpack.c.h.b16 %v5519
      %v5879 = vunpack.c.l.b16 %v5520
      %v5880 = vunpack.c.h.b16 %v5520
      %v5881 = vunpack.c.l.b16 %v5521
      %v5882 = vunpack.c.h.b16 %v5521
      %v5883 = vunpack.c.l.b16 %v5522
      %v5884 = vunpack.c.h.b16 %v5522
      %v5885 = vunpack.c.l.b16 %v5523
      %v5886 = vunpack.c.h.b16 %v5523
      %v5887 = vunpack.c.l.b16 %v5524
      %v5888 = vunpack.c.h.b16 %v5524
      %v5889 = vunpack.c.l.b16 %v5525
      %v5890 = vunpack.c.h.b16 %v5525
      %v5891 = vunpack.c.l.b16 %v5526
      %v5892 = vunpack.c.h.b16 %v5526
      %v5893 = vunpack.c.l.b16 %v5527
      %v5894 = vunpack.c.h.b16 %v5527
      %v5895 = vunpack.c.l.b16 %v5528
      %v5896 = vunpack.c.h.b16 %v5528
      %v5897 = vunpack.c.l.b16 %v5529
      %v5898 = vunpack.c.h.b16 %v5529
      %v5899 = vunpack.c.l.b16 %v5530
      %v5900 = vunpack.c.h.b16 %v5530
      %v5901 = vunpack.c.l.b16 %v5531
      %v5902 = vunpack.c.h.b16 %v5531
      %v5903 = vunpack.c.l.b16 %v5532
      %v5904 = vunpack.c.h.b16 %v5532
      %v5905 = vunpack.c.l.b16 %v5533
      %v5906 = vunpack.c.h.b16 %v5533
      %v5907 = vunpack.c.l.b16 %v5534
      %v5908 = vunpack.c.h.b16 %v5534
      %v5909 = vunpack.c.l.b16 %v5535
      %v5910 = vunpack.c.h.b16 %v5535
      %v5911 = vunpack.c.l.b16 %v5536
      %v5912 = vunpack.c.h.b16 %v5536
      %v5913 = vunpack.c.l.b16 %v5537
      %v5914 = vunpack.c.h.b16 %v5537
      %v5915 = vunpack.c.l.b16 %v5538
      %v5916 = vunpack.c.h.b16 %v5538
      %v5917 = vunpack.c.l.b16 %v5539
      %v5918 = vunpack.c.h.b16 %v5539
      %v5919 = vunpack.c.l.b16 %v5540
      %v5920 = vunpack.c.h.b16 %v5540
      %v5921 = vunpack.c.l.b16 %v5541
      %v5922 = vunpack.c.h.b16 %v5541
      %v5923 = vunpack.c.l.b16 %v5542
      %v5924 = vunpack.c.h.b16 %v5542
      %v5925 = vunpack.c.l.b16 %v5543
      %v5926 = vunpack.c.h.b16 %v5543
      %v5927 = vunpack.c.l.b16 %v5544
      %v5928 = vunpack.c.h.b16 %v5544
      %v5929 = vunpack.c.l.b16 %v5545
      %v5930 = vunpack.c.h.b16 %v5545
      %v5931 = vunpack.c.l.b16 %v5546
      %v5932 = vunpack.c.h.b16 %v5546
      %v5933 = vunpack.c.l.b16 %v5547
      %v5934 = vunpack.c.h.b16 %v5547
      %v5935 = vunpack.c.l.b16 %v5548
      %v5936 = vunpack.c.h.b16 %v5548
      %v5937 = vunpack.c.l.b16 %v5549
      %v5938 = vunpack.c.h.b16 %v5549
      %v5939 = vunpack.c.l.b16 %v5550
      %v5940 = vunpack.c.h.b16 %v5550
      %v5941 = vunpack.c.l.b16 %v5551
      %v5942 = vunpack.c.h.b16 %v5551
      %v5943 = vunpack.c.l.b16 %v5552
      %v5944 = vunpack.c.h.b16 %v5552
      %v5945 = vunpack.c.l.b16 %v5553
      %v5946 = vunpack.c.h.b16 %v5553
      %v5947 = vunpack.c.l.b16 %v5554
      %v5948 = vunpack.c.h.b16 %v5554
      %v5949 = vunpack.c.l.b16 %v5555
      %v5950 = vunpack.c.h.b16 %v5555
      %v5951 = vunpack.c.l.b16 %v5556
      %v5952 = vunpack.c.h.b16 %v5556
      %v5953 = vunpack.c.l.b16 %v5557
      %v5954 = vunpack.c.h.b16 %v5557
      %v5955 = vunpack.c.l.b16 %v5558
      %v5956 = vunpack.c.h.b16 %v5558
      %v5957 = vunpack.c.l.b16 %v5559
      %v5958 = vunpack.c.h.b16 %v5559
      %v5959 = vunpack.c.l.b16 %v5560
      %v5960 = vunpack.c.h.b16 %v5560
      %v5961 = vunpack.c.l.b16 %v5561
      %v5962 = vunpack.c.h.b16 %v5561
      %v5963 = vunpack.c.l.b16 %v5562
      %v5964 = vunpack.c.h.b16 %v5562
      %v5965 = vunpack.c.l.b16 %v5563
      %v5966 = vunpack.c.h.b16 %v5563
      %v5967 = vunpack.c.l.b16 %v5564
      %v5968 = vunpack.c.h.b16 %v5564
      %v5969 = vunpack.c.l.b16 %v5565
      %v5970 = vunpack.c.h.b16 %v5565
      %v5971 = vunpack.c.l.b16 %v5566
      %v5972 = vunpack.c.h.b16 %v5566
      %v5973 = vpack.c.b16 %v5721, %v5717
      %v5974 = vpack.c.b16 %v5722, %v5718
      %v5975 = vpack.c.b16 %v5723, %v5719
      %v5976 = vpack.c.b16 %v5724, %v5720
      %v5977 = vpack.c.b16 %v5729, %v5725
      %v5978 = vpack.c.b16 %v5730, %v5726
      %v5979 = vpack.c.b16 %v5731, %v5727
      %v5980 = vpack.c.b16 %v5732, %v5728
      %v5981 = vpack.c.b16 %v5737, %v5733
      %v5982 = vpack.c.b16 %v5738, %v5734
      %v5983 = vpack.c.b16 %v5739, %v5735
      %v5984 = vpack.c.b16 %v5740, %v5736
      %v5985 = vpack.c.b16 %v5745, %v5741
      %v5986 = vpack.c.b16 %v5746, %v5742
      %v5987 = vpack.c.b16 %v5747, %v5743
      %v5988 = vpack.c.b16 %v5748, %v5744
      %v5989 = vpack.c.b16 %v5753, %v5749
      %v5990 = vpack.c.b16 %v5754, %v5750
      %v5991 = vpack.c.b16 %v5755, %v5751
      %v5992 = vpack.c.b16 %v5756, %v5752
      %v5993 = vpack.c.b16 %v5761, %v5757
      %v5994 = vpack.c.b16 %v5762, %v5758
      %v5995 = vpack.c.b16 %v5763, %v5759
      %v5996 = vpack.c.b16 %v5764, %v5760
      %v5997 = vpack.c.b16 %v5769, %v5765
      %v5998 = vpack.c.b16 %v5770, %v5766
      %v5999 = vpack.c.b16 %v5771, %v5767
      %v6000 = vpack.c.b16 %v5772, %v5768
      %v6001 = vpack.c.b16 %v5777, %v5773
      %v6002 = vpack.c.b16 %v5778, %v5774
      %v6003 = vpack.c.b16 %v5779, %v5775
      %v6004 = vpack.c.b16 %v5780, %v5776
      %v6005 = vpack.c.b16 %v5785, %v5781
      %v6006 = vpack.c.b16 %v5786, %v5782
      %v6007 = vpack.c.b16 %v5787, %v5783
      %v6008 = vpack.c.b16 %v5788, %v5784
      %v6009 = vpack.c.b16 %v5793, %v5789
      %v6010 = vpack.c.b16 %v5794, %v5790
      %v6011 = vpack.c.b16 %v5795, %v5791
      %v6012 = vpack.c.b16 %v5796, %v5792
      %v6013 = vpack.c.b16 %v5801, %v5797
      %v6014 = vpack.c.b16 %v5802, %v5798
      %v6015 = vpack.c.b16 %v5803, %v5799
      %v6016 = vpack.c.b16 %v5804, %v5800
      %v6017 = vpack.c.b16 %v5809, %v5805
      %v6018 = vpack.c.b16 %v5810, %v5806
      %v6019 = vpack.c.b16 %v5811, %v5807
      %v6020 = vpack.c.b16 %v5812, %v5808
      %v6021 = vpack.c.b16 %v5817, %v5813
      %v6022 = vpack.c.b16 %v5818, %v5814
      %v6023 = vpack.c.b16 %v5819, %v5815
      %v6024 = vpack.c.b16 %v5820, %v5816
      %v6025 = vpack.c.b16 %v5825, %v5821
      %v6026 = vpack.c.b16 %v5826, %v5822
      %v6027 = vpack.c.b16 %v5827, %v5823
      %v6028 = vpack.c.b16 %v5828, %v5824
      %v6029 = vpack.c.b16 %v5833, %v5829
      %v6030 = vpack.c.b16 %v5834, %v5830
      %v6031 = vpack.c.b16 %v5835, %v5831
      %v6032 = vpack.c.b16 %v5836, %v5832
      %v6033 = vpack.c.b16 %v5841, %v5837
      %v6034 = vpack.c.b16 %v5842, %v5838
      %v6035 = vpack.c.b16 %v5843, %v5839
      %v6036 = vpack.c.b16 %v5844, %v5840
      %v6037 = vpack.c.b16 %v5849, %v5845
      %v6038 = vpack.c.b16 %v5850, %v5846
      %v6039 = vpack.c.b16 %v5851, %v5847
      %v6040 = vpack.c.b16 %v5852, %v5848
      %v6041 = vpack.c.b16 %v5857, %v5853
      %v6042 = vpack.c.b16 %v5858, %v5854
      %v6043 = vpack.c.b16 %v5859, %v5855
      %v6044 = vpack.c.b16 %v5860, %v5856
      %v6045 = vpack.c.b16 %v5865, %v5861
      %v6046 = vpack.c.b16 %v5866, %v5862
      %v6047 = vpack.c.b16 %v5867, %v5863
      %v6048 = vpack.c.b16 %v5868, %v5864
      %v6049 = vpack.c.b16 %v5873, %v5869
      %v6050 = vpack.c.b16 %v5874, %v5870
      %v6051 = vpack.c.b16 %v5875, %v5871
      %v6052 = vpack.c.b16 %v5876, %v5872
      %v6053 = vpack.c.b16 %v5881, %v5877
      %v6054 = vpack.c.b16 %v5882, %v5878
      %v6055 = vpack.c.b16 %v5883, %v5879
      %v6056 = vpack.c.b16 %v5884, %v5880
      %v6057 = vpack.c.b16 %v5889, %v5885
      %v6058 = vpack.c.b16 %v5890, %v5886
      %v6059 = vpack.c.b16 %v5891, %v5887
      %v6060 = vpack.c.b16 %v5892, %v5888
      %v6061 = vpack.c.b16 %v5897, %v5893
      %v6062 = vpack.c.b16 %v5898, %v5894
      %v6063 = vpack.c.b16 %v5899, %v5895
      %v6064 = vpack.c.b16 %v5900, %v5896
      %v6065 = vpack.c.b16 %v5905, %v5901
      %v6066 = vpack.c.b16 %v5906, %v5902
      %v6067 = vpack.c.b16 %v5907, %v5903
      %v6068 = vpack.c.b16 %v5908, %v5904
      %v6069 = vpack.c.b16 %v5913, %v5909
      %v6070 = vpack.c.b16 %v5914, %v5910
      %v6071 = vpack.c.b16 %v5915, %v5911
      %v6072 = vpack.c.b16 %v5916, %v5912
      %v6073 = vpack.c.b16 %v5921, %v5917
      %v6074 = vpack.c.b16 %v5922, %v5918
      %v6075 = vpack.c.b16 %v5923, %v5919
      %v6076 = vpack.c.b16 %v5924, %v5920
      %v6077 = vpack.c.b16 %v5929, %v5925
      %v6078 = vpack.c.b16 %v5930, %v5926
      %v6079 = vpack.c.b16 %v5931, %v5927
      %v6080 = vpack.c.b16 %v5932, %v5928
      %v6081 = vpack.c.b16 %v5937, %v5933
      %v6082 = vpack.c.b16 %v5938, %v5934
      %v6083 = vpack.c.b16 %v5939, %v5935
      %v6084 = vpack.c.b16 %v5940, %v5936
      %v6085 = vpack.c.b16 %v5945, %v5941
      %v6086 = vpack.c.b16 %v5946, %v5942
      %v6087 = vpack.c.b16 %v5947, %v5943
      %v6088 = vpack.c.b16 %v5948, %v5944
      %v6089 = vpack.c.b16 %v5953, %v5949
      %v6090 = vpack.c.b16 %v5954, %v5950
      %v6091 = vpack.c.b16 %v5955, %v5951
      %v6092 = vpack.c.b16 %v5956, %v5952
      %v6093 = vpack.c.b16 %v5961, %v5957
      %v6094 = vpack.c.b16 %v5962, %v5958
      %v6095 = vpack.c.b16 %v5963, %v5959
      %v6096 = vpack.c.b16 %v5964, %v5960
      %v6097 = vpack.c.b16 %v5969, %v5965
      %v6098 = vpack.c.b16 %v5970, %v5966
      %v6099 = vpack.c.b16 %v5971, %v5967
      %v6100 = vpack.c.b16 %v5972, %v5968
      %6229 = vmatprep.subr.bf16.mxu0 %v6002
      %6230 = vmatpush1.bf16.msra.mxu0 %v6001
      %6231 = vmatprep.subr.bf16.mxu0 %v5998
      %6232 = vmatpush1.bf16.msra.mxu0 %v5997
      %6233 = vmatprep.subr.bf16.mxu0 %v5994
      %6234 = vmatpush1.bf16.msra.mxu0 %v5993
      %6235 = vmatprep.subr.bf16.mxu0 %v5990
      %6236 = vmatpush1.bf16.msra.mxu0 %v5989
      %6237 = vmatprep.subr.bf16.mxu0 %v5986
      %6238 = vmatpush1.bf16.msra.mxu0 %v5985
      %6239 = vmatprep.subr.bf16.mxu0 %v5982
      %6240 = vmatpush1.bf16.msra.mxu0 %v5981
      %6241 = vmatprep.subr.bf16.mxu0 %v5978
      %6242 = vmatpush1.bf16.msra.mxu0 %v5977
      %6243 = vmatprep.subr.bf16.mxu0 %v5974
      %6244 = vmatpush1.bf16.msra.mxu0 %v5973
      %6245 = vmatprep.subr.bf16.mxu0 %v6034
      %6246 = vmatpush2.bf16.msra.mxu0 %v6033
      %6247 = vmatprep.subr.bf16.mxu0 %v6030
      %6248 = vmatpush2.bf16.msra.mxu0 %v6029
      %6249 = vmatprep.subr.bf16.mxu0 %v6026
      %6250 = vmatpush2.bf16.msra.mxu0 %v6025
      %6251 = vmatprep.subr.bf16.mxu0 %v6022
      %6252 = vmatpush2.bf16.msra.mxu0 %v6021
      %6253 = vmatprep.subr.bf16.mxu0 %v6018
      %6254 = vmatpush2.bf16.msra.mxu0 %v6017
      %6255 = vmatprep.subr.bf16.mxu0 %v6014
      %6256 = vmatpush2.bf16.msra.mxu0 %v6013
      %6257 = vmatprep.subr.bf16.mxu0 %v6010
      %6258 = vmatpush2.bf16.msra.mxu0 %v6009
      %6259 = vmatprep.subr.bf16.mxu0 %v6006
      %6260 = vmatpush2.bf16.msra.mxu0 %v6005
      %6261 = vmatprep.mubr.bf16.mxu0 %v5408
      %6262 = vmatmul.mubr.bf16.gmra.mxu0 %v5407
      %v6263 = vpop.f32.mrf.mxu0
      %v6264 = vadd.f32 %v5572, %v6263
      %v6265 = vpop.f32.mrf.mxu0
      %v6266 = vadd.f32 %v5576, %v6265
      %v6267 = vpop.f32.mrf.mxu0
      %v6268 = vadd.f32 %v5572, %v6267
      %v6269 = vpop.f32.mrf.mxu0
      %v6270 = vadd.f32 %v5576, %v6269
      %6271 = vmatprep.mubr.bf16.mxu0 %v5412
      %6272 = vmatmul.mubr.bf16.gmra.mxu0 %v5411
      %v6273 = vpop.f32.mrf.mxu0
      %v6274 = vadd.f32 %v5572, %v6273
      %v6275 = vpop.f32.mrf.mxu0
      %v6276 = vadd.f32 %v5576, %v6275
      %v6277 = vpop.f32.mrf.mxu0
      %v6278 = vadd.f32 %v5572, %v6277
      %v6279 = vpop.f32.mrf.mxu0
      %v6280 = vadd.f32 %v5576, %v6279
      %6281 = vmatprep.mubr.bf16.mxu0 %v5416
      %6282 = vmatmul.mubr.bf16.gmra.mxu0 %v5415
      %v6283 = vpop.f32.mrf.mxu0
      %v6284 = vadd.f32 %v5572, %v6283
      %v6285 = vpop.f32.mrf.mxu0
      %v6286 = vadd.f32 %v5576, %v6285
      %v6287 = vpop.f32.mrf.mxu0
      %v6288 = vadd.f32 %v5572, %v6287
      %v6289 = vpop.f32.mrf.mxu0
      %v6290 = vadd.f32 %v5576, %v6289
      %6291 = vmatprep.mubr.bf16.mxu0 %v5420
      %6292 = vmatmul.mubr.bf16.gmra.mxu0 %v5419
      %v6293 = vpop.f32.mrf.mxu0
      %v6294 = vadd.f32 %v5572, %v6293
      %v6295 = vpop.f32.mrf.mxu0
      %v6296 = vadd.f32 %v5576, %v6295
      %v6297 = vpop.f32.mrf.mxu0
      %v6298 = vadd.f32 %v5572, %v6297
      %v6299 = vpop.f32.mrf.mxu0
      %v6300 = vadd.f32 %v5576, %v6299
      %6301 = vmatprep.mubr.bf16.mxu0 %v5424
      %6302 = vmatmul.mubr.bf16.gmra.mxu0 %v5423
      %v6303 = vpop.f32.mrf.mxu0
      %v6304 = vadd.f32 %v5572, %v6303
      %v6305 = vpop.f32.mrf.mxu0
      %v6306 = vadd.f32 %v5576, %v6305
      %v6307 = vpop.f32.mrf.mxu0
      %v6308 = vadd.f32 %v5572, %v6307
      %v6309 = vpop.f32.mrf.mxu0
      %v6310 = vadd.f32 %v5576, %v6309
      %6311 = vmatprep.mubr.bf16.mxu0 %v5428
      %6312 = vmatmul.mubr.bf16.gmra.mxu0 %v5427
      %v6313 = vpop.f32.mrf.mxu0
      %v6314 = vadd.f32 %v5572, %v6313
      %v6315 = vpop.f32.mrf.mxu0
      %v6316 = vadd.f32 %v5576, %v6315
      %v6317 = vpop.f32.mrf.mxu0
      %v6318 = vadd.f32 %v5572, %v6317
      %v6319 = vpop.f32.mrf.mxu0
      %v6320 = vadd.f32 %v5576, %v6319
      %6321 = vmatprep.mubr.bf16.mxu0 %v5432
      %6322 = vmatmul.mubr.bf16.gmra.mxu0 %v5431
      %v6323 = vpop.f32.mrf.mxu0
      %v6324 = vadd.f32 %v5572, %v6323
      %v6325 = vpop.f32.mrf.mxu0
      %v6326 = vadd.f32 %v5576, %v6325
      %v6327 = vpop.f32.mrf.mxu0
      %v6328 = vadd.f32 %v5572, %v6327
      %v6329 = vpop.f32.mrf.mxu0
      %v6330 = vadd.f32 %v5576, %v6329
      %6331 = vmatprep.mubr.bf16.mxu0 %v5436
      %6332 = vmatmul.mubr.bf16.gmra.mxu0 %v5435
      %v6333 = vpop.f32.mrf.mxu0
      %v6334 = vadd.f32 %v5572, %v6333
      %v6335 = vpop.f32.mrf.mxu0
      %v6336 = vadd.f32 %v5576, %v6335
      %v6337 = vpop.f32.mrf.mxu0
      %v6338 = vadd.f32 %v5572, %v6337
      %v6339 = vpop.f32.mrf.mxu0
      %v6340 = vadd.f32 %v5576, %v6339
      %6341 = vdwg.mxu0
      %6342 = vmatprep.subr.bf16.mxu0 %v6066
      %6343 = vmatpush1.bf16.msra.mxu0 %v6065
      %6344 = vmatprep.subr.bf16.mxu0 %v6062
      %6345 = vmatpush1.bf16.msra.mxu0 %v6061
      %6346 = vmatprep.subr.bf16.mxu0 %v6058
      %6347 = vmatpush1.bf16.msra.mxu0 %v6057
      %6348 = vmatprep.subr.bf16.mxu0 %v6054
      %6349 = vmatpush1.bf16.msra.mxu0 %v6053
      %6350 = vmatprep.subr.bf16.mxu0 %v6050
      %6351 = vmatpush1.bf16.msra.mxu0 %v6049
      %6352 = vmatprep.subr.bf16.mxu0 %v6046
      %6353 = vmatpush1.bf16.msra.mxu0 %v6045
      %6354 = vmatprep.subr.bf16.mxu0 %v6042
      %6355 = vmatpush1.bf16.msra.mxu0 %v6041
      %6356 = vmatprep.subr.bf16.mxu0 %v6038
      %6357 = vmatpush1.bf16.msra.mxu0 %v6037
      %6358 = vmatprep.subr.bf16.mxu0 %v6098
      %6359 = vmatpush2.bf16.msra.mxu0 %v6097
      %6360 = vmatprep.subr.bf16.mxu0 %v6094
      %6361 = vmatpush2.bf16.msra.mxu0 %v6093
      %6362 = vmatprep.subr.bf16.mxu0 %v6090
      %6363 = vmatpush2.bf16.msra.mxu0 %v6089
      %6364 = vmatprep.subr.bf16.mxu0 %v6086
      %6365 = vmatpush2.bf16.msra.mxu0 %v6085
      %6366 = vmatprep.subr.bf16.mxu0 %v6082
      %6367 = vmatpush2.bf16.msra.mxu0 %v6081
      %6368 = vmatprep.subr.bf16.mxu0 %v6078
      %6369 = vmatpush2.bf16.msra.mxu0 %v6077
      %6370 = vmatprep.subr.bf16.mxu0 %v6074
      %6371 = vmatpush2.bf16.msra.mxu0 %v6073
      %6372 = vmatprep.subr.bf16.mxu0 %v6070
      %6373 = vmatpush2.bf16.msra.mxu0 %v6069
      %6374 = vmatprep.mubr.bf16.mxu0 %v5410
      %6375 = vmatmul.mubr.bf16.gmra.mxu0 %v5409
      %v6376 = vpop.f32.mrf.mxu0
      %v6377 = vadd.f32 %v6264, %v6376
      %v6378 = vpop.f32.mrf.mxu0
      %v6379 = vadd.f32 %v6266, %v6378
      %v6380 = vpop.f32.mrf.mxu0
      %v6381 = vadd.f32 %v6268, %v6380
      %v6382 = vpop.f32.mrf.mxu0
      %v6383 = vadd.f32 %v6270, %v6382
      %6384 = vmatprep.mubr.bf16.mxu0 %v5414
      %6385 = vmatmul.mubr.bf16.gmra.mxu0 %v5413
      %v6386 = vpop.f32.mrf.mxu0
      %v6387 = vadd.f32 %v6274, %v6386
      %v6388 = vpop.f32.mrf.mxu0
      %v6389 = vadd.f32 %v6276, %v6388
      %v6390 = vpop.f32.mrf.mxu0
      %v6391 = vadd.f32 %v6278, %v6390
      %v6392 = vpop.f32.mrf.mxu0
      %v6393 = vadd.f32 %v6280, %v6392
      %6394 = vmatprep.mubr.bf16.mxu0 %v5418
      %6395 = vmatmul.mubr.bf16.gmra.mxu0 %v5417
      %v6396 = vpop.f32.mrf.mxu0
      %v6397 = vadd.f32 %v6284, %v6396
      %v6398 = vpop.f32.mrf.mxu0
      %v6399 = vadd.f32 %v6286, %v6398
      %v6400 = vpop.f32.mrf.mxu0
      %v6401 = vadd.f32 %v6288, %v6400
      %v6402 = vpop.f32.mrf.mxu0
      %v6403 = vadd.f32 %v6290, %v6402
      %6404 = vmatprep.mubr.bf16.mxu0 %v5422
      %6405 = vmatmul.mubr.bf16.gmra.mxu0 %v5421
      %v6406 = vpop.f32.mrf.mxu0
      %v6407 = vadd.f32 %v6294, %v6406
      %v6408 = vpop.f32.mrf.mxu0
      %v6409 = vadd.f32 %v6296, %v6408
      %v6410 = vpop.f32.mrf.mxu0
      %v6411 = vadd.f32 %v6298, %v6410
      %v6412 = vpop.f32.mrf.mxu0
      %v6413 = vadd.f32 %v6300, %v6412
      %6414 = vmatprep.mubr.bf16.mxu0 %v5426
      %6415 = vmatmul.mubr.bf16.gmra.mxu0 %v5425
      %v6416 = vpop.f32.mrf.mxu0
      %v6417 = vadd.f32 %v6304, %v6416
      %v6418 = vpop.f32.mrf.mxu0
      %v6419 = vadd.f32 %v6306, %v6418
      %v6420 = vpop.f32.mrf.mxu0
      %v6421 = vadd.f32 %v6308, %v6420
      %v6422 = vpop.f32.mrf.mxu0
      %v6423 = vadd.f32 %v6310, %v6422
      %6424 = vmatprep.mubr.bf16.mxu0 %v5430
      %6425 = vmatmul.mubr.bf16.gmra.mxu0 %v5429
      %v6426 = vpop.f32.mrf.mxu0
      %v6427 = vadd.f32 %v6314, %v6426
      %v6428 = vpop.f32.mrf.mxu0
      %v6429 = vadd.f32 %v6316, %v6428
      %v6430 = vpop.f32.mrf.mxu0
      %v6431 = vadd.f32 %v6318, %v6430
      %v6432 = vpop.f32.mrf.mxu0
      %v6433 = vadd.f32 %v6320, %v6432
      %6434 = vmatprep.mubr.bf16.mxu0 %v5434
      %6435 = vmatmul.mubr.bf16.gmra.mxu0 %v5433
      %v6436 = vpop.f32.mrf.mxu0
      %v6437 = vadd.f32 %v6324, %v6436
      %v6438 = vpop.f32.mrf.mxu0
      %v6439 = vadd.f32 %v6326, %v6438
      %v6440 = vpop.f32.mrf.mxu0
      %v6441 = vadd.f32 %v6328, %v6440
      %v6442 = vpop.f32.mrf.mxu0
      %v6443 = vadd.f32 %v6330, %v6442
      %6444 = vmatprep.mubr.bf16.mxu0 %v5438
      %6445 = vmatmul.mubr.bf16.gmra.mxu0 %v5437
      %v6446 = vpop.f32.mrf.mxu0
      %v6447 = vadd.f32 %v6334, %v6446
      %v6448 = vpop.f32.mrf.mxu0
      %v6449 = vadd.f32 %v6336, %v6448
      %v6450 = vpop.f32.mrf.mxu0
      %v6451 = vadd.f32 %v6338, %v6450
      %v6452 = vpop.f32.mrf.mxu0
      %v6453 = vadd.f32 %v6340, %v6452
      %6454 = vdwg.mxu0
      %6455 = vmatprep.subr.bf16.mxu0 %v6004
      %6456 = vmatpush1.bf16.msra.mxu0 %v6003
      %6457 = vmatprep.subr.bf16.mxu0 %v6000
      %6458 = vmatpush1.bf16.msra.mxu0 %v5999
      %6459 = vmatprep.subr.bf16.mxu0 %v5996
      %6460 = vmatpush1.bf16.msra.mxu0 %v5995
      %6461 = vmatprep.subr.bf16.mxu0 %v5992
      %6462 = vmatpush1.bf16.msra.mxu0 %v5991
      %6463 = vmatprep.subr.bf16.mxu0 %v5988
      %6464 = vmatpush1.bf16.msra.mxu0 %v5987
      %6465 = vmatprep.subr.bf16.mxu0 %v5984
      %6466 = vmatpush1.bf16.msra.mxu0 %v5983
      %6467 = vmatprep.subr.bf16.mxu0 %v5980
      %6468 = vmatpush1.bf16.msra.mxu0 %v5979
      %6469 = vmatprep.subr.bf16.mxu0 %v5976
      %6470 = vmatpush1.bf16.msra.mxu0 %v5975
      %6471 = vmatprep.subr.bf16.mxu0 %v6036
      %6472 = vmatpush2.bf16.msra.mxu0 %v6035
      %6473 = vmatprep.subr.bf16.mxu0 %v6032
      %6474 = vmatpush2.bf16.msra.mxu0 %v6031
      %6475 = vmatprep.subr.bf16.mxu0 %v6028
      %6476 = vmatpush2.bf16.msra.mxu0 %v6027
      %6477 = vmatprep.subr.bf16.mxu0 %v6024
      %6478 = vmatpush2.bf16.msra.mxu0 %v6023
      %6479 = vmatprep.subr.bf16.mxu0 %v6020
      %6480 = vmatpush2.bf16.msra.mxu0 %v6019
      %6481 = vmatprep.subr.bf16.mxu0 %v6016
      %6482 = vmatpush2.bf16.msra.mxu0 %v6015
      %6483 = vmatprep.subr.bf16.mxu0 %v6012
      %6484 = vmatpush2.bf16.msra.mxu0 %v6011
      %6485 = vmatprep.subr.bf16.mxu0 %v6008
      %6486 = vmatpush2.bf16.msra.mxu0 %v6007
      %6487 = vmatprep.mubr.bf16.mxu0 %v5408
      %6488 = vmatmul.mubr.bf16.gmra.mxu0 %v5407
      %v6489 = vpop.f32.mrf.mxu0
      %v6490 = vadd.f32 %v5580, %v6489
      %v6491 = vpop.f32.mrf.mxu0
      %v6492 = vadd.f32 %v5584, %v6491
      %v6493 = vpop.f32.mrf.mxu0
      %v6494 = vadd.f32 %v5580, %v6493
      %v6495 = vpop.f32.mrf.mxu0
      %v6496 = vadd.f32 %v5584, %v6495
      %6497 = vmatprep.mubr.bf16.mxu0 %v5412
      %6498 = vmatmul.mubr.bf16.gmra.mxu0 %v5411
      %v6499 = vpop.f32.mrf.mxu0
      %v6500 = vadd.f32 %v5580, %v6499
      %v6501 = vpop.f32.mrf.mxu0
      %v6502 = vadd.f32 %v5584, %v6501
      %v6503 = vpop.f32.mrf.mxu0
      %v6504 = vadd.f32 %v5580, %v6503
      %v6505 = vpop.f32.mrf.mxu0
      %v6506 = vadd.f32 %v5584, %v6505
      %6507 = vmatprep.mubr.bf16.mxu0 %v5416
      %6508 = vmatmul.mubr.bf16.gmra.mxu0 %v5415
      %v6509 = vpop.f32.mrf.mxu0
      %v6510 = vadd.f32 %v5580, %v6509
      %v6511 = vpop.f32.mrf.mxu0
      %v6512 = vadd.f32 %v5584, %v6511
      %v6513 = vpop.f32.mrf.mxu0
      %v6514 = vadd.f32 %v5580, %v6513
      %v6515 = vpop.f32.mrf.mxu0
      %v6516 = vadd.f32 %v5584, %v6515
      %6517 = vmatprep.mubr.bf16.mxu0 %v5420
      %6518 = vmatmul.mubr.bf16.gmra.mxu0 %v5419
      %v6519 = vpop.f32.mrf.mxu0
      %v6520 = vadd.f32 %v5580, %v6519
      %v6521 = vpop.f32.mrf.mxu0
      %v6522 = vadd.f32 %v5584, %v6521
      %v6523 = vpop.f32.mrf.mxu0
      %v6524 = vadd.f32 %v5580, %v6523
      %v6525 = vpop.f32.mrf.mxu0
      %v6526 = vadd.f32 %v5584, %v6525
      %6527 = vmatprep.mubr.bf16.mxu0 %v5424
      %6528 = vmatmul.mubr.bf16.gmra.mxu0 %v5423
      %v6529 = vpop.f32.mrf.mxu0
      %v6530 = vadd.f32 %v5580, %v6529
      %v6531 = vpop.f32.mrf.mxu0
      %v6532 = vadd.f32 %v5584, %v6531
      %v6533 = vpop.f32.mrf.mxu0
      %v6534 = vadd.f32 %v5580, %v6533
      %v6535 = vpop.f32.mrf.mxu0
      %v6536 = vadd.f32 %v5584, %v6535
      %6537 = vmatprep.mubr.bf16.mxu0 %v5428
      %6538 = vmatmul.mubr.bf16.gmra.mxu0 %v5427
      %v6539 = vpop.f32.mrf.mxu0
      %v6540 = vadd.f32 %v5580, %v6539
      %v6541 = vpop.f32.mrf.mxu0
      %v6542 = vadd.f32 %v5584, %v6541
      %v6543 = vpop.f32.mrf.mxu0
      %v6544 = vadd.f32 %v5580, %v6543
      %v6545 = vpop.f32.mrf.mxu0
      %v6546 = vadd.f32 %v5584, %v6545
      %6547 = vmatprep.mubr.bf16.mxu0 %v5432
      %6548 = vmatmul.mubr.bf16.gmra.mxu0 %v5431
      %v6549 = vpop.f32.mrf.mxu0
      %v6550 = vadd.f32 %v5580, %v6549
      %v6551 = vpop.f32.mrf.mxu0
      %v6552 = vadd.f32 %v5584, %v6551
      %v6553 = vpop.f32.mrf.mxu0
      %v6554 = vadd.f32 %v5580, %v6553
      %v6555 = vpop.f32.mrf.mxu0
      %v6556 = vadd.f32 %v5584, %v6555
      %6557 = vmatprep.mubr.bf16.mxu0 %v5436
      %6558 = vmatmul.mubr.bf16.gmra.mxu0 %v5435
      %v6559 = vpop.f32.mrf.mxu0
      %v6560 = vadd.f32 %v5580, %v6559
      %v6561 = vpop.f32.mrf.mxu0
      %v6562 = vadd.f32 %v5584, %v6561
      %v6563 = vpop.f32.mrf.mxu0
      %v6564 = vadd.f32 %v5580, %v6563
      %v6565 = vpop.f32.mrf.mxu0
      %v6566 = vadd.f32 %v5584, %v6565
      %6567 = vdwg.mxu0
      %6568 = vmatprep.subr.bf16.mxu0 %v6068
      %6569 = vmatpush1.bf16.msra.mxu0 %v6067
      %6570 = vmatprep.subr.bf16.mxu0 %v6064
      %6571 = vmatpush1.bf16.msra.mxu0 %v6063
      %6572 = vmatprep.subr.bf16.mxu0 %v6060
      %6573 = vmatpush1.bf16.msra.mxu0 %v6059
      %6574 = vmatprep.subr.bf16.mxu0 %v6056
      %6575 = vmatpush1.bf16.msra.mxu0 %v6055
      %6576 = vmatprep.subr.bf16.mxu0 %v6052
      %6577 = vmatpush1.bf16.msra.mxu0 %v6051
      %6578 = vmatprep.subr.bf16.mxu0 %v6048
      %6579 = vmatpush1.bf16.msra.mxu0 %v6047
      %6580 = vmatprep.subr.bf16.mxu0 %v6044
      %6581 = vmatpush1.bf16.msra.mxu0 %v6043
      %6582 = vmatprep.subr.bf16.mxu0 %v6040
      %6583 = vmatpush1.bf16.msra.mxu0 %v6039
      %6584 = vmatprep.subr.bf16.mxu0 %v6100
      %6585 = vmatpush2.bf16.msra.mxu0 %v6099
      %6586 = vmatprep.subr.bf16.mxu0 %v6096
      %6587 = vmatpush2.bf16.msra.mxu0 %v6095
      %6588 = vmatprep.subr.bf16.mxu0 %v6092
      %6589 = vmatpush2.bf16.msra.mxu0 %v6091
      %6590 = vmatprep.subr.bf16.mxu0 %v6088
      %6591 = vmatpush2.bf16.msra.mxu0 %v6087
      %6592 = vmatprep.subr.bf16.mxu0 %v6084
      %6593 = vmatpush2.bf16.msra.mxu0 %v6083
      %6594 = vmatprep.subr.bf16.mxu0 %v6080
      %6595 = vmatpush2.bf16.msra.mxu0 %v6079
      %6596 = vmatprep.subr.bf16.mxu0 %v6076
      %6597 = vmatpush2.bf16.msra.mxu0 %v6075
      %6598 = vmatprep.subr.bf16.mxu0 %v6072
      %6599 = vmatpush2.bf16.msra.mxu0 %v6071
      %6600 = vmatprep.mubr.bf16.mxu0 %v5410
      %6601 = vmatmul.mubr.bf16.gmra.mxu0 %v5409
      %v6602 = vpop.f32.mrf.mxu0
      %v6603 = vadd.f32 %v6490, %v6602
      %v6604 = vpop.f32.mrf.mxu0
      %v6605 = vadd.f32 %v6492, %v6604
      %v6606 = vpop.f32.mrf.mxu0
      %v6607 = vadd.f32 %v6494, %v6606
      %v6608 = vpop.f32.mrf.mxu0
      %v6609 = vadd.f32 %v6496, %v6608
      %6610 = vmatprep.mubr.bf16.mxu0 %v5414
      %6611 = vmatmul.mubr.bf16.gmra.mxu0 %v5413
      %v6612 = vpop.f32.mrf.mxu0
      %v6613 = vadd.f32 %v6500, %v6612
      %v6614 = vpop.f32.mrf.mxu0
      %v6615 = vadd.f32 %v6502, %v6614
      %v6616 = vpop.f32.mrf.mxu0
      %v6617 = vadd.f32 %v6504, %v6616
      %v6618 = vpop.f32.mrf.mxu0
      %v6619 = vadd.f32 %v6506, %v6618
      %6620 = vmatprep.mubr.bf16.mxu0 %v5418
      %6621 = vmatmul.mubr.bf16.gmra.mxu0 %v5417
      %v6622 = vpop.f32.mrf.mxu0
      %v6623 = vadd.f32 %v6510, %v6622
      %v6624 = vpop.f32.mrf.mxu0
      %v6625 = vadd.f32 %v6512, %v6624
      %v6626 = vpop.f32.mrf.mxu0
      %v6627 = vadd.f32 %v6514, %v6626
      %v6628 = vpop.f32.mrf.mxu0
      %v6629 = vadd.f32 %v6516, %v6628
      %6630 = vmatprep.mubr.bf16.mxu0 %v5422
      %6631 = vmatmul.mubr.bf16.gmra.mxu0 %v5421
      %v6632 = vpop.f32.mrf.mxu0
      %v6633 = vadd.f32 %v6520, %v6632
      %v6634 = vpop.f32.mrf.mxu0
      %v6635 = vadd.f32 %v6522, %v6634
      %v6636 = vpop.f32.mrf.mxu0
      %v6637 = vadd.f32 %v6524, %v6636
      %v6638 = vpop.f32.mrf.mxu0
      %v6639 = vadd.f32 %v6526, %v6638
      %6640 = vmatprep.mubr.bf16.mxu0 %v5426
      %6641 = vmatmul.mubr.bf16.gmra.mxu0 %v5425
      %v6642 = vpop.f32.mrf.mxu0
      %v6643 = vadd.f32 %v6530, %v6642
      %v6644 = vpop.f32.mrf.mxu0
      %v6645 = vadd.f32 %v6532, %v6644
      %v6646 = vpop.f32.mrf.mxu0
      %v6647 = vadd.f32 %v6534, %v6646
      %v6648 = vpop.f32.mrf.mxu0
      %v6649 = vadd.f32 %v6536, %v6648
      %6650 = vmatprep.mubr.bf16.mxu0 %v5430
      %6651 = vmatmul.mubr.bf16.gmra.mxu0 %v5429
      %v6652 = vpop.f32.mrf.mxu0
      %v6653 = vadd.f32 %v6540, %v6652
      %v6654 = vpop.f32.mrf.mxu0
      %v6655 = vadd.f32 %v6542, %v6654
      %v6656 = vpop.f32.mrf.mxu0
      %v6657 = vadd.f32 %v6544, %v6656
      %v6658 = vpop.f32.mrf.mxu0
      %v6659 = vadd.f32 %v6546, %v6658
      %6660 = vmatprep.mubr.bf16.mxu0 %v5434
      %6661 = vmatmul.mubr.bf16.gmra.mxu0 %v5433
      %v6662 = vpop.f32.mrf.mxu0
      %v6663 = vadd.f32 %v6550, %v6662
      %v6664 = vpop.f32.mrf.mxu0
      %v6665 = vadd.f32 %v6552, %v6664
      %v6666 = vpop.f32.mrf.mxu0
      %v6667 = vadd.f32 %v6554, %v6666
      %v6668 = vpop.f32.mrf.mxu0
      %v6669 = vadd.f32 %v6556, %v6668
      %6670 = vmatprep.mubr.bf16.mxu0 %v5438
      %6671 = vmatmul.mubr.bf16.gmra.mxu0 %v5437
      %v6672 = vpop.f32.mrf.mxu0
      %v6673 = vadd.f32 %v6560, %v6672
      %v6674 = vpop.f32.mrf.mxu0
      %v6675 = vadd.f32 %v6562, %v6674
      %v6676 = vpop.f32.mrf.mxu0
      %v6677 = vadd.f32 %v6564, %v6676
      %v6678 = vpop.f32.mrf.mxu0
      %v6679 = vadd.f32 %v6566, %v6678
      %6680 = vdwg.mxu0
      %v6681 = vsub.f32 0.0, %v6377
      %v6682 = vsub.f32 0.0, %v6379
      %v6683 = vsub.f32 0.0, %v6603
      %v6684 = vsub.f32 0.0, %v6605
      %v6685 = vsub.f32 0.0, %v6381
      %v6686 = vsub.f32 0.0, %v6383
      %v6687 = vsub.f32 0.0, %v6607
      %v6688 = vsub.f32 0.0, %v6609
      %v6689 = vsub.f32 0.0, %v6387
      %v6690 = vsub.f32 0.0, %v6389
      %v6691 = vsub.f32 0.0, %v6613
      %v6692 = vsub.f32 0.0, %v6615
      %v6693 = vsub.f32 0.0, %v6391
      %v6694 = vsub.f32 0.0, %v6393
      %v6695 = vsub.f32 0.0, %v6617
      %v6696 = vsub.f32 0.0, %v6619
      %v6697 = vsub.f32 0.0, %v6397
      %v6698 = vsub.f32 0.0, %v6399
      %v6699 = vsub.f32 0.0, %v6623
      %v6700 = vsub.f32 0.0, %v6625
      %v6701 = vsub.f32 0.0, %v6401
      %v6702 = vsub.f32 0.0, %v6403
      %v6703 = vsub.f32 0.0, %v6627
      %v6704 = vsub.f32 0.0, %v6629
      %v6705 = vsub.f32 0.0, %v6407
      %v6706 = vsub.f32 0.0, %v6409
      %v6707 = vsub.f32 0.0, %v6633
      %v6708 = vsub.f32 0.0, %v6635
      %v6709 = vsub.f32 0.0, %v6411
      %v6710 = vsub.f32 0.0, %v6413
      %v6711 = vsub.f32 0.0, %v6637
      %v6712 = vsub.f32 0.0, %v6639
      %v6713 = vsub.f32 0.0, %v6417
      %v6714 = vsub.f32 0.0, %v6419
      %v6715 = vsub.f32 0.0, %v6643
      %v6716 = vsub.f32 0.0, %v6645
      %v6717 = vsub.f32 0.0, %v6421
      %v6718 = vsub.f32 0.0, %v6423
      %v6719 = vsub.f32 0.0, %v6647
      %v6720 = vsub.f32 0.0, %v6649
      %v6721 = vsub.f32 0.0, %v6427
      %v6722 = vsub.f32 0.0, %v6429
      %v6723 = vsub.f32 0.0, %v6653
      %v6724 = vsub.f32 0.0, %v6655
      %v6725 = vsub.f32 0.0, %v6431
      %v6726 = vsub.f32 0.0, %v6433
      %v6727 = vsub.f32 0.0, %v6657
      %v6728 = vsub.f32 0.0, %v6659
      %v6729 = vsub.f32 0.0, %v6437
      %v6730 = vsub.f32 0.0, %v6439
      %v6731 = vsub.f32 0.0, %v6663
      %v6732 = vsub.f32 0.0, %v6665
      %v6733 = vsub.f32 0.0, %v6441
      %v6734 = vsub.f32 0.0, %v6443
      %v6735 = vsub.f32 0.0, %v6667
      %v6736 = vsub.f32 0.0, %v6669
      %v6737 = vsub.f32 0.0, %v6447
      %v6738 = vsub.f32 0.0, %v6449
      %v6739 = vsub.f32 0.0, %v6673
      %v6740 = vsub.f32 0.0, %v6675
      %v6741 = vsub.f32 0.0, %v6451
      %v6742 = vsub.f32 0.0, %v6453
      %v6743 = vsub.f32 0.0, %v6677
      %v6744 = vsub.f32 0.0, %v6679
      %v6745 = vmul.f32 %v6681, 1.442695
      %v6746 = vpow.pop %v6745
      %v6747 = vmul.f32 %v6682, 1.442695
      %v6748 = vpow.pop %v6747
      %v6749 = vmul.f32 %v6683, 1.442695
      %v6750 = vpow.pop %v6749
      %v6751 = vmul.f32 %v6684, 1.442695
      %v6752 = vpow.pop %v6751
      %v6753 = vmul.f32 %v6685, 1.442695
      %v6754 = vpow.pop %v6753
      %v6755 = vmul.f32 %v6686, 1.442695
      %v6756 = vpow.pop %v6755
      %v6757 = vmul.f32 %v6687, 1.442695
      %v6758 = vpow.pop %v6757
      %v6759 = vmul.f32 %v6688, 1.442695
      %v6760 = vpow.pop %v6759
      %v6761 = vmul.f32 %v6689, 1.442695
      %v6762 = vpow.pop %v6761
      %v6763 = vmul.f32 %v6690, 1.442695
      %v6764 = vpow.pop %v6763
      %v6765 = vmul.f32 %v6691, 1.442695
      %v6766 = vpow.pop %v6765
      %v6767 = vmul.f32 %v6692, 1.442695
      %v6768 = vpow.pop %v6767
      %v6769 = vmul.f32 %v6693, 1.442695
      %v6770 = vpow.pop %v6769
      %v6771 = vmul.f32 %v6694, 1.442695
      %v6772 = vpow.pop %v6771
      %v6773 = vmul.f32 %v6695, 1.442695
      %v6774 = vpow.pop %v6773
      %v6775 = vmul.f32 %v6696, 1.442695
      %v6776 = vpow.pop %v6775
      %v6777 = vmul.f32 %v6697, 1.442695
      %v6778 = vpow.pop %v6777
      %v6779 = vmul.f32 %v6698, 1.442695
      %v6780 = vpow.pop %v6779
      %v6781 = vmul.f32 %v6699, 1.442695
      %v6782 = vpow.pop %v6781
      %v6783 = vmul.f32 %v6700, 1.442695
      %v6784 = vpow.pop %v6783
      %v6785 = vmul.f32 %v6701, 1.442695
      %v6786 = vpow.pop %v6785
      %v6787 = vmul.f32 %v6702, 1.442695
      %v6788 = vpow.pop %v6787
      %v6789 = vmul.f32 %v6703, 1.442695
      %v6790 = vpow.pop %v6789
      %v6791 = vmul.f32 %v6704, 1.442695
      %v6792 = vpow.pop %v6791
      %v6793 = vmul.f32 %v6705, 1.442695
      %v6794 = vpow.pop %v6793
      %v6795 = vmul.f32 %v6706, 1.442695
      %v6796 = vpow.pop %v6795
      %v6797 = vmul.f32 %v6707, 1.442695
      %v6798 = vpow.pop %v6797
      %v6799 = vmul.f32 %v6708, 1.442695
      %v6800 = vpow.pop %v6799
      %v6801 = vmul.f32 %v6709, 1.442695
      %v6802 = vpow.pop %v6801
      %v6803 = vmul.f32 %v6710, 1.442695
      %v6804 = vpow.pop %v6803
      %v6805 = vmul.f32 %v6711, 1.442695
      %v6806 = vpow.pop %v6805
      %v6807 = vmul.f32 %v6712, 1.442695
      %v6808 = vpow.pop %v6807
      %v6809 = vmul.f32 %v6713, 1.442695
      %v6810 = vpow.pop %v6809
      %v6811 = vmul.f32 %v6714, 1.442695
      %v6812 = vpow.pop %v6811
      %v6813 = vmul.f32 %v6715, 1.442695
      %v6814 = vpow.pop %v6813
      %v6815 = vmul.f32 %v6716, 1.442695
      %v6816 = vpow.pop %v6815
      %v6817 = vmul.f32 %v6717, 1.442695
      %v6818 = vpow.pop %v6817
      %v6819 = vmul.f32 %v6718, 1.442695
      %v6820 = vpow.pop %v6819
      %v6821 = vmul.f32 %v6719, 1.442695
      %v6822 = vpow.pop %v6821
      %v6823 = vmul.f32 %v6720, 1.442695
      %v6824 = vpow.pop %v6823
      %v6825 = vmul.f32 %v6721, 1.442695
      %v6826 = vpow.pop %v6825
      %v6827 = vmul.f32 %v6722, 1.442695
      %v6828 = vpow.pop %v6827
      %v6829 = vmul.f32 %v6723, 1.442695
      %v6830 = vpow.pop %v6829
      %v6831 = vmul.f32 %v6724, 1.442695
      %v6832 = vpow.pop %v6831
      %v6833 = vmul.f32 %v6725, 1.442695
      %v6834 = vpow.pop %v6833
      %v6835 = vmul.f32 %v6726, 1.442695
      %v6836 = vpow.pop %v6835
      %v6837 = vmul.f32 %v6727, 1.442695
      %v6838 = vpow.pop %v6837
      %v6839 = vmul.f32 %v6728, 1.442695
      %v6840 = vpow.pop %v6839
      %v6841 = vmul.f32 %v6729, 1.442695
      %v6842 = vpow.pop %v6841
      %v6843 = vmul.f32 %v6730, 1.442695
      %v6844 = vpow.pop %v6843
      %v6845 = vmul.f32 %v6731, 1.442695
      %v6846 = vpow.pop %v6845
      %v6847 = vmul.f32 %v6732, 1.442695
      %v6848 = vpow.pop %v6847
      %v6849 = vmul.f32 %v6733, 1.442695
      %v6850 = vpow.pop %v6849
      %v6851 = vmul.f32 %v6734, 1.442695
      %v6852 = vpow.pop %v6851
      %v6853 = vmul.f32 %v6735, 1.442695
      %v6854 = vpow.pop %v6853
      %v6855 = vmul.f32 %v6736, 1.442695
      %v6856 = vpow.pop %v6855
      %v6857 = vmul.f32 %v6737, 1.442695
      %v6858 = vpow.pop %v6857
      %v6859 = vmul.f32 %v6738, 1.442695
      %v6860 = vpow.pop %v6859
      %v6861 = vmul.f32 %v6739, 1.442695
      %v6862 = vpow.pop %v6861
      %v6863 = vmul.f32 %v6740, 1.442695
      %v6864 = vpow.pop %v6863
      %v6865 = vmul.f32 %v6741, 1.442695
      %v6866 = vpow.pop %v6865
      %v6867 = vmul.f32 %v6742, 1.442695
      %v6868 = vpow.pop %v6867
      %v6869 = vmul.f32 %v6743, 1.442695
      %v6870 = vpow.pop %v6869
      %v6871 = vmul.f32 %v6744, 1.442695
      %v6872 = vpow.pop %v6871
      %v6873 = vadd.f32 %v6746, 1.0
      %v6874 = vadd.f32 %v6748, 1.0
      %v6875 = vadd.f32 %v6750, 1.0
      %v6876 = vadd.f32 %v6752, 1.0
      %v6877 = vadd.f32 %v6754, 1.0
      %v6878 = vadd.f32 %v6756, 1.0
      %v6879 = vadd.f32 %v6758, 1.0
      %v6880 = vadd.f32 %v6760, 1.0
      %v6881 = vadd.f32 %v6762, 1.0
      %v6882 = vadd.f32 %v6764, 1.0
      %v6883 = vadd.f32 %v6766, 1.0
      %v6884 = vadd.f32 %v6768, 1.0
      %v6885 = vadd.f32 %v6770, 1.0
      %v6886 = vadd.f32 %v6772, 1.0
      %v6887 = vadd.f32 %v6774, 1.0
      %v6888 = vadd.f32 %v6776, 1.0
      %v6889 = vadd.f32 %v6778, 1.0
      %v6890 = vadd.f32 %v6780, 1.0
      %v6891 = vadd.f32 %v6782, 1.0
      %v6892 = vadd.f32 %v6784, 1.0
      %v6893 = vadd.f32 %v6786, 1.0
      %v6894 = vadd.f32 %v6788, 1.0
      %v6895 = vadd.f32 %v6790, 1.0
      %v6896 = vadd.f32 %v6792, 1.0
      %v6897 = vadd.f32 %v6794, 1.0
      %v6898 = vadd.f32 %v6796, 1.0
      %v6899 = vadd.f32 %v6798, 1.0
      %v6900 = vadd.f32 %v6800, 1.0
      %v6901 = vadd.f32 %v6802, 1.0
      %v6902 = vadd.f32 %v6804, 1.0
      %v6903 = vadd.f32 %v6806, 1.0
      %v6904 = vadd.f32 %v6808, 1.0
      %v6905 = vadd.f32 %v6810, 1.0
      %v6906 = vadd.f32 %v6812, 1.0
      %v6907 = vadd.f32 %v6814, 1.0
      %v6908 = vadd.f32 %v6816, 1.0
      %v6909 = vadd.f32 %v6818, 1.0
      %v6910 = vadd.f32 %v6820, 1.0
      %v6911 = vadd.f32 %v6822, 1.0
      %v6912 = vadd.f32 %v6824, 1.0
      %v6913 = vadd.f32 %v6826, 1.0
      %v6914 = vadd.f32 %v6828, 1.0
      %v6915 = vadd.f32 %v6830, 1.0
      %v6916 = vadd.f32 %v6832, 1.0
      %v6917 = vadd.f32 %v6834, 1.0
      %v6918 = vadd.f32 %v6836, 1.0
      %v6919 = vadd.f32 %v6838, 1.0
      %v6920 = vadd.f32 %v6840, 1.0
      %v6921 = vadd.f32 %v6842, 1.0
      %v6922 = vadd.f32 %v6844, 1.0
      %v6923 = vadd.f32 %v6846, 1.0
      %v6924 = vadd.f32 %v6848, 1.0
      %v6925 = vadd.f32 %v6850, 1.0
      %v6926 = vadd.f32 %v6852, 1.0
      %v6927 = vadd.f32 %v6854, 1.0
      %v6928 = vadd.f32 %v6856, 1.0
      %v6929 = vadd.f32 %v6858, 1.0
      %v6930 = vadd.f32 %v6860, 1.0
      %v6931 = vadd.f32 %v6862, 1.0
      %v6932 = vadd.f32 %v6864, 1.0
      %v6933 = vadd.f32 %v6866, 1.0
      %v6934 = vadd.f32 %v6868, 1.0
      %v6935 = vadd.f32 %v6870, 1.0
      %v6936 = vadd.f32 %v6872, 1.0
      %v6937 = vrcp.pop %v6873
      %v6938 = vmul.f32 1.0, %v6937
      %v6939 = vrcp.pop %v6874
      %v6940 = vmul.f32 1.0, %v6939
      %v6941 = vrcp.pop %v6875
      %v6942 = vmul.f32 1.0, %v6941
      %v6943 = vrcp.pop %v6876
      %v6944 = vmul.f32 1.0, %v6943
      %v6945 = vrcp.pop %v6877
      %v6946 = vmul.f32 1.0, %v6945
      %v6947 = vrcp.pop %v6878
      %v6948 = vmul.f32 1.0, %v6947
      %v6949 = vrcp.pop %v6879
      %v6950 = vmul.f32 1.0, %v6949
      %v6951 = vrcp.pop %v6880
      %v6952 = vmul.f32 1.0, %v6951
      %v6953 = vrcp.pop %v6881
      %v6954 = vmul.f32 1.0, %v6953
      %v6955 = vrcp.pop %v6882
      %v6956 = vmul.f32 1.0, %v6955
      %v6957 = vrcp.pop %v6883
      %v6958 = vmul.f32 1.0, %v6957
      %v6959 = vrcp.pop %v6884
      %v6960 = vmul.f32 1.0, %v6959
      %v6961 = vrcp.pop %v6885
      %v6962 = vmul.f32 1.0, %v6961
      %v6963 = vrcp.pop %v6886
      %v6964 = vmul.f32 1.0, %v6963
      %v6965 = vrcp.pop %v6887
      %v6966 = vmul.f32 1.0, %v6965
      %v6967 = vrcp.pop %v6888
      %v6968 = vmul.f32 1.0, %v6967
      %v6969 = vrcp.pop %v6889
      %v6970 = vmul.f32 1.0, %v6969
      %v6971 = vrcp.pop %v6890
      %v6972 = vmul.f32 1.0, %v6971
      %v6973 = vrcp.pop %v6891
      %v6974 = vmul.f32 1.0, %v6973
      %v6975 = vrcp.pop %v6892
      %v6976 = vmul.f32 1.0, %v6975
      %v6977 = vrcp.pop %v6893
      %v6978 = vmul.f32 1.0, %v6977
      %v6979 = vrcp.pop %v6894
      %v6980 = vmul.f32 1.0, %v6979
      %v6981 = vrcp.pop %v6895
      %v6982 = vmul.f32 1.0, %v6981
      %v6983 = vrcp.pop %v6896
      %v6984 = vmul.f32 1.0, %v6983
      %v6985 = vrcp.pop %v6897
      %v6986 = vmul.f32 1.0, %v6985
      %v6987 = vrcp.pop %v6898
      %v6988 = vmul.f32 1.0, %v6987
      %v6989 = vrcp.pop %v6899
      %v6990 = vmul.f32 1.0, %v6989
      %v6991 = vrcp.pop %v6900
      %v6992 = vmul.f32 1.0, %v6991
      %v6993 = vrcp.pop %v6901
      %v6994 = vmul.f32 1.0, %v6993
      %v6995 = vrcp.pop %v6902
      %v6996 = vmul.f32 1.0, %v6995
      %v6997 = vrcp.pop %v6903
      %v6998 = vmul.f32 1.0, %v6997
      %v6999 = vrcp.pop %v6904
      %v7000 = vmul.f32 1.0, %v6999
      %v7001 = vrcp.pop %v6905
      %v7002 = vmul.f32 1.0, %v7001
      %v7003 = vrcp.pop %v6906
      %v7004 = vmul.f32 1.0, %v7003
      %v7005 = vrcp.pop %v6907
      %v7006 = vmul.f32 1.0, %v7005
      %v7007 = vrcp.pop %v6908
      %v7008 = vmul.f32 1.0, %v7007
      %v7009 = vrcp.pop %v6909
      %v7010 = vmul.f32 1.0, %v7009
      %v7011 = vrcp.pop %v6910
      %v7012 = vmul.f32 1.0, %v7011
      %v7013 = vrcp.pop %v6911
      %v7014 = vmul.f32 1.0, %v7013
      %v7015 = vrcp.pop %v6912
      %v7016 = vmul.f32 1.0, %v7015
      %v7017 = vrcp.pop %v6913
      %v7018 = vmul.f32 1.0, %v7017
      %v7019 = vrcp.pop %v6914
      %v7020 = vmul.f32 1.0, %v7019
      %v7021 = vrcp.pop %v6915
      %v7022 = vmul.f32 1.0, %v7021
      %v7023 = vrcp.pop %v6916
      %v7024 = vmul.f32 1.0, %v7023
      %v7025 = vrcp.pop %v6917
      %v7026 = vmul.f32 1.0, %v7025
      %v7027 = vrcp.pop %v6918
      %v7028 = vmul.f32 1.0, %v7027
      %v7029 = vrcp.pop %v6919
      %v7030 = vmul.f32 1.0, %v7029
      %v7031 = vrcp.pop %v6920
      %v7032 = vmul.f32 1.0, %v7031
      %v7033 = vrcp.pop %v6921
      %v7034 = vmul.f32 1.0, %v7033
      %v7035 = vrcp.pop %v6922
      %v7036 = vmul.f32 1.0, %v7035
      %v7037 = vrcp.pop %v6923
      %v7038 = vmul.f32 1.0, %v7037
      %v7039 = vrcp.pop %v6924
      %v7040 = vmul.f32 1.0, %v7039
      %v7041 = vrcp.pop %v6925
      %v7042 = vmul.f32 1.0, %v7041
      %v7043 = vrcp.pop %v6926
      %v7044 = vmul.f32 1.0, %v7043
      %v7045 = vrcp.pop %v6927
      %v7046 = vmul.f32 1.0, %v7045
      %v7047 = vrcp.pop %v6928
      %v7048 = vmul.f32 1.0, %v7047
      %v7049 = vrcp.pop %v6929
      %v7050 = vmul.f32 1.0, %v7049
      %v7051 = vrcp.pop %v6930
      %v7052 = vmul.f32 1.0, %v7051
      %v7053 = vrcp.pop %v6931
      %v7054 = vmul.f32 1.0, %v7053
      %v7055 = vrcp.pop %v6932
      %v7056 = vmul.f32 1.0, %v7055
      %v7057 = vrcp.pop %v6933
      %v7058 = vmul.f32 1.0, %v7057
      %v7059 = vrcp.pop %v6934
      %v7060 = vmul.f32 1.0, %v7059
      %v7061 = vrcp.pop %v6935
      %v7062 = vmul.f32 1.0, %v7061
      %v7063 = vrcp.pop %v6936
      %v7064 = vmul.f32 1.0, %v7063
      %v7065 = vadd.f32 %v6938, 1.0
      %v7066 = vadd.f32 %v6940, 1.0
      %v7067 = vadd.f32 %v6942, 1.0
      %v7068 = vadd.f32 %v6944, 1.0
      %v7069 = vadd.f32 %v6946, 1.0
      %v7070 = vadd.f32 %v6948, 1.0
      %v7071 = vadd.f32 %v6950, 1.0
      %v7072 = vadd.f32 %v6952, 1.0
      %v7073 = vadd.f32 %v6954, 1.0
      %v7074 = vadd.f32 %v6956, 1.0
      %v7075 = vadd.f32 %v6958, 1.0
      %v7076 = vadd.f32 %v6960, 1.0
      %v7077 = vadd.f32 %v6962, 1.0
      %v7078 = vadd.f32 %v6964, 1.0
      %v7079 = vadd.f32 %v6966, 1.0
      %v7080 = vadd.f32 %v6968, 1.0
      %v7081 = vadd.f32 %v6970, 1.0
      %v7082 = vadd.f32 %v6972, 1.0
      %v7083 = vadd.f32 %v6974, 1.0
      %v7084 = vadd.f32 %v6976, 1.0
      %v7085 = vadd.f32 %v6978, 1.0
      %v7086 = vadd.f32 %v6980, 1.0
      %v7087 = vadd.f32 %v6982, 1.0
      %v7088 = vadd.f32 %v6984, 1.0
      %v7089 = vadd.f32 %v6986, 1.0
      %v7090 = vadd.f32 %v6988, 1.0
      %v7091 = vadd.f32 %v6990, 1.0
      %v7092 = vadd.f32 %v6992, 1.0
      %v7093 = vadd.f32 %v6994, 1.0
      %v7094 = vadd.f32 %v6996, 1.0
      %v7095 = vadd.f32 %v6998, 1.0
      %v7096 = vadd.f32 %v7000, 1.0
      %v7097 = vadd.f32 %v7002, 1.0
      %v7098 = vadd.f32 %v7004, 1.0
      %v7099 = vadd.f32 %v7006, 1.0
      %v7100 = vadd.f32 %v7008, 1.0
      %v7101 = vadd.f32 %v7010, 1.0
      %v7102 = vadd.f32 %v7012, 1.0
      %v7103 = vadd.f32 %v7014, 1.0
      %v7104 = vadd.f32 %v7016, 1.0
      %v7105 = vadd.f32 %v7018, 1.0
      %v7106 = vadd.f32 %v7020, 1.0
      %v7107 = vadd.f32 %v7022, 1.0
      %v7108 = vadd.f32 %v7024, 1.0
      %v7109 = vadd.f32 %v7026, 1.0
      %v7110 = vadd.f32 %v7028, 1.0
      %v7111 = vadd.f32 %v7030, 1.0
      %v7112 = vadd.f32 %v7032, 1.0
      %v7113 = vadd.f32 %v7034, 1.0
      %v7114 = vadd.f32 %v7036, 1.0
      %v7115 = vadd.f32 %v7038, 1.0
      %v7116 = vadd.f32 %v7040, 1.0
      %v7117 = vadd.f32 %v7042, 1.0
      %v7118 = vadd.f32 %v7044, 1.0
      %v7119 = vadd.f32 %v7046, 1.0
      %v7120 = vadd.f32 %v7048, 1.0
      %v7121 = vadd.f32 %v7050, 1.0
      %v7122 = vadd.f32 %v7052, 1.0
      %v7123 = vadd.f32 %v7054, 1.0
      %v7124 = vadd.f32 %v7056, 1.0
      %v7125 = vadd.f32 %v7058, 1.0
      %v7126 = vadd.f32 %v7060, 1.0
      %v7127 = vadd.f32 %v7062, 1.0
      %v7128 = vadd.f32 %v7064, 1.0
      %7129 = vst [vmem:[%s248] sm:$0xff] %v7065
      %7130 = vst [vmem:[%s248 + $0x8] sm:$0xff] %v7066
      %7131 = vst [vmem:[%s248 + $0x10] sm:$0xff] %v7067
      %7132 = vst [vmem:[%s248 + $0x18] sm:$0xff] %v7068
      %7133 = vst [vmem:[%s248 + $0x20] sm:$0xff] %v7069
      %7134 = vst [vmem:[%s248 + $0x28] sm:$0xff] %v7070
      %7135 = vst [vmem:[%s248 + $0x30] sm:$0xff] %v7071
      %7136 = vst [vmem:[%s248 + $0x38] sm:$0xff] %v7072
      %7137 = vst [vmem:[%s248 + $0x40] sm:$0xff] %v7073
      %7138 = vst [vmem:[%s248 + $0x48] sm:$0xff] %v7074
      %7139 = vst [vmem:[%s248 + $0x50] sm:$0xff] %v7075
      %7140 = vst [vmem:[%s248 + $0x58] sm:$0xff] %v7076
      %7141 = vst [vmem:[%s248 + $0x60] sm:$0xff] %v7077
      %7142 = vst [vmem:[%s248 + $0x68] sm:$0xff] %v7078
      %7143 = vst [vmem:[%s248 + $0x70] sm:$0xff] %v7079
      %7144 = vst [vmem:[%s248 + $0x78] sm:$0xff] %v7080
      %7145 = vst [vmem:[%s248 + $0x80] sm:$0xff] %v7081
      %7146 = vst [vmem:[%s248 + $0x88] sm:$0xff] %v7082
      %7147 = vst [vmem:[%s248 + $0x90] sm:$0xff] %v7083
      %7148 = vst [vmem:[%s248 + $0x98] sm:$0xff] %v7084
      %7149 = vst [vmem:[%s248 + $0xa0] sm:$0xff] %v7085
      %7150 = vst [vmem:[%s248 + $0xa8] sm:$0xff] %v7086
      %7151 = vst [vmem:[%s248 + $0xb0] sm:$0xff] %v7087
      %7152 = vst [vmem:[%s248 + $0xb8] sm:$0xff] %v7088
      %7153 = vst [vmem:[%s248 + $0xc0] sm:$0xff] %v7089
      %7154 = vst [vmem:[%s248 + $0xc8] sm:$0xff] %v7090
      %7155 = vst [vmem:[%s248 + $0xd0] sm:$0xff] %v7091
      %7156 = vst [vmem:[%s248 + $0xd8] sm:$0xff] %v7092
      %7157 = vst [vmem:[%s248 + $0xe0] sm:$0xff] %v7093
      %7158 = vst [vmem:[%s248 + $0xe8] sm:$0xff] %v7094
      %7159 = vst [vmem:[%s248 + $0xf0] sm:$0xff] %v7095
      %7160 = vst [vmem:[%s248 + $0xf8] sm:$0xff] %v7096
      %7161 = vst [vmem:[%s248 + $0x100] sm:$0xff] %v7097
      %7162 = vst [vmem:[%s248 + $0x108] sm:$0xff] %v7098
      %7163 = vst [vmem:[%s248 + $0x110] sm:$0xff] %v7099
      %7164 = vst [vmem:[%s248 + $0x118] sm:$0xff] %v7100
      %7165 = vst [vmem:[%s248 + $0x120] sm:$0xff] %v7101
      %7166 = vst [vmem:[%s248 + $0x128] sm:$0xff] %v7102
      %7167 = vst [vmem:[%s248 + $0x130] sm:$0xff] %v7103
      %7168 = vst [vmem:[%s248 + $0x138] sm:$0xff] %v7104
      %7169 = vst [vmem:[%s248 + $0x140] sm:$0xff] %v7105
      %7170 = vst [vmem:[%s248 + $0x148] sm:$0xff] %v7106
      %7171 = vst [vmem:[%s248 + $0x150] sm:$0xff] %v7107
      %7172 = vst [vmem:[%s248 + $0x158] sm:$0xff] %v7108
      %7173 = vst [vmem:[%s248 + $0x160] sm:$0xff] %v7109
      %7174 = vst [vmem:[%s248 + $0x168] sm:$0xff] %v7110
      %7175 = vst [vmem:[%s248 + $0x170] sm:$0xff] %v7111
      %7176 = vst [vmem:[%s248 + $0x178] sm:$0xff] %v7112
      %7177 = vst [vmem:[%s248 + $0x180] sm:$0xff] %v7113
      %7178 = vst [vmem:[%s248 + $0x188] sm:$0xff] %v7114
      %7179 = vst [vmem:[%s248 + $0x190] sm:$0xff] %v7115
      %7180 = vst [vmem:[%s248 + $0x198] sm:$0xff] %v7116
      %7181 = vst [vmem:[%s248 + $0x1a0] sm:$0xff] %v7117
      %7182 = vst [vmem:[%s248 + $0x1a8] sm:$0xff] %v7118
      %7183 = vst [vmem:[%s248 + $0x1b0] sm:$0xff] %v7119
      %7184 = vst [vmem:[%s248 + $0x1b8] sm:$0xff] %v7120
      %7185 = vst [vmem:[%s248 + $0x1c0] sm:$0xff] %v7121
      %7186 = vst [vmem:[%s248 + $0x1c8] sm:$0xff] %v7122
      %7187 = vst [vmem:[%s248 + $0x1d0] sm:$0xff] %v7123
      %7188 = vst [vmem:[%s248 + $0x1d8] sm:$0xff] %v7124
      %7189 = vst [vmem:[%s248 + $0x1e0] sm:$0xff] %v7125
      %7190 = vst [vmem:[%s248 + $0x1e8] sm:$0xff] %v7126
      %7191 = vst [vmem:[%s248 + $0x1f0] sm:$0xff] %v7127
      %7192 = vst [vmem:[%s248 + $0x1f8] sm:$0xff] %v7128
      %s7193 = smul.u32 8, %s21
      %p7194 = scmp.lt.s32.totalorder %s20, 1
      %s7195 = scalar_select %p7194, %s20, 1
      %p7196 = scmp.lt.s32.totalorder %s7193, 15
      %s7197 = scalar_select %p7196, %s7193, 15
      %s7198 = smul.addr %s7197, 8
      %s7199 = smul.addr %s7195, 128
      %s7200 = sadd.s32 %s7198, %s7199
      %s7201 = smul.addr %s7200, 8
      %s7202 = scalar_lea.vmem %s5, %s7201
      // Predicated region
      $region41: #{attention_forward.1} parent=39 // pred_check
        %p7203 = pneg %p158
      $region42: #{attention_forward.1} parent=39 // pred_check_branch
        %7205 = sbr.rel (%p7203) target = $region44
      $region43: #{attention_forward.1} parent=39 // pred_region
        %s7206 = smul.u32 8, %s21
      $region44: #{attention_forward.1} parent=39 // pred_fallthru
        _
    $region40: #{attention_forward.1} parent=5 // pred_fallthru
      _
    %p7207 = scmp.le.s32.totalorder 2, %s11
    // Predicated region
    $region45: #{attention_forward.1} parent=5 // pred_check
      %p7208 = pneg %p7207
    $region46: #{attention_forward.1} parent=5 // pred_check_branch
      %7210 = sbr.rel (%p7208) target = $region48
    $region47: #{attention_forward.1} parent=5 // pred_region
      %s7211 = ssub.s32 %s11, 2
      // Predicated region
      $region49: #{attention_forward.1} parent=47 // pred_check
        %p7212 = pneg %p164
      $region50: #{attention_forward.1} parent=47 // pred_check_branch
        %7214 = sbr.rel (%p7212) target = $region52
      $region51: #{attention_forward.1} parent=47 // pred_region
        %s7215 = smul.u32 8, %s23
        %p7216 = scmp.lt.s32.totalorder %s22, 1
        %s7217 = scalar_select %p7216, %s22, 1
        %p7218 = scmp.lt.s32.totalorder %s7215, 15
        %s7219 = scalar_select %p7218, %s7215, 15
        %s7220 = smul.addr %s7219, 8
        %s7221 = smul.addr %s7217, 128
        %s7222 = sadd.s32 %s7220, %s7221
        %s7223 = smul.addr %s7222, 8
        %s7224 = scalar_lea.vmem %s5, %s7223
      $region52: #{attention_forward.1} parent=47 // pred_fallthru
        _
    $region48: #{attention_forward.1} parent=5 // pred_fallthru
      _
  $region6: #{attention_forward.1} parent=0 // loop_footer
    %s15 = sadd.s32 1, %s11
  $region7: #{attention_forward.1} parent=0 // loop_footer_branch
    %10 = sbr.rel target = $region3
  $region8: #{attention_forward.1} parent=0 // loop_exit
    _

</llo_original>
